<compile_context>
chip_gen: v7x
topology: tpu7x:2x2x1
jax: 0.10.0
libtpu: 0.0.40
codegen_flags: <defaults>
</compile_context>

<pallas_src>
from functools import partial

import jax
import jax.numpy as jnp
from jax.experimental import pallas as pl
from jax.experimental.pallas import tpu as pltpu

# Hyperparameters matching the PyTorch module
HIDDEN_SIZE = 30
INPUT_SIZE = 12
NUM_CLASSES = 12
NUM_LAYERS = 5
SEQ_LEN = 8
BATCH = 2
FC1_OUT = 128

HIDDEN_PAD = 32                  # per-gate lane padding (30 -> 32)
GATE_LANES = 4 * HIDDEN_PAD      # 128 lanes: one full vreg / MXU pass
OUT_PAD = 128                    # lane-dense output slab (12 -> 128)

_VMEM = pl.BlockSpec(memory_space=pltpu.MemorySpace.VMEM)


# ---------------------------------------------------------------------------
# Fused Pallas kernel: 5 LSTM layers + FC head
# ---------------------------------------------------------------------------
def _lstm_cell(z, c, Hp):
    """One LSTM cell update from packed pre-activations z=[i|f|g|o] (lanes)."""
    zs = jax.nn.sigmoid(z)                 # one EUP pass for i, f, o
    zt = jnp.tanh(z)                       # one EUP pass for g
    i_g = zs[:, 0 * Hp:1 * Hp]
    f_g = zs[:, 1 * Hp:2 * Hp]
    g_g = zt[:, 2 * Hp:3 * Hp]
    o_g = zs[:, 3 * Hp:4 * Hp]
    c_new = f_g * c + i_g * g_g
    h_new = o_g * jnp.tanh(c_new)
    return h_new, c_new


def _lstm1_kernel(x_ref, wih_ref, whh_ref, b_ref,
                  w1_ref, b1_ref, w2_ref, b2_ref,
                  out_ref, *, seq_len, batch):
    """x_ref:   [T*B, Hp]        time-major input, zero-padded to Hp lanes
    wih_ref: [L, Hp, 4*Hp]      packed input-hidden weights (gates i,f,g,o)
    whh_ref: [L, Hp, 4*Hp]      packed hidden-hidden weights
    b_ref:   [L, 1, 4*Hp]       packed combined bias (b_ih + b_hh)
    w1_ref:  [Hp, 128]          fc_1 weight (transposed, row-padded)
    b1_ref:  [1, 128]
    w2_ref:  [128, OUT_PAD]     fc weight (transposed, col-padded)
    b2_ref:  [1, OUT_PAD]
    out_ref: [L*B, OUT_PAD]
    """
    T, B, Hp = seq_len, batch, HIDDEN_PAD

    # ---- Layer 0: input fully available -> hoist x-projection + bias -----
    wih0 = wih_ref[0]                                                # [Hp, 4Hp]
    whh0 = whh_ref[0]                                                # [Hp, 4Hp]
    zx0 = jnp.dot(x_ref[...], wih0,
                  preferred_element_type=jnp.float32) + b_ref[0]     # [T*B, 4Hp]

    h = jnp.zeros((B, Hp), jnp.float32)
    c = jnp.zeros((B, Hp), jnp.float32)
    hs_prev = []
    for t in range(T):  # fully unrolled (T fixed, small)
        z = zx0[t * B:(t + 1) * B, :] + jnp.dot(
            h, whh0, preferred_element_type=jnp.float32)             # [B, 4Hp]
        h, c = _lstm_cell(z, c, Hp)
        hs_prev.append(h)
    h_finals = [h]

    # ---- Layers 1..L-1: per-step x-projection -> wavefront dependencies --
    # Layer l step t only depends on (layer l-1, step t) and (layer l, t-1),
    # so the serial critical path is T + (L-1) steps, not T*L.
    for layer in range(1, NUM_LAYERS):
        wih = wih_ref[layer]
        whh = whh_ref[layer]
        bias = jnp.broadcast_to(b_ref[layer], (B, GATE_LANES))       # hoisted

        h = jnp.zeros((B, Hp), jnp.float32)
        c = jnp.zeros((B, Hp), jnp.float32)
        hs_cur = []
        for t in range(T):
            # zx is independent of this layer's recurrence -> off critical path.
            zx = jnp.dot(hs_prev[t], wih,
                         preferred_element_type=jnp.float32) + bias   # [B, 4Hp]
            z = zx + jnp.dot(h, whh, preferred_element_type=jnp.float32)
            h, c = _lstm_cell(z, c, Hp)
            hs_cur.append(h)
        hs_prev = hs_cur
        h_finals.append(h)

    # hn.view(-1, H) is layer-major: row = layer * B + batch
    hn = jnp.concatenate(h_finals, axis=0)                           # [L*B, Hp]

    # FC head: relu(hn) -> fc_1 -> relu -> fc   (lane-dense padded output)
    x1 = jnp.maximum(hn, 0.0)
    z1 = jnp.dot(x1, w1_ref[...], preferred_element_type=jnp.float32) + b1_ref[...]
    z1 = jnp.maximum(z1, 0.0)
    out = jnp.dot(z1, w2_ref[...], preferred_element_type=jnp.float32) + b2_ref[...]
    out_ref[...] = out.astype(out_ref.dtype)


# ---------------------------------------------------------------------------
# Parameter packing (plain JAX, outside the kernel)
# ---------------------------------------------------------------------------
def _pack_gate_weight(w, d_in_pad):
    """w: [4*H, d_in] (torch layout, gates i,f,g,o) -> [d_in_pad, 4*Hp]."""
    H, Hp = HIDDEN_SIZE, HIDDEN_PAD
    d_in = w.shape[1]
    w4 = w.reshape(4, H, d_in)
    w4 = jnp.pad(w4, ((0, 0), (0, Hp - H), (0, d_in_pad - d_in)))
    return jnp.transpose(w4, (2, 0, 1)).reshape(d_in_pad, 4 * Hp)


def _pack_gate_bias(b_ih, b_hh):
    """-> [1, 4*Hp] with zero pad lanes (keeps c/h pad lanes exactly 0)."""
    H, Hp = HIDDEN_SIZE, HIDDEN_PAD
    b = (b_ih + b_hh).reshape(4, H)
    b = jnp.pad(b, ((0, 0), (0, Hp - H)))
    return b.reshape(1, 4 * Hp)


def init_params(key):
    """Deterministic init mirroring torch.nn.LSTM / nn.Linear, then packed."""
    k = 1.0 / jnp.sqrt(jnp.float32(HIDDEN_SIZE))
    keys = jax.random.split(key, NUM_LAYERS * 4 + 4)
    idx = 0
    wih_l, whh_l, b_l = [], [], []
    for layer in range(NUM_LAYERS):
        d_in = INPUT_SIZE if layer == 0 else HIDDEN_SIZE
        w_ih = jax.random.uniform(keys[idx], (4 * HIDDEN_SIZE, d_in),
                                  jnp.float32, -k, k); idx += 1
        w_hh = jax.random.uniform(keys[idx], (4 * HIDDEN_SIZE, HIDDEN_SIZE),
                                  jnp.float32, -k, k); idx += 1
        b_ih = jax.random.uniform(keys[idx], (4 * HIDDEN_SIZE,),
                                  jnp.float32, -k, k); idx += 1
        b_hh = jax.random.uniform(keys[idx], (4 * HIDDEN_SIZE,),
                                  jnp.float32, -k, k); idx += 1
        wih_l.append(_pack_gate_weight(w_ih, HIDDEN_PAD))
        whh_l.append(_pack_gate_weight(w_hh, HIDDEN_PAD))
        b_l.append(_pack_gate_bias(b_ih, b_hh))

    params = {
        "wih": jnp.stack(wih_l),   # [L, 32, 128]
        "whh": jnp.stack(whh_l),   # [L, 32, 128]
        "b": jnp.stack(b_l),       # [L, 1, 128]
    }

    k1 = 1.0 / jnp.sqrt(jnp.float32(HIDDEN_SIZE))
    fc1_w = jax.random.uniform(keys[idx], (FC1_OUT, HIDDEN_SIZE),
                               jnp.float32, -k1, k1); idx += 1
    fc1_b = jax.random.uniform(keys[idx], (FC1_OUT,), jnp.float32, -k1, k1); idx += 1
    k2 = 1.0 / jnp.sqrt(jnp.float32(FC1_OUT))
    fc_w = jax.random.uniform(keys[idx], (NUM_CLASSES, FC1_OUT),
                              jnp.float32, -k2, k2); idx += 1
    fc_b = jax.random.uniform(keys[idx], (NUM_CLASSES,), jnp.float32, -k2, k2); idx += 1

    params["fc1_w"] = jnp.pad(fc1_w.T, ((0, HIDDEN_PAD - HIDDEN_SIZE), (0, 0)))  # [32, 128]
    params["fc1_b"] = fc1_b.reshape(1, FC1_OUT)                                   # [1, 128]
    params["fc_w"] = jnp.pad(fc_w.T, ((0, 0), (0, OUT_PAD - NUM_CLASSES)))        # [128, 128]
    params["fc_b"] = jnp.pad(fc_b, (0, OUT_PAD - NUM_CLASSES)).reshape(1, OUT_PAD)
    return params


# ---------------------------------------------------------------------------
# Forward wrapper (single pallas_call)
# ---------------------------------------------------------------------------
def lstm1_forward(x, params):
    """x: [B, T, INPUT_SIZE] (batch_first). Returns [NUM_LAYERS*B, NUM_CLASSES]."""
    B, T, D = x.shape
    x_tm = jnp.transpose(x, (1, 0, 2)).reshape(T * B, D)        # time-major flat
    x_pad = jnp.pad(x_tm, ((0, 0), (0, HIDDEN_PAD - D)))         # [T*B, 32]

    out_pad = pl.pallas_call(
        partial(_lstm1_kernel, seq_len=T, batch=B),
        out_shape=jax.ShapeDtypeStruct((NUM_LAYERS * B, OUT_PAD), jnp.float32),
        in_specs=[_VMEM] * 8,
        out_specs=_VMEM,
    )(x_pad, params["wih"], params["whh"], params["b"],
      params["fc1_w"], params["fc1_b"], params["fc_w"], params["fc_b"])

    return out_pad[:, :NUM_CLASSES]


if __name__ == "__main__":
    key = jax.random.PRNGKey(0)
    k_x, k_p = jax.random.split(key)
    x = jax.random.normal(k_x, (BATCH, SEQ_LEN, INPUT_SIZE), jnp.float32)
    params = init_params(k_p)

    out = jax.jit(lstm1_forward)(x, params)
    jax.block_until_ready(out)
    assert out.shape == (NUM_LAYERS * BATCH, NUM_CLASSES), out.shape
    assert out.dtype == jnp.float32
    assert bool(jnp.all(jnp.isfinite(out)))
    print("KERNEL_OK")
</pallas_src>

<mosaic_0001>
module attributes {stable_mosaic.version = 11 : i64} {
  func.func @_lstm1_kernel(%arg0: memref<16x32xf32, #tpu.memory_space<vmem>>, %arg1: memref<5x32x128xf32, #tpu.memory_space<vmem>>, %arg2: memref<5x32x128xf32, #tpu.memory_space<vmem>>, %arg3: memref<5x1x128xf32, #tpu.memory_space<vmem>>, %arg4: memref<32x128xf32, #tpu.memory_space<vmem>>, %arg5: memref<1x128xf32, #tpu.memory_space<vmem>>, %arg6: memref<128x128xf32, #tpu.memory_space<vmem>>, %arg7: memref<1x128xf32, #tpu.memory_space<vmem>>, %arg8: memref<10x128xf32, #tpu.memory_space<vmem>>) attributes {dimension_semantics = [], scalar_prefetch = 0 : i64, scratch_operands = 0 : i64, tpu.core_type = #tpu.core_type<tc>} {
    %c0 = arith.constant 0 : index
    %c0_0 = arith.constant 0 : index
    %c0_1 = arith.constant 0 : index
    %0 = vector.load %arg1[%c0, %c0_0, %c0_1] : memref<5x32x128xf32, #tpu.memory_space<vmem>>, vector<1x32x128xf32>
    %1 = vector.shape_cast %0 : vector<1x32x128xf32> to vector<32x128xf32>
    %c0_2 = arith.constant 0 : index
    %c0_3 = arith.constant 0 : index
    %c0_4 = arith.constant 0 : index
    %2 = vector.load %arg2[%c0_2, %c0_3, %c0_4] : memref<5x32x128xf32, #tpu.memory_space<vmem>>, vector<1x32x128xf32>
    %3 = vector.shape_cast %2 : vector<1x32x128xf32> to vector<32x128xf32>
    %c0_5 = arith.constant 0 : index
    %c0_6 = arith.constant 0 : index
    %4 = vector.load %arg0[%c0_5, %c0_6] : memref<16x32xf32, #tpu.memory_space<vmem>>, vector<16x32xf32>
    %cst = arith.constant dense<0.000000e+00> : vector<16x128xf32>
    %5 = tpu.matmul %4, %1, %cst {dimension_numbers = #tpu.dot_dimension_numbers<[1], [0], [0], [1], [0, 0, 1, 1], [], []>} : vector<16x32xf32>, vector<32x128xf32>, vector<16x128xf32> -> vector<16x128xf32>
    %c0_7 = arith.constant 0 : index
    %c0_8 = arith.constant 0 : index
    %c0_9 = arith.constant 0 : index
    %6 = vector.load %arg3[%c0_7, %c0_8, %c0_9] : memref<5x1x128xf32, #tpu.memory_space<vmem>>, vector<1x1x128xf32>
    %7 = vector.shape_cast %6 : vector<1x1x128xf32> to vector<1x128xf32>
    %8 = vector.broadcast %7 : vector<1x128xf32> to vector<16x128xf32>
    %9 = arith.addf %5, %8 : vector<16x128xf32>
    %cst_10 = arith.constant 0.000000e+00 : f32
    %10 = vector.broadcast %cst_10 : f32 to vector<2x32xf32>
    %cst_11 = arith.constant 0.000000e+00 : f32
    %11 = vector.broadcast %cst_11 : f32 to vector<2x32xf32>
    %12 = vector.extract_strided_slice %9 {offsets = [0, 0], sizes = [2, 128], strides = [1, 1]} : vector<16x128xf32> to vector<2x128xf32>
    %cst_12 = arith.constant dense<0.000000e+00> : vector<2x128xf32>
    %13 = tpu.matmul %10, %3, %cst_12 {dimension_numbers = #tpu.dot_dimension_numbers<[1], [0], [0], [1], [0, 0, 1, 1], [], []>} : vector<2x32xf32>, vector<32x128xf32>, vector<2x128xf32> -> vector<2x128xf32>
    %14 = arith.addf %12, %13 : vector<2x128xf32>
    %15 = arith.negf %14 : vector<2x128xf32>
    %16 = math.exp %15 : vector<2x128xf32>
    %cst_13 = arith.constant 1.000000e+00 : f32
    %17 = vector.broadcast %cst_13 : f32 to vector<2x128xf32>
    %18 = arith.addf %17, %16 : vector<2x128xf32>
    %19 = arith.divf %17, %18 : vector<2x128xf32>
    %20 = math.tanh %14 : vector<2x128xf32>
    %21 = vector.extract_strided_slice %19 {offsets = [0, 0], sizes = [2, 32], strides = [1, 1]} : vector<2x128xf32> to vector<2x32xf32>
    %22 = vector.extract_strided_slice %19 {offsets = [0, 32], sizes = [2, 32], strides = [1, 1]} : vector<2x128xf32> to vector<2x32xf32>
    %23 = vector.extract_strided_slice %20 {offsets = [0, 64], sizes = [2, 32], strides = [1, 1]} : vector<2x128xf32> to vector<2x32xf32>
    %24 = vector.extract_strided_slice %19 {offsets = [0, 96], sizes = [2, 32], strides = [1, 1]} : vector<2x128xf32> to vector<2x32xf32>
    %25 = arith.mulf %22, %11 : vector<2x32xf32>
    %26 = arith.mulf %21, %23 : vector<2x32xf32>
    %27 = arith.addf %25, %26 : vector<2x32xf32>
    %28 = math.tanh %27 : vector<2x32xf32>
    %29 = arith.mulf %24, %28 : vector<2x32xf32>
    %30 = vector.extract_strided_slice %9 {offsets = [2, 0], sizes = [2, 128], strides = [1, 1]} : vector<16x128xf32> to vector<2x128xf32>
    %cst_14 = arith.constant dense<0.000000e+00> : vector<2x128xf32>
    %31 = tpu.matmul %29, %3, %cst_14 {dimension_numbers = #tpu.dot_dimension_numbers<[1], [0], [0], [1], [0, 0, 1, 1], [], []>} : vector<2x32xf32>, vector<32x128xf32>, vector<2x128xf32> -> vector<2x128xf32>
    %32 = arith.addf %30, %31 : vector<2x128xf32>
    %33 = arith.negf %32 : vector<2x128xf32>
    %34 = math.exp %33 : vector<2x128xf32>
    %cst_15 = arith.constant 1.000000e+00 : f32
    %35 = vector.broadcast %cst_15 : f32 to vector<2x128xf32>
    %36 = arith.addf %35, %34 : vector<2x128xf32>
    %37 = arith.divf %35, %36 : vector<2x128xf32>
    %38 = math.tanh %32 : vector<2x128xf32>
    %39 = vector.extract_strided_slice %37 {offsets = [0, 0], sizes = [2, 32], strides = [1, 1]} : vector<2x128xf32> to vector<2x32xf32>
    %40 = vector.extract_strided_slice %37 {offsets = [0, 32], sizes = [2, 32], strides = [1, 1]} : vector<2x128xf32> to vector<2x32xf32>
    %41 = vector.extract_strided_slice %38 {offsets = [0, 64], sizes = [2, 32], strides = [1, 1]} : vector<2x128xf32> to vector<2x32xf32>
    %42 = vector.extract_strided_slice %37 {offsets = [0, 96], sizes = [2, 32], strides = [1, 1]} : vector<2x128xf32> to vector<2x32xf32>
    %43 = arith.mulf %40, %27 : vector<2x32xf32>
    %44 = arith.mulf %39, %41 : vector<2x32xf32>
    %45 = arith.addf %43, %44 : vector<2x32xf32>
    %46 = math.tanh %45 : vector<2x32xf32>
    %47 = arith.mulf %42, %46 : vector<2x32xf32>
    %48 = vector.extract_strided_slice %9 {offsets = [4, 0], sizes = [2, 128], strides = [1, 1]} : vector<16x128xf32> to vector<2x128xf32>
    %cst_16 = arith.constant dense<0.000000e+00> : vector<2x128xf32>
    %49 = tpu.matmul %47, %3, %cst_16 {dimension_numbers = #tpu.dot_dimension_numbers<[1], [0], [0], [1], [0, 0, 1, 1], [], []>} : vector<2x32xf32>, vector<32x128xf32>, vector<2x128xf32> -> vector<2x128xf32>
    %50 = arith.addf %48, %49 : vector<2x128xf32>
    %51 = arith.negf %50 : vector<2x128xf32>
    %52 = math.exp %51 : vector<2x128xf32>
    %cst_17 = arith.constant 1.000000e+00 : f32
    %53 = vector.broadcast %cst_17 : f32 to vector<2x128xf32>
    %54 = arith.addf %53, %52 : vector<2x128xf32>
    %55 = arith.divf %53, %54 : vector<2x128xf32>
    %56 = math.tanh %50 : vector<2x128xf32>
    %57 = vector.extract_strided_slice %55 {offsets = [0, 0], sizes = [2, 32], strides = [1, 1]} : vector<2x128xf32> to vector<2x32xf32>
    %58 = vector.extract_strided_slice %55 {offsets = [0, 32], sizes = [2, 32], strides = [1, 1]} : vector<2x128xf32> to vector<2x32xf32>
    %59 = vector.extract_strided_slice %56 {offsets = [0, 64], sizes = [2, 32], strides = [1, 1]} : vector<2x128xf32> to vector<2x32xf32>
    %60 = vector.extract_strided_slice %55 {offsets = [0, 96], sizes = [2, 32], strides = [1, 1]} : vector<2x128xf32> to vector<2x32xf32>
    %61 = arith.mulf %58, %45 : vector<2x32xf32>
    %62 = arith.mulf %57, %59 : vector<2x32xf32>
    %63 = arith.addf %61, %62 : vector<2x32xf32>
    %64 = math.tanh %63 : vector<2x32xf32>
    %65 = arith.mulf %60, %64 : vector<2x32xf32>
    %66 = vector.extract_strided_slice %9 {offsets = [6, 0], sizes = [2, 128], strides = [1, 1]} : vector<16x128xf32> to vector<2x128xf32>
    %cst_18 = arith.constant dense<0.000000e+00> : vector<2x128xf32>
    %67 = tpu.matmul %65, %3, %cst_18 {dimension_numbers = #tpu.dot_dimension_numbers<[1], [0], [0], [1], [0, 0, 1, 1], [], []>} : vector<2x32xf32>, vector<32x128xf32>, vector<2x128xf32> -> vector<2x128xf32>
    %68 = arith.addf %66, %67 : vector<2x128xf32>
    %69 = arith.negf %68 : vector<2x128xf32>
    %70 = math.exp %69 : vector<2x128xf32>
    %cst_19 = arith.constant 1.000000e+00 : f32
    %71 = vector.broadcast %cst_19 : f32 to vector<2x128xf32>
    %72 = arith.addf %71, %70 : vector<2x128xf32>
    %73 = arith.divf %71, %72 : vector<2x128xf32>
    %74 = math.tanh %68 : vector<2x128xf32>
    %75 = vector.extract_strided_slice %73 {offsets = [0, 0], sizes = [2, 32], strides = [1, 1]} : vector<2x128xf32> to vector<2x32xf32>
    %76 = vector.extract_strided_slice %73 {offsets = [0, 32], sizes = [2, 32], strides = [1, 1]} : vector<2x128xf32> to vector<2x32xf32>
    %77 = vector.extract_strided_slice %74 {offsets = [0, 64], sizes = [2, 32], strides = [1, 1]} : vector<2x128xf32> to vector<2x32xf32>
    %78 = vector.extract_strided_slice %73 {offsets = [0, 96], sizes = [2, 32], strides = [1, 1]} : vector<2x128xf32> to vector<2x32xf32>
    %79 = arith.mulf %76, %63 : vector<2x32xf32>
    %80 = arith.mulf %75, %77 : vector<2x32xf32>
    %81 = arith.addf %79, %80 : vector<2x32xf32>
    %82 = math.tanh %81 : vector<2x32xf32>
    %83 = arith.mulf %78, %82 : vector<2x32xf32>
    %84 = vector.extract_strided_slice %9 {offsets = [8, 0], sizes = [2, 128], strides = [1, 1]} : vector<16x128xf32> to vector<2x128xf32>
    %cst_20 = arith.constant dense<0.000000e+00> : vector<2x128xf32>
    %85 = tpu.matmul %83, %3, %cst_20 {dimension_numbers = #tpu.dot_dimension_numbers<[1], [0], [0], [1], [0, 0, 1, 1], [], []>} : vector<2x32xf32>, vector<32x128xf32>, vector<2x128xf32> -> vector<2x128xf32>
    %86 = arith.addf %84, %85 : vector<2x128xf32>
    %87 = arith.negf %86 : vector<2x128xf32>
    %88 = math.exp %87 : vector<2x128xf32>
    %cst_21 = arith.constant 1.000000e+00 : f32
    %89 = vector.broadcast %cst_21 : f32 to vector<2x128xf32>
    %90 = arith.addf %89, %88 : vector<2x128xf32>
    %91 = arith.divf %89, %90 : vector<2x128xf32>
    %92 = math.tanh %86 : vector<2x128xf32>
    %93 = vector.extract_strided_slice %91 {offsets = [0, 0], sizes = [2, 32], strides = [1, 1]} : vector<2x128xf32> to vector<2x32xf32>
    %94 = vector.extract_strided_slice %91 {offsets = [0, 32], sizes = [2, 32], strides = [1, 1]} : vector<2x128xf32> to vector<2x32xf32>
    %95 = vector.extract_strided_slice %92 {offsets = [0, 64], sizes = [2, 32], strides = [1, 1]} : vector<2x128xf32> to vector<2x32xf32>
    %96 = vector.extract_strided_slice %91 {offsets = [0, 96], sizes = [2, 32], strides = [1, 1]} : vector<2x128xf32> to vector<2x32xf32>
    %97 = arith.mulf %94, %81 : vector<2x32xf32>
    %98 = arith.mulf %93, %95 : vector<2x32xf32>
    %99 = arith.addf %97, %98 : vector<2x32xf32>
    %100 = math.tanh %99 : vector<2x32xf32>
    %101 = arith.mulf %96, %100 : vector<2x32xf32>
    %102 = vector.extract_strided_slice %9 {offsets = [10, 0], sizes = [2, 128], strides = [1, 1]} : vector<16x128xf32> to vector<2x128xf32>
    %cst_22 = arith.constant dense<0.000000e+00> : vector<2x128xf32>
    %103 = tpu.matmul %101, %3, %cst_22 {dimension_numbers = #tpu.dot_dimension_numbers<[1], [0], [0], [1], [0, 0, 1, 1], [], []>} : vector<2x32xf32>, vector<32x128xf32>, vector<2x128xf32> -> vector<2x128xf32>
    %104 = arith.addf %102, %103 : vector<2x128xf32>
    %105 = arith.negf %104 : vector<2x128xf32>
    %106 = math.exp %105 : vector<2x128xf32>
    %cst_23 = arith.constant 1.000000e+00 : f32
    %107 = vector.broadcast %cst_23 : f32 to vector<2x128xf32>
    %108 = arith.addf %107, %106 : vector<2x128xf32>
    %109 = arith.divf %107, %108 : vector<2x128xf32>
    %110 = math.tanh %104 : vector<2x128xf32>
    %111 = vector.extract_strided_slice %109 {offsets = [0, 0], sizes = [2, 32], strides = [1, 1]} : vector<2x128xf32> to vector<2x32xf32>
    %112 = vector.extract_strided_slice %109 {offsets = [0, 32], sizes = [2, 32], strides = [1, 1]} : vector<2x128xf32> to vector<2x32xf32>
    %113 = vector.extract_strided_slice %110 {offsets = [0, 64], sizes = [2, 32], strides = [1, 1]} : vector<2x128xf32> to vector<2x32xf32>
    %114 = vector.extract_strided_slice %109 {offsets = [0, 96], sizes = [2, 32], strides = [1, 1]} : vector<2x128xf32> to vector<2x32xf32>
    %115 = arith.mulf %112, %99 : vector<2x32xf32>
    %116 = arith.mulf %111, %113 : vector<2x32xf32>
    %117 = arith.addf %115, %116 : vector<2x32xf32>
    %118 = math.tanh %117 : vector<2x32xf32>
    %119 = arith.mulf %114, %118 : vector<2x32xf32>
    %120 = vector.extract_strided_slice %9 {offsets = [12, 0], sizes = [2, 128], strides = [1, 1]} : vector<16x128xf32> to vector<2x128xf32>
    %cst_24 = arith.constant dense<0.000000e+00> : vector<2x128xf32>
    %121 = tpu.matmul %119, %3, %cst_24 {dimension_numbers = #tpu.dot_dimension_numbers<[1], [0], [0], [1], [0, 0, 1, 1], [], []>} : vector<2x32xf32>, vector<32x128xf32>, vector<2x128xf32> -> vector<2x128xf32>
    %122 = arith.addf %120, %121 : vector<2x128xf32>
    %123 = arith.negf %122 : vector<2x128xf32>
    %124 = math.exp %123 : vector<2x128xf32>
    %cst_25 = arith.constant 1.000000e+00 : f32
    %125 = vector.broadcast %cst_25 : f32 to vector<2x128xf32>
    %126 = arith.addf %125, %124 : vector<2x128xf32>
    %127 = arith.divf %125, %126 : vector<2x128xf32>
    %128 = math.tanh %122 : vector<2x128xf32>
    %129 = vector.extract_strided_slice %127 {offsets = [0, 0], sizes = [2, 32], strides = [1, 1]} : vector<2x128xf32> to vector<2x32xf32>
    %130 = vector.extract_strided_slice %127 {offsets = [0, 32], sizes = [2, 32], strides = [1, 1]} : vector<2x128xf32> to vector<2x32xf32>
    %131 = vector.extract_strided_slice %128 {offsets = [0, 64], sizes = [2, 32], strides = [1, 1]} : vector<2x128xf32> to vector<2x32xf32>
    %132 = vector.extract_strided_slice %127 {offsets = [0, 96], sizes = [2, 32], strides = [1, 1]} : vector<2x128xf32> to vector<2x32xf32>
    %133 = arith.mulf %130, %117 : vector<2x32xf32>
    %134 = arith.mulf %129, %131 : vector<2x32xf32>
    %135 = arith.addf %133, %134 : vector<2x32xf32>
    %136 = math.tanh %135 : vector<2x32xf32>
    %137 = arith.mulf %132, %136 : vector<2x32xf32>
    %138 = vector.extract_strided_slice %9 {offsets = [14, 0], sizes = [2, 128], strides = [1, 1]} : vector<16x128xf32> to vector<2x128xf32>
    %cst_26 = arith.constant dense<0.000000e+00> : vector<2x128xf32>
    %139 = tpu.matmul %137, %3, %cst_26 {dimension_numbers = #tpu.dot_dimension_numbers<[1], [0], [0], [1], [0, 0, 1, 1], [], []>} : vector<2x32xf32>, vector<32x128xf32>, vector<2x128xf32> -> vector<2x128xf32>
    %140 = arith.addf %138, %139 : vector<2x128xf32>
    %141 = arith.negf %140 : vector<2x128xf32>
    %142 = math.exp %141 : vector<2x128xf32>
    %cst_27 = arith.constant 1.000000e+00 : f32
    %143 = vector.broadcast %cst_27 : f32 to vector<2x128xf32>
    %144 = arith.addf %143, %142 : vector<2x128xf32>
    %145 = arith.divf %143, %144 : vector<2x128xf32>
    %146 = math.tanh %140 : vector<2x128xf32>
    %147 = vector.extract_strided_slice %145 {offsets = [0, 0], sizes = [2, 32], strides = [1, 1]} : vector<2x128xf32> to vector<2x32xf32>
    %148 = vector.extract_strided_slice %145 {offsets = [0, 32], sizes = [2, 32], strides = [1, 1]} : vector<2x128xf32> to vector<2x32xf32>
    %149 = vector.extract_strided_slice %146 {offsets = [0, 64], sizes = [2, 32], strides = [1, 1]} : vector<2x128xf32> to vector<2x32xf32>
    %150 = vector.extract_strided_slice %145 {offsets = [0, 96], sizes = [2, 32], strides = [1, 1]} : vector<2x128xf32> to vector<2x32xf32>
    %151 = arith.mulf %148, %135 : vector<2x32xf32>
    %152 = arith.mulf %147, %149 : vector<2x32xf32>
    %153 = arith.addf %151, %152 : vector<2x32xf32>
    %154 = math.tanh %153 : vector<2x32xf32>
    %155 = arith.mulf %150, %154 : vector<2x32xf32>
    %c1 = arith.constant 1 : index
    %c0_28 = arith.constant 0 : index
    %c0_29 = arith.constant 0 : index
    %156 = vector.load %arg1[%c1, %c0_28, %c0_29] : memref<5x32x128xf32, #tpu.memory_space<vmem>>, vector<1x32x128xf32>
    %157 = vector.shape_cast %156 : vector<1x32x128xf32> to vector<32x128xf32>
    %c1_30 = arith.constant 1 : index
    %c0_31 = arith.constant 0 : index
    %c0_32 = arith.constant 0 : index
    %158 = vector.load %arg2[%c1_30, %c0_31, %c0_32] : memref<5x32x128xf32, #tpu.memory_space<vmem>>, vector<1x32x128xf32>
    %159 = vector.shape_cast %158 : vector<1x32x128xf32> to vector<32x128xf32>
    %c1_33 = arith.constant 1 : index
    %c0_34 = arith.constant 0 : index
    %c0_35 = arith.constant 0 : index
    %160 = vector.load %arg3[%c1_33, %c0_34, %c0_35] : memref<5x1x128xf32, #tpu.memory_space<vmem>>, vector<1x1x128xf32>
    %161 = vector.shape_cast %160 : vector<1x1x128xf32> to vector<1x128xf32>
    %162 = vector.shape_cast %161 : vector<1x128xf32> to vector<1x128xf32>
    %163 = vector.broadcast %162 : vector<1x128xf32> to vector<2x128xf32>
    %cst_36 = arith.constant 0.000000e+00 : f32
    %164 = vector.broadcast %cst_36 : f32 to vector<2x32xf32>
    %cst_37 = arith.constant 0.000000e+00 : f32
    %165 = vector.broadcast %cst_37 : f32 to vector<2x32xf32>
    %cst_38 = arith.constant dense<0.000000e+00> : vector<2x128xf32>
    %166 = tpu.matmul %29, %157, %cst_38 {dimension_numbers = #tpu.dot_dimension_numbers<[1], [0], [0], [1], [0, 0, 1, 1], [], []>} : vector<2x32xf32>, vector<32x128xf32>, vector<2x128xf32> -> vector<2x128xf32>
    %167 = arith.addf %166, %163 : vector<2x128xf32>
    %cst_39 = arith.constant dense<0.000000e+00> : vector<2x128xf32>
    %168 = tpu.matmul %164, %159, %cst_39 {dimension_numbers = #tpu.dot_dimension_numbers<[1], [0], [0], [1], [0, 0, 1, 1], [], []>} : vector<2x32xf32>, vector<32x128xf32>, vector<2x128xf32> -> vector<2x128xf32>
    %169 = arith.addf %167, %168 : vector<2x128xf32>
    %170 = arith.negf %169 : vector<2x128xf32>
    %171 = math.exp %170 : vector<2x128xf32>
    %cst_40 = arith.constant 1.000000e+00 : f32
    %172 = vector.broadcast %cst_40 : f32 to vector<2x128xf32>
    %173 = arith.addf %172, %171 : vector<2x128xf32>
    %174 = arith.divf %172, %173 : vector<2x128xf32>
    %175 = math.tanh %169 : vector<2x128xf32>
    %176 = vector.extract_strided_slice %174 {offsets = [0, 0], sizes = [2, 32], strides = [1, 1]} : vector<2x128xf32> to vector<2x32xf32>
    %177 = vector.extract_strided_slice %174 {offsets = [0, 32], sizes = [2, 32], strides = [1, 1]} : vector<2x128xf32> to vector<2x32xf32>
    %178 = vector.extract_strided_slice %175 {offsets = [0, 64], sizes = [2, 32], strides = [1, 1]} : vector<2x128xf32> to vector<2x32xf32>
    %179 = vector.extract_strided_slice %174 {offsets = [0, 96], sizes = [2, 32], strides = [1, 1]} : vector<2x128xf32> to vector<2x32xf32>
    %180 = arith.mulf %177, %165 : vector<2x32xf32>
    %181 = arith.mulf %176, %178 : vector<2x32xf32>
    %182 = arith.addf %180, %181 : vector<2x32xf32>
    %183 = math.tanh %182 : vector<2x32xf32>
    %184 = arith.mulf %179, %183 : vector<2x32xf32>
    %cst_41 = arith.constant dense<0.000000e+00> : vector<2x128xf32>
    %185 = tpu.matmul %47, %157, %cst_41 {dimension_numbers = #tpu.dot_dimension_numbers<[1], [0], [0], [1], [0, 0, 1, 1], [], []>} : vector<2x32xf32>, vector<32x128xf32>, vector<2x128xf32> -> vector<2x128xf32>
    %186 = arith.addf %185, %163 : vector<2x128xf32>
    %cst_42 = arith.constant dense<0.000000e+00> : vector<2x128xf32>
    %187 = tpu.matmul %184, %159, %cst_42 {dimension_numbers = #tpu.dot_dimension_numbers<[1], [0], [0], [1], [0, 0, 1, 1], [], []>} : vector<2x32xf32>, vector<32x128xf32>, vector<2x128xf32> -> vector<2x128xf32>
    %188 = arith.addf %186, %187 : vector<2x128xf32>
    %189 = arith.negf %188 : vector<2x128xf32>
    %190 = math.exp %189 : vector<2x128xf32>
    %cst_43 = arith.constant 1.000000e+00 : f32
    %191 = vector.broadcast %cst_43 : f32 to vector<2x128xf32>
    %192 = arith.addf %191, %190 : vector<2x128xf32>
    %193 = arith.divf %191, %192 : vector<2x128xf32>
    %194 = math.tanh %188 : vector<2x128xf32>
    %195 = vector.extract_strided_slice %193 {offsets = [0, 0], sizes = [2, 32], strides = [1, 1]} : vector<2x128xf32> to vector<2x32xf32>
    %196 = vector.extract_strided_slice %193 {offsets = [0, 32], sizes = [2, 32], strides = [1, 1]} : vector<2x128xf32> to vector<2x32xf32>
    %197 = vector.extract_strided_slice %194 {offsets = [0, 64], sizes = [2, 32], strides = [1, 1]} : vector<2x128xf32> to vector<2x32xf32>
    %198 = vector.extract_strided_slice %193 {offsets = [0, 96], sizes = [2, 32], strides = [1, 1]} : vector<2x128xf32> to vector<2x32xf32>
    %199 = arith.mulf %196, %182 : vector<2x32xf32>
    %200 = arith.mulf %195, %197 : vector<2x32xf32>
    %201 = arith.addf %199, %200 : vector<2x32xf32>
    %202 = math.tanh %201 : vector<2x32xf32>
    %203 = arith.mulf %198, %202 : vector<2x32xf32>
    %cst_44 = arith.constant dense<0.000000e+00> : vector<2x128xf32>
    %204 = tpu.matmul %65, %157, %cst_44 {dimension_numbers = #tpu.dot_dimension_numbers<[1], [0], [0], [1], [0, 0, 1, 1], [], []>} : vector<2x32xf32>, vector<32x128xf32>, vector<2x128xf32> -> vector<2x128xf32>
    %205 = arith.addf %204, %163 : vector<2x128xf32>
    %cst_45 = arith.constant dense<0.000000e+00> : vector<2x128xf32>
    %206 = tpu.matmul %203, %159, %cst_45 {dimension_numbers = #tpu.dot_dimension_numbers<[1], [0], [0], [1], [0, 0, 1, 1], [], []>} : vector<2x32xf32>, vector<32x128xf32>, vector<2x128xf32> -> vector<2x128xf32>
    %207 = arith.addf %205, %206 : vector<2x128xf32>
    %208 = arith.negf %207 : vector<2x128xf32>
    %209 = math.exp %208 : vector<2x128xf32>
    %cst_46 = arith.constant 1.000000e+00 : f32
    %210 = vector.broadcast %cst_46 : f32 to vector<2x128xf32>
    %211 = arith.addf %210, %209 : vector<2x128xf32>
    %212 = arith.divf %210, %211 : vector<2x128xf32>
    %213 = math.tanh %207 : vector<2x128xf32>
    %214 = vector.extract_strided_slice %212 {offsets = [0, 0], sizes = [2, 32], strides = [1, 1]} : vector<2x128xf32> to vector<2x32xf32>
    %215 = vector.extract_strided_slice %212 {offsets = [0, 32], sizes = [2, 32], strides = [1, 1]} : vector<2x128xf32> to vector<2x32xf32>
    %216 = vector.extract_strided_slice %213 {offsets = [0, 64], sizes = [2, 32], strides = [1, 1]} : vector<2x128xf32> to vector<2x32xf32>
    %217 = vector.extract_strided_slice %212 {offsets = [0, 96], sizes = [2, 32], strides = [1, 1]} : vector<2x128xf32> to vector<2x32xf32>
    %218 = arith.mulf %215, %201 : vector<2x32xf32>
    %219 = arith.mulf %214, %216 : vector<2x32xf32>
    %220 = arith.addf %218, %219 : vector<2x32xf32>
    %221 = math.tanh %220 : vector<2x32xf32>
    %222 = arith.mulf %217, %221 : vector<2x32xf32>
    %cst_47 = arith.constant dense<0.000000e+00> : vector<2x128xf32>
    %223 = tpu.matmul %83, %157, %cst_47 {dimension_numbers = #tpu.dot_dimension_numbers<[1], [0], [0], [1], [0, 0, 1, 1], [], []>} : vector<2x32xf32>, vector<32x128xf32>, vector<2x128xf32> -> vector<2x128xf32>
    %224 = arith.addf %223, %163 : vector<2x128xf32>
    %cst_48 = arith.constant dense<0.000000e+00> : vector<2x128xf32>
    %225 = tpu.matmul %222, %159, %cst_48 {dimension_numbers = #tpu.dot_dimension_numbers<[1], [0], [0], [1], [0, 0, 1, 1], [], []>} : vector<2x32xf32>, vector<32x128xf32>, vector<2x128xf32> -> vector<2x128xf32>
    %226 = arith.addf %224, %225 : vector<2x128xf32>
    %227 = arith.negf %226 : vector<2x128xf32>
    %228 = math.exp %227 : vector<2x128xf32>
    %cst_49 = arith.constant 1.000000e+00 : f32
    %229 = vector.broadcast %cst_49 : f32 to vector<2x128xf32>
    %230 = arith.addf %229, %228 : vector<2x128xf32>
    %231 = arith.divf %229, %230 : vector<2x128xf32>
    %232 = math.tanh %226 : vector<2x128xf32>
    %233 = vector.extract_strided_slice %231 {offsets = [0, 0], sizes = [2, 32], strides = [1, 1]} : vector<2x128xf32> to vector<2x32xf32>
    %234 = vector.extract_strided_slice %231 {offsets = [0, 32], sizes = [2, 32], strides = [1, 1]} : vector<2x128xf32> to vector<2x32xf32>
    %235 = vector.extract_strided_slice %232 {offsets = [0, 64], sizes = [2, 32], strides = [1, 1]} : vector<2x128xf32> to vector<2x32xf32>
    %236 = vector.extract_strided_slice %231 {offsets = [0, 96], sizes = [2, 32], strides = [1, 1]} : vector<2x128xf32> to vector<2x32xf32>
    %237 = arith.mulf %234, %220 : vector<2x32xf32>
    %238 = arith.mulf %233, %235 : vector<2x32xf32>
    %239 = arith.addf %237, %238 : vector<2x32xf32>
    %240 = math.tanh %239 : vector<2x32xf32>
    %241 = arith.mulf %236, %240 : vector<2x32xf32>
    %cst_50 = arith.constant dense<0.000000e+00> : vector<2x128xf32>
    %242 = tpu.matmul %101, %157, %cst_50 {dimension_numbers = #tpu.dot_dimension_numbers<[1], [0], [0], [1], [0, 0, 1, 1], [], []>} : vector<2x32xf32>, vector<32x128xf32>, vector<2x128xf32> -> vector<2x128xf32>
    %243 = arith.addf %242, %163 : vector<2x128xf32>
    %cst_51 = arith.constant dense<0.000000e+00> : vector<2x128xf32>
    %244 = tpu.matmul %241, %159, %cst_51 {dimension_numbers = #tpu.dot_dimension_numbers<[1], [0], [0], [1], [0, 0, 1, 1], [], []>} : vector<2x32xf32>, vector<32x128xf32>, vector<2x128xf32> -> vector<2x128xf32>
    %245 = arith.addf %243, %244 : vector<2x128xf32>
    %246 = arith.negf %245 : vector<2x128xf32>
    %247 = math.exp %246 : vector<2x128xf32>
    %cst_52 = arith.constant 1.000000e+00 : f32
    %248 = vector.broadcast %cst_52 : f32 to vector<2x128xf32>
    %249 = arith.addf %248, %247 : vector<2x128xf32>
    %250 = arith.divf %248, %249 : vector<2x128xf32>
    %251 = math.tanh %245 : vector<2x128xf32>
    %252 = vector.extract_strided_slice %250 {offsets = [0, 0], sizes = [2, 32], strides = [1, 1]} : vector<2x128xf32> to vector<2x32xf32>
    %253 = vector.extract_strided_slice %250 {offsets = [0, 32], sizes = [2, 32], strides = [1, 1]} : vector<2x128xf32> to vector<2x32xf32>
    %254 = vector.extract_strided_slice %251 {offsets = [0, 64], sizes = [2, 32], strides = [1, 1]} : vector<2x128xf32> to vector<2x32xf32>
    %255 = vector.extract_strided_slice %250 {offsets = [0, 96], sizes = [2, 32], strides = [1, 1]} : vector<2x128xf32> to vector<2x32xf32>
    %256 = arith.mulf %253, %239 : vector<2x32xf32>
    %257 = arith.mulf %252, %254 : vector<2x32xf32>
    %258 = arith.addf %256, %257 : vector<2x32xf32>
    %259 = math.tanh %258 : vector<2x32xf32>
    %260 = arith.mulf %255, %259 : vector<2x32xf32>
    %cst_53 = arith.constant dense<0.000000e+00> : vector<2x128xf32>
    %261 = tpu.matmul %119, %157, %cst_53 {dimension_numbers = #tpu.dot_dimension_numbers<[1], [0], [0], [1], [0, 0, 1, 1], [], []>} : vector<2x32xf32>, vector<32x128xf32>, vector<2x128xf32> -> vector<2x128xf32>
    %262 = arith.addf %261, %163 : vector<2x128xf32>
    %cst_54 = arith.constant dense<0.000000e+00> : vector<2x128xf32>
    %263 = tpu.matmul %260, %159, %cst_54 {dimension_numbers = #tpu.dot_dimension_numbers<[1], [0], [0], [1], [0, 0, 1, 1], [], []>} : vector<2x32xf32>, vector<32x128xf32>, vector<2x128xf32> -> vector<2x128xf32>
    %264 = arith.addf %262, %263 : vector<2x128xf32>
    %265 = arith.negf %264 : vector<2x128xf32>
    %266 = math.exp %265 : vector<2x128xf32>
    %cst_55 = arith.constant 1.000000e+00 : f32
    %267 = vector.broadcast %cst_55 : f32 to vector<2x128xf32>
    %268 = arith.addf %267, %266 : vector<2x128xf32>
    %269 = arith.divf %267, %268 : vector<2x128xf32>
    %270 = math.tanh %264 : vector<2x128xf32>
    %271 = vector.extract_strided_slice %269 {offsets = [0, 0], sizes = [2, 32], strides = [1, 1]} : vector<2x128xf32> to vector<2x32xf32>
    %272 = vector.extract_strided_slice %269 {offsets = [0, 32], sizes = [2, 32], strides = [1, 1]} : vector<2x128xf32> to vector<2x32xf32>
    %273 = vector.extract_strided_slice %270 {offsets = [0, 64], sizes = [2, 32], strides = [1, 1]} : vector<2x128xf32> to vector<2x32xf32>
    %274 = vector.extract_strided_slice %269 {offsets = [0, 96], sizes = [2, 32], strides = [1, 1]} : vector<2x128xf32> to vector<2x32xf32>
    %275 = arith.mulf %272, %258 : vector<2x32xf32>
    %276 = arith.mulf %271, %273 : vector<2x32xf32>
    %277 = arith.addf %275, %276 : vector<2x32xf32>
    %278 = math.tanh %277 : vector<2x32xf32>
    %279 = arith.mulf %274, %278 : vector<2x32xf32>
    %cst_56 = arith.constant dense<0.000000e+00> : vector<2x128xf32>
    %280 = tpu.matmul %137, %157, %cst_56 {dimension_numbers = #tpu.dot_dimension_numbers<[1], [0], [0], [1], [0, 0, 1, 1], [], []>} : vector<2x32xf32>, vector<32x128xf32>, vector<2x128xf32> -> vector<2x128xf32>
    %281 = arith.addf %280, %163 : vector<2x128xf32>
    %cst_57 = arith.constant dense<0.000000e+00> : vector<2x128xf32>
    %282 = tpu.matmul %279, %159, %cst_57 {dimension_numbers = #tpu.dot_dimension_numbers<[1], [0], [0], [1], [0, 0, 1, 1], [], []>} : vector<2x32xf32>, vector<32x128xf32>, vector<2x128xf32> -> vector<2x128xf32>
    %283 = arith.addf %281, %282 : vector<2x128xf32>
    %284 = arith.negf %283 : vector<2x128xf32>
    %285 = math.exp %284 : vector<2x128xf32>
    %cst_58 = arith.constant 1.000000e+00 : f32
    %286 = vector.broadcast %cst_58 : f32 to vector<2x128xf32>
    %287 = arith.addf %286, %285 : vector<2x128xf32>
    %288 = arith.divf %286, %287 : vector<2x128xf32>
    %289 = math.tanh %283 : vector<2x128xf32>
    %290 = vector.extract_strided_slice %288 {offsets = [0, 0], sizes = [2, 32], strides = [1, 1]} : vector<2x128xf32> to vector<2x32xf32>
    %291 = vector.extract_strided_slice %288 {offsets = [0, 32], sizes = [2, 32], strides = [1, 1]} : vector<2x128xf32> to vector<2x32xf32>
    %292 = vector.extract_strided_slice %289 {offsets = [0, 64], sizes = [2, 32], strides = [1, 1]} : vector<2x128xf32> to vector<2x32xf32>
    %293 = vector.extract_strided_slice %288 {offsets = [0, 96], sizes = [2, 32], strides = [1, 1]} : vector<2x128xf32> to vector<2x32xf32>
    %294 = arith.mulf %291, %277 : vector<2x32xf32>
    %295 = arith.mulf %290, %292 : vector<2x32xf32>
    %296 = arith.addf %294, %295 : vector<2x32xf32>
    %297 = math.tanh %296 : vector<2x32xf32>
    %298 = arith.mulf %293, %297 : vector<2x32xf32>
    %cst_59 = arith.constant dense<0.000000e+00> : vector<2x128xf32>
    %299 = tpu.matmul %155, %157, %cst_59 {dimension_numbers = #tpu.dot_dimension_numbers<[1], [0], [0], [1], [0, 0, 1, 1], [], []>} : vector<2x32xf32>, vector<32x128xf32>, vector<2x128xf32> -> vector<2x128xf32>
    %300 = arith.addf %299, %163 : vector<2x128xf32>
    %cst_60 = arith.constant dense<0.000000e+00> : vector<2x128xf32>
    %301 = tpu.matmul %298, %159, %cst_60 {dimension_numbers = #tpu.dot_dimension_numbers<[1], [0], [0], [1], [0, 0, 1, 1], [], []>} : vector<2x32xf32>, vector<32x128xf32>, vector<2x128xf32> -> vector<2x128xf32>
    %302 = arith.addf %300, %301 : vector<2x128xf32>
    %303 = arith.negf %302 : vector<2x128xf32>
    %304 = math.exp %303 : vector<2x128xf32>
    %cst_61 = arith.constant 1.000000e+00 : f32
    %305 = vector.broadcast %cst_61 : f32 to vector<2x128xf32>
    %306 = arith.addf %305, %304 : vector<2x128xf32>
    %307 = arith.divf %305, %306 : vector<2x128xf32>
    %308 = math.tanh %302 : vector<2x128xf32>
    %309 = vector.extract_strided_slice %307 {offsets = [0, 0], sizes = [2, 32], strides = [1, 1]} : vector<2x128xf32> to vector<2x32xf32>
    %310 = vector.extract_strided_slice %307 {offsets = [0, 32], sizes = [2, 32], strides = [1, 1]} : vector<2x128xf32> to vector<2x32xf32>
    %311 = vector.extract_strided_slice %308 {offsets = [0, 64], sizes = [2, 32], strides = [1, 1]} : vector<2x128xf32> to vector<2x32xf32>
    %312 = vector.extract_strided_slice %307 {offsets = [0, 96], sizes = [2, 32], strides = [1, 1]} : vector<2x128xf32> to vector<2x32xf32>
    %313 = arith.mulf %310, %296 : vector<2x32xf32>
    %314 = arith.mulf %309, %311 : vector<2x32xf32>
    %315 = arith.addf %313, %314 : vector<2x32xf32>
    %316 = math.tanh %315 : vector<2x32xf32>
    %317 = arith.mulf %312, %316 : vector<2x32xf32>
    %c2 = arith.constant 2 : index
    %c0_62 = arith.constant 0 : index
    %c0_63 = arith.constant 0 : index
    %318 = vector.load %arg1[%c2, %c0_62, %c0_63] : memref<5x32x128xf32, #tpu.memory_space<vmem>>, vector<1x32x128xf32>
    %319 = vector.shape_cast %318 : vector<1x32x128xf32> to vector<32x128xf32>
    %c2_64 = arith.constant 2 : index
    %c0_65 = arith.constant 0 : index
    %c0_66 = arith.constant 0 : index
    %320 = vector.load %arg2[%c2_64, %c0_65, %c0_66] : memref<5x32x128xf32, #tpu.memory_space<vmem>>, vector<1x32x128xf32>
    %321 = vector.shape_cast %320 : vector<1x32x128xf32> to vector<32x128xf32>
    %c2_67 = arith.constant 2 : index
    %c0_68 = arith.constant 0 : index
    %c0_69 = arith.constant 0 : index
    %322 = vector.load %arg3[%c2_67, %c0_68, %c0_69] : memref<5x1x128xf32, #tpu.memory_space<vmem>>, vector<1x1x128xf32>
    %323 = vector.shape_cast %322 : vector<1x1x128xf32> to vector<1x128xf32>
    %324 = vector.shape_cast %323 : vector<1x128xf32> to vector<1x128xf32>
    %325 = vector.broadcast %324 : vector<1x128xf32> to vector<2x128xf32>
    %cst_70 = arith.constant 0.000000e+00 : f32
    %326 = vector.broadcast %cst_70 : f32 to vector<2x32xf32>
    %cst_71 = arith.constant 0.000000e+00 : f32
    %327 = vector.broadcast %cst_71 : f32 to vector<2x32xf32>
    %cst_72 = arith.constant dense<0.000000e+00> : vector<2x128xf32>
    %328 = tpu.matmul %184, %319, %cst_72 {dimension_numbers = #tpu.dot_dimension_numbers<[1], [0], [0], [1], [0, 0, 1, 1], [], []>} : vector<2x32xf32>, vector<32x128xf32>, vector<2x128xf32> -> vector<2x128xf32>
    %329 = arith.addf %328, %325 : vector<2x128xf32>
    %cst_73 = arith.constant dense<0.000000e+00> : vector<2x128xf32>
    %330 = tpu.matmul %326, %321, %cst_73 {dimension_numbers = #tpu.dot_dimension_numbers<[1], [0], [0], [1], [0, 0, 1, 1], [], []>} : vector<2x32xf32>, vector<32x128xf32>, vector<2x128xf32> -> vector<2x128xf32>
    %331 = arith.addf %329, %330 : vector<2x128xf32>
    %332 = arith.negf %331 : vector<2x128xf32>
    %333 = math.exp %332 : vector<2x128xf32>
    %cst_74 = arith.constant 1.000000e+00 : f32
    %334 = vector.broadcast %cst_74 : f32 to vector<2x128xf32>
    %335 = arith.addf %334, %333 : vector<2x128xf32>
    %336 = arith.divf %334, %335 : vector<2x128xf32>
    %337 = math.tanh %331 : vector<2x128xf32>
    %338 = vector.extract_strided_slice %336 {offsets = [0, 0], sizes = [2, 32], strides = [1, 1]} : vector<2x128xf32> to vector<2x32xf32>
    %339 = vector.extract_strided_slice %336 {offsets = [0, 32], sizes = [2, 32], strides = [1, 1]} : vector<2x128xf32> to vector<2x32xf32>
    %340 = vector.extract_strided_slice %337 {offsets = [0, 64], sizes = [2, 32], strides = [1, 1]} : vector<2x128xf32> to vector<2x32xf32>
    %341 = vector.extract_strided_slice %336 {offsets = [0, 96], sizes = [2, 32], strides = [1, 1]} : vector<2x128xf32> to vector<2x32xf32>
    %342 = arith.mulf %339, %327 : vector<2x32xf32>
    %343 = arith.mulf %338, %340 : vector<2x32xf32>
    %344 = arith.addf %342, %343 : vector<2x32xf32>
    %345 = math.tanh %344 : vector<2x32xf32>
    %346 = arith.mulf %341, %345 : vector<2x32xf32>
    %cst_75 = arith.constant dense<0.000000e+00> : vector<2x128xf32>
    %347 = tpu.matmul %203, %319, %cst_75 {dimension_numbers = #tpu.dot_dimension_numbers<[1], [0], [0], [1], [0, 0, 1, 1], [], []>} : vector<2x32xf32>, vector<32x128xf32>, vector<2x128xf32> -> vector<2x128xf32>
    %348 = arith.addf %347, %325 : vector<2x128xf32>
    %cst_76 = arith.constant dense<0.000000e+00> : vector<2x128xf32>
    %349 = tpu.matmul %346, %321, %cst_76 {dimension_numbers = #tpu.dot_dimension_numbers<[1], [0], [0], [1], [0, 0, 1, 1], [], []>} : vector<2x32xf32>, vector<32x128xf32>, vector<2x128xf32> -> vector<2x128xf32>
    %350 = arith.addf %348, %349 : vector<2x128xf32>
    %351 = arith.negf %350 : vector<2x128xf32>
    %352 = math.exp %351 : vector<2x128xf32>
    %cst_77 = arith.constant 1.000000e+00 : f32
    %353 = vector.broadcast %cst_77 : f32 to vector<2x128xf32>
    %354 = arith.addf %353, %352 : vector<2x128xf32>
    %355 = arith.divf %353, %354 : vector<2x128xf32>
    %356 = math.tanh %350 : vector<2x128xf32>
    %357 = vector.extract_strided_slice %355 {offsets = [0, 0], sizes = [2, 32], strides = [1, 1]} : vector<2x128xf32> to vector<2x32xf32>
    %358 = vector.extract_strided_slice %355 {offsets = [0, 32], sizes = [2, 32], strides = [1, 1]} : vector<2x128xf32> to vector<2x32xf32>
    %359 = vector.extract_strided_slice %356 {offsets = [0, 64], sizes = [2, 32], strides = [1, 1]} : vector<2x128xf32> to vector<2x32xf32>
    %360 = vector.extract_strided_slice %355 {offsets = [0, 96], sizes = [2, 32], strides = [1, 1]} : vector<2x128xf32> to vector<2x32xf32>
    %361 = arith.mulf %358, %344 : vector<2x32xf32>
    %362 = arith.mulf %357, %359 : vector<2x32xf32>
    %363 = arith.addf %361, %362 : vector<2x32xf32>
    %364 = math.tanh %363 : vector<2x32xf32>
    %365 = arith.mulf %360, %364 : vector<2x32xf32>
    %cst_78 = arith.constant dense<0.000000e+00> : vector<2x128xf32>
    %366 = tpu.matmul %222, %319, %cst_78 {dimension_numbers = #tpu.dot_dimension_numbers<[1], [0], [0], [1], [0, 0, 1, 1], [], []>} : vector<2x32xf32>, vector<32x128xf32>, vector<2x128xf32> -> vector<2x128xf32>
    %367 = arith.addf %366, %325 : vector<2x128xf32>
    %cst_79 = arith.constant dense<0.000000e+00> : vector<2x128xf32>
    %368 = tpu.matmul %365, %321, %cst_79 {dimension_numbers = #tpu.dot_dimension_numbers<[1], [0], [0], [1], [0, 0, 1, 1], [], []>} : vector<2x32xf32>, vector<32x128xf32>, vector<2x128xf32> -> vector<2x128xf32>
    %369 = arith.addf %367, %368 : vector<2x128xf32>
    %370 = arith.negf %369 : vector<2x128xf32>
    %371 = math.exp %370 : vector<2x128xf32>
    %cst_80 = arith.constant 1.000000e+00 : f32
    %372 = vector.broadcast %cst_80 : f32 to vector<2x128xf32>
    %373 = arith.addf %372, %371 : vector<2x128xf32>
    %374 = arith.divf %372, %373 : vector<2x128xf32>
    %375 = math.tanh %369 : vector<2x128xf32>
    %376 = vector.extract_strided_slice %374 {offsets = [0, 0], sizes = [2, 32], strides = [1, 1]} : vector<2x128xf32> to vector<2x32xf32>
    %377 = vector.extract_strided_slice %374 {offsets = [0, 32], sizes = [2, 32], strides = [1, 1]} : vector<2x128xf32> to vector<2x32xf32>
    %378 = vector.extract_strided_slice %375 {offsets = [0, 64], sizes = [2, 32], strides = [1, 1]} : vector<2x128xf32> to vector<2x32xf32>
    %379 = vector.extract_strided_slice %374 {offsets = [0, 96], sizes = [2, 32], strides = [1, 1]} : vector<2x128xf32> to vector<2x32xf32>
    %380 = arith.mulf %377, %363 : vector<2x32xf32>
    %381 = arith.mulf %376, %378 : vector<2x32xf32>
    %382 = arith.addf %380, %381 : vector<2x32xf32>
    %383 = math.tanh %382 : vector<2x32xf32>
    %384 = arith.mulf %379, %383 : vector<2x32xf32>
    %cst_81 = arith.constant dense<0.000000e+00> : vector<2x128xf32>
    %385 = tpu.matmul %241, %319, %cst_81 {dimension_numbers = #tpu.dot_dimension_numbers<[1], [0], [0], [1], [0, 0, 1, 1], [], []>} : vector<2x32xf32>, vector<32x128xf32>, vector<2x128xf32> -> vector<2x128xf32>
    %386 = arith.addf %385, %325 : vector<2x128xf32>
    %cst_82 = arith.constant dense<0.000000e+00> : vector<2x128xf32>
    %387 = tpu.matmul %384, %321, %cst_82 {dimension_numbers = #tpu.dot_dimension_numbers<[1], [0], [0], [1], [0, 0, 1, 1], [], []>} : vector<2x32xf32>, vector<32x128xf32>, vector<2x128xf32> -> vector<2x128xf32>
    %388 = arith.addf %386, %387 : vector<2x128xf32>
    %389 = arith.negf %388 : vector<2x128xf32>
    %390 = math.exp %389 : vector<2x128xf32>
    %cst_83 = arith.constant 1.000000e+00 : f32
    %391 = vector.broadcast %cst_83 : f32 to vector<2x128xf32>
    %392 = arith.addf %391, %390 : vector<2x128xf32>
    %393 = arith.divf %391, %392 : vector<2x128xf32>
    %394 = math.tanh %388 : vector<2x128xf32>
    %395 = vector.extract_strided_slice %393 {offsets = [0, 0], sizes = [2, 32], strides = [1, 1]} : vector<2x128xf32> to vector<2x32xf32>
    %396 = vector.extract_strided_slice %393 {offsets = [0, 32], sizes = [2, 32], strides = [1, 1]} : vector<2x128xf32> to vector<2x32xf32>
    %397 = vector.extract_strided_slice %394 {offsets = [0, 64], sizes = [2, 32], strides = [1, 1]} : vector<2x128xf32> to vector<2x32xf32>
    %398 = vector.extract_strided_slice %393 {offsets = [0, 96], sizes = [2, 32], strides = [1, 1]} : vector<2x128xf32> to vector<2x32xf32>
    %399 = arith.mulf %396, %382 : vector<2x32xf32>
    %400 = arith.mulf %395, %397 : vector<2x32xf32>
    %401 = arith.addf %399, %400 : vector<2x32xf32>
    %402 = math.tanh %401 : vector<2x32xf32>
    %403 = arith.mulf %398, %402 : vector<2x32xf32>
    %cst_84 = arith.constant dense<0.000000e+00> : vector<2x128xf32>
    %404 = tpu.matmul %260, %319, %cst_84 {dimension_numbers = #tpu.dot_dimension_numbers<[1], [0], [0], [1], [0, 0, 1, 1], [], []>} : vector<2x32xf32>, vector<32x128xf32>, vector<2x128xf32> -> vector<2x128xf32>
    %405 = arith.addf %404, %325 : vector<2x128xf32>
    %cst_85 = arith.constant dense<0.000000e+00> : vector<2x128xf32>
    %406 = tpu.matmul %403, %321, %cst_85 {dimension_numbers = #tpu.dot_dimension_numbers<[1], [0], [0], [1], [0, 0, 1, 1], [], []>} : vector<2x32xf32>, vector<32x128xf32>, vector<2x128xf32> -> vector<2x128xf32>
    %407 = arith.addf %405, %406 : vector<2x128xf32>
    %408 = arith.negf %407 : vector<2x128xf32>
    %409 = math.exp %408 : vector<2x128xf32>
    %cst_86 = arith.constant 1.000000e+00 : f32
    %410 = vector.broadcast %cst_86 : f32 to vector<2x128xf32>
    %411 = arith.addf %410, %409 : vector<2x128xf32>
    %412 = arith.divf %410, %411 : vector<2x128xf32>
    %413 = math.tanh %407 : vector<2x128xf32>
    %414 = vector.extract_strided_slice %412 {offsets = [0, 0], sizes = [2, 32], strides = [1, 1]} : vector<2x128xf32> to vector<2x32xf32>
    %415 = vector.extract_strided_slice %412 {offsets = [0, 32], sizes = [2, 32], strides = [1, 1]} : vector<2x128xf32> to vector<2x32xf32>
    %416 = vector.extract_strided_slice %413 {offsets = [0, 64], sizes = [2, 32], strides = [1, 1]} : vector<2x128xf32> to vector<2x32xf32>
    %417 = vector.extract_strided_slice %412 {offsets = [0, 96], sizes = [2, 32], strides = [1, 1]} : vector<2x128xf32> to vector<2x32xf32>
    %418 = arith.mulf %415, %401 : vector<2x32xf32>
    %419 = arith.mulf %414, %416 : vector<2x32xf32>
    %420 = arith.addf %418, %419 : vector<2x32xf32>
    %421 = math.tanh %420 : vector<2x32xf32>
    %422 = arith.mulf %417, %421 : vector<2x32xf32>
    %cst_87 = arith.constant dense<0.000000e+00> : vector<2x128xf32>
    %423 = tpu.matmul %279, %319, %cst_87 {dimension_numbers = #tpu.dot_dimension_numbers<[1], [0], [0], [1], [0, 0, 1, 1], [], []>} : vector<2x32xf32>, vector<32x128xf32>, vector<2x128xf32> -> vector<2x128xf32>
    %424 = arith.addf %423, %325 : vector<2x128xf32>
    %cst_88 = arith.constant dense<0.000000e+00> : vector<2x128xf32>
    %425 = tpu.matmul %422, %321, %cst_88 {dimension_numbers = #tpu.dot_dimension_numbers<[1], [0], [0], [1], [0, 0, 1, 1], [], []>} : vector<2x32xf32>, vector<32x128xf32>, vector<2x128xf32> -> vector<2x128xf32>
    %426 = arith.addf %424, %425 : vector<2x128xf32>
    %427 = arith.negf %426 : vector<2x128xf32>
    %428 = math.exp %427 : vector<2x128xf32>
    %cst_89 = arith.constant 1.000000e+00 : f32
    %429 = vector.broadcast %cst_89 : f32 to vector<2x128xf32>
    %430 = arith.addf %429, %428 : vector<2x128xf32>
    %431 = arith.divf %429, %430 : vector<2x128xf32>
    %432 = math.tanh %426 : vector<2x128xf32>
    %433 = vector.extract_strided_slice %431 {offsets = [0, 0], sizes = [2, 32], strides = [1, 1]} : vector<2x128xf32> to vector<2x32xf32>
    %434 = vector.extract_strided_slice %431 {offsets = [0, 32], sizes = [2, 32], strides = [1, 1]} : vector<2x128xf32> to vector<2x32xf32>
    %435 = vector.extract_strided_slice %432 {offsets = [0, 64], sizes = [2, 32], strides = [1, 1]} : vector<2x128xf32> to vector<2x32xf32>
    %436 = vector.extract_strided_slice %431 {offsets = [0, 96], sizes = [2, 32], strides = [1, 1]} : vector<2x128xf32> to vector<2x32xf32>
    %437 = arith.mulf %434, %420 : vector<2x32xf32>
    %438 = arith.mulf %433, %435 : vector<2x32xf32>
    %439 = arith.addf %437, %438 : vector<2x32xf32>
    %440 = math.tanh %439 : vector<2x32xf32>
    %441 = arith.mulf %436, %440 : vector<2x32xf32>
    %cst_90 = arith.constant dense<0.000000e+00> : vector<2x128xf32>
    %442 = tpu.matmul %298, %319, %cst_90 {dimension_numbers = #tpu.dot_dimension_numbers<[1], [0], [0], [1], [0, 0, 1, 1], [], []>} : vector<2x32xf32>, vector<32x128xf32>, vector<2x128xf32> -> vector<2x128xf32>
    %443 = arith.addf %442, %325 : vector<2x128xf32>
    %cst_91 = arith.constant dense<0.000000e+00> : vector<2x128xf32>
    %444 = tpu.matmul %441, %321, %cst_91 {dimension_numbers = #tpu.dot_dimension_numbers<[1], [0], [0], [1], [0, 0, 1, 1], [], []>} : vector<2x32xf32>, vector<32x128xf32>, vector<2x128xf32> -> vector<2x128xf32>
    %445 = arith.addf %443, %444 : vector<2x128xf32>
    %446 = arith.negf %445 : vector<2x128xf32>
    %447 = math.exp %446 : vector<2x128xf32>
    %cst_92 = arith.constant 1.000000e+00 : f32
    %448 = vector.broadcast %cst_92 : f32 to vector<2x128xf32>
    %449 = arith.addf %448, %447 : vector<2x128xf32>
    %450 = arith.divf %448, %449 : vector<2x128xf32>
    %451 = math.tanh %445 : vector<2x128xf32>
    %452 = vector.extract_strided_slice %450 {offsets = [0, 0], sizes = [2, 32], strides = [1, 1]} : vector<2x128xf32> to vector<2x32xf32>
    %453 = vector.extract_strided_slice %450 {offsets = [0, 32], sizes = [2, 32], strides = [1, 1]} : vector<2x128xf32> to vector<2x32xf32>
    %454 = vector.extract_strided_slice %451 {offsets = [0, 64], sizes = [2, 32], strides = [1, 1]} : vector<2x128xf32> to vector<2x32xf32>
    %455 = vector.extract_strided_slice %450 {offsets = [0, 96], sizes = [2, 32], strides = [1, 1]} : vector<2x128xf32> to vector<2x32xf32>
    %456 = arith.mulf %453, %439 : vector<2x32xf32>
    %457 = arith.mulf %452, %454 : vector<2x32xf32>
    %458 = arith.addf %456, %457 : vector<2x32xf32>
    %459 = math.tanh %458 : vector<2x32xf32>
    %460 = arith.mulf %455, %459 : vector<2x32xf32>
    %cst_93 = arith.constant dense<0.000000e+00> : vector<2x128xf32>
    %461 = tpu.matmul %317, %319, %cst_93 {dimension_numbers = #tpu.dot_dimension_numbers<[1], [0], [0], [1], [0, 0, 1, 1], [], []>} : vector<2x32xf32>, vector<32x128xf32>, vector<2x128xf32> -> vector<2x128xf32>
    %462 = arith.addf %461, %325 : vector<2x128xf32>
    %cst_94 = arith.constant dense<0.000000e+00> : vector<2x128xf32>
    %463 = tpu.matmul %460, %321, %cst_94 {dimension_numbers = #tpu.dot_dimension_numbers<[1], [0], [0], [1], [0, 0, 1, 1], [], []>} : vector<2x32xf32>, vector<32x128xf32>, vector<2x128xf32> -> vector<2x128xf32>
    %464 = arith.addf %462, %463 : vector<2x128xf32>
    %465 = arith.negf %464 : vector<2x128xf32>
    %466 = math.exp %465 : vector<2x128xf32>
    %cst_95 = arith.constant 1.000000e+00 : f32
    %467 = vector.broadcast %cst_95 : f32 to vector<2x128xf32>
    %468 = arith.addf %467, %466 : vector<2x128xf32>
    %469 = arith.divf %467, %468 : vector<2x128xf32>
    %470 = math.tanh %464 : vector<2x128xf32>
    %471 = vector.extract_strided_slice %469 {offsets = [0, 0], sizes = [2, 32], strides = [1, 1]} : vector<2x128xf32> to vector<2x32xf32>
    %472 = vector.extract_strided_slice %469 {offsets = [0, 32], sizes = [2, 32], strides = [1, 1]} : vector<2x128xf32> to vector<2x32xf32>
    %473 = vector.extract_strided_slice %470 {offsets = [0, 64], sizes = [2, 32], strides = [1, 1]} : vector<2x128xf32> to vector<2x32xf32>
    %474 = vector.extract_strided_slice %469 {offsets = [0, 96], sizes = [2, 32], strides = [1, 1]} : vector<2x128xf32> to vector<2x32xf32>
    %475 = arith.mulf %472, %458 : vector<2x32xf32>
    %476 = arith.mulf %471, %473 : vector<2x32xf32>
    %477 = arith.addf %475, %476 : vector<2x32xf32>
    %478 = math.tanh %477 : vector<2x32xf32>
    %479 = arith.mulf %474, %478 : vector<2x32xf32>
    %c3 = arith.constant 3 : index
    %c0_96 = arith.constant 0 : index
    %c0_97 = arith.constant 0 : index
    %480 = vector.load %arg1[%c3, %c0_96, %c0_97] : memref<5x32x128xf32, #tpu.memory_space<vmem>>, vector<1x32x128xf32>
    %481 = vector.shape_cast %480 : vector<1x32x128xf32> to vector<32x128xf32>
    %c3_98 = arith.constant 3 : index
    %c0_99 = arith.constant 0 : index
    %c0_100 = arith.constant 0 : index
    %482 = vector.load %arg2[%c3_98, %c0_99, %c0_100] : memref<5x32x128xf32, #tpu.memory_space<vmem>>, vector<1x32x128xf32>
    %483 = vector.shape_cast %482 : vector<1x32x128xf32> to vector<32x128xf32>
    %c3_101 = arith.constant 3 : index
    %c0_102 = arith.constant 0 : index
    %c0_103 = arith.constant 0 : index
    %484 = vector.load %arg3[%c3_101, %c0_102, %c0_103] : memref<5x1x128xf32, #tpu.memory_space<vmem>>, vector<1x1x128xf32>
    %485 = vector.shape_cast %484 : vector<1x1x128xf32> to vector<1x128xf32>
    %486 = vector.shape_cast %485 : vector<1x128xf32> to vector<1x128xf32>
    %487 = vector.broadcast %486 : vector<1x128xf32> to vector<2x128xf32>
    %cst_104 = arith.constant 0.000000e+00 : f32
    %488 = vector.broadcast %cst_104 : f32 to vector<2x32xf32>
    %cst_105 = arith.constant 0.000000e+00 : f32
    %489 = vector.broadcast %cst_105 : f32 to vector<2x32xf32>
    %cst_106 = arith.constant dense<0.000000e+00> : vector<2x128xf32>
    %490 = tpu.matmul %346, %481, %cst_106 {dimension_numbers = #tpu.dot_dimension_numbers<[1], [0], [0], [1], [0, 0, 1, 1], [], []>} : vector<2x32xf32>, vector<32x128xf32>, vector<2x128xf32> -> vector<2x128xf32>
    %491 = arith.addf %490, %487 : vector<2x128xf32>
    %cst_107 = arith.constant dense<0.000000e+00> : vector<2x128xf32>
    %492 = tpu.matmul %488, %483, %cst_107 {dimension_numbers = #tpu.dot_dimension_numbers<[1], [0], [0], [1], [0, 0, 1, 1], [], []>} : vector<2x32xf32>, vector<32x128xf32>, vector<2x128xf32> -> vector<2x128xf32>
    %493 = arith.addf %491, %492 : vector<2x128xf32>
    %494 = arith.negf %493 : vector<2x128xf32>
    %495 = math.exp %494 : vector<2x128xf32>
    %cst_108 = arith.constant 1.000000e+00 : f32
    %496 = vector.broadcast %cst_108 : f32 to vector<2x128xf32>
    %497 = arith.addf %496, %495 : vector<2x128xf32>
    %498 = arith.divf %496, %497 : vector<2x128xf32>
    %499 = math.tanh %493 : vector<2x128xf32>
    %500 = vector.extract_strided_slice %498 {offsets = [0, 0], sizes = [2, 32], strides = [1, 1]} : vector<2x128xf32> to vector<2x32xf32>
    %501 = vector.extract_strided_slice %498 {offsets = [0, 32], sizes = [2, 32], strides = [1, 1]} : vector<2x128xf32> to vector<2x32xf32>
    %502 = vector.extract_strided_slice %499 {offsets = [0, 64], sizes = [2, 32], strides = [1, 1]} : vector<2x128xf32> to vector<2x32xf32>
    %503 = vector.extract_strided_slice %498 {offsets = [0, 96], sizes = [2, 32], strides = [1, 1]} : vector<2x128xf32> to vector<2x32xf32>
    %504 = arith.mulf %501, %489 : vector<2x32xf32>
    %505 = arith.mulf %500, %502 : vector<2x32xf32>
    %506 = arith.addf %504, %505 : vector<2x32xf32>
    %507 = math.tanh %506 : vector<2x32xf32>
    %508 = arith.mulf %503, %507 : vector<2x32xf32>
    %cst_109 = arith.constant dense<0.000000e+00> : vector<2x128xf32>
    %509 = tpu.matmul %365, %481, %cst_109 {dimension_numbers = #tpu.dot_dimension_numbers<[1], [0], [0], [1], [0, 0, 1, 1], [], []>} : vector<2x32xf32>, vector<32x128xf32>, vector<2x128xf32> -> vector<2x128xf32>
    %510 = arith.addf %509, %487 : vector<2x128xf32>
    %cst_110 = arith.constant dense<0.000000e+00> : vector<2x128xf32>
    %511 = tpu.matmul %508, %483, %cst_110 {dimension_numbers = #tpu.dot_dimension_numbers<[1], [0], [0], [1], [0, 0, 1, 1], [], []>} : vector<2x32xf32>, vector<32x128xf32>, vector<2x128xf32> -> vector<2x128xf32>
    %512 = arith.addf %510, %511 : vector<2x128xf32>
    %513 = arith.negf %512 : vector<2x128xf32>
    %514 = math.exp %513 : vector<2x128xf32>
    %cst_111 = arith.constant 1.000000e+00 : f32
    %515 = vector.broadcast %cst_111 : f32 to vector<2x128xf32>
    %516 = arith.addf %515, %514 : vector<2x128xf32>
    %517 = arith.divf %515, %516 : vector<2x128xf32>
    %518 = math.tanh %512 : vector<2x128xf32>
    %519 = vector.extract_strided_slice %517 {offsets = [0, 0], sizes = [2, 32], strides = [1, 1]} : vector<2x128xf32> to vector<2x32xf32>
    %520 = vector.extract_strided_slice %517 {offsets = [0, 32], sizes = [2, 32], strides = [1, 1]} : vector<2x128xf32> to vector<2x32xf32>
    %521 = vector.extract_strided_slice %518 {offsets = [0, 64], sizes = [2, 32], strides = [1, 1]} : vector<2x128xf32> to vector<2x32xf32>
    %522 = vector.extract_strided_slice %517 {offsets = [0, 96], sizes = [2, 32], strides = [1, 1]} : vector<2x128xf32> to vector<2x32xf32>
    %523 = arith.mulf %520, %506 : vector<2x32xf32>
    %524 = arith.mulf %519, %521 : vector<2x32xf32>
    %525 = arith.addf %523, %524 : vector<2x32xf32>
    %526 = math.tanh %525 : vector<2x32xf32>
    %527 = arith.mulf %522, %526 : vector<2x32xf32>
    %cst_112 = arith.constant dense<0.000000e+00> : vector<2x128xf32>
    %528 = tpu.matmul %384, %481, %cst_112 {dimension_numbers = #tpu.dot_dimension_numbers<[1], [0], [0], [1], [0, 0, 1, 1], [], []>} : vector<2x32xf32>, vector<32x128xf32>, vector<2x128xf32> -> vector<2x128xf32>
    %529 = arith.addf %528, %487 : vector<2x128xf32>
    %cst_113 = arith.constant dense<0.000000e+00> : vector<2x128xf32>
    %530 = tpu.matmul %527, %483, %cst_113 {dimension_numbers = #tpu.dot_dimension_numbers<[1], [0], [0], [1], [0, 0, 1, 1], [], []>} : vector<2x32xf32>, vector<32x128xf32>, vector<2x128xf32> -> vector<2x128xf32>
    %531 = arith.addf %529, %530 : vector<2x128xf32>
    %532 = arith.negf %531 : vector<2x128xf32>
    %533 = math.exp %532 : vector<2x128xf32>
    %cst_114 = arith.constant 1.000000e+00 : f32
    %534 = vector.broadcast %cst_114 : f32 to vector<2x128xf32>
    %535 = arith.addf %534, %533 : vector<2x128xf32>
    %536 = arith.divf %534, %535 : vector<2x128xf32>
    %537 = math.tanh %531 : vector<2x128xf32>
    %538 = vector.extract_strided_slice %536 {offsets = [0, 0], sizes = [2, 32], strides = [1, 1]} : vector<2x128xf32> to vector<2x32xf32>
    %539 = vector.extract_strided_slice %536 {offsets = [0, 32], sizes = [2, 32], strides = [1, 1]} : vector<2x128xf32> to vector<2x32xf32>
    %540 = vector.extract_strided_slice %537 {offsets = [0, 64], sizes = [2, 32], strides = [1, 1]} : vector<2x128xf32> to vector<2x32xf32>
    %541 = vector.extract_strided_slice %536 {offsets = [0, 96], sizes = [2, 32], strides = [1, 1]} : vector<2x128xf32> to vector<2x32xf32>
    %542 = arith.mulf %539, %525 : vector<2x32xf32>
    %543 = arith.mulf %538, %540 : vector<2x32xf32>
    %544 = arith.addf %542, %543 : vector<2x32xf32>
    %545 = math.tanh %544 : vector<2x32xf32>
    %546 = arith.mulf %541, %545 : vector<2x32xf32>
    %cst_115 = arith.constant dense<0.000000e+00> : vector<2x128xf32>
    %547 = tpu.matmul %403, %481, %cst_115 {dimension_numbers = #tpu.dot_dimension_numbers<[1], [0], [0], [1], [0, 0, 1, 1], [], []>} : vector<2x32xf32>, vector<32x128xf32>, vector<2x128xf32> -> vector<2x128xf32>
    %548 = arith.addf %547, %487 : vector<2x128xf32>
    %cst_116 = arith.constant dense<0.000000e+00> : vector<2x128xf32>
    %549 = tpu.matmul %546, %483, %cst_116 {dimension_numbers = #tpu.dot_dimension_numbers<[1], [0], [0], [1], [0, 0, 1, 1], [], []>} : vector<2x32xf32>, vector<32x128xf32>, vector<2x128xf32> -> vector<2x128xf32>
    %550 = arith.addf %548, %549 : vector<2x128xf32>
    %551 = arith.negf %550 : vector<2x128xf32>
    %552 = math.exp %551 : vector<2x128xf32>
    %cst_117 = arith.constant 1.000000e+00 : f32
    %553 = vector.broadcast %cst_117 : f32 to vector<2x128xf32>
    %554 = arith.addf %553, %552 : vector<2x128xf32>
    %555 = arith.divf %553, %554 : vector<2x128xf32>
    %556 = math.tanh %550 : vector<2x128xf32>
    %557 = vector.extract_strided_slice %555 {offsets = [0, 0], sizes = [2, 32], strides = [1, 1]} : vector<2x128xf32> to vector<2x32xf32>
    %558 = vector.extract_strided_slice %555 {offsets = [0, 32], sizes = [2, 32], strides = [1, 1]} : vector<2x128xf32> to vector<2x32xf32>
    %559 = vector.extract_strided_slice %556 {offsets = [0, 64], sizes = [2, 32], strides = [1, 1]} : vector<2x128xf32> to vector<2x32xf32>
    %560 = vector.extract_strided_slice %555 {offsets = [0, 96], sizes = [2, 32], strides = [1, 1]} : vector<2x128xf32> to vector<2x32xf32>
    %561 = arith.mulf %558, %544 : vector<2x32xf32>
    %562 = arith.mulf %557, %559 : vector<2x32xf32>
    %563 = arith.addf %561, %562 : vector<2x32xf32>
    %564 = math.tanh %563 : vector<2x32xf32>
    %565 = arith.mulf %560, %564 : vector<2x32xf32>
    %cst_118 = arith.constant dense<0.000000e+00> : vector<2x128xf32>
    %566 = tpu.matmul %422, %481, %cst_118 {dimension_numbers = #tpu.dot_dimension_numbers<[1], [0], [0], [1], [0, 0, 1, 1], [], []>} : vector<2x32xf32>, vector<32x128xf32>, vector<2x128xf32> -> vector<2x128xf32>
    %567 = arith.addf %566, %487 : vector<2x128xf32>
    %cst_119 = arith.constant dense<0.000000e+00> : vector<2x128xf32>
    %568 = tpu.matmul %565, %483, %cst_119 {dimension_numbers = #tpu.dot_dimension_numbers<[1], [0], [0], [1], [0, 0, 1, 1], [], []>} : vector<2x32xf32>, vector<32x128xf32>, vector<2x128xf32> -> vector<2x128xf32>
    %569 = arith.addf %567, %568 : vector<2x128xf32>
    %570 = arith.negf %569 : vector<2x128xf32>
    %571 = math.exp %570 : vector<2x128xf32>
    %cst_120 = arith.constant 1.000000e+00 : f32
    %572 = vector.broadcast %cst_120 : f32 to vector<2x128xf32>
    %573 = arith.addf %572, %571 : vector<2x128xf32>
    %574 = arith.divf %572, %573 : vector<2x128xf32>
    %575 = math.tanh %569 : vector<2x128xf32>
    %576 = vector.extract_strided_slice %574 {offsets = [0, 0], sizes = [2, 32], strides = [1, 1]} : vector<2x128xf32> to vector<2x32xf32>
    %577 = vector.extract_strided_slice %574 {offsets = [0, 32], sizes = [2, 32], strides = [1, 1]} : vector<2x128xf32> to vector<2x32xf32>
    %578 = vector.extract_strided_slice %575 {offsets = [0, 64], sizes = [2, 32], strides = [1, 1]} : vector<2x128xf32> to vector<2x32xf32>
    %579 = vector.extract_strided_slice %574 {offsets = [0, 96], sizes = [2, 32], strides = [1, 1]} : vector<2x128xf32> to vector<2x32xf32>
    %580 = arith.mulf %577, %563 : vector<2x32xf32>
    %581 = arith.mulf %576, %578 : vector<2x32xf32>
    %582 = arith.addf %580, %581 : vector<2x32xf32>
    %583 = math.tanh %582 : vector<2x32xf32>
    %584 = arith.mulf %579, %583 : vector<2x32xf32>
    %cst_121 = arith.constant dense<0.000000e+00> : vector<2x128xf32>
    %585 = tpu.matmul %441, %481, %cst_121 {dimension_numbers = #tpu.dot_dimension_numbers<[1], [0], [0], [1], [0, 0, 1, 1], [], []>} : vector<2x32xf32>, vector<32x128xf32>, vector<2x128xf32> -> vector<2x128xf32>
    %586 = arith.addf %585, %487 : vector<2x128xf32>
    %cst_122 = arith.constant dense<0.000000e+00> : vector<2x128xf32>
    %587 = tpu.matmul %584, %483, %cst_122 {dimension_numbers = #tpu.dot_dimension_numbers<[1], [0], [0], [1], [0, 0, 1, 1], [], []>} : vector<2x32xf32>, vector<32x128xf32>, vector<2x128xf32> -> vector<2x128xf32>
    %588 = arith.addf %586, %587 : vector<2x128xf32>
    %589 = arith.negf %588 : vector<2x128xf32>
    %590 = math.exp %589 : vector<2x128xf32>
    %cst_123 = arith.constant 1.000000e+00 : f32
    %591 = vector.broadcast %cst_123 : f32 to vector<2x128xf32>
    %592 = arith.addf %591, %590 : vector<2x128xf32>
    %593 = arith.divf %591, %592 : vector<2x128xf32>
    %594 = math.tanh %588 : vector<2x128xf32>
    %595 = vector.extract_strided_slice %593 {offsets = [0, 0], sizes = [2, 32], strides = [1, 1]} : vector<2x128xf32> to vector<2x32xf32>
    %596 = vector.extract_strided_slice %593 {offsets = [0, 32], sizes = [2, 32], strides = [1, 1]} : vector<2x128xf32> to vector<2x32xf32>
    %597 = vector.extract_strided_slice %594 {offsets = [0, 64], sizes = [2, 32], strides = [1, 1]} : vector<2x128xf32> to vector<2x32xf32>
    %598 = vector.extract_strided_slice %593 {offsets = [0, 96], sizes = [2, 32], strides = [1, 1]} : vector<2x128xf32> to vector<2x32xf32>
    %599 = arith.mulf %596, %582 : vector<2x32xf32>
    %600 = arith.mulf %595, %597 : vector<2x32xf32>
    %601 = arith.addf %599, %600 : vector<2x32xf32>
    %602 = math.tanh %601 : vector<2x32xf32>
    %603 = arith.mulf %598, %602 : vector<2x32xf32>
    %cst_124 = arith.constant dense<0.000000e+00> : vector<2x128xf32>
    %604 = tpu.matmul %460, %481, %cst_124 {dimension_numbers = #tpu.dot_dimension_numbers<[1], [0], [0], [1], [0, 0, 1, 1], [], []>} : vector<2x32xf32>, vector<32x128xf32>, vector<2x128xf32> -> vector<2x128xf32>
    %605 = arith.addf %604, %487 : vector<2x128xf32>
    %cst_125 = arith.constant dense<0.000000e+00> : vector<2x128xf32>
    %606 = tpu.matmul %603, %483, %cst_125 {dimension_numbers = #tpu.dot_dimension_numbers<[1], [0], [0], [1], [0, 0, 1, 1], [], []>} : vector<2x32xf32>, vector<32x128xf32>, vector<2x128xf32> -> vector<2x128xf32>
    %607 = arith.addf %605, %606 : vector<2x128xf32>
    %608 = arith.negf %607 : vector<2x128xf32>
    %609 = math.exp %608 : vector<2x128xf32>
    %cst_126 = arith.constant 1.000000e+00 : f32
    %610 = vector.broadcast %cst_126 : f32 to vector<2x128xf32>
    %611 = arith.addf %610, %609 : vector<2x128xf32>
    %612 = arith.divf %610, %611 : vector<2x128xf32>
    %613 = math.tanh %607 : vector<2x128xf32>
    %614 = vector.extract_strided_slice %612 {offsets = [0, 0], sizes = [2, 32], strides = [1, 1]} : vector<2x128xf32> to vector<2x32xf32>
    %615 = vector.extract_strided_slice %612 {offsets = [0, 32], sizes = [2, 32], strides = [1, 1]} : vector<2x128xf32> to vector<2x32xf32>
    %616 = vector.extract_strided_slice %613 {offsets = [0, 64], sizes = [2, 32], strides = [1, 1]} : vector<2x128xf32> to vector<2x32xf32>
    %617 = vector.extract_strided_slice %612 {offsets = [0, 96], sizes = [2, 32], strides = [1, 1]} : vector<2x128xf32> to vector<2x32xf32>
    %618 = arith.mulf %615, %601 : vector<2x32xf32>
    %619 = arith.mulf %614, %616 : vector<2x32xf32>
    %620 = arith.addf %618, %619 : vector<2x32xf32>
    %621 = math.tanh %620 : vector<2x32xf32>
    %622 = arith.mulf %617, %621 : vector<2x32xf32>
    %cst_127 = arith.constant dense<0.000000e+00> : vector<2x128xf32>
    %623 = tpu.matmul %479, %481, %cst_127 {dimension_numbers = #tpu.dot_dimension_numbers<[1], [0], [0], [1], [0, 0, 1, 1], [], []>} : vector<2x32xf32>, vector<32x128xf32>, vector<2x128xf32> -> vector<2x128xf32>
    %624 = arith.addf %623, %487 : vector<2x128xf32>
    %cst_128 = arith.constant dense<0.000000e+00> : vector<2x128xf32>
    %625 = tpu.matmul %622, %483, %cst_128 {dimension_numbers = #tpu.dot_dimension_numbers<[1], [0], [0], [1], [0, 0, 1, 1], [], []>} : vector<2x32xf32>, vector<32x128xf32>, vector<2x128xf32> -> vector<2x128xf32>
    %626 = arith.addf %624, %625 : vector<2x128xf32>
    %627 = arith.negf %626 : vector<2x128xf32>
    %628 = math.exp %627 : vector<2x128xf32>
    %cst_129 = arith.constant 1.000000e+00 : f32
    %629 = vector.broadcast %cst_129 : f32 to vector<2x128xf32>
    %630 = arith.addf %629, %628 : vector<2x128xf32>
    %631 = arith.divf %629, %630 : vector<2x128xf32>
    %632 = math.tanh %626 : vector<2x128xf32>
    %633 = vector.extract_strided_slice %631 {offsets = [0, 0], sizes = [2, 32], strides = [1, 1]} : vector<2x128xf32> to vector<2x32xf32>
    %634 = vector.extract_strided_slice %631 {offsets = [0, 32], sizes = [2, 32], strides = [1, 1]} : vector<2x128xf32> to vector<2x32xf32>
    %635 = vector.extract_strided_slice %632 {offsets = [0, 64], sizes = [2, 32], strides = [1, 1]} : vector<2x128xf32> to vector<2x32xf32>
    %636 = vector.extract_strided_slice %631 {offsets = [0, 96], sizes = [2, 32], strides = [1, 1]} : vector<2x128xf32> to vector<2x32xf32>
    %637 = arith.mulf %634, %620 : vector<2x32xf32>
    %638 = arith.mulf %633, %635 : vector<2x32xf32>
    %639 = arith.addf %637, %638 : vector<2x32xf32>
    %640 = math.tanh %639 : vector<2x32xf32>
    %641 = arith.mulf %636, %640 : vector<2x32xf32>
    %c4 = arith.constant 4 : index
    %c0_130 = arith.constant 0 : index
    %c0_131 = arith.constant 0 : index
    %642 = vector.load %arg1[%c4, %c0_130, %c0_131] : memref<5x32x128xf32, #tpu.memory_space<vmem>>, vector<1x32x128xf32>
    %643 = vector.shape_cast %642 : vector<1x32x128xf32> to vector<32x128xf32>
    %c4_132 = arith.constant 4 : index
    %c0_133 = arith.constant 0 : index
    %c0_134 = arith.constant 0 : index
    %644 = vector.load %arg2[%c4_132, %c0_133, %c0_134] : memref<5x32x128xf32, #tpu.memory_space<vmem>>, vector<1x32x128xf32>
    %645 = vector.shape_cast %644 : vector<1x32x128xf32> to vector<32x128xf32>
    %c4_135 = arith.constant 4 : index
    %c0_136 = arith.constant 0 : index
    %c0_137 = arith.constant 0 : index
    %646 = vector.load %arg3[%c4_135, %c0_136, %c0_137] : memref<5x1x128xf32, #tpu.memory_space<vmem>>, vector<1x1x128xf32>
    %647 = vector.shape_cast %646 : vector<1x1x128xf32> to vector<1x128xf32>
    %648 = vector.shape_cast %647 : vector<1x128xf32> to vector<1x128xf32>
    %649 = vector.broadcast %648 : vector<1x128xf32> to vector<2x128xf32>
    %cst_138 = arith.constant 0.000000e+00 : f32
    %650 = vector.broadcast %cst_138 : f32 to vector<2x32xf32>
    %cst_139 = arith.constant 0.000000e+00 : f32
    %651 = vector.broadcast %cst_139 : f32 to vector<2x32xf32>
    %cst_140 = arith.constant dense<0.000000e+00> : vector<2x128xf32>
    %652 = tpu.matmul %508, %643, %cst_140 {dimension_numbers = #tpu.dot_dimension_numbers<[1], [0], [0], [1], [0, 0, 1, 1], [], []>} : vector<2x32xf32>, vector<32x128xf32>, vector<2x128xf32> -> vector<2x128xf32>
    %653 = arith.addf %652, %649 : vector<2x128xf32>
    %cst_141 = arith.constant dense<0.000000e+00> : vector<2x128xf32>
    %654 = tpu.matmul %650, %645, %cst_141 {dimension_numbers = #tpu.dot_dimension_numbers<[1], [0], [0], [1], [0, 0, 1, 1], [], []>} : vector<2x32xf32>, vector<32x128xf32>, vector<2x128xf32> -> vector<2x128xf32>
    %655 = arith.addf %653, %654 : vector<2x128xf32>
    %656 = arith.negf %655 : vector<2x128xf32>
    %657 = math.exp %656 : vector<2x128xf32>
    %cst_142 = arith.constant 1.000000e+00 : f32
    %658 = vector.broadcast %cst_142 : f32 to vector<2x128xf32>
    %659 = arith.addf %658, %657 : vector<2x128xf32>
    %660 = arith.divf %658, %659 : vector<2x128xf32>
    %661 = math.tanh %655 : vector<2x128xf32>
    %662 = vector.extract_strided_slice %660 {offsets = [0, 0], sizes = [2, 32], strides = [1, 1]} : vector<2x128xf32> to vector<2x32xf32>
    %663 = vector.extract_strided_slice %660 {offsets = [0, 32], sizes = [2, 32], strides = [1, 1]} : vector<2x128xf32> to vector<2x32xf32>
    %664 = vector.extract_strided_slice %661 {offsets = [0, 64], sizes = [2, 32], strides = [1, 1]} : vector<2x128xf32> to vector<2x32xf32>
    %665 = vector.extract_strided_slice %660 {offsets = [0, 96], sizes = [2, 32], strides = [1, 1]} : vector<2x128xf32> to vector<2x32xf32>
    %666 = arith.mulf %663, %651 : vector<2x32xf32>
    %667 = arith.mulf %662, %664 : vector<2x32xf32>
    %668 = arith.addf %666, %667 : vector<2x32xf32>
    %669 = math.tanh %668 : vector<2x32xf32>
    %670 = arith.mulf %665, %669 : vector<2x32xf32>
    %cst_143 = arith.constant dense<0.000000e+00> : vector<2x128xf32>
    %671 = tpu.matmul %527, %643, %cst_143 {dimension_numbers = #tpu.dot_dimension_numbers<[1], [0], [0], [1], [0, 0, 1, 1], [], []>} : vector<2x32xf32>, vector<32x128xf32>, vector<2x128xf32> -> vector<2x128xf32>
    %672 = arith.addf %671, %649 : vector<2x128xf32>
    %cst_144 = arith.constant dense<0.000000e+00> : vector<2x128xf32>
    %673 = tpu.matmul %670, %645, %cst_144 {dimension_numbers = #tpu.dot_dimension_numbers<[1], [0], [0], [1], [0, 0, 1, 1], [], []>} : vector<2x32xf32>, vector<32x128xf32>, vector<2x128xf32> -> vector<2x128xf32>
    %674 = arith.addf %672, %673 : vector<2x128xf32>
    %675 = arith.negf %674 : vector<2x128xf32>
    %676 = math.exp %675 : vector<2x128xf32>
    %cst_145 = arith.constant 1.000000e+00 : f32
    %677 = vector.broadcast %cst_145 : f32 to vector<2x128xf32>
    %678 = arith.addf %677, %676 : vector<2x128xf32>
    %679 = arith.divf %677, %678 : vector<2x128xf32>
    %680 = math.tanh %674 : vector<2x128xf32>
    %681 = vector.extract_strided_slice %679 {offsets = [0, 0], sizes = [2, 32], strides = [1, 1]} : vector<2x128xf32> to vector<2x32xf32>
    %682 = vector.extract_strided_slice %679 {offsets = [0, 32], sizes = [2, 32], strides = [1, 1]} : vector<2x128xf32> to vector<2x32xf32>
    %683 = vector.extract_strided_slice %680 {offsets = [0, 64], sizes = [2, 32], strides = [1, 1]} : vector<2x128xf32> to vector<2x32xf32>
    %684 = vector.extract_strided_slice %679 {offsets = [0, 96], sizes = [2, 32], strides = [1, 1]} : vector<2x128xf32> to vector<2x32xf32>
    %685 = arith.mulf %682, %668 : vector<2x32xf32>
    %686 = arith.mulf %681, %683 : vector<2x32xf32>
    %687 = arith.addf %685, %686 : vector<2x32xf32>
    %688 = math.tanh %687 : vector<2x32xf32>
    %689 = arith.mulf %684, %688 : vector<2x32xf32>
    %cst_146 = arith.constant dense<0.000000e+00> : vector<2x128xf32>
    %690 = tpu.matmul %546, %643, %cst_146 {dimension_numbers = #tpu.dot_dimension_numbers<[1], [0], [0], [1], [0, 0, 1, 1], [], []>} : vector<2x32xf32>, vector<32x128xf32>, vector<2x128xf32> -> vector<2x128xf32>
    %691 = arith.addf %690, %649 : vector<2x128xf32>
    %cst_147 = arith.constant dense<0.000000e+00> : vector<2x128xf32>
    %692 = tpu.matmul %689, %645, %cst_147 {dimension_numbers = #tpu.dot_dimension_numbers<[1], [0], [0], [1], [0, 0, 1, 1], [], []>} : vector<2x32xf32>, vector<32x128xf32>, vector<2x128xf32> -> vector<2x128xf32>
    %693 = arith.addf %691, %692 : vector<2x128xf32>
    %694 = arith.negf %693 : vector<2x128xf32>
    %695 = math.exp %694 : vector<2x128xf32>
    %cst_148 = arith.constant 1.000000e+00 : f32
    %696 = vector.broadcast %cst_148 : f32 to vector<2x128xf32>
    %697 = arith.addf %696, %695 : vector<2x128xf32>
    %698 = arith.divf %696, %697 : vector<2x128xf32>
    %699 = math.tanh %693 : vector<2x128xf32>
    %700 = vector.extract_strided_slice %698 {offsets = [0, 0], sizes = [2, 32], strides = [1, 1]} : vector<2x128xf32> to vector<2x32xf32>
    %701 = vector.extract_strided_slice %698 {offsets = [0, 32], sizes = [2, 32], strides = [1, 1]} : vector<2x128xf32> to vector<2x32xf32>
    %702 = vector.extract_strided_slice %699 {offsets = [0, 64], sizes = [2, 32], strides = [1, 1]} : vector<2x128xf32> to vector<2x32xf32>
    %703 = vector.extract_strided_slice %698 {offsets = [0, 96], sizes = [2, 32], strides = [1, 1]} : vector<2x128xf32> to vector<2x32xf32>
    %704 = arith.mulf %701, %687 : vector<2x32xf32>
    %705 = arith.mulf %700, %702 : vector<2x32xf32>
    %706 = arith.addf %704, %705 : vector<2x32xf32>
    %707 = math.tanh %706 : vector<2x32xf32>
    %708 = arith.mulf %703, %707 : vector<2x32xf32>
    %cst_149 = arith.constant dense<0.000000e+00> : vector<2x128xf32>
    %709 = tpu.matmul %565, %643, %cst_149 {dimension_numbers = #tpu.dot_dimension_numbers<[1], [0], [0], [1], [0, 0, 1, 1], [], []>} : vector<2x32xf32>, vector<32x128xf32>, vector<2x128xf32> -> vector<2x128xf32>
    %710 = arith.addf %709, %649 : vector<2x128xf32>
    %cst_150 = arith.constant dense<0.000000e+00> : vector<2x128xf32>
    %711 = tpu.matmul %708, %645, %cst_150 {dimension_numbers = #tpu.dot_dimension_numbers<[1], [0], [0], [1], [0, 0, 1, 1], [], []>} : vector<2x32xf32>, vector<32x128xf32>, vector<2x128xf32> -> vector<2x128xf32>
    %712 = arith.addf %710, %711 : vector<2x128xf32>
    %713 = arith.negf %712 : vector<2x128xf32>
    %714 = math.exp %713 : vector<2x128xf32>
    %cst_151 = arith.constant 1.000000e+00 : f32
    %715 = vector.broadcast %cst_151 : f32 to vector<2x128xf32>
    %716 = arith.addf %715, %714 : vector<2x128xf32>
    %717 = arith.divf %715, %716 : vector<2x128xf32>
    %718 = math.tanh %712 : vector<2x128xf32>
    %719 = vector.extract_strided_slice %717 {offsets = [0, 0], sizes = [2, 32], strides = [1, 1]} : vector<2x128xf32> to vector<2x32xf32>
    %720 = vector.extract_strided_slice %717 {offsets = [0, 32], sizes = [2, 32], strides = [1, 1]} : vector<2x128xf32> to vector<2x32xf32>
    %721 = vector.extract_strided_slice %718 {offsets = [0, 64], sizes = [2, 32], strides = [1, 1]} : vector<2x128xf32> to vector<2x32xf32>
    %722 = vector.extract_strided_slice %717 {offsets = [0, 96], sizes = [2, 32], strides = [1, 1]} : vector<2x128xf32> to vector<2x32xf32>
    %723 = arith.mulf %720, %706 : vector<2x32xf32>
    %724 = arith.mulf %719, %721 : vector<2x32xf32>
    %725 = arith.addf %723, %724 : vector<2x32xf32>
    %726 = math.tanh %725 : vector<2x32xf32>
    %727 = arith.mulf %722, %726 : vector<2x32xf32>
    %cst_152 = arith.constant dense<0.000000e+00> : vector<2x128xf32>
    %728 = tpu.matmul %584, %643, %cst_152 {dimension_numbers = #tpu.dot_dimension_numbers<[1], [0], [0], [1], [0, 0, 1, 1], [], []>} : vector<2x32xf32>, vector<32x128xf32>, vector<2x128xf32> -> vector<2x128xf32>
    %729 = arith.addf %728, %649 : vector<2x128xf32>
    %cst_153 = arith.constant dense<0.000000e+00> : vector<2x128xf32>
    %730 = tpu.matmul %727, %645, %cst_153 {dimension_numbers = #tpu.dot_dimension_numbers<[1], [0], [0], [1], [0, 0, 1, 1], [], []>} : vector<2x32xf32>, vector<32x128xf32>, vector<2x128xf32> -> vector<2x128xf32>
    %731 = arith.addf %729, %730 : vector<2x128xf32>
    %732 = arith.negf %731 : vector<2x128xf32>
    %733 = math.exp %732 : vector<2x128xf32>
    %cst_154 = arith.constant 1.000000e+00 : f32
    %734 = vector.broadcast %cst_154 : f32 to vector<2x128xf32>
    %735 = arith.addf %734, %733 : vector<2x128xf32>
    %736 = arith.divf %734, %735 : vector<2x128xf32>
    %737 = math.tanh %731 : vector<2x128xf32>
    %738 = vector.extract_strided_slice %736 {offsets = [0, 0], sizes = [2, 32], strides = [1, 1]} : vector<2x128xf32> to vector<2x32xf32>
    %739 = vector.extract_strided_slice %736 {offsets = [0, 32], sizes = [2, 32], strides = [1, 1]} : vector<2x128xf32> to vector<2x32xf32>
    %740 = vector.extract_strided_slice %737 {offsets = [0, 64], sizes = [2, 32], strides = [1, 1]} : vector<2x128xf32> to vector<2x32xf32>
    %741 = vector.extract_strided_slice %736 {offsets = [0, 96], sizes = [2, 32], strides = [1, 1]} : vector<2x128xf32> to vector<2x32xf32>
    %742 = arith.mulf %739, %725 : vector<2x32xf32>
    %743 = arith.mulf %738, %740 : vector<2x32xf32>
    %744 = arith.addf %742, %743 : vector<2x32xf32>
    %745 = math.tanh %744 : vector<2x32xf32>
    %746 = arith.mulf %741, %745 : vector<2x32xf32>
    %cst_155 = arith.constant dense<0.000000e+00> : vector<2x128xf32>
    %747 = tpu.matmul %603, %643, %cst_155 {dimension_numbers = #tpu.dot_dimension_numbers<[1], [0], [0], [1], [0, 0, 1, 1], [], []>} : vector<2x32xf32>, vector<32x128xf32>, vector<2x128xf32> -> vector<2x128xf32>
    %748 = arith.addf %747, %649 : vector<2x128xf32>
    %cst_156 = arith.constant dense<0.000000e+00> : vector<2x128xf32>
    %749 = tpu.matmul %746, %645, %cst_156 {dimension_numbers = #tpu.dot_dimension_numbers<[1], [0], [0], [1], [0, 0, 1, 1], [], []>} : vector<2x32xf32>, vector<32x128xf32>, vector<2x128xf32> -> vector<2x128xf32>
    %750 = arith.addf %748, %749 : vector<2x128xf32>
    %751 = arith.negf %750 : vector<2x128xf32>
    %752 = math.exp %751 : vector<2x128xf32>
    %cst_157 = arith.constant 1.000000e+00 : f32
    %753 = vector.broadcast %cst_157 : f32 to vector<2x128xf32>
    %754 = arith.addf %753, %752 : vector<2x128xf32>
    %755 = arith.divf %753, %754 : vector<2x128xf32>
    %756 = math.tanh %750 : vector<2x128xf32>
    %757 = vector.extract_strided_slice %755 {offsets = [0, 0], sizes = [2, 32], strides = [1, 1]} : vector<2x128xf32> to vector<2x32xf32>
    %758 = vector.extract_strided_slice %755 {offsets = [0, 32], sizes = [2, 32], strides = [1, 1]} : vector<2x128xf32> to vector<2x32xf32>
    %759 = vector.extract_strided_slice %756 {offsets = [0, 64], sizes = [2, 32], strides = [1, 1]} : vector<2x128xf32> to vector<2x32xf32>
    %760 = vector.extract_strided_slice %755 {offsets = [0, 96], sizes = [2, 32], strides = [1, 1]} : vector<2x128xf32> to vector<2x32xf32>
    %761 = arith.mulf %758, %744 : vector<2x32xf32>
    %762 = arith.mulf %757, %759 : vector<2x32xf32>
    %763 = arith.addf %761, %762 : vector<2x32xf32>
    %764 = math.tanh %763 : vector<2x32xf32>
    %765 = arith.mulf %760, %764 : vector<2x32xf32>
    %cst_158 = arith.constant dense<0.000000e+00> : vector<2x128xf32>
    %766 = tpu.matmul %622, %643, %cst_158 {dimension_numbers = #tpu.dot_dimension_numbers<[1], [0], [0], [1], [0, 0, 1, 1], [], []>} : vector<2x32xf32>, vector<32x128xf32>, vector<2x128xf32> -> vector<2x128xf32>
    %767 = arith.addf %766, %649 : vector<2x128xf32>
    %cst_159 = arith.constant dense<0.000000e+00> : vector<2x128xf32>
    %768 = tpu.matmul %765, %645, %cst_159 {dimension_numbers = #tpu.dot_dimension_numbers<[1], [0], [0], [1], [0, 0, 1, 1], [], []>} : vector<2x32xf32>, vector<32x128xf32>, vector<2x128xf32> -> vector<2x128xf32>
    %769 = arith.addf %767, %768 : vector<2x128xf32>
    %770 = arith.negf %769 : vector<2x128xf32>
    %771 = math.exp %770 : vector<2x128xf32>
    %cst_160 = arith.constant 1.000000e+00 : f32
    %772 = vector.broadcast %cst_160 : f32 to vector<2x128xf32>
    %773 = arith.addf %772, %771 : vector<2x128xf32>
    %774 = arith.divf %772, %773 : vector<2x128xf32>
    %775 = math.tanh %769 : vector<2x128xf32>
    %776 = vector.extract_strided_slice %774 {offsets = [0, 0], sizes = [2, 32], strides = [1, 1]} : vector<2x128xf32> to vector<2x32xf32>
    %777 = vector.extract_strided_slice %774 {offsets = [0, 32], sizes = [2, 32], strides = [1, 1]} : vector<2x128xf32> to vector<2x32xf32>
    %778 = vector.extract_strided_slice %775 {offsets = [0, 64], sizes = [2, 32], strides = [1, 1]} : vector<2x128xf32> to vector<2x32xf32>
    %779 = vector.extract_strided_slice %774 {offsets = [0, 96], sizes = [2, 32], strides = [1, 1]} : vector<2x128xf32> to vector<2x32xf32>
    %780 = arith.mulf %777, %763 : vector<2x32xf32>
    %781 = arith.mulf %776, %778 : vector<2x32xf32>
    %782 = arith.addf %780, %781 : vector<2x32xf32>
    %783 = math.tanh %782 : vector<2x32xf32>
    %784 = arith.mulf %779, %783 : vector<2x32xf32>
    %cst_161 = arith.constant dense<0.000000e+00> : vector<2x128xf32>
    %785 = tpu.matmul %641, %643, %cst_161 {dimension_numbers = #tpu.dot_dimension_numbers<[1], [0], [0], [1], [0, 0, 1, 1], [], []>} : vector<2x32xf32>, vector<32x128xf32>, vector<2x128xf32> -> vector<2x128xf32>
    %786 = arith.addf %785, %649 : vector<2x128xf32>
    %cst_162 = arith.constant dense<0.000000e+00> : vector<2x128xf32>
    %787 = tpu.matmul %784, %645, %cst_162 {dimension_numbers = #tpu.dot_dimension_numbers<[1], [0], [0], [1], [0, 0, 1, 1], [], []>} : vector<2x32xf32>, vector<32x128xf32>, vector<2x128xf32> -> vector<2x128xf32>
    %788 = arith.addf %786, %787 : vector<2x128xf32>
    %789 = arith.negf %788 : vector<2x128xf32>
    %790 = math.exp %789 : vector<2x128xf32>
    %cst_163 = arith.constant 1.000000e+00 : f32
    %791 = vector.broadcast %cst_163 : f32 to vector<2x128xf32>
    %792 = arith.addf %791, %790 : vector<2x128xf32>
    %793 = arith.divf %791, %792 : vector<2x128xf32>
    %794 = math.tanh %788 : vector<2x128xf32>
    %795 = vector.extract_strided_slice %793 {offsets = [0, 0], sizes = [2, 32], strides = [1, 1]} : vector<2x128xf32> to vector<2x32xf32>
    %796 = vector.extract_strided_slice %793 {offsets = [0, 32], sizes = [2, 32], strides = [1, 1]} : vector<2x128xf32> to vector<2x32xf32>
    %797 = vector.extract_strided_slice %794 {offsets = [0, 64], sizes = [2, 32], strides = [1, 1]} : vector<2x128xf32> to vector<2x32xf32>
    %798 = vector.extract_strided_slice %793 {offsets = [0, 96], sizes = [2, 32], strides = [1, 1]} : vector<2x128xf32> to vector<2x32xf32>
    %799 = arith.mulf %796, %782 : vector<2x32xf32>
    %800 = arith.mulf %795, %797 : vector<2x32xf32>
    %801 = arith.addf %799, %800 : vector<2x32xf32>
    %802 = math.tanh %801 : vector<2x32xf32>
    %803 = arith.mulf %798, %802 : vector<2x32xf32>
    %804 = tpu.concatenate %155, %317, %479, %641, %803 in 0 : vector<2x32xf32>, vector<2x32xf32>, vector<2x32xf32>, vector<2x32xf32>, vector<2x32xf32> -> vector<10x32xf32>
    %cst_164 = arith.constant 0.000000e+00 : f32
    %805 = vector.broadcast %cst_164 : f32 to vector<10x32xf32>
    %806 = arith.maximumf %804, %805 : vector<10x32xf32>
    %c0_165 = arith.constant 0 : index
    %c0_166 = arith.constant 0 : index
    %807 = vector.load %arg4[%c0_165, %c0_166] : memref<32x128xf32, #tpu.memory_space<vmem>>, vector<32x128xf32>
    %cst_167 = arith.constant dense<0.000000e+00> : vector<10x128xf32>
    %808 = tpu.matmul %806, %807, %cst_167 {dimension_numbers = #tpu.dot_dimension_numbers<[1], [0], [0], [1], [0, 0, 1, 1], [], []>} : vector<10x32xf32>, vector<32x128xf32>, vector<10x128xf32> -> vector<10x128xf32>
    %c0_168 = arith.constant 0 : index
    %c0_169 = arith.constant 0 : index
    %809 = vector.load %arg5[%c0_168, %c0_169] : memref<1x128xf32, #tpu.memory_space<vmem>>, vector<1x128xf32>
    %810 = vector.broadcast %809 : vector<1x128xf32> to vector<10x128xf32>
    %811 = arith.addf %808, %810 : vector<10x128xf32>
    %cst_170 = arith.constant 0.000000e+00 : f32
    %812 = vector.broadcast %cst_170 : f32 to vector<10x128xf32>
    %813 = arith.maximumf %811, %812 : vector<10x128xf32>
    %c0_171 = arith.constant 0 : index
    %c0_172 = arith.constant 0 : index
    %814 = vector.load %arg6[%c0_171, %c0_172] : memref<128x128xf32, #tpu.memory_space<vmem>>, vector<128x128xf32>
    %cst_173 = arith.constant dense<0.000000e+00> : vector<10x128xf32>
    %815 = tpu.matmul %813, %814, %cst_173 {dimension_numbers = #tpu.dot_dimension_numbers<[1], [0], [0], [1], [0, 0, 1, 1], [], []>} : vector<10x128xf32>, vector<128x128xf32>, vector<10x128xf32> -> vector<10x128xf32>
    %c0_174 = arith.constant 0 : index
    %c0_175 = arith.constant 0 : index
    %816 = vector.load %arg7[%c0_174, %c0_175] : memref<1x128xf32, #tpu.memory_space<vmem>>, vector<1x128xf32>
    %817 = vector.broadcast %816 : vector<1x128xf32> to vector<10x128xf32>
    %818 = arith.addf %815, %817 : vector<10x128xf32>
    %c0_176 = arith.constant 0 : index
    %c0_177 = arith.constant 0 : index
    %819 = vector.load %arg8[%c0_176, %c0_177] : memref<10x128xf32, #tpu.memory_space<vmem>>, vector<10x128xf32>
    tpu.vector_store %arg8[%c0_176, %c0_177], %818 {strides = array<i32>} : memref<10x128xf32, #tpu.memory_space<vmem>>, vector<10x128xf32>,
    return
  }
}

</mosaic_0001>

<llo_original>
// kernel: lstm1_forward.1
$region0: #{lstm1_forward.1}
  #allocation0 [shape = 'u32[]', space=smem, size = 0x4, offset = 0x4, fixed_abs, tag = 'smem constant byte address 0x4 - core index']
  #allocation1 [shape = 'u32[144,128]{1,0:T(1,128)}', space=vmem, size = 0x12000, scoped, tag = 'internal scratch']
  %s0 = inlined_call_operand.vmem [shape: f32[16,32], index: 0, kind: input, shape index: {}]
  %s1 = inlined_call_operand.hbm [shape: f32[5,32,128], index: 1, kind: input, shape index: {}]
  %s2 = inlined_call_operand.hbm [shape: f32[5,32,128], index: 2, kind: input, shape index: {}]
  %s3 = inlined_call_operand.vmem [shape: f32[5,1,128], index: 3, kind: input, shape index: {}]
  %s4 = inlined_call_operand.vmem [shape: f32[32,128], index: 4, kind: input, shape index: {}]
  %s5 = inlined_call_operand.vmem [shape: f32[1,128], index: 5, kind: input, shape index: {}]
  %s6 = inlined_call_operand.hbm [shape: f32[128,128], index: 6, kind: input, shape index: {}]
  %s7 = inlined_call_operand.vmem [shape: f32[1,128], index: 7, kind: input, shape index: {}]
  %s8 = inlined_call_operand.hbm [shape: f32[10,128], index: 8, kind: output, shape index: {}]
  %s9 = sld [smem:[#allocation0]]
  $region54: #{lstm1_forward.1} parent=0
    _
  %s11 = ssub.s32 1, %s9
  %s12 = scalar_select 0, %s11, %s9
  $region1: #{lstm1_forward.1} parent=0
    #allocation2 [shape = 'u8[81920]{0}', space=vmem, size = 0x14000, scoped, tag = 'input window, operand 1, single buffered']
    #allocation3 [shape = 's32[1]{0}', space=sflag, size = 0x4, scoped, tag = 'scoped memory for lstm1_forward.1']
    #allocation4 [shape = 's32[1]{0}', space=sflag, size = 0x4, scoped, tag = 'scoped memory for lstm1_forward.1']
    #allocation5 [shape = 'u8[81920]{0}', space=vmem, size = 0x14000, scoped, tag = 'input window, operand 2, single buffered']
    #allocation6 [shape = 's32[1]{0}', space=sflag, size = 0x4, scoped, tag = 'scoped memory for lstm1_forward.1']
    #allocation7 [shape = 'u8[65536]{0}', space=vmem, size = 0x10000, scoped, tag = 'input window, operand 6, single buffered']
    #allocation8 [shape = 'u8[8192]{0}', space=vmem, size = 0x2000, scoped, tag = 'output window, operand 0, single buffered']
    %13 = vsyncpa [#allocation3], 0
    %14 = vsyncpa [#allocation6], 0
    %15 = vsyncpa [#allocation4], 0
    // Predicated region
    $region2: #{lstm1_forward.1} parent=1 // pred_check
      _
    $region3: #{lstm1_forward.1} parent=1 // pred_check_branch
      %17 = sbr.rel (0) target = $region5
    $region4: #{lstm1_forward.1} parent=1 // pred_region
      _
    $region5: #{lstm1_forward.1} parent=1 // pred_fallthru
      _
    // Predicated region
    $region6: #{lstm1_forward.1} parent=1 // pred_check
      _
    $region7: #{lstm1_forward.1} parent=1 // pred_check_branch
      %19 = sbr.rel (0) target = $region9
    $region8: #{lstm1_forward.1} parent=1 // pred_region
      %s21 = ssub.s32 2560, 2560
      %22 = vsyncadd [#allocation3], %s21
      %s23 = sshll.u32 [#allocation2], 4
      %s24 = int_to_ptr.vmem [resolvable:$true] %s23
      %29 = dma.hbm_to_vmem [thread:$0]  %s1, 2560, %s24, [#allocation3], 128, 128, 8
    $region9: #{lstm1_forward.1} parent=1 // pred_fallthru
      _
    // Predicated region
    $region10: #{lstm1_forward.1} parent=1 // pred_check
      _
    $region11: #{lstm1_forward.1} parent=1 // pred_check_branch
      %31 = sbr.rel (0) target = $region13
    $region12: #{lstm1_forward.1} parent=1 // pred_region
      %s33 = ssub.s32 2560, 2560
      %34 = vsyncadd [#allocation6], %s33
      %s35 = sshll.u32 [#allocation5], 4
      %s36 = int_to_ptr.vmem [resolvable:$true] %s35
      %41 = dma.hbm_to_vmem [thread:$0]  %s2, 2560, %s36, [#allocation6], 128, 128, 8
    $region13: #{lstm1_forward.1} parent=1 // pred_fallthru
      _
    // Predicated region
    $region14: #{lstm1_forward.1} parent=1 // pred_check
      _
    $region15: #{lstm1_forward.1} parent=1 // pred_check_branch
      %43 = sbr.rel (0) target = $region17
    $region16: #{lstm1_forward.1} parent=1 // pred_region
      _
    $region17: #{lstm1_forward.1} parent=1 // pred_fallthru
      _
    // Predicated region
    $region18: #{lstm1_forward.1} parent=1 // pred_check
      _
    $region19: #{lstm1_forward.1} parent=1 // pred_check_branch
      %45 = sbr.rel (0) target = $region21
    $region20: #{lstm1_forward.1} parent=1 // pred_region
      _
    $region21: #{lstm1_forward.1} parent=1 // pred_fallthru
      _
    // Predicated region
    $region22: #{lstm1_forward.1} parent=1 // pred_check
      _
    $region23: #{lstm1_forward.1} parent=1 // pred_check_branch
      %47 = sbr.rel (0) target = $region25
    $region24: #{lstm1_forward.1} parent=1 // pred_region
      _
    $region25: #{lstm1_forward.1} parent=1 // pred_fallthru
      _
    // Predicated region
    $region26: #{lstm1_forward.1} parent=1 // pred_check
      _
    $region27: #{lstm1_forward.1} parent=1 // pred_check_branch
      %49 = sbr.rel (0) target = $region29
    $region28: #{lstm1_forward.1} parent=1 // pred_region
      %s51 = ssub.s32 2048, 2048
      %52 = vsyncadd [#allocation6], %s51
      %s53 = sshll.u32 [#allocation7], 4
      %s54 = int_to_ptr.vmem [resolvable:$true] %s53
      %59 = dma.hbm_to_vmem [thread:$0]  %s6, 2048, %s54, [#allocation6], 128, 128, 8
    $region29: #{lstm1_forward.1} parent=1 // pred_fallthru
      _
    // Predicated region
    $region30: #{lstm1_forward.1} parent=1 // pred_check
      _
    $region31: #{lstm1_forward.1} parent=1 // pred_check_branch
      %61 = sbr.rel (0) target = $region33
    $region32: #{lstm1_forward.1} parent=1 // pred_region
      _
    $region33: #{lstm1_forward.1} parent=1 // pred_fallthru
      _
    // Predicated region
    $region34: #{lstm1_forward.1} parent=1 // pred_check
      _
    $region35: #{lstm1_forward.1} parent=1 // pred_check_branch
      %63 = sbr.rel (0) target = $region37
    $region36: #{lstm1_forward.1} parent=1 // pred_region
      %64 = dma.done [#allocation3], 2560
    $region37: #{lstm1_forward.1} parent=1 // pred_fallthru
      _
    // Predicated region
    $region38: #{lstm1_forward.1} parent=1 // pred_check
      _
    $region39: #{lstm1_forward.1} parent=1 // pred_check_branch
      %66 = sbr.rel (0) target = $region41
    $region40: #{lstm1_forward.1} parent=1 // pred_region
      %67 = dma.done [#allocation6], 2560
    $region41: #{lstm1_forward.1} parent=1 // pred_fallthru
      _
    // Predicated region
    $region42: #{lstm1_forward.1} parent=1 // pred_check
      _
    $region43: #{lstm1_forward.1} parent=1 // pred_check_branch
      %69 = sbr.rel (0) target = $region45
    $region44: #{lstm1_forward.1} parent=1 // pred_region
      %70 = dma.done [#allocation6], 2048
    $region45: #{lstm1_forward.1} parent=1 // pred_fallthru
      _
    %v71 = vld [vmem:[#allocation2] sm:$0xff]
    %v72 = vld [vmem:[#allocation2 + $0x8] sm:$0xff]
    %v73 = vld [vmem:[#allocation2 + $0x10] sm:$0xff]
    %v74 = vld [vmem:[#allocation2 + $0x18] sm:$0xff]
    %v75 = vld [vmem:[#allocation5] sm:$0xff]
    %v76 = vld [vmem:[#allocation5 + $0x8] sm:$0xff]
    %v77 = vld [vmem:[#allocation5 + $0x10] sm:$0xff]
    %v78 = vld [vmem:[#allocation5 + $0x18] sm:$0xff]
    %v79 = vld [vmem:[%s0] sm:$0xff]
    %v80 = vld [vmem:[%s0 + $0x8] sm:$0xff]
    %v81 = vld [vmem:[%s3] sm:$0x1]
    %v83 = vlaneseq
    %v84 = vshrl.u32 %v83, 7
    %v85 = vsub.s32 0, %v84
    %v86 = vrot.slane %v81, %v85
    %vm88 = vcmask 261120
    %v90 = vsel %vm88, %v79, 0
    %v93 = vsel %vm88, %v80, 0
    %95 = vmatprep.subr.mxu0 0.0
    %96 = vmatpush1.msra.mxu0 %v71
    %97 = vmatprep.subr.mxu0 0.0
    %98 = vmatpush1.msra.mxu0 %v72
    %99 = vmatprep.subr.mxu0 0.0
    %100 = vmatpush1.msra.mxu0 %v73
    %101 = vmatprep.subr.mxu0 0.0
    %102 = vmatpush1.msra.mxu0 %v74
    %103 = vmatprep.subr.mxu0 0.0
    %104 = vmatpush1.msra.mxu0 0.0
    %105 = vmatprep.subr.mxu0 0.0
    %106 = vmatpush1.msra.mxu0 0.0
    %107 = vmatprep.subr.mxu0 0.0
    %108 = vmatpush1.msra.mxu0 0.0
    %109 = vmatprep.subr.mxu0 0.0
    %110 = vmatpush1.msra.mxu0 0.0
    %111 = vmatprep.subr.mxu0 0.0
    %112 = vmatpush1.msra.mxu0 0.0
    %113 = vmatprep.subr.mxu0 0.0
    %114 = vmatpush1.msra.mxu0 0.0
    %115 = vmatprep.subr.mxu0 0.0
    %116 = vmatpush1.msra.mxu0 0.0
    %117 = vmatprep.subr.mxu0 0.0
    %118 = vmatpush1.msra.mxu0 0.0
    %119 = vmatprep.subr.mxu0 0.0
    %120 = vmatpush1.msra.mxu0 0.0
    %121 = vmatprep.subr.mxu0 0.0
    %122 = vmatpush1.msra.mxu0 0.0
    %123 = vmatprep.subr.mxu0 0.0
    %124 = vmatpush1.msra.mxu0 0.0
    %125 = vmatprep.subr.mxu0 0.0
    %126 = vmatpush1.msra.mxu0 0.0
    %127 = vmatprep.subr.mxu0 0.0
    %128 = vmatpush1.msra.mxu0 0.0
    %129 = vmatprep.subr.mxu0 0.0
    %130 = vmatpush1.msra.mxu0 0.0
    %131 = vmatprep.subr.mxu0 0.0
    %132 = vmatpush1.msra.mxu0 0.0
    %133 = vmatprep.subr.mxu0 0.0
    %134 = vmatpush1.msra.mxu0 0.0
    %135 = vmatprep.subr.mxu0 0.0
    %136 = vmatpush1.msra.mxu0 0.0
    %137 = vmatprep.subr.mxu0 0.0
    %138 = vmatpush1.msra.mxu0 0.0
    %139 = vmatprep.subr.mxu0 0.0
    %140 = vmatpush1.msra.mxu0 0.0
    %141 = vmatprep.subr.mxu0 0.0
    %142 = vmatpush1.msra.mxu0 0.0
    %143 = vmatprep.subr.mxu0 0.0
    %144 = vmatpush1.msra.mxu0 0.0
    %145 = vmatprep.subr.mxu0 0.0
    %146 = vmatpush1.msra.mxu0 0.0
    %147 = vmatprep.subr.mxu0 0.0
    %148 = vmatpush1.msra.mxu0 0.0
    %149 = vmatprep.subr.mxu0 0.0
    %150 = vmatpush1.msra.mxu0 0.0
    %151 = vmatprep.subr.mxu0 0.0
    %152 = vmatpush1.msra.mxu0 0.0
    %153 = vmatprep.subr.mxu0 0.0
    %154 = vmatpush1.msra.mxu0 0.0
    %155 = vmatprep.subr.mxu0 0.0
    %156 = vmatpush1.msra.mxu0 0.0
    %157 = vmatprep.subr.mxu0 0.0
    %158 = vmatpush1.msra.mxu0 0.0
    %159 = vmatprep.mubr.f32.mxu0 0.0
    %160 = vmatmul.mubr.f32.gmra.mrb[0].mxu0 %v90
    %v161 = vpop.f32.mrb[0].mxu0
    %v162 = vadd.f32 %v86, %v161
    %v163 = vpop.f32.mrb[0].mxu0
    %164 = vmatprep.mubr.f32.mxu0 0.0
    %165 = vmatmul.mubr.f32.gmra.mrb[0].mxu0 %v93
    %v166 = vpop.f32.mrb[0].mxu0
    %v167 = vadd.f32 %v86, %v166
    %v168 = vpop.f32.mrb[0].mxu0
    %169 = vdwg.mxu0
    %v171 = vsel %vm88, 0.0, 0
    %173 = vmatprep.subr.mxu0 0.0
    %174 = vmatpush1.msra.mxu0 %v75
    %175 = vmatprep.subr.mxu0 0.0
    %176 = vmatpush1.msra.mxu0 %v76
    %177 = vmatprep.subr.mxu0 0.0
    %178 = vmatpush1.msra.mxu0 %v77
    %179 = vmatprep.subr.mxu0 0.0
    %180 = vmatpush1.msra.mxu0 %v78
    %181 = vmatprep.subr.mxu0 0.0
    %182 = vmatpush1.msra.mxu0 0.0
    %183 = vmatprep.subr.mxu0 0.0
    %184 = vmatpush1.msra.mxu0 0.0
    %185 = vmatprep.subr.mxu0 0.0
    %186 = vmatpush1.msra.mxu0 0.0
    %187 = vmatprep.subr.mxu0 0.0
    %188 = vmatpush1.msra.mxu0 0.0
    %189 = vmatprep.subr.mxu0 0.0
    %190 = vmatpush1.msra.mxu0 0.0
    %191 = vmatprep.subr.mxu0 0.0
    %192 = vmatpush1.msra.mxu0 0.0
    %193 = vmatprep.subr.mxu0 0.0
    %194 = vmatpush1.msra.mxu0 0.0
    %195 = vmatprep.subr.mxu0 0.0
    %196 = vmatpush1.msra.mxu0 0.0
    %197 = vmatprep.subr.mxu0 0.0
    %198 = vmatpush1.msra.mxu0 0.0
    %199 = vmatprep.subr.mxu0 0.0
    %200 = vmatpush1.msra.mxu0 0.0
    %201 = vmatprep.subr.mxu0 0.0
    %202 = vmatpush1.msra.mxu0 0.0
    %203 = vmatprep.subr.mxu0 0.0
    %204 = vmatpush1.msra.mxu0 0.0
    %205 = vmatprep.subr.mxu0 0.0
    %206 = vmatpush1.msra.mxu0 0.0
    %207 = vmatprep.subr.mxu0 0.0
    %208 = vmatpush1.msra.mxu0 0.0
    %209 = vmatprep.subr.mxu0 0.0
    %210 = vmatpush1.msra.mxu0 0.0
    %211 = vmatprep.subr.mxu0 0.0
    %212 = vmatpush1.msra.mxu0 0.0
    %213 = vmatprep.subr.mxu0 0.0
    %214 = vmatpush1.msra.mxu0 0.0
    %215 = vmatprep.subr.mxu0 0.0
    %216 = vmatpush1.msra.mxu0 0.0
    %217 = vmatprep.subr.mxu0 0.0
    %218 = vmatpush1.msra.mxu0 0.0
    %219 = vmatprep.subr.mxu0 0.0
    %220 = vmatpush1.msra.mxu0 0.0
    %221 = vmatprep.subr.mxu0 0.0
    %222 = vmatpush1.msra.mxu0 0.0
    %223 = vmatprep.subr.mxu0 0.0
    %224 = vmatpush1.msra.mxu0 0.0
    %225 = vmatprep.subr.mxu0 0.0
    %226 = vmatpush1.msra.mxu0 0.0
    %227 = vmatprep.subr.mxu0 0.0
    %228 = vmatpush1.msra.mxu0 0.0
    %229 = vmatprep.subr.mxu0 0.0
    %230 = vmatpush1.msra.mxu0 0.0
    %231 = vmatprep.subr.mxu0 0.0
    %232 = vmatpush1.msra.mxu0 0.0
    %233 = vmatprep.subr.mxu0 0.0
    %234 = vmatpush1.msra.mxu0 0.0
    %235 = vmatprep.subr.mxu0 0.0
    %236 = vmatpush1.msra.mxu0 0.0
    %237 = vmatprep.mubr.f32.mxu0 0.0
    %238 = vmatmul.mubr.f32.gmra.mrb[0].mxu0 %v171
    %v239 = vpop.f32.mrb[0].mxu0
    %v240 = vadd.f32 0.0, %v239
    %v241 = vpop.f32.mrb[0].mxu0
    %242 = vdwg.mxu0
    %v243 = vadd.f32 %v162, %v240
    %v244 = vxor.u32 %v243, 2147483648
    %v245 = vmul.f32 %v244, 1.442695
    %v246 = vpow.pop %v245
    %v247 = vadd.f32 %v246, 1.0
    %v248 = vrcp.pop %v247
    %v249 = vmul.f32 1.0, %v248
    %v250 = vtanh.pop %v243
    %v251 = vmul.f32 %v249, 0.0
    %253 = vrot.lane.b32.xlu0 %v250, 64
    %v254 = vpop.permute.xlu0 %253
    %v256 = vmul.f32 %v249, %v254
    %258 = vrot.lane.b32.xlu0 %v256, 32
    %v259 = vpop.permute.xlu0 %258
    %v261 = vadd.f32 %v251, %v259
    %v262 = vtanh.pop %v261
    %264 = vrot.lane.b32.xlu0 %v262, 64
    %v265 = vpop.permute.xlu0 %264
    %v267 = vmul.f32 %v249, %v265
    %269 = vrot.lane.b32.xlu0 %v267, 32
    %v270 = vpop.permute.xlu0 %269
    %v271 = vsel %vm88, %v270, 0
    %273 = vmatprep.subr.mxu0 0.0
    %274 = vmatpush1.msra.mxu0 %v75
    %275 = vmatprep.subr.mxu0 0.0
    %276 = vmatpush1.msra.mxu0 %v76
    %277 = vmatprep.subr.mxu0 0.0
    %278 = vmatpush1.msra.mxu0 %v77
    %279 = vmatprep.subr.mxu0 0.0
    %280 = vmatpush1.msra.mxu0 %v78
    %281 = vmatprep.subr.mxu0 0.0
    %282 = vmatpush1.msra.mxu0 0.0
    %283 = vmatprep.subr.mxu0 0.0
    %284 = vmatpush1.msra.mxu0 0.0
    %285 = vmatprep.subr.mxu0 0.0
    %286 = vmatpush1.msra.mxu0 0.0
    %287 = vmatprep.subr.mxu0 0.0
    %288 = vmatpush1.msra.mxu0 0.0
    %289 = vmatprep.subr.mxu0 0.0
    %290 = vmatpush1.msra.mxu0 0.0
    %291 = vmatprep.subr.mxu0 0.0
    %292 = vmatpush1.msra.mxu0 0.0
    %293 = vmatprep.subr.mxu0 0.0
    %294 = vmatpush1.msra.mxu0 0.0
    %295 = vmatprep.subr.mxu0 0.0
    %296 = vmatpush1.msra.mxu0 0.0
    %297 = vmatprep.subr.mxu0 0.0
    %298 = vmatpush1.msra.mxu0 0.0
    %299 = vmatprep.subr.mxu0 0.0
    %300 = vmatpush1.msra.mxu0 0.0
    %301 = vmatprep.subr.mxu0 0.0
    %302 = vmatpush1.msra.mxu0 0.0
    %303 = vmatprep.subr.mxu0 0.0
    %304 = vmatpush1.msra.mxu0 0.0
    %305 = vmatprep.subr.mxu0 0.0
    %306 = vmatpush1.msra.mxu0 0.0
    %307 = vmatprep.subr.mxu0 0.0
    %308 = vmatpush1.msra.mxu0 0.0
    %309 = vmatprep.subr.mxu0 0.0
    %310 = vmatpush1.msra.mxu0 0.0
    %311 = vmatprep.subr.mxu0 0.0
    %312 = vmatpush1.msra.mxu0 0.0
    %313 = vmatprep.subr.mxu0 0.0
    %314 = vmatpush1.msra.mxu0 0.0
    %315 = vmatprep.subr.mxu0 0.0
    %316 = vmatpush1.msra.mxu0 0.0
    %317 = vmatprep.subr.mxu0 0.0
    %318 = vmatpush1.msra.mxu0 0.0
    %319 = vmatprep.subr.mxu0 0.0
    %320 = vmatpush1.msra.mxu0 0.0
    %321 = vmatprep.subr.mxu0 0.0
    %322 = vmatpush1.msra.mxu0 0.0
    %323 = vmatprep.subr.mxu0 0.0
    %324 = vmatpush1.msra.mxu0 0.0
    %325 = vmatprep.subr.mxu0 0.0
    %326 = vmatpush1.msra.mxu0 0.0
    %327 = vmatprep.subr.mxu0 0.0
    %328 = vmatpush1.msra.mxu0 0.0
    %329 = vmatprep.subr.mxu0 0.0
    %330 = vmatpush1.msra.mxu0 0.0
    %331 = vmatprep.subr.mxu0 0.0
    %332 = vmatpush1.msra.mxu0 0.0
    %333 = vmatprep.subr.mxu0 0.0
    %334 = vmatpush1.msra.mxu0 0.0
    %335 = vmatprep.subr.mxu0 0.0
    %336 = vmatpush1.msra.mxu0 0.0
    %337 = vmatprep.mubr.f32.mxu0 0.0
    %338 = vmatmul.mubr.f32.gmra.mrb[0].mxu0 %v271
    %v339 = vpop.f32.mrb[0].mxu0
    %v340 = vadd.f32 0.0, %v339
    %v341 = vpop.f32.mrb[0].mxu0
    %342 = vdwg.mxu0
    %v344 = vrot.slane %v340, 6
    %v346 = vadd.f32 %v162, %v344
    %v347 = vxor.u32 %v346, 2147483648
    %v348 = vmul.f32 %v347, 1.442695
    %v349 = vpow.pop %v348
    %v350 = vadd.f32 %v349, 1.0
    %v351 = vrcp.pop %v350
    %v352 = vmul.f32 1.0, %v351
    %v353 = vtanh.pop %v346
    %v355 = vrot.slane %v261, 6
    %v357 = vmul.f32 %v352, %v355
    %359 = vrot.lane.b32.xlu0 %v353, 64
    %v360 = vpop.permute.xlu0 %359
    %v362 = vmul.f32 %v352, %v360
    %364 = vrot.lane.b32.xlu0 %v362, 32
    %v365 = vpop.permute.xlu0 %364
    %v367 = vadd.f32 %v357, %v365
    %v368 = vtanh.pop %v367
    %370 = vrot.lane.b32.xlu0 %v368, 64
    %v371 = vpop.permute.xlu0 %370
    %v373 = vmul.f32 %v352, %v371
    %v375 = vrot.slane %v373, 2
    %376 = vrot.lane.b32.xlu0 %v375, 32
    %v377 = vpop.permute.xlu0 %376
    %v378 = vsel %vm88, %v377, 0
    %380 = vmatprep.subr.mxu0 0.0
    %381 = vmatpush1.msra.mxu0 %v75
    %382 = vmatprep.subr.mxu0 0.0
    %383 = vmatpush1.msra.mxu0 %v76
    %384 = vmatprep.subr.mxu0 0.0
    %385 = vmatpush1.msra.mxu0 %v77
    %386 = vmatprep.subr.mxu0 0.0
    %387 = vmatpush1.msra.mxu0 %v78
    %388 = vmatprep.subr.mxu0 0.0
    %389 = vmatpush1.msra.mxu0 0.0
    %390 = vmatprep.subr.mxu0 0.0
    %391 = vmatpush1.msra.mxu0 0.0
    %392 = vmatprep.subr.mxu0 0.0
    %393 = vmatpush1.msra.mxu0 0.0
    %394 = vmatprep.subr.mxu0 0.0
    %395 = vmatpush1.msra.mxu0 0.0
    %396 = vmatprep.subr.mxu0 0.0
    %397 = vmatpush1.msra.mxu0 0.0
    %398 = vmatprep.subr.mxu0 0.0
    %399 = vmatpush1.msra.mxu0 0.0
    %400 = vmatprep.subr.mxu0 0.0
    %401 = vmatpush1.msra.mxu0 0.0
    %402 = vmatprep.subr.mxu0 0.0
    %403 = vmatpush1.msra.mxu0 0.0
    %404 = vmatprep.subr.mxu0 0.0
    %405 = vmatpush1.msra.mxu0 0.0
    %406 = vmatprep.subr.mxu0 0.0
    %407 = vmatpush1.msra.mxu0 0.0
    %408 = vmatprep.subr.mxu0 0.0
    %409 = vmatpush1.msra.mxu0 0.0
    %410 = vmatprep.subr.mxu0 0.0
    %411 = vmatpush1.msra.mxu0 0.0
    %412 = vmatprep.subr.mxu0 0.0
    %413 = vmatpush1.msra.mxu0 0.0
    %414 = vmatprep.subr.mxu0 0.0
    %415 = vmatpush1.msra.mxu0 0.0
    %416 = vmatprep.subr.mxu0 0.0
    %417 = vmatpush1.msra.mxu0 0.0
    %418 = vmatprep.subr.mxu0 0.0
    %419 = vmatpush1.msra.mxu0 0.0
    %420 = vmatprep.subr.mxu0 0.0
    %421 = vmatpush1.msra.mxu0 0.0
    %422 = vmatprep.subr.mxu0 0.0
    %423 = vmatpush1.msra.mxu0 0.0
    %424 = vmatprep.subr.mxu0 0.0
    %425 = vmatpush1.msra.mxu0 0.0
    %426 = vmatprep.subr.mxu0 0.0
    %427 = vmatpush1.msra.mxu0 0.0
    %428 = vmatprep.subr.mxu0 0.0
    %429 = vmatpush1.msra.mxu0 0.0
    %430 = vmatprep.subr.mxu0 0.0
    %431 = vmatpush1.msra.mxu0 0.0
    %432 = vmatprep.subr.mxu0 0.0
    %433 = vmatpush1.msra.mxu0 0.0
    %434 = vmatprep.subr.mxu0 0.0
    %435 = vmatpush1.msra.mxu0 0.0
    %436 = vmatprep.subr.mxu0 0.0
    %437 = vmatpush1.msra.mxu0 0.0
    %438 = vmatprep.subr.mxu0 0.0
    %439 = vmatpush1.msra.mxu0 0.0
    %440 = vmatprep.subr.mxu0 0.0
    %441 = vmatpush1.msra.mxu0 0.0
    %442 = vmatprep.subr.mxu0 0.0
    %443 = vmatpush1.msra.mxu0 0.0
    %444 = vmatprep.mubr.f32.mxu0 0.0
    %445 = vmatmul.mubr.f32.gmra.mrb[0].mxu0 %v378
    %v446 = vpop.f32.mrb[0].mxu0
    %v447 = vadd.f32 0.0, %v446
    %v448 = vpop.f32.mrb[0].mxu0
    %449 = vdwg.mxu0
    %v451 = vrot.slane %v447, 4
    %v453 = vadd.f32 %v162, %v451
    %v454 = vxor.u32 %v453, 2147483648
    %v455 = vmul.f32 %v454, 1.442695
    %v456 = vpow.pop %v455
    %v457 = vadd.f32 %v456, 1.0
    %v458 = vrcp.pop %v457
    %v459 = vmul.f32 1.0, %v458
    %v460 = vtanh.pop %v453
    %v462 = vrot.slane %v367, 6
    %v464 = vmul.f32 %v459, %v462
    %466 = vrot.lane.b32.xlu0 %v460, 64
    %v467 = vpop.permute.xlu0 %466
    %v469 = vmul.f32 %v459, %v467
    %471 = vrot.lane.b32.xlu0 %v469, 32
    %v472 = vpop.permute.xlu0 %471
    %v474 = vadd.f32 %v464, %v472
    %v475 = vtanh.pop %v474
    %477 = vrot.lane.b32.xlu0 %v475, 64
    %v478 = vpop.permute.xlu0 %477
    %v480 = vmul.f32 %v459, %v478
    %v482 = vrot.slane %v480, 4
    %483 = vrot.lane.b32.xlu0 %v482, 32
    %v484 = vpop.permute.xlu0 %483
    %v485 = vsel %vm88, %v484, 0
    %487 = vmatprep.subr.mxu0 0.0
    %488 = vmatpush1.msra.mxu0 %v75
    %489 = vmatprep.subr.mxu0 0.0
    %490 = vmatpush1.msra.mxu0 %v76
    %491 = vmatprep.subr.mxu0 0.0
    %492 = vmatpush1.msra.mxu0 %v77
    %493 = vmatprep.subr.mxu0 0.0
    %494 = vmatpush1.msra.mxu0 %v78
    %495 = vmatprep.subr.mxu0 0.0
    %496 = vmatpush1.msra.mxu0 0.0
    %497 = vmatprep.subr.mxu0 0.0
    %498 = vmatpush1.msra.mxu0 0.0
    %499 = vmatprep.subr.mxu0 0.0
    %500 = vmatpush1.msra.mxu0 0.0
    %501 = vmatprep.subr.mxu0 0.0
    %502 = vmatpush1.msra.mxu0 0.0
    %503 = vmatprep.subr.mxu0 0.0
    %504 = vmatpush1.msra.mxu0 0.0
    %505 = vmatprep.subr.mxu0 0.0
    %506 = vmatpush1.msra.mxu0 0.0
    %507 = vmatprep.subr.mxu0 0.0
    %508 = vmatpush1.msra.mxu0 0.0
    %509 = vmatprep.subr.mxu0 0.0
    %510 = vmatpush1.msra.mxu0 0.0
    %511 = vmatprep.subr.mxu0 0.0
    %512 = vmatpush1.msra.mxu0 0.0
    %513 = vmatprep.subr.mxu0 0.0
    %514 = vmatpush1.msra.mxu0 0.0
    %515 = vmatprep.subr.mxu0 0.0
    %516 = vmatpush1.msra.mxu0 0.0
    %517 = vmatprep.subr.mxu0 0.0
    %518 = vmatpush1.msra.mxu0 0.0
    %519 = vmatprep.subr.mxu0 0.0
    %520 = vmatpush1.msra.mxu0 0.0
    %521 = vmatprep.subr.mxu0 0.0
    %522 = vmatpush1.msra.mxu0 0.0
    %523 = vmatprep.subr.mxu0 0.0
    %524 = vmatpush1.msra.mxu0 0.0
    %525 = vmatprep.subr.mxu0 0.0
    %526 = vmatpush1.msra.mxu0 0.0
    %527 = vmatprep.subr.mxu0 0.0
    %528 = vmatpush1.msra.mxu0 0.0
    %529 = vmatprep.subr.mxu0 0.0
    %530 = vmatpush1.msra.mxu0 0.0
    %531 = vmatprep.subr.mxu0 0.0
    %532 = vmatpush1.msra.mxu0 0.0
    %533 = vmatprep.subr.mxu0 0.0
    %534 = vmatpush1.msra.mxu0 0.0
    %535 = vmatprep.subr.mxu0 0.0
    %536 = vmatpush1.msra.mxu0 0.0
    %537 = vmatprep.subr.mxu0 0.0
    %538 = vmatpush1.msra.mxu0 0.0
    %539 = vmatprep.subr.mxu0 0.0
    %540 = vmatpush1.msra.mxu0 0.0
    %541 = vmatprep.subr.mxu0 0.0
    %542 = vmatpush1.msra.mxu0 0.0
    %543 = vmatprep.subr.mxu0 0.0
    %544 = vmatpush1.msra.mxu0 0.0
    %545 = vmatprep.subr.mxu0 0.0
    %546 = vmatpush1.msra.mxu0 0.0
    %547 = vmatprep.subr.mxu0 0.0
    %548 = vmatpush1.msra.mxu0 0.0
    %549 = vmatprep.subr.mxu0 0.0
    %550 = vmatpush1.msra.mxu0 0.0
    %551 = vmatprep.mubr.f32.mxu0 0.0
    %552 = vmatmul.mubr.f32.gmra.mrb[0].mxu0 %v485
    %v553 = vpop.f32.mrb[0].mxu0
    %v554 = vadd.f32 0.0, %v553
    %v555 = vpop.f32.mrb[0].mxu0
    %556 = vdwg.mxu0
    %v558 = vrot.slane %v554, 2
    %v560 = vadd.f32 %v162, %v558
    %v561 = vxor.u32 %v560, 2147483648
    %v562 = vmul.f32 %v561, 1.442695
    %v563 = vpow.pop %v562
    %v564 = vadd.f32 %v563, 1.0
    %v565 = vrcp.pop %v564
    %v566 = vmul.f32 1.0, %v565
    %v567 = vtanh.pop %v560
    %v569 = vrot.slane %v474, 6
    %v571 = vmul.f32 %v566, %v569
    %573 = vrot.lane.b32.xlu0 %v567, 64
    %v574 = vpop.permute.xlu0 %573
    %v576 = vmul.f32 %v566, %v574
    %578 = vrot.lane.b32.xlu0 %v576, 32
    %v579 = vpop.permute.xlu0 %578
    %v581 = vadd.f32 %v571, %v579
    %v582 = vtanh.pop %v581
    %584 = vrot.lane.b32.xlu0 %v582, 64
    %v585 = vpop.permute.xlu0 %584
    %v587 = vmul.f32 %v566, %v585
    %v589 = vrot.slane %v587, 6
    %590 = vrot.lane.b32.xlu0 %v589, 32
    %v591 = vpop.permute.xlu0 %590
    %v592 = vsel %vm88, %v591, 0
    %594 = vmatprep.subr.mxu0 0.0
    %595 = vmatpush1.msra.mxu0 %v75
    %596 = vmatprep.subr.mxu0 0.0
    %597 = vmatpush1.msra.mxu0 %v76
    %598 = vmatprep.subr.mxu0 0.0
    %599 = vmatpush1.msra.mxu0 %v77
    %600 = vmatprep.subr.mxu0 0.0
    %601 = vmatpush1.msra.mxu0 %v78
    %602 = vmatprep.subr.mxu0 0.0
    %603 = vmatpush1.msra.mxu0 0.0
    %604 = vmatprep.subr.mxu0 0.0
    %605 = vmatpush1.msra.mxu0 0.0
    %606 = vmatprep.subr.mxu0 0.0
    %607 = vmatpush1.msra.mxu0 0.0
    %608 = vmatprep.subr.mxu0 0.0
    %609 = vmatpush1.msra.mxu0 0.0
    %610 = vmatprep.subr.mxu0 0.0
    %611 = vmatpush1.msra.mxu0 0.0
    %612 = vmatprep.subr.mxu0 0.0
    %613 = vmatpush1.msra.mxu0 0.0
    %614 = vmatprep.subr.mxu0 0.0
    %615 = vmatpush1.msra.mxu0 0.0
    %616 = vmatprep.subr.mxu0 0.0
    %617 = vmatpush1.msra.mxu0 0.0
    %618 = vmatprep.subr.mxu0 0.0
    %619 = vmatpush1.msra.mxu0 0.0
    %620 = vmatprep.subr.mxu0 0.0
    %621 = vmatpush1.msra.mxu0 0.0
    %622 = vmatprep.subr.mxu0 0.0
    %623 = vmatpush1.msra.mxu0 0.0
    %624 = vmatprep.subr.mxu0 0.0
    %625 = vmatpush1.msra.mxu0 0.0
    %626 = vmatprep.subr.mxu0 0.0
    %627 = vmatpush1.msra.mxu0 0.0
    %628 = vmatprep.subr.mxu0 0.0
    %629 = vmatpush1.msra.mxu0 0.0
    %630 = vmatprep.subr.mxu0 0.0
    %631 = vmatpush1.msra.mxu0 0.0
    %632 = vmatprep.subr.mxu0 0.0
    %633 = vmatpush1.msra.mxu0 0.0
    %634 = vmatprep.subr.mxu0 0.0
    %635 = vmatpush1.msra.mxu0 0.0
    %636 = vmatprep.subr.mxu0 0.0
    %637 = vmatpush1.msra.mxu0 0.0
    %638 = vmatprep.subr.mxu0 0.0
    %639 = vmatpush1.msra.mxu0 0.0
    %640 = vmatprep.subr.mxu0 0.0
    %641 = vmatpush1.msra.mxu0 0.0
    %642 = vmatprep.subr.mxu0 0.0
    %643 = vmatpush1.msra.mxu0 0.0
    %644 = vmatprep.subr.mxu0 0.0
    %645 = vmatpush1.msra.mxu0 0.0
    %646 = vmatprep.subr.mxu0 0.0
    %647 = vmatpush1.msra.mxu0 0.0
    %648 = vmatprep.subr.mxu0 0.0
    %649 = vmatpush1.msra.mxu0 0.0
    %650 = vmatprep.subr.mxu0 0.0
    %651 = vmatpush1.msra.mxu0 0.0
    %652 = vmatprep.subr.mxu0 0.0
    %653 = vmatpush1.msra.mxu0 0.0
    %654 = vmatprep.subr.mxu0 0.0
    %655 = vmatpush1.msra.mxu0 0.0
    %656 = vmatprep.subr.mxu0 0.0
    %657 = vmatpush1.msra.mxu0 0.0
    %658 = vmatprep.mubr.f32.mxu0 0.0
    %659 = vmatmul.mubr.f32.gmra.mrb[0].mxu0 %v592
    %v660 = vpop.f32.mrb[0].mxu0
    %v661 = vadd.f32 0.0, %v660
    %v662 = vpop.f32.mrb[0].mxu0
    %663 = vdwg.mxu0
    %v664 = vadd.f32 %v167, %v661
    %v665 = vxor.u32 %v664, 2147483648
    %v666 = vmul.f32 %v665, 1.442695
    %v667 = vpow.pop %v666
    %v668 = vadd.f32 %v667, 1.0
    %v669 = vrcp.pop %v668
    %v670 = vmul.f32 1.0, %v669
    %v671 = vtanh.pop %v664
    %v673 = vrot.slane %v581, 6
    %v675 = vmul.f32 %v670, %v673
    %677 = vrot.lane.b32.xlu0 %v671, 64
    %v678 = vpop.permute.xlu0 %677
    %v680 = vmul.f32 %v670, %v678
    %682 = vrot.lane.b32.xlu0 %v680, 32
    %v683 = vpop.permute.xlu0 %682
    %v685 = vadd.f32 %v675, %v683
    %v686 = vtanh.pop %v685
    %688 = vrot.lane.b32.xlu0 %v686, 64
    %v689 = vpop.permute.xlu0 %688
    %v691 = vmul.f32 %v670, %v689
    %693 = vrot.lane.b32.xlu0 %v691, 32
    %v694 = vpop.permute.xlu0 %693
    %v695 = vsel %vm88, %v694, 0
    %697 = vmatprep.subr.mxu0 0.0
    %698 = vmatpush1.msra.mxu0 %v75
    %699 = vmatprep.subr.mxu0 0.0
    %700 = vmatpush1.msra.mxu0 %v76
    %701 = vmatprep.subr.mxu0 0.0
    %702 = vmatpush1.msra.mxu0 %v77
    %703 = vmatprep.subr.mxu0 0.0
    %704 = vmatpush1.msra.mxu0 %v78
    %705 = vmatprep.subr.mxu0 0.0
    %706 = vmatpush1.msra.mxu0 0.0
    %707 = vmatprep.subr.mxu0 0.0
    %708 = vmatpush1.msra.mxu0 0.0
    %709 = vmatprep.subr.mxu0 0.0
    %710 = vmatpush1.msra.mxu0 0.0
    %711 = vmatprep.subr.mxu0 0.0
    %712 = vmatpush1.msra.mxu0 0.0
    %713 = vmatprep.subr.mxu0 0.0
    %714 = vmatpush1.msra.mxu0 0.0
    %715 = vmatprep.subr.mxu0 0.0
    %716 = vmatpush1.msra.mxu0 0.0
    %717 = vmatprep.subr.mxu0 0.0
    %718 = vmatpush1.msra.mxu0 0.0
    %719 = vmatprep.subr.mxu0 0.0
    %720 = vmatpush1.msra.mxu0 0.0
    %721 = vmatprep.subr.mxu0 0.0
    %722 = vmatpush1.msra.mxu0 0.0
    %723 = vmatprep.subr.mxu0 0.0
    %724 = vmatpush1.msra.mxu0 0.0
    %725 = vmatprep.subr.mxu0 0.0
    %726 = vmatpush1.msra.mxu0 0.0
    %727 = vmatprep.subr.mxu0 0.0
    %728 = vmatpush1.msra.mxu0 0.0
    %729 = vmatprep.subr.mxu0 0.0
    %730 = vmatpush1.msra.mxu0 0.0
    %731 = vmatprep.subr.mxu0 0.0
    %732 = vmatpush1.msra.mxu0 0.0
    %733 = vmatprep.subr.mxu0 0.0
    %734 = vmatpush1.msra.mxu0 0.0
    %735 = vmatprep.subr.mxu0 0.0
    %736 = vmatpush1.msra.mxu0 0.0
    %737 = vmatprep.subr.mxu0 0.0
    %738 = vmatpush1.msra.mxu0 0.0
    %739 = vmatprep.subr.mxu0 0.0
    %740 = vmatpush1.msra.mxu0 0.0
    %741 = vmatprep.subr.mxu0 0.0
    %742 = vmatpush1.msra.mxu0 0.0
    %743 = vmatprep.subr.mxu0 0.0
    %744 = vmatpush1.msra.mxu0 0.0
    %745 = vmatprep.subr.mxu0 0.0
    %746 = vmatpush1.msra.mxu0 0.0
    %747 = vmatprep.subr.mxu0 0.0
    %748 = vmatpush1.msra.mxu0 0.0
    %749 = vmatprep.subr.mxu0 0.0
    %750 = vmatpush1.msra.mxu0 0.0
    %751 = vmatprep.subr.mxu0 0.0
    %752 = vmatpush1.msra.mxu0 0.0
    %753 = vmatprep.subr.mxu0 0.0
    %754 = vmatpush1.msra.mxu0 0.0
    %755 = vmatprep.subr.mxu0 0.0
    %756 = vmatpush1.msra.mxu0 0.0
    %757 = vmatprep.subr.mxu0 0.0
    %758 = vmatpush1.msra.mxu0 0.0
    %759 = vmatprep.subr.mxu0 0.0
    %760 = vmatpush1.msra.mxu0 0.0
    %761 = vmatprep.mubr.f32.mxu0 0.0
    %762 = vmatmul.mubr.f32.gmra.mrb[0].mxu0 %v695
    %v763 = vpop.f32.mrb[0].mxu0
    %v764 = vadd.f32 0.0, %v763
    %v765 = vpop.f32.mrb[0].mxu0
    %766 = vdwg.mxu0
    %v768 = vrot.slane %v764, 6
    %v770 = vadd.f32 %v167, %v768
    %v771 = vxor.u32 %v770, 2147483648
    %v772 = vmul.f32 %v771, 1.442695
    %v773 = vpow.pop %v772
    %v774 = vadd.f32 %v773, 1.0
    %v775 = vrcp.pop %v774
    %v776 = vmul.f32 1.0, %v775
    %v777 = vtanh.pop %v770
    %v779 = vrot.slane %v685, 6
    %v781 = vmul.f32 %v776, %v779
    %783 = vrot.lane.b32.xlu0 %v777, 64
    %v784 = vpop.permute.xlu0 %783
    %v786 = vmul.f32 %v776, %v784
    %788 = vrot.lane.b32.xlu0 %v786, 32
    %v789 = vpop.permute.xlu0 %788
    %v791 = vadd.f32 %v781, %v789
    %v792 = vtanh.pop %v791
    %794 = vrot.lane.b32.xlu0 %v792, 64
    %v795 = vpop.permute.xlu0 %794
    %v797 = vmul.f32 %v776, %v795
    %v799 = vrot.slane %v797, 2
    %800 = vrot.lane.b32.xlu0 %v799, 32
    %v801 = vpop.permute.xlu0 %800
    %v802 = vsel %vm88, %v801, 0
    %804 = vmatprep.subr.mxu0 0.0
    %805 = vmatpush1.msra.mxu0 %v75
    %806 = vmatprep.subr.mxu0 0.0
    %807 = vmatpush1.msra.mxu0 %v76
    %808 = vmatprep.subr.mxu0 0.0
    %809 = vmatpush1.msra.mxu0 %v77
    %810 = vmatprep.subr.mxu0 0.0
    %811 = vmatpush1.msra.mxu0 %v78
    %812 = vmatprep.subr.mxu0 0.0
    %813 = vmatpush1.msra.mxu0 0.0
    %814 = vmatprep.subr.mxu0 0.0
    %815 = vmatpush1.msra.mxu0 0.0
    %816 = vmatprep.subr.mxu0 0.0
    %817 = vmatpush1.msra.mxu0 0.0
    %818 = vmatprep.subr.mxu0 0.0
    %819 = vmatpush1.msra.mxu0 0.0
    %820 = vmatprep.subr.mxu0 0.0
    %821 = vmatpush1.msra.mxu0 0.0
    %822 = vmatprep.subr.mxu0 0.0
    %823 = vmatpush1.msra.mxu0 0.0
    %824 = vmatprep.subr.mxu0 0.0
    %825 = vmatpush1.msra.mxu0 0.0
    %826 = vmatprep.subr.mxu0 0.0
    %827 = vmatpush1.msra.mxu0 0.0
    %828 = vmatprep.subr.mxu0 0.0
    %829 = vmatpush1.msra.mxu0 0.0
    %830 = vmatprep.subr.mxu0 0.0
    %831 = vmatpush1.msra.mxu0 0.0
    %832 = vmatprep.subr.mxu0 0.0
    %833 = vmatpush1.msra.mxu0 0.0
    %834 = vmatprep.subr.mxu0 0.0
    %835 = vmatpush1.msra.mxu0 0.0
    %836 = vmatprep.subr.mxu0 0.0
    %837 = vmatpush1.msra.mxu0 0.0
    %838 = vmatprep.subr.mxu0 0.0
    %839 = vmatpush1.msra.mxu0 0.0
    %840 = vmatprep.subr.mxu0 0.0
    %841 = vmatpush1.msra.mxu0 0.0
    %842 = vmatprep.subr.mxu0 0.0
    %843 = vmatpush1.msra.mxu0 0.0
    %844 = vmatprep.subr.mxu0 0.0
    %845 = vmatpush1.msra.mxu0 0.0
    %846 = vmatprep.subr.mxu0 0.0
    %847 = vmatpush1.msra.mxu0 0.0
    %848 = vmatprep.subr.mxu0 0.0
    %849 = vmatpush1.msra.mxu0 0.0
    %850 = vmatprep.subr.mxu0 0.0
    %851 = vmatpush1.msra.mxu0 0.0
    %852 = vmatprep.subr.mxu0 0.0
    %853 = vmatpush1.msra.mxu0 0.0
    %854 = vmatprep.subr.mxu0 0.0
    %855 = vmatpush1.msra.mxu0 0.0
    %856 = vmatprep.subr.mxu0 0.0
    %857 = vmatpush1.msra.mxu0 0.0
    %858 = vmatprep.subr.mxu0 0.0
    %859 = vmatpush1.msra.mxu0 0.0
    %860 = vmatprep.subr.mxu0 0.0
    %861 = vmatpush1.msra.mxu0 0.0
    %862 = vmatprep.subr.mxu0 0.0
    %863 = vmatpush1.msra.mxu0 0.0
    %864 = vmatprep.subr.mxu0 0.0
    %865 = vmatpush1.msra.mxu0 0.0
    %866 = vmatprep.subr.mxu0 0.0
    %867 = vmatpush1.msra.mxu0 0.0
    %868 = vmatprep.mubr.f32.mxu0 0.0
    %869 = vmatmul.mubr.f32.gmra.mrb[0].mxu0 %v802
    %v870 = vpop.f32.mrb[0].mxu0
    %v871 = vadd.f32 0.0, %v870
    %v872 = vpop.f32.mrb[0].mxu0
    %873 = vdwg.mxu0
    %v875 = vrot.slane %v871, 4
    %v877 = vadd.f32 %v167, %v875
    %v878 = vxor.u32 %v877, 2147483648
    %v879 = vmul.f32 %v878, 1.442695
    %v880 = vpow.pop %v879
    %v881 = vadd.f32 %v880, 1.0
    %v882 = vrcp.pop %v881
    %v883 = vmul.f32 1.0, %v882
    %v884 = vtanh.pop %v877
    %v886 = vrot.slane %v791, 6
    %v888 = vmul.f32 %v883, %v886
    %890 = vrot.lane.b32.xlu0 %v884, 64
    %v891 = vpop.permute.xlu0 %890
    %v893 = vmul.f32 %v883, %v891
    %895 = vrot.lane.b32.xlu0 %v893, 32
    %v896 = vpop.permute.xlu0 %895
    %v898 = vadd.f32 %v888, %v896
    %v899 = vtanh.pop %v898
    %901 = vrot.lane.b32.xlu0 %v899, 64
    %v902 = vpop.permute.xlu0 %901
    %v904 = vmul.f32 %v883, %v902
    %v906 = vrot.slane %v904, 4
    %907 = vrot.lane.b32.xlu0 %v906, 32
    %v908 = vpop.permute.xlu0 %907
    %v909 = vsel %vm88, %v908, 0
    %911 = vmatprep.subr.mxu0 0.0
    %912 = vmatpush1.msra.mxu0 %v75
    %913 = vmatprep.subr.mxu0 0.0
    %914 = vmatpush1.msra.mxu0 %v76
    %915 = vmatprep.subr.mxu0 0.0
    %916 = vmatpush1.msra.mxu0 %v77
    %917 = vmatprep.subr.mxu0 0.0
    %918 = vmatpush1.msra.mxu0 %v78
    %919 = vmatprep.subr.mxu0 0.0
    %920 = vmatpush1.msra.mxu0 0.0
    %921 = vmatprep.subr.mxu0 0.0
    %922 = vmatpush1.msra.mxu0 0.0
    %923 = vmatprep.subr.mxu0 0.0
    %924 = vmatpush1.msra.mxu0 0.0
    %925 = vmatprep.subr.mxu0 0.0
    %926 = vmatpush1.msra.mxu0 0.0
    %927 = vmatprep.subr.mxu0 0.0
    %928 = vmatpush1.msra.mxu0 0.0
    %929 = vmatprep.subr.mxu0 0.0
    %930 = vmatpush1.msra.mxu0 0.0
    %931 = vmatprep.subr.mxu0 0.0
    %932 = vmatpush1.msra.mxu0 0.0
    %933 = vmatprep.subr.mxu0 0.0
    %934 = vmatpush1.msra.mxu0 0.0
    %935 = vmatprep.subr.mxu0 0.0
    %936 = vmatpush1.msra.mxu0 0.0
    %937 = vmatprep.subr.mxu0 0.0
    %938 = vmatpush1.msra.mxu0 0.0
    %939 = vmatprep.subr.mxu0 0.0
    %940 = vmatpush1.msra.mxu0 0.0
    %941 = vmatprep.subr.mxu0 0.0
    %942 = vmatpush1.msra.mxu0 0.0
    %943 = vmatprep.subr.mxu0 0.0
    %944 = vmatpush1.msra.mxu0 0.0
    %945 = vmatprep.subr.mxu0 0.0
    %946 = vmatpush1.msra.mxu0 0.0
    %947 = vmatprep.subr.mxu0 0.0
    %948 = vmatpush1.msra.mxu0 0.0
    %949 = vmatprep.subr.mxu0 0.0
    %950 = vmatpush1.msra.mxu0 0.0
    %951 = vmatprep.subr.mxu0 0.0
    %952 = vmatpush1.msra.mxu0 0.0
    %953 = vmatprep.subr.mxu0 0.0
    %954 = vmatpush1.msra.mxu0 0.0
    %955 = vmatprep.subr.mxu0 0.0
    %956 = vmatpush1.msra.mxu0 0.0
    %957 = vmatprep.subr.mxu0 0.0
    %958 = vmatpush1.msra.mxu0 0.0
    %959 = vmatprep.subr.mxu0 0.0
    %960 = vmatpush1.msra.mxu0 0.0
    %961 = vmatprep.subr.mxu0 0.0
    %962 = vmatpush1.msra.mxu0 0.0
    %963 = vmatprep.subr.mxu0 0.0
    %964 = vmatpush1.msra.mxu0 0.0
    %965 = vmatprep.subr.mxu0 0.0
    %966 = vmatpush1.msra.mxu0 0.0
    %967 = vmatprep.subr.mxu0 0.0
    %968 = vmatpush1.msra.mxu0 0.0
    %969 = vmatprep.subr.mxu0 0.0
    %970 = vmatpush1.msra.mxu0 0.0
    %971 = vmatprep.subr.mxu0 0.0
    %972 = vmatpush1.msra.mxu0 0.0
    %973 = vmatprep.subr.mxu0 0.0
    %974 = vmatpush1.msra.mxu0 0.0
    %975 = vmatprep.mubr.f32.mxu0 0.0
    %976 = vmatmul.mubr.f32.gmra.mrb[0].mxu0 %v909
    %v977 = vpop.f32.mrb[0].mxu0
    %v978 = vadd.f32 0.0, %v977
    %v979 = vpop.f32.mrb[0].mxu0
    %980 = vdwg.mxu0
    %v982 = vrot.slane %v978, 2
    %v984 = vadd.f32 %v167, %v982
    %v985 = vxor.u32 %v984, 2147483648
    %v986 = vmul.f32 %v985, 1.442695
    %v987 = vpow.pop %v986
    %v988 = vadd.f32 %v987, 1.0
    %v989 = vrcp.pop %v988
    %v990 = vmul.f32 1.0, %v989
    %v991 = vtanh.pop %v984
    %v993 = vrot.slane %v898, 6
    %v995 = vmul.f32 %v990, %v993
    %997 = vrot.lane.b32.xlu0 %v991, 64
    %v998 = vpop.permute.xlu0 %997
    %v1000 = vmul.f32 %v990, %v998
    %1002 = vrot.lane.b32.xlu0 %v1000, 32
    %v1003 = vpop.permute.xlu0 %1002
    %v1005 = vadd.f32 %v995, %v1003
    %v1006 = vtanh.pop %v1005
    %1008 = vrot.lane.b32.xlu0 %v1006, 64
    %v1009 = vpop.permute.xlu0 %1008
    %v1011 = vmul.f32 %v990, %v1009
    %s1012 = scalar_lea.vmem [#allocation2], 32
    %v1013 = vld [vmem:[%s1012] sm:$0xff]
    %v1014 = vld [vmem:[%s1012 + $0x8] sm:$0xff]
    %v1015 = vld [vmem:[%s1012 + $0x10] sm:$0xff]
    %v1016 = vld [vmem:[%s1012 + $0x18] sm:$0xff]
    %s1017 = scalar_lea.vmem [#allocation5], 32
    %v1018 = vld [vmem:[%s1017] sm:$0xff]
    %v1019 = vld [vmem:[%s1017 + $0x8] sm:$0xff]
    %v1020 = vld [vmem:[%s1017 + $0x10] sm:$0xff]
    %v1021 = vld [vmem:[%s1017 + $0x18] sm:$0xff]
    %s1022 = scalar_lea.vmem %s3, 1
    %v1023 = vld [vmem:[%s1022] sm:$0x1]
    %v1025 = vlaneseq
    %v1026 = vshrl.u32 %v1025, 7
    %v1027 = vsub.s32 0, %v1026
    %v1028 = vrot.slane %v1023, %v1027
    %1030 = vmatprep.subr.mxu0 0.0
    %1031 = vmatpush1.msra.mxu0 %v1013
    %1032 = vmatprep.subr.mxu0 0.0
    %1033 = vmatpush1.msra.mxu0 %v1014
    %1034 = vmatprep.subr.mxu0 0.0
    %1035 = vmatpush1.msra.mxu0 %v1015
    %1036 = vmatprep.subr.mxu0 0.0
    %1037 = vmatpush1.msra.mxu0 %v1016
    %1038 = vmatprep.subr.mxu0 0.0
    %1039 = vmatpush1.msra.mxu0 0.0
    %1040 = vmatprep.subr.mxu0 0.0
    %1041 = vmatpush1.msra.mxu0 0.0
    %1042 = vmatprep.subr.mxu0 0.0
    %1043 = vmatpush1.msra.mxu0 0.0
    %1044 = vmatprep.subr.mxu0 0.0
    %1045 = vmatpush1.msra.mxu0 0.0
    %1046 = vmatprep.subr.mxu0 0.0
    %1047 = vmatpush1.msra.mxu0 0.0
    %1048 = vmatprep.subr.mxu0 0.0
    %1049 = vmatpush1.msra.mxu0 0.0
    %1050 = vmatprep.subr.mxu0 0.0
    %1051 = vmatpush1.msra.mxu0 0.0
    %1052 = vmatprep.subr.mxu0 0.0
    %1053 = vmatpush1.msra.mxu0 0.0
    %1054 = vmatprep.subr.mxu0 0.0
    %1055 = vmatpush1.msra.mxu0 0.0
    %1056 = vmatprep.subr.mxu0 0.0
    %1057 = vmatpush1.msra.mxu0 0.0
    %1058 = vmatprep.subr.mxu0 0.0
    %1059 = vmatpush1.msra.mxu0 0.0
    %1060 = vmatprep.subr.mxu0 0.0
    %1061 = vmatpush1.msra.mxu0 0.0
    %1062 = vmatprep.subr.mxu0 0.0
    %1063 = vmatpush1.msra.mxu0 0.0
    %1064 = vmatprep.subr.mxu0 0.0
    %1065 = vmatpush1.msra.mxu0 0.0
    %1066 = vmatprep.subr.mxu0 0.0
    %1067 = vmatpush1.msra.mxu0 0.0
    %1068 = vmatprep.subr.mxu0 0.0
    %1069 = vmatpush1.msra.mxu0 0.0
    %1070 = vmatprep.subr.mxu0 0.0
    %1071 = vmatpush1.msra.mxu0 0.0
    %1072 = vmatprep.subr.mxu0 0.0
    %1073 = vmatpush1.msra.mxu0 0.0
    %1074 = vmatprep.subr.mxu0 0.0
    %1075 = vmatpush1.msra.mxu0 0.0
    %1076 = vmatprep.subr.mxu0 0.0
    %1077 = vmatpush1.msra.mxu0 0.0
    %1078 = vmatprep.subr.mxu0 0.0
    %1079 = vmatpush1.msra.mxu0 0.0
    %1080 = vmatprep.subr.mxu0 0.0
    %1081 = vmatpush1.msra.mxu0 0.0
    %1082 = vmatprep.subr.mxu0 0.0
    %1083 = vmatpush1.msra.mxu0 0.0
    %1084 = vmatprep.subr.mxu0 0.0
    %1085 = vmatpush1.msra.mxu0 0.0
    %1086 = vmatprep.subr.mxu0 0.0
    %1087 = vmatpush1.msra.mxu0 0.0
    %1088 = vmatprep.subr.mxu0 0.0
    %1089 = vmatpush1.msra.mxu0 0.0
    %1090 = vmatprep.subr.mxu0 0.0
    %1091 = vmatpush1.msra.mxu0 0.0
    %1092 = vmatprep.subr.mxu0 0.0
    %1093 = vmatpush1.msra.mxu0 0.0
    %1094 = vmatprep.mubr.f32.mxu0 0.0
    %1095 = vmatmul.mubr.f32.gmra.mrb[0].mxu0 %v271
    %v1096 = vpop.f32.mrb[0].mxu0
    %v1097 = vadd.f32 %v1028, %v1096
    %v1098 = vpop.f32.mrb[0].mxu0
    %1099 = vdwg.mxu0
    %1100 = vmatprep.subr.mxu0 0.0
    %1101 = vmatpush1.msra.mxu0 %v1018
    %1102 = vmatprep.subr.mxu0 0.0
    %1103 = vmatpush1.msra.mxu0 %v1019
    %1104 = vmatprep.subr.mxu0 0.0
    %1105 = vmatpush1.msra.mxu0 %v1020
    %1106 = vmatprep.subr.mxu0 0.0
    %1107 = vmatpush1.msra.mxu0 %v1021
    %1108 = vmatprep.subr.mxu0 0.0
    %1109 = vmatpush1.msra.mxu0 0.0
    %1110 = vmatprep.subr.mxu0 0.0
    %1111 = vmatpush1.msra.mxu0 0.0
    %1112 = vmatprep.subr.mxu0 0.0
    %1113 = vmatpush1.msra.mxu0 0.0
    %1114 = vmatprep.subr.mxu0 0.0
    %1115 = vmatpush1.msra.mxu0 0.0
    %1116 = vmatprep.subr.mxu0 0.0
    %1117 = vmatpush1.msra.mxu0 0.0
    %1118 = vmatprep.subr.mxu0 0.0
    %1119 = vmatpush1.msra.mxu0 0.0
    %1120 = vmatprep.subr.mxu0 0.0
    %1121 = vmatpush1.msra.mxu0 0.0
    %1122 = vmatprep.subr.mxu0 0.0
    %1123 = vmatpush1.msra.mxu0 0.0
    %1124 = vmatprep.subr.mxu0 0.0
    %1125 = vmatpush1.msra.mxu0 0.0
    %1126 = vmatprep.subr.mxu0 0.0
    %1127 = vmatpush1.msra.mxu0 0.0
    %1128 = vmatprep.subr.mxu0 0.0
    %1129 = vmatpush1.msra.mxu0 0.0
    %1130 = vmatprep.subr.mxu0 0.0
    %1131 = vmatpush1.msra.mxu0 0.0
    %1132 = vmatprep.subr.mxu0 0.0
    %1133 = vmatpush1.msra.mxu0 0.0
    %1134 = vmatprep.subr.mxu0 0.0
    %1135 = vmatpush1.msra.mxu0 0.0
    %1136 = vmatprep.subr.mxu0 0.0
    %1137 = vmatpush1.msra.mxu0 0.0
    %1138 = vmatprep.subr.mxu0 0.0
    %1139 = vmatpush1.msra.mxu0 0.0
    %1140 = vmatprep.subr.mxu0 0.0
    %1141 = vmatpush1.msra.mxu0 0.0
    %1142 = vmatprep.subr.mxu0 0.0
    %1143 = vmatpush1.msra.mxu0 0.0
    %1144 = vmatprep.subr.mxu0 0.0
    %1145 = vmatpush1.msra.mxu0 0.0
    %1146 = vmatprep.subr.mxu0 0.0
    %1147 = vmatpush1.msra.mxu0 0.0
    %1148 = vmatprep.subr.mxu0 0.0
    %1149 = vmatpush1.msra.mxu0 0.0
    %1150 = vmatprep.subr.mxu0 0.0
    %1151 = vmatpush1.msra.mxu0 0.0
    %1152 = vmatprep.subr.mxu0 0.0
    %1153 = vmatpush1.msra.mxu0 0.0
    %1154 = vmatprep.subr.mxu0 0.0
    %1155 = vmatpush1.msra.mxu0 0.0
    %1156 = vmatprep.subr.mxu0 0.0
    %1157 = vmatpush1.msra.mxu0 0.0
    %1158 = vmatprep.subr.mxu0 0.0
    %1159 = vmatpush1.msra.mxu0 0.0
    %1160 = vmatprep.subr.mxu0 0.0
    %1161 = vmatpush1.msra.mxu0 0.0
    %1162 = vmatprep.subr.mxu0 0.0
    %1163 = vmatpush1.msra.mxu0 0.0
    %1164 = vmatprep.mubr.f32.mxu0 0.0
    %1165 = vmatmul.mubr.f32.gmra.mrb[0].mxu0 %v171
    %v1166 = vpop.f32.mrb[0].mxu0
    %v1167 = vadd.f32 0.0, %v1166
    %v1168 = vpop.f32.mrb[0].mxu0
    %1169 = vdwg.mxu0
    %v1170 = vadd.f32 %v1097, %v1167
    %v1171 = vxor.u32 %v1170, 2147483648
    %v1172 = vmul.f32 %v1171, 1.442695
    %v1173 = vpow.pop %v1172
    %v1174 = vadd.f32 %v1173, 1.0
    %v1175 = vrcp.pop %v1174
    %v1176 = vmul.f32 1.0, %v1175
    %v1177 = vtanh.pop %v1170
    %v1178 = vmul.f32 %v1176, 0.0
    %1180 = vrot.lane.b32.xlu0 %v1177, 64
    %v1181 = vpop.permute.xlu0 %1180
    %v1183 = vmul.f32 %v1176, %v1181
    %1185 = vrot.lane.b32.xlu0 %v1183, 32
    %v1186 = vpop.permute.xlu0 %1185
    %v1188 = vadd.f32 %v1178, %v1186
    %v1189 = vtanh.pop %v1188
    %1191 = vrot.lane.b32.xlu0 %v1189, 64
    %v1192 = vpop.permute.xlu0 %1191
    %v1194 = vmul.f32 %v1176, %v1192
    %1195 = vmatprep.subr.mxu0 0.0
    %1196 = vmatpush1.msra.mxu0 %v1013
    %1197 = vmatprep.subr.mxu0 0.0
    %1198 = vmatpush1.msra.mxu0 %v1014
    %1199 = vmatprep.subr.mxu0 0.0
    %1200 = vmatpush1.msra.mxu0 %v1015
    %1201 = vmatprep.subr.mxu0 0.0
    %1202 = vmatpush1.msra.mxu0 %v1016
    %1203 = vmatprep.subr.mxu0 0.0
    %1204 = vmatpush1.msra.mxu0 0.0
    %1205 = vmatprep.subr.mxu0 0.0
    %1206 = vmatpush1.msra.mxu0 0.0
    %1207 = vmatprep.subr.mxu0 0.0
    %1208 = vmatpush1.msra.mxu0 0.0
    %1209 = vmatprep.subr.mxu0 0.0
    %1210 = vmatpush1.msra.mxu0 0.0
    %1211 = vmatprep.subr.mxu0 0.0
    %1212 = vmatpush1.msra.mxu0 0.0
    %1213 = vmatprep.subr.mxu0 0.0
    %1214 = vmatpush1.msra.mxu0 0.0
    %1215 = vmatprep.subr.mxu0 0.0
    %1216 = vmatpush1.msra.mxu0 0.0
    %1217 = vmatprep.subr.mxu0 0.0
    %1218 = vmatpush1.msra.mxu0 0.0
    %1219 = vmatprep.subr.mxu0 0.0
    %1220 = vmatpush1.msra.mxu0 0.0
    %1221 = vmatprep.subr.mxu0 0.0
    %1222 = vmatpush1.msra.mxu0 0.0
    %1223 = vmatprep.subr.mxu0 0.0
    %1224 = vmatpush1.msra.mxu0 0.0
    %1225 = vmatprep.subr.mxu0 0.0
    %1226 = vmatpush1.msra.mxu0 0.0
    %1227 = vmatprep.subr.mxu0 0.0
    %1228 = vmatpush1.msra.mxu0 0.0
    %1229 = vmatprep.subr.mxu0 0.0
    %1230 = vmatpush1.msra.mxu0 0.0
    %1231 = vmatprep.subr.mxu0 0.0
    %1232 = vmatpush1.msra.mxu0 0.0
    %1233 = vmatprep.subr.mxu0 0.0
    %1234 = vmatpush1.msra.mxu0 0.0
    %1235 = vmatprep.subr.mxu0 0.0
    %1236 = vmatpush1.msra.mxu0 0.0
    %1237 = vmatprep.subr.mxu0 0.0
    %1238 = vmatpush1.msra.mxu0 0.0
    %1239 = vmatprep.subr.mxu0 0.0
    %1240 = vmatpush1.msra.mxu0 0.0
    %1241 = vmatprep.subr.mxu0 0.0
    %1242 = vmatpush1.msra.mxu0 0.0
    %1243 = vmatprep.subr.mxu0 0.0
    %1244 = vmatpush1.msra.mxu0 0.0
    %1245 = vmatprep.subr.mxu0 0.0
    %1246 = vmatpush1.msra.mxu0 0.0
    %1247 = vmatprep.subr.mxu0 0.0
    %1248 = vmatpush1.msra.mxu0 0.0
    %1249 = vmatprep.subr.mxu0 0.0
    %1250 = vmatpush1.msra.mxu0 0.0
    %1251 = vmatprep.subr.mxu0 0.0
    %1252 = vmatpush1.msra.mxu0 0.0
    %1253 = vmatprep.subr.mxu0 0.0
    %1254 = vmatpush1.msra.mxu0 0.0
    %1255 = vmatprep.subr.mxu0 0.0
    %1256 = vmatpush1.msra.mxu0 0.0
    %1257 = vmatprep.subr.mxu0 0.0
    %1258 = vmatpush1.msra.mxu0 0.0
    %1259 = vmatprep.mubr.f32.mxu0 0.0
    %1260 = vmatmul.mubr.f32.gmra.mrb[0].mxu0 %v378
    %v1261 = vpop.f32.mrb[0].mxu0
    %v1262 = vadd.f32 %v1028, %v1261
    %v1263 = vpop.f32.mrb[0].mxu0
    %1264 = vdwg.mxu0
    %1266 = vrot.lane.b32.xlu0 %v1194, 32
    %v1267 = vpop.permute.xlu0 %1266
    %v1268 = vsel %vm88, %v1267, 0
    %1270 = vmatprep.subr.mxu0 0.0
    %1271 = vmatpush1.msra.mxu0 %v1018
    %1272 = vmatprep.subr.mxu0 0.0
    %1273 = vmatpush1.msra.mxu0 %v1019
    %1274 = vmatprep.subr.mxu0 0.0
    %1275 = vmatpush1.msra.mxu0 %v1020
    %1276 = vmatprep.subr.mxu0 0.0
    %1277 = vmatpush1.msra.mxu0 %v1021
    %1278 = vmatprep.subr.mxu0 0.0
    %1279 = vmatpush1.msra.mxu0 0.0
    %1280 = vmatprep.subr.mxu0 0.0
    %1281 = vmatpush1.msra.mxu0 0.0
    %1282 = vmatprep.subr.mxu0 0.0
    %1283 = vmatpush1.msra.mxu0 0.0
    %1284 = vmatprep.subr.mxu0 0.0
    %1285 = vmatpush1.msra.mxu0 0.0
    %1286 = vmatprep.subr.mxu0 0.0
    %1287 = vmatpush1.msra.mxu0 0.0
    %1288 = vmatprep.subr.mxu0 0.0
    %1289 = vmatpush1.msra.mxu0 0.0
    %1290 = vmatprep.subr.mxu0 0.0
    %1291 = vmatpush1.msra.mxu0 0.0
    %1292 = vmatprep.subr.mxu0 0.0
    %1293 = vmatpush1.msra.mxu0 0.0
    %1294 = vmatprep.subr.mxu0 0.0
    %1295 = vmatpush1.msra.mxu0 0.0
    %1296 = vmatprep.subr.mxu0 0.0
    %1297 = vmatpush1.msra.mxu0 0.0
    %1298 = vmatprep.subr.mxu0 0.0
    %1299 = vmatpush1.msra.mxu0 0.0
    %1300 = vmatprep.subr.mxu0 0.0
    %1301 = vmatpush1.msra.mxu0 0.0
    %1302 = vmatprep.subr.mxu0 0.0
    %1303 = vmatpush1.msra.mxu0 0.0
    %1304 = vmatprep.subr.mxu0 0.0
    %1305 = vmatpush1.msra.mxu0 0.0
    %1306 = vmatprep.subr.mxu0 0.0
    %1307 = vmatpush1.msra.mxu0 0.0
    %1308 = vmatprep.subr.mxu0 0.0
    %1309 = vmatpush1.msra.mxu0 0.0
    %1310 = vmatprep.subr.mxu0 0.0
    %1311 = vmatpush1.msra.mxu0 0.0
    %1312 = vmatprep.subr.mxu0 0.0
    %1313 = vmatpush1.msra.mxu0 0.0
    %1314 = vmatprep.subr.mxu0 0.0
    %1315 = vmatpush1.msra.mxu0 0.0
    %1316 = vmatprep.subr.mxu0 0.0
    %1317 = vmatpush1.msra.mxu0 0.0
    %1318 = vmatprep.subr.mxu0 0.0
    %1319 = vmatpush1.msra.mxu0 0.0
    %1320 = vmatprep.subr.mxu0 0.0
    %1321 = vmatpush1.msra.mxu0 0.0
    %1322 = vmatprep.subr.mxu0 0.0
    %1323 = vmatpush1.msra.mxu0 0.0
    %1324 = vmatprep.subr.mxu0 0.0
    %1325 = vmatpush1.msra.mxu0 0.0
    %1326 = vmatprep.subr.mxu0 0.0
    %1327 = vmatpush1.msra.mxu0 0.0
    %1328 = vmatprep.subr.mxu0 0.0
    %1329 = vmatpush1.msra.mxu0 0.0
    %1330 = vmatprep.subr.mxu0 0.0
    %1331 = vmatpush1.msra.mxu0 0.0
    %1332 = vmatprep.subr.mxu0 0.0
    %1333 = vmatpush1.msra.mxu0 0.0
    %1334 = vmatprep.mubr.f32.mxu0 0.0
    %1335 = vmatmul.mubr.f32.gmra.mrb[0].mxu0 %v1268
    %v1336 = vpop.f32.mrb[0].mxu0
    %v1337 = vadd.f32 0.0, %v1336
    %v1338 = vpop.f32.mrb[0].mxu0
    %1339 = vdwg.mxu0
    %v1340 = vadd.f32 %v1262, %v1337
    %v1341 = vxor.u32 %v1340, 2147483648
    %v1342 = vmul.f32 %v1341, 1.442695
    %v1343 = vpow.pop %v1342
    %v1344 = vadd.f32 %v1343, 1.0
    %v1345 = vrcp.pop %v1344
    %v1346 = vmul.f32 1.0, %v1345
    %v1347 = vtanh.pop %v1340
    %v1348 = vmul.f32 %v1346, %v1188
    %1350 = vrot.lane.b32.xlu0 %v1347, 64
    %v1351 = vpop.permute.xlu0 %1350
    %v1353 = vmul.f32 %v1346, %v1351
    %1355 = vrot.lane.b32.xlu0 %v1353, 32
    %v1356 = vpop.permute.xlu0 %1355
    %v1358 = vadd.f32 %v1348, %v1356
    %v1359 = vtanh.pop %v1358
    %1361 = vrot.lane.b32.xlu0 %v1359, 64
    %v1362 = vpop.permute.xlu0 %1361
    %v1364 = vmul.f32 %v1346, %v1362
    %1365 = vmatprep.subr.mxu0 0.0
    %1366 = vmatpush1.msra.mxu0 %v1013
    %1367 = vmatprep.subr.mxu0 0.0
    %1368 = vmatpush1.msra.mxu0 %v1014
    %1369 = vmatprep.subr.mxu0 0.0
    %1370 = vmatpush1.msra.mxu0 %v1015
    %1371 = vmatprep.subr.mxu0 0.0
    %1372 = vmatpush1.msra.mxu0 %v1016
    %1373 = vmatprep.subr.mxu0 0.0
    %1374 = vmatpush1.msra.mxu0 0.0
    %1375 = vmatprep.subr.mxu0 0.0
    %1376 = vmatpush1.msra.mxu0 0.0
    %1377 = vmatprep.subr.mxu0 0.0
    %1378 = vmatpush1.msra.mxu0 0.0
    %1379 = vmatprep.subr.mxu0 0.0
    %1380 = vmatpush1.msra.mxu0 0.0
    %1381 = vmatprep.subr.mxu0 0.0
    %1382 = vmatpush1.msra.mxu0 0.0
    %1383 = vmatprep.subr.mxu0 0.0
    %1384 = vmatpush1.msra.mxu0 0.0
    %1385 = vmatprep.subr.mxu0 0.0
    %1386 = vmatpush1.msra.mxu0 0.0
    %1387 = vmatprep.subr.mxu0 0.0
    %1388 = vmatpush1.msra.mxu0 0.0
    %1389 = vmatprep.subr.mxu0 0.0
    %1390 = vmatpush1.msra.mxu0 0.0
    %1391 = vmatprep.subr.mxu0 0.0
    %1392 = vmatpush1.msra.mxu0 0.0
    %1393 = vmatprep.subr.mxu0 0.0
    %1394 = vmatpush1.msra.mxu0 0.0
    %1395 = vmatprep.subr.mxu0 0.0
    %1396 = vmatpush1.msra.mxu0 0.0
    %1397 = vmatprep.subr.mxu0 0.0
    %1398 = vmatpush1.msra.mxu0 0.0
    %1399 = vmatprep.subr.mxu0 0.0
    %1400 = vmatpush1.msra.mxu0 0.0
    %1401 = vmatprep.subr.mxu0 0.0
    %1402 = vmatpush1.msra.mxu0 0.0
    %1403 = vmatprep.subr.mxu0 0.0
    %1404 = vmatpush1.msra.mxu0 0.0
    %1405 = vmatprep.subr.mxu0 0.0
    %1406 = vmatpush1.msra.mxu0 0.0
    %1407 = vmatprep.subr.mxu0 0.0
    %1408 = vmatpush1.msra.mxu0 0.0
    %1409 = vmatprep.subr.mxu0 0.0
    %1410 = vmatpush1.msra.mxu0 0.0
    %1411 = vmatprep.subr.mxu0 0.0
    %1412 = vmatpush1.msra.mxu0 0.0
    %1413 = vmatprep.subr.mxu0 0.0
    %1414 = vmatpush1.msra.mxu0 0.0
    %1415 = vmatprep.subr.mxu0 0.0
    %1416 = vmatpush1.msra.mxu0 0.0
    %1417 = vmatprep.subr.mxu0 0.0
    %1418 = vmatpush1.msra.mxu0 0.0
    %1419 = vmatprep.subr.mxu0 0.0
    %1420 = vmatpush1.msra.mxu0 0.0
    %1421 = vmatprep.subr.mxu0 0.0
    %1422 = vmatpush1.msra.mxu0 0.0
    %1423 = vmatprep.subr.mxu0 0.0
    %1424 = vmatpush1.msra.mxu0 0.0
    %1425 = vmatprep.subr.mxu0 0.0
    %1426 = vmatpush1.msra.mxu0 0.0
    %1427 = vmatprep.subr.mxu0 0.0
    %1428 = vmatpush1.msra.mxu0 0.0
    %1429 = vmatprep.mubr.f32.mxu0 0.0
    %1430 = vmatmul.mubr.f32.gmra.mrb[0].mxu0 %v485
    %v1431 = vpop.f32.mrb[0].mxu0
    %v1432 = vadd.f32 %v1028, %v1431
    %v1433 = vpop.f32.mrb[0].mxu0
    %1434 = vdwg.mxu0
    %1436 = vrot.lane.b32.xlu0 %v1364, 32
    %v1437 = vpop.permute.xlu0 %1436
    %v1438 = vsel %vm88, %v1437, 0
    %1440 = vmatprep.subr.mxu0 0.0
    %1441 = vmatpush1.msra.mxu0 %v1018
    %1442 = vmatprep.subr.mxu0 0.0
    %1443 = vmatpush1.msra.mxu0 %v1019
    %1444 = vmatprep.subr.mxu0 0.0
    %1445 = vmatpush1.msra.mxu0 %v1020
    %1446 = vmatprep.subr.mxu0 0.0
    %1447 = vmatpush1.msra.mxu0 %v1021
    %1448 = vmatprep.subr.mxu0 0.0
    %1449 = vmatpush1.msra.mxu0 0.0
    %1450 = vmatprep.subr.mxu0 0.0
    %1451 = vmatpush1.msra.mxu0 0.0
    %1452 = vmatprep.subr.mxu0 0.0
    %1453 = vmatpush1.msra.mxu0 0.0
    %1454 = vmatprep.subr.mxu0 0.0
    %1455 = vmatpush1.msra.mxu0 0.0
    %1456 = vmatprep.subr.mxu0 0.0
    %1457 = vmatpush1.msra.mxu0 0.0
    %1458 = vmatprep.subr.mxu0 0.0
    %1459 = vmatpush1.msra.mxu0 0.0
    %1460 = vmatprep.subr.mxu0 0.0
    %1461 = vmatpush1.msra.mxu0 0.0
    %1462 = vmatprep.subr.mxu0 0.0
    %1463 = vmatpush1.msra.mxu0 0.0
    %1464 = vmatprep.subr.mxu0 0.0
    %1465 = vmatpush1.msra.mxu0 0.0
    %1466 = vmatprep.subr.mxu0 0.0
    %1467 = vmatpush1.msra.mxu0 0.0
    %1468 = vmatprep.subr.mxu0 0.0
    %1469 = vmatpush1.msra.mxu0 0.0
    %1470 = vmatprep.subr.mxu0 0.0
    %1471 = vmatpush1.msra.mxu0 0.0
    %1472 = vmatprep.subr.mxu0 0.0
    %1473 = vmatpush1.msra.mxu0 0.0
    %1474 = vmatprep.subr.mxu0 0.0
    %1475 = vmatpush1.msra.mxu0 0.0
    %1476 = vmatprep.subr.mxu0 0.0
    %1477 = vmatpush1.msra.mxu0 0.0
    %1478 = vmatprep.subr.mxu0 0.0
    %1479 = vmatpush1.msra.mxu0 0.0
    %1480 = vmatprep.subr.mxu0 0.0
    %1481 = vmatpush1.msra.mxu0 0.0
    %1482 = vmatprep.subr.mxu0 0.0
    %1483 = vmatpush1.msra.mxu0 0.0
    %1484 = vmatprep.subr.mxu0 0.0
    %1485 = vmatpush1.msra.mxu0 0.0
    %1486 = vmatprep.subr.mxu0 0.0
    %1487 = vmatpush1.msra.mxu0 0.0
    %1488 = vmatprep.subr.mxu0 0.0
    %1489 = vmatpush1.msra.mxu0 0.0
    %1490 = vmatprep.subr.mxu0 0.0
    %1491 = vmatpush1.msra.mxu0 0.0
    %1492 = vmatprep.subr.mxu0 0.0
    %1493 = vmatpush1.msra.mxu0 0.0
    %1494 = vmatprep.subr.mxu0 0.0
    %1495 = vmatpush1.msra.mxu0 0.0
    %1496 = vmatprep.subr.mxu0 0.0
    %1497 = vmatpush1.msra.mxu0 0.0
    %1498 = vmatprep.subr.mxu0 0.0
    %1499 = vmatpush1.msra.mxu0 0.0
    %1500 = vmatprep.subr.mxu0 0.0
    %1501 = vmatpush1.msra.mxu0 0.0
    %1502 = vmatprep.subr.mxu0 0.0
    %1503 = vmatpush1.msra.mxu0 0.0
    %1504 = vmatprep.mubr.f32.mxu0 0.0
    %1505 = vmatmul.mubr.f32.gmra.mrb[0].mxu0 %v1438
    %v1506 = vpop.f32.mrb[0].mxu0
    %v1507 = vadd.f32 0.0, %v1506
    %v1508 = vpop.f32.mrb[0].mxu0
    %1509 = vdwg.mxu0
    %v1510 = vadd.f32 %v1432, %v1507
    %v1511 = vxor.u32 %v1510, 2147483648
    %v1512 = vmul.f32 %v1511, 1.442695
    %v1513 = vpow.pop %v1512
    %v1514 = vadd.f32 %v1513, 1.0
    %v1515 = vrcp.pop %v1514
    %v1516 = vmul.f32 1.0, %v1515
    %v1517 = vtanh.pop %v1510
    %v1518 = vmul.f32 %v1516, %v1358
    %1520 = vrot.lane.b32.xlu0 %v1517, 64
    %v1521 = vpop.permute.xlu0 %1520
    %v1523 = vmul.f32 %v1516, %v1521
    %1525 = vrot.lane.b32.xlu0 %v1523, 32
    %v1526 = vpop.permute.xlu0 %1525
    %v1528 = vadd.f32 %v1518, %v1526
    %v1529 = vtanh.pop %v1528
    %1531 = vrot.lane.b32.xlu0 %v1529, 64
    %v1532 = vpop.permute.xlu0 %1531
    %v1534 = vmul.f32 %v1516, %v1532
    %1535 = vmatprep.subr.mxu0 0.0
    %1536 = vmatpush1.msra.mxu0 %v1013
    %1537 = vmatprep.subr.mxu0 0.0
    %1538 = vmatpush1.msra.mxu0 %v1014
    %1539 = vmatprep.subr.mxu0 0.0
    %1540 = vmatpush1.msra.mxu0 %v1015
    %1541 = vmatprep.subr.mxu0 0.0
    %1542 = vmatpush1.msra.mxu0 %v1016
    %1543 = vmatprep.subr.mxu0 0.0
    %1544 = vmatpush1.msra.mxu0 0.0
    %1545 = vmatprep.subr.mxu0 0.0
    %1546 = vmatpush1.msra.mxu0 0.0
    %1547 = vmatprep.subr.mxu0 0.0
    %1548 = vmatpush1.msra.mxu0 0.0
    %1549 = vmatprep.subr.mxu0 0.0
    %1550 = vmatpush1.msra.mxu0 0.0
    %1551 = vmatprep.subr.mxu0 0.0
    %1552 = vmatpush1.msra.mxu0 0.0
    %1553 = vmatprep.subr.mxu0 0.0
    %1554 = vmatpush1.msra.mxu0 0.0
    %1555 = vmatprep.subr.mxu0 0.0
    %1556 = vmatpush1.msra.mxu0 0.0
    %1557 = vmatprep.subr.mxu0 0.0
    %1558 = vmatpush1.msra.mxu0 0.0
    %1559 = vmatprep.subr.mxu0 0.0
    %1560 = vmatpush1.msra.mxu0 0.0
    %1561 = vmatprep.subr.mxu0 0.0
    %1562 = vmatpush1.msra.mxu0 0.0
    %1563 = vmatprep.subr.mxu0 0.0
    %1564 = vmatpush1.msra.mxu0 0.0
    %1565 = vmatprep.subr.mxu0 0.0
    %1566 = vmatpush1.msra.mxu0 0.0
    %1567 = vmatprep.subr.mxu0 0.0
    %1568 = vmatpush1.msra.mxu0 0.0
    %1569 = vmatprep.subr.mxu0 0.0
    %1570 = vmatpush1.msra.mxu0 0.0
    %1571 = vmatprep.subr.mxu0 0.0
    %1572 = vmatpush1.msra.mxu0 0.0
    %1573 = vmatprep.subr.mxu0 0.0
    %1574 = vmatpush1.msra.mxu0 0.0
    %1575 = vmatprep.subr.mxu0 0.0
    %1576 = vmatpush1.msra.mxu0 0.0
    %1577 = vmatprep.subr.mxu0 0.0
    %1578 = vmatpush1.msra.mxu0 0.0
    %1579 = vmatprep.subr.mxu0 0.0
    %1580 = vmatpush1.msra.mxu0 0.0
    %1581 = vmatprep.subr.mxu0 0.0
    %1582 = vmatpush1.msra.mxu0 0.0
    %1583 = vmatprep.subr.mxu0 0.0
    %1584 = vmatpush1.msra.mxu0 0.0
    %1585 = vmatprep.subr.mxu0 0.0
    %1586 = vmatpush1.msra.mxu0 0.0
    %1587 = vmatprep.subr.mxu0 0.0
    %1588 = vmatpush1.msra.mxu0 0.0
    %1589 = vmatprep.subr.mxu0 0.0
    %1590 = vmatpush1.msra.mxu0 0.0
    %1591 = vmatprep.subr.mxu0 0.0
    %1592 = vmatpush1.msra.mxu0 0.0
    %1593 = vmatprep.subr.mxu0 0.0
    %1594 = vmatpush1.msra.mxu0 0.0
    %1595 = vmatprep.subr.mxu0 0.0
    %1596 = vmatpush1.msra.mxu0 0.0
    %1597 = vmatprep.subr.mxu0 0.0
    %1598 = vmatpush1.msra.mxu0 0.0
    %1599 = vmatprep.mubr.f32.mxu0 0.0
    %1600 = vmatmul.mubr.f32.gmra.mrb[0].mxu0 %v592
    %v1601 = vpop.f32.mrb[0].mxu0
    %v1602 = vadd.f32 %v1028, %v1601
    %v1603 = vpop.f32.mrb[0].mxu0
    %1604 = vdwg.mxu0
    %1606 = vrot.lane.b32.xlu0 %v1534, 32
    %v1607 = vpop.permute.xlu0 %1606
    %v1608 = vsel %vm88, %v1607, 0
    %1610 = vmatprep.subr.mxu0 0.0
    %1611 = vmatpush1.msra.mxu0 %v1018
    %1612 = vmatprep.subr.mxu0 0.0
    %1613 = vmatpush1.msra.mxu0 %v1019
    %1614 = vmatprep.subr.mxu0 0.0
    %1615 = vmatpush1.msra.mxu0 %v1020
    %1616 = vmatprep.subr.mxu0 0.0
    %1617 = vmatpush1.msra.mxu0 %v1021
    %1618 = vmatprep.subr.mxu0 0.0
    %1619 = vmatpush1.msra.mxu0 0.0
    %1620 = vmatprep.subr.mxu0 0.0
    %1621 = vmatpush1.msra.mxu0 0.0
    %1622 = vmatprep.subr.mxu0 0.0
    %1623 = vmatpush1.msra.mxu0 0.0
    %1624 = vmatprep.subr.mxu0 0.0
    %1625 = vmatpush1.msra.mxu0 0.0
    %1626 = vmatprep.subr.mxu0 0.0
    %1627 = vmatpush1.msra.mxu0 0.0
    %1628 = vmatprep.subr.mxu0 0.0
    %1629 = vmatpush1.msra.mxu0 0.0
    %1630 = vmatprep.subr.mxu0 0.0
    %1631 = vmatpush1.msra.mxu0 0.0
    %1632 = vmatprep.subr.mxu0 0.0
    %1633 = vmatpush1.msra.mxu0 0.0
    %1634 = vmatprep.subr.mxu0 0.0
    %1635 = vmatpush1.msra.mxu0 0.0
    %1636 = vmatprep.subr.mxu0 0.0
    %1637 = vmatpush1.msra.mxu0 0.0
    %1638 = vmatprep.subr.mxu0 0.0
    %1639 = vmatpush1.msra.mxu0 0.0
    %1640 = vmatprep.subr.mxu0 0.0
    %1641 = vmatpush1.msra.mxu0 0.0
    %1642 = vmatprep.subr.mxu0 0.0
    %1643 = vmatpush1.msra.mxu0 0.0
    %1644 = vmatprep.subr.mxu0 0.0
    %1645 = vmatpush1.msra.mxu0 0.0
    %1646 = vmatprep.subr.mxu0 0.0
    %1647 = vmatpush1.msra.mxu0 0.0
    %1648 = vmatprep.subr.mxu0 0.0
    %1649 = vmatpush1.msra.mxu0 0.0
    %1650 = vmatprep.subr.mxu0 0.0
    %1651 = vmatpush1.msra.mxu0 0.0
    %1652 = vmatprep.subr.mxu0 0.0
    %1653 = vmatpush1.msra.mxu0 0.0
    %1654 = vmatprep.subr.mxu0 0.0
    %1655 = vmatpush1.msra.mxu0 0.0
    %1656 = vmatprep.subr.mxu0 0.0
    %1657 = vmatpush1.msra.mxu0 0.0
    %1658 = vmatprep.subr.mxu0 0.0
    %1659 = vmatpush1.msra.mxu0 0.0
    %1660 = vmatprep.subr.mxu0 0.0
    %1661 = vmatpush1.msra.mxu0 0.0
    %1662 = vmatprep.subr.mxu0 0.0
    %1663 = vmatpush1.msra.mxu0 0.0
    %1664 = vmatprep.subr.mxu0 0.0
    %1665 = vmatpush1.msra.mxu0 0.0
    %1666 = vmatprep.subr.mxu0 0.0
    %1667 = vmatpush1.msra.mxu0 0.0
    %1668 = vmatprep.subr.mxu0 0.0
    %1669 = vmatpush1.msra.mxu0 0.0
    %1670 = vmatprep.subr.mxu0 0.0
    %1671 = vmatpush1.msra.mxu0 0.0
    %1672 = vmatprep.subr.mxu0 0.0
    %1673 = vmatpush1.msra.mxu0 0.0
    %1674 = vmatprep.mubr.f32.mxu0 0.0
    %1675 = vmatmul.mubr.f32.gmra.mrb[0].mxu0 %v1608
    %v1676 = vpop.f32.mrb[0].mxu0
    %v1677 = vadd.f32 0.0, %v1676
    %v1678 = vpop.f32.mrb[0].mxu0
    %1679 = vdwg.mxu0
    %v1680 = vadd.f32 %v1602, %v1677
    %v1681 = vxor.u32 %v1680, 2147483648
    %v1682 = vmul.f32 %v1681, 1.442695
    %v1683 = vpow.pop %v1682
    %v1684 = vadd.f32 %v1683, 1.0
    %v1685 = vrcp.pop %v1684
    %v1686 = vmul.f32 1.0, %v1685
    %v1687 = vtanh.pop %v1680
    %v1688 = vmul.f32 %v1686, %v1528
    %1690 = vrot.lane.b32.xlu0 %v1687, 64
    %v1691 = vpop.permute.xlu0 %1690
    %v1693 = vmul.f32 %v1686, %v1691
    %1695 = vrot.lane.b32.xlu0 %v1693, 32
    %v1696 = vpop.permute.xlu0 %1695
    %v1698 = vadd.f32 %v1688, %v1696
    %v1699 = vtanh.pop %v1698
    %1701 = vrot.lane.b32.xlu0 %v1699, 64
    %v1702 = vpop.permute.xlu0 %1701
    %v1704 = vmul.f32 %v1686, %v1702
    %1705 = vmatprep.subr.mxu0 0.0
    %1706 = vmatpush1.msra.mxu0 %v1013
    %1707 = vmatprep.subr.mxu0 0.0
    %1708 = vmatpush1.msra.mxu0 %v1014
    %1709 = vmatprep.subr.mxu0 0.0
    %1710 = vmatpush1.msra.mxu0 %v1015
    %1711 = vmatprep.subr.mxu0 0.0
    %1712 = vmatpush1.msra.mxu0 %v1016
    %1713 = vmatprep.subr.mxu0 0.0
    %1714 = vmatpush1.msra.mxu0 0.0
    %1715 = vmatprep.subr.mxu0 0.0
    %1716 = vmatpush1.msra.mxu0 0.0
    %1717 = vmatprep.subr.mxu0 0.0
    %1718 = vmatpush1.msra.mxu0 0.0
    %1719 = vmatprep.subr.mxu0 0.0
    %1720 = vmatpush1.msra.mxu0 0.0
    %1721 = vmatprep.subr.mxu0 0.0
    %1722 = vmatpush1.msra.mxu0 0.0
    %1723 = vmatprep.subr.mxu0 0.0
    %1724 = vmatpush1.msra.mxu0 0.0
    %1725 = vmatprep.subr.mxu0 0.0
    %1726 = vmatpush1.msra.mxu0 0.0
    %1727 = vmatprep.subr.mxu0 0.0
    %1728 = vmatpush1.msra.mxu0 0.0
    %1729 = vmatprep.subr.mxu0 0.0
    %1730 = vmatpush1.msra.mxu0 0.0
    %1731 = vmatprep.subr.mxu0 0.0
    %1732 = vmatpush1.msra.mxu0 0.0
    %1733 = vmatprep.subr.mxu0 0.0
    %1734 = vmatpush1.msra.mxu0 0.0
    %1735 = vmatprep.subr.mxu0 0.0
    %1736 = vmatpush1.msra.mxu0 0.0
    %1737 = vmatprep.subr.mxu0 0.0
    %1738 = vmatpush1.msra.mxu0 0.0
    %1739 = vmatprep.subr.mxu0 0.0
    %1740 = vmatpush1.msra.mxu0 0.0
    %1741 = vmatprep.subr.mxu0 0.0
    %1742 = vmatpush1.msra.mxu0 0.0
    %1743 = vmatprep.subr.mxu0 0.0
    %1744 = vmatpush1.msra.mxu0 0.0
    %1745 = vmatprep.subr.mxu0 0.0
    %1746 = vmatpush1.msra.mxu0 0.0
    %1747 = vmatprep.subr.mxu0 0.0
    %1748 = vmatpush1.msra.mxu0 0.0
    %1749 = vmatprep.subr.mxu0 0.0
    %1750 = vmatpush1.msra.mxu0 0.0
    %1751 = vmatprep.subr.mxu0 0.0
    %1752 = vmatpush1.msra.mxu0 0.0
    %1753 = vmatprep.subr.mxu0 0.0
    %1754 = vmatpush1.msra.mxu0 0.0
    %1755 = vmatprep.subr.mxu0 0.0
    %1756 = vmatpush1.msra.mxu0 0.0
    %1757 = vmatprep.subr.mxu0 0.0
    %1758 = vmatpush1.msra.mxu0 0.0
    %1759 = vmatprep.subr.mxu0 0.0
    %1760 = vmatpush1.msra.mxu0 0.0
    %1761 = vmatprep.subr.mxu0 0.0
    %1762 = vmatpush1.msra.mxu0 0.0
    %1763 = vmatprep.subr.mxu0 0.0
    %1764 = vmatpush1.msra.mxu0 0.0
    %1765 = vmatprep.subr.mxu0 0.0
    %1766 = vmatpush1.msra.mxu0 0.0
    %1767 = vmatprep.subr.mxu0 0.0
    %1768 = vmatpush1.msra.mxu0 0.0
    %1769 = vmatprep.mubr.f32.mxu0 0.0
    %1770 = vmatmul.mubr.f32.gmra.mrb[0].mxu0 %v695
    %v1771 = vpop.f32.mrb[0].mxu0
    %v1772 = vadd.f32 %v1028, %v1771
    %v1773 = vpop.f32.mrb[0].mxu0
    %1774 = vdwg.mxu0
    %1776 = vrot.lane.b32.xlu0 %v1704, 32
    %v1777 = vpop.permute.xlu0 %1776
    %v1778 = vsel %vm88, %v1777, 0
    %1780 = vmatprep.subr.mxu0 0.0
    %1781 = vmatpush1.msra.mxu0 %v1018
    %1782 = vmatprep.subr.mxu0 0.0
    %1783 = vmatpush1.msra.mxu0 %v1019
    %1784 = vmatprep.subr.mxu0 0.0
    %1785 = vmatpush1.msra.mxu0 %v1020
    %1786 = vmatprep.subr.mxu0 0.0
    %1787 = vmatpush1.msra.mxu0 %v1021
    %1788 = vmatprep.subr.mxu0 0.0
    %1789 = vmatpush1.msra.mxu0 0.0
    %1790 = vmatprep.subr.mxu0 0.0
    %1791 = vmatpush1.msra.mxu0 0.0
    %1792 = vmatprep.subr.mxu0 0.0
    %1793 = vmatpush1.msra.mxu0 0.0
    %1794 = vmatprep.subr.mxu0 0.0
    %1795 = vmatpush1.msra.mxu0 0.0
    %1796 = vmatprep.subr.mxu0 0.0
    %1797 = vmatpush1.msra.mxu0 0.0
    %1798 = vmatprep.subr.mxu0 0.0
    %1799 = vmatpush1.msra.mxu0 0.0
    %1800 = vmatprep.subr.mxu0 0.0
    %1801 = vmatpush1.msra.mxu0 0.0
    %1802 = vmatprep.subr.mxu0 0.0
    %1803 = vmatpush1.msra.mxu0 0.0
    %1804 = vmatprep.subr.mxu0 0.0
    %1805 = vmatpush1.msra.mxu0 0.0
    %1806 = vmatprep.subr.mxu0 0.0
    %1807 = vmatpush1.msra.mxu0 0.0
    %1808 = vmatprep.subr.mxu0 0.0
    %1809 = vmatpush1.msra.mxu0 0.0
    %1810 = vmatprep.subr.mxu0 0.0
    %1811 = vmatpush1.msra.mxu0 0.0
    %1812 = vmatprep.subr.mxu0 0.0
    %1813 = vmatpush1.msra.mxu0 0.0
    %1814 = vmatprep.subr.mxu0 0.0
    %1815 = vmatpush1.msra.mxu0 0.0
    %1816 = vmatprep.subr.mxu0 0.0
    %1817 = vmatpush1.msra.mxu0 0.0
    %1818 = vmatprep.subr.mxu0 0.0
    %1819 = vmatpush1.msra.mxu0 0.0
    %1820 = vmatprep.subr.mxu0 0.0
    %1821 = vmatpush1.msra.mxu0 0.0
    %1822 = vmatprep.subr.mxu0 0.0
    %1823 = vmatpush1.msra.mxu0 0.0
    %1824 = vmatprep.subr.mxu0 0.0
    %1825 = vmatpush1.msra.mxu0 0.0
    %1826 = vmatprep.subr.mxu0 0.0
    %1827 = vmatpush1.msra.mxu0 0.0
    %1828 = vmatprep.subr.mxu0 0.0
    %1829 = vmatpush1.msra.mxu0 0.0
    %1830 = vmatprep.subr.mxu0 0.0
    %1831 = vmatpush1.msra.mxu0 0.0
    %1832 = vmatprep.subr.mxu0 0.0
    %1833 = vmatpush1.msra.mxu0 0.0
    %1834 = vmatprep.subr.mxu0 0.0
    %1835 = vmatpush1.msra.mxu0 0.0
    %1836 = vmatprep.subr.mxu0 0.0
    %1837 = vmatpush1.msra.mxu0 0.0
    %1838 = vmatprep.subr.mxu0 0.0
    %1839 = vmatpush1.msra.mxu0 0.0
    %1840 = vmatprep.subr.mxu0 0.0
    %1841 = vmatpush1.msra.mxu0 0.0
    %1842 = vmatprep.subr.mxu0 0.0
    %1843 = vmatpush1.msra.mxu0 0.0
    %1844 = vmatprep.mubr.f32.mxu0 0.0
    %1845 = vmatmul.mubr.f32.gmra.mrb[0].mxu0 %v1778
    %v1846 = vpop.f32.mrb[0].mxu0
    %v1847 = vadd.f32 0.0, %v1846
    %v1848 = vpop.f32.mrb[0].mxu0
    %1849 = vdwg.mxu0
    %v1850 = vadd.f32 %v1772, %v1847
    %v1851 = vxor.u32 %v1850, 2147483648
    %v1852 = vmul.f32 %v1851, 1.442695
    %v1853 = vpow.pop %v1852
    %v1854 = vadd.f32 %v1853, 1.0
    %v1855 = vrcp.pop %v1854
    %v1856 = vmul.f32 1.0, %v1855
    %v1857 = vtanh.pop %v1850
    %v1858 = vmul.f32 %v1856, %v1698
    %1860 = vrot.lane.b32.xlu0 %v1857, 64
    %v1861 = vpop.permute.xlu0 %1860
    %v1863 = vmul.f32 %v1856, %v1861
    %1865 = vrot.lane.b32.xlu0 %v1863, 32
    %v1866 = vpop.permute.xlu0 %1865
    %v1868 = vadd.f32 %v1858, %v1866
    %v1869 = vtanh.pop %v1868
    %1871 = vrot.lane.b32.xlu0 %v1869, 64
    %v1872 = vpop.permute.xlu0 %1871
    %v1874 = vmul.f32 %v1856, %v1872
    %1875 = vmatprep.subr.mxu0 0.0
    %1876 = vmatpush1.msra.mxu0 %v1013
    %1877 = vmatprep.subr.mxu0 0.0
    %1878 = vmatpush1.msra.mxu0 %v1014
    %1879 = vmatprep.subr.mxu0 0.0
    %1880 = vmatpush1.msra.mxu0 %v1015
    %1881 = vmatprep.subr.mxu0 0.0
    %1882 = vmatpush1.msra.mxu0 %v1016
    %1883 = vmatprep.subr.mxu0 0.0
    %1884 = vmatpush1.msra.mxu0 0.0
    %1885 = vmatprep.subr.mxu0 0.0
    %1886 = vmatpush1.msra.mxu0 0.0
    %1887 = vmatprep.subr.mxu0 0.0
    %1888 = vmatpush1.msra.mxu0 0.0
    %1889 = vmatprep.subr.mxu0 0.0
    %1890 = vmatpush1.msra.mxu0 0.0
    %1891 = vmatprep.subr.mxu0 0.0
    %1892 = vmatpush1.msra.mxu0 0.0
    %1893 = vmatprep.subr.mxu0 0.0
    %1894 = vmatpush1.msra.mxu0 0.0
    %1895 = vmatprep.subr.mxu0 0.0
    %1896 = vmatpush1.msra.mxu0 0.0
    %1897 = vmatprep.subr.mxu0 0.0
    %1898 = vmatpush1.msra.mxu0 0.0
    %1899 = vmatprep.subr.mxu0 0.0
    %1900 = vmatpush1.msra.mxu0 0.0
    %1901 = vmatprep.subr.mxu0 0.0
    %1902 = vmatpush1.msra.mxu0 0.0
    %1903 = vmatprep.subr.mxu0 0.0
    %1904 = vmatpush1.msra.mxu0 0.0
    %1905 = vmatprep.subr.mxu0 0.0
    %1906 = vmatpush1.msra.mxu0 0.0
    %1907 = vmatprep.subr.mxu0 0.0
    %1908 = vmatpush1.msra.mxu0 0.0
    %1909 = vmatprep.subr.mxu0 0.0
    %1910 = vmatpush1.msra.mxu0 0.0
    %1911 = vmatprep.subr.mxu0 0.0
    %1912 = vmatpush1.msra.mxu0 0.0
    %1913 = vmatprep.subr.mxu0 0.0
    %1914 = vmatpush1.msra.mxu0 0.0
    %1915 = vmatprep.subr.mxu0 0.0
    %1916 = vmatpush1.msra.mxu0 0.0
    %1917 = vmatprep.subr.mxu0 0.0
    %1918 = vmatpush1.msra.mxu0 0.0
    %1919 = vmatprep.subr.mxu0 0.0
    %1920 = vmatpush1.msra.mxu0 0.0
    %1921 = vmatprep.subr.mxu0 0.0
    %1922 = vmatpush1.msra.mxu0 0.0
    %1923 = vmatprep.subr.mxu0 0.0
    %1924 = vmatpush1.msra.mxu0 0.0
    %1925 = vmatprep.subr.mxu0 0.0
    %1926 = vmatpush1.msra.mxu0 0.0
    %1927 = vmatprep.subr.mxu0 0.0
    %1928 = vmatpush1.msra.mxu0 0.0
    %1929 = vmatprep.subr.mxu0 0.0
    %1930 = vmatpush1.msra.mxu0 0.0
    %1931 = vmatprep.subr.mxu0 0.0
    %1932 = vmatpush1.msra.mxu0 0.0
    %1933 = vmatprep.subr.mxu0 0.0
    %1934 = vmatpush1.msra.mxu0 0.0
    %1935 = vmatprep.subr.mxu0 0.0
    %1936 = vmatpush1.msra.mxu0 0.0
    %1937 = vmatprep.subr.mxu0 0.0
    %1938 = vmatpush1.msra.mxu0 0.0
    %1939 = vmatprep.mubr.f32.mxu0 0.0
    %1940 = vmatmul.mubr.f32.gmra.mrb[0].mxu0 %v802
    %v1941 = vpop.f32.mrb[0].mxu0
    %v1942 = vadd.f32 %v1028, %v1941
    %v1943 = vpop.f32.mrb[0].mxu0
    %1944 = vdwg.mxu0
    %1946 = vrot.lane.b32.xlu0 %v1874, 32
    %v1947 = vpop.permute.xlu0 %1946
    %v1948 = vsel %vm88, %v1947, 0
    %1950 = vmatprep.subr.mxu0 0.0
    %1951 = vmatpush1.msra.mxu0 %v1018
    %1952 = vmatprep.subr.mxu0 0.0
    %1953 = vmatpush1.msra.mxu0 %v1019
    %1954 = vmatprep.subr.mxu0 0.0
    %1955 = vmatpush1.msra.mxu0 %v1020
    %1956 = vmatprep.subr.mxu0 0.0
    %1957 = vmatpush1.msra.mxu0 %v1021
    %1958 = vmatprep.subr.mxu0 0.0
    %1959 = vmatpush1.msra.mxu0 0.0
    %1960 = vmatprep.subr.mxu0 0.0
    %1961 = vmatpush1.msra.mxu0 0.0
    %1962 = vmatprep.subr.mxu0 0.0
    %1963 = vmatpush1.msra.mxu0 0.0
    %1964 = vmatprep.subr.mxu0 0.0
    %1965 = vmatpush1.msra.mxu0 0.0
    %1966 = vmatprep.subr.mxu0 0.0
    %1967 = vmatpush1.msra.mxu0 0.0
    %1968 = vmatprep.subr.mxu0 0.0
    %1969 = vmatpush1.msra.mxu0 0.0
    %1970 = vmatprep.subr.mxu0 0.0
    %1971 = vmatpush1.msra.mxu0 0.0
    %1972 = vmatprep.subr.mxu0 0.0
    %1973 = vmatpush1.msra.mxu0 0.0
    %1974 = vmatprep.subr.mxu0 0.0
    %1975 = vmatpush1.msra.mxu0 0.0
    %1976 = vmatprep.subr.mxu0 0.0
    %1977 = vmatpush1.msra.mxu0 0.0
    %1978 = vmatprep.subr.mxu0 0.0
    %1979 = vmatpush1.msra.mxu0 0.0
    %1980 = vmatprep.subr.mxu0 0.0
    %1981 = vmatpush1.msra.mxu0 0.0
    %1982 = vmatprep.subr.mxu0 0.0
    %1983 = vmatpush1.msra.mxu0 0.0
    %1984 = vmatprep.subr.mxu0 0.0
    %1985 = vmatpush1.msra.mxu0 0.0
    %1986 = vmatprep.subr.mxu0 0.0
    %1987 = vmatpush1.msra.mxu0 0.0
    %1988 = vmatprep.subr.mxu0 0.0
    %1989 = vmatpush1.msra.mxu0 0.0
    %1990 = vmatprep.subr.mxu0 0.0
    %1991 = vmatpush1.msra.mxu0 0.0
    %1992 = vmatprep.subr.mxu0 0.0
    %1993 = vmatpush1.msra.mxu0 0.0
    %1994 = vmatprep.subr.mxu0 0.0
    %1995 = vmatpush1.msra.mxu0 0.0
    %1996 = vmatprep.subr.mxu0 0.0
    %1997 = vmatpush1.msra.mxu0 0.0
    %1998 = vmatprep.subr.mxu0 0.0
    %1999 = vmatpush1.msra.mxu0 0.0
    %2000 = vmatprep.subr.mxu0 0.0
    %2001 = vmatpush1.msra.mxu0 0.0
    %2002 = vmatprep.subr.mxu0 0.0
    %2003 = vmatpush1.msra.mxu0 0.0
    %2004 = vmatprep.subr.mxu0 0.0
    %2005 = vmatpush1.msra.mxu0 0.0
    %2006 = vmatprep.subr.mxu0 0.0
    %2007 = vmatpush1.msra.mxu0 0.0
    %2008 = vmatprep.subr.mxu0 0.0
    %2009 = vmatpush1.msra.mxu0 0.0
    %2010 = vmatprep.subr.mxu0 0.0
    %2011 = vmatpush1.msra.mxu0 0.0
    %2012 = vmatprep.subr.mxu0 0.0
    %2013 = vmatpush1.msra.mxu0 0.0
    %2014 = vmatprep.mubr.f32.mxu0 0.0
    %2015 = vmatmul.mubr.f32.gmra.mrb[0].mxu0 %v1948
    %v2016 = vpop.f32.mrb[0].mxu0
    %v2017 = vadd.f32 0.0, %v2016
    %v2018 = vpop.f32.mrb[0].mxu0
    %2019 = vdwg.mxu0
    %v2020 = vadd.f32 %v1942, %v2017
    %v2021 = vxor.u32 %v2020, 2147483648
    %v2022 = vmul.f32 %v2021, 1.442695
    %v2023 = vpow.pop %v2022
    %v2024 = vadd.f32 %v2023, 1.0
    %v2025 = vrcp.pop %v2024
    %v2026 = vmul.f32 1.0, %v2025
    %v2027 = vtanh.pop %v2020
    %v2028 = vmul.f32 %v2026, %v1868
    %2030 = vrot.lane.b32.xlu0 %v2027, 64
    %v2031 = vpop.permute.xlu0 %2030
    %v2033 = vmul.f32 %v2026, %v2031
    %2035 = vrot.lane.b32.xlu0 %v2033, 32
    %v2036 = vpop.permute.xlu0 %2035
    %v2038 = vadd.f32 %v2028, %v2036
    %v2039 = vtanh.pop %v2038
    %2041 = vrot.lane.b32.xlu0 %v2039, 64
    %v2042 = vpop.permute.xlu0 %2041
    %v2044 = vmul.f32 %v2026, %v2042
    %2045 = vmatprep.subr.mxu0 0.0
    %2046 = vmatpush1.msra.mxu0 %v1013
    %2047 = vmatprep.subr.mxu0 0.0
    %2048 = vmatpush1.msra.mxu0 %v1014
    %2049 = vmatprep.subr.mxu0 0.0
    %2050 = vmatpush1.msra.mxu0 %v1015
    %2051 = vmatprep.subr.mxu0 0.0
    %2052 = vmatpush1.msra.mxu0 %v1016
    %2053 = vmatprep.subr.mxu0 0.0
    %2054 = vmatpush1.msra.mxu0 0.0
    %2055 = vmatprep.subr.mxu0 0.0
    %2056 = vmatpush1.msra.mxu0 0.0
    %2057 = vmatprep.subr.mxu0 0.0
    %2058 = vmatpush1.msra.mxu0 0.0
    %2059 = vmatprep.subr.mxu0 0.0
    %2060 = vmatpush1.msra.mxu0 0.0
    %2061 = vmatprep.subr.mxu0 0.0
    %2062 = vmatpush1.msra.mxu0 0.0
    %2063 = vmatprep.subr.mxu0 0.0
    %2064 = vmatpush1.msra.mxu0 0.0
    %2065 = vmatprep.subr.mxu0 0.0
    %2066 = vmatpush1.msra.mxu0 0.0
    %2067 = vmatprep.subr.mxu0 0.0
    %2068 = vmatpush1.msra.mxu0 0.0
    %2069 = vmatprep.subr.mxu0 0.0
    %2070 = vmatpush1.msra.mxu0 0.0
    %2071 = vmatprep.subr.mxu0 0.0
    %2072 = vmatpush1.msra.mxu0 0.0
    %2073 = vmatprep.subr.mxu0 0.0
    %2074 = vmatpush1.msra.mxu0 0.0
    %2075 = vmatprep.subr.mxu0 0.0
    %2076 = vmatpush1.msra.mxu0 0.0
    %2077 = vmatprep.subr.mxu0 0.0
    %2078 = vmatpush1.msra.mxu0 0.0
    %2079 = vmatprep.subr.mxu0 0.0
    %2080 = vmatpush1.msra.mxu0 0.0
    %2081 = vmatprep.subr.mxu0 0.0
    %2082 = vmatpush1.msra.mxu0 0.0
    %2083 = vmatprep.subr.mxu0 0.0
    %2084 = vmatpush1.msra.mxu0 0.0
    %2085 = vmatprep.subr.mxu0 0.0
    %2086 = vmatpush1.msra.mxu0 0.0
    %2087 = vmatprep.subr.mxu0 0.0
    %2088 = vmatpush1.msra.mxu0 0.0
    %2089 = vmatprep.subr.mxu0 0.0
    %2090 = vmatpush1.msra.mxu0 0.0
    %2091 = vmatprep.subr.mxu0 0.0
    %2092 = vmatpush1.msra.mxu0 0.0
    %2093 = vmatprep.subr.mxu0 0.0
    %2094 = vmatpush1.msra.mxu0 0.0
    %2095 = vmatprep.subr.mxu0 0.0
    %2096 = vmatpush1.msra.mxu0 0.0
    %2097 = vmatprep.subr.mxu0 0.0
    %2098 = vmatpush1.msra.mxu0 0.0
    %2099 = vmatprep.subr.mxu0 0.0
    %2100 = vmatpush1.msra.mxu0 0.0
    %2101 = vmatprep.subr.mxu0 0.0
    %2102 = vmatpush1.msra.mxu0 0.0
    %2103 = vmatprep.subr.mxu0 0.0
    %2104 = vmatpush1.msra.mxu0 0.0
    %2105 = vmatprep.subr.mxu0 0.0
    %2106 = vmatpush1.msra.mxu0 0.0
    %2107 = vmatprep.subr.mxu0 0.0
    %2108 = vmatpush1.msra.mxu0 0.0
    %2109 = vmatprep.mubr.f32.mxu0 0.0
    %2110 = vmatmul.mubr.f32.gmra.mrb[0].mxu0 %v909
    %v2111 = vpop.f32.mrb[0].mxu0
    %v2112 = vadd.f32 %v1028, %v2111
    %v2113 = vpop.f32.mrb[0].mxu0
    %2114 = vdwg.mxu0
    %2116 = vrot.lane.b32.xlu0 %v2044, 32
    %v2117 = vpop.permute.xlu0 %2116
    %v2118 = vsel %vm88, %v2117, 0
    %2120 = vmatprep.subr.mxu0 0.0
    %2121 = vmatpush1.msra.mxu0 %v1018
    %2122 = vmatprep.subr.mxu0 0.0
    %2123 = vmatpush1.msra.mxu0 %v1019
    %2124 = vmatprep.subr.mxu0 0.0
    %2125 = vmatpush1.msra.mxu0 %v1020
    %2126 = vmatprep.subr.mxu0 0.0
    %2127 = vmatpush1.msra.mxu0 %v1021
    %2128 = vmatprep.subr.mxu0 0.0
    %2129 = vmatpush1.msra.mxu0 0.0
    %2130 = vmatprep.subr.mxu0 0.0
    %2131 = vmatpush1.msra.mxu0 0.0
    %2132 = vmatprep.subr.mxu0 0.0
    %2133 = vmatpush1.msra.mxu0 0.0
    %2134 = vmatprep.subr.mxu0 0.0
    %2135 = vmatpush1.msra.mxu0 0.0
    %2136 = vmatprep.subr.mxu0 0.0
    %2137 = vmatpush1.msra.mxu0 0.0
    %2138 = vmatprep.subr.mxu0 0.0
    %2139 = vmatpush1.msra.mxu0 0.0
    %2140 = vmatprep.subr.mxu0 0.0
    %2141 = vmatpush1.msra.mxu0 0.0
    %2142 = vmatprep.subr.mxu0 0.0
    %2143 = vmatpush1.msra.mxu0 0.0
    %2144 = vmatprep.subr.mxu0 0.0
    %2145 = vmatpush1.msra.mxu0 0.0
    %2146 = vmatprep.subr.mxu0 0.0
    %2147 = vmatpush1.msra.mxu0 0.0
    %2148 = vmatprep.subr.mxu0 0.0
    %2149 = vmatpush1.msra.mxu0 0.0
    %2150 = vmatprep.subr.mxu0 0.0
    %2151 = vmatpush1.msra.mxu0 0.0
    %2152 = vmatprep.subr.mxu0 0.0
    %2153 = vmatpush1.msra.mxu0 0.0
    %2154 = vmatprep.subr.mxu0 0.0
    %2155 = vmatpush1.msra.mxu0 0.0
    %2156 = vmatprep.subr.mxu0 0.0
    %2157 = vmatpush1.msra.mxu0 0.0
    %2158 = vmatprep.subr.mxu0 0.0
    %2159 = vmatpush1.msra.mxu0 0.0
    %2160 = vmatprep.subr.mxu0 0.0
    %2161 = vmatpush1.msra.mxu0 0.0
    %2162 = vmatprep.subr.mxu0 0.0
    %2163 = vmatpush1.msra.mxu0 0.0
    %2164 = vmatprep.subr.mxu0 0.0
    %2165 = vmatpush1.msra.mxu0 0.0
    %2166 = vmatprep.subr.mxu0 0.0
    %2167 = vmatpush1.msra.mxu0 0.0
    %2168 = vmatprep.subr.mxu0 0.0
    %2169 = vmatpush1.msra.mxu0 0.0
    %2170 = vmatprep.subr.mxu0 0.0
    %2171 = vmatpush1.msra.mxu0 0.0
    %2172 = vmatprep.subr.mxu0 0.0
    %2173 = vmatpush1.msra.mxu0 0.0
    %2174 = vmatprep.subr.mxu0 0.0
    %2175 = vmatpush1.msra.mxu0 0.0
    %2176 = vmatprep.subr.mxu0 0.0
    %2177 = vmatpush1.msra.mxu0 0.0
    %2178 = vmatprep.subr.mxu0 0.0
    %2179 = vmatpush1.msra.mxu0 0.0
    %2180 = vmatprep.subr.mxu0 0.0
    %2181 = vmatpush1.msra.mxu0 0.0
    %2182 = vmatprep.subr.mxu0 0.0
    %2183 = vmatpush1.msra.mxu0 0.0
    %2184 = vmatprep.mubr.f32.mxu0 0.0
    %2185 = vmatmul.mubr.f32.gmra.mrb[0].mxu0 %v2118
    %v2186 = vpop.f32.mrb[0].mxu0
    %v2187 = vadd.f32 0.0, %v2186
    %v2188 = vpop.f32.mrb[0].mxu0
    %2189 = vdwg.mxu0
    %v2190 = vadd.f32 %v2112, %v2187
    %v2191 = vxor.u32 %v2190, 2147483648
    %v2192 = vmul.f32 %v2191, 1.442695
    %v2193 = vpow.pop %v2192
    %v2194 = vadd.f32 %v2193, 1.0
    %v2195 = vrcp.pop %v2194
    %v2196 = vmul.f32 1.0, %v2195
    %v2197 = vtanh.pop %v2190
    %v2198 = vmul.f32 %v2196, %v2038
    %2200 = vrot.lane.b32.xlu0 %v2197, 64
    %v2201 = vpop.permute.xlu0 %2200
    %v2203 = vmul.f32 %v2196, %v2201
    %2205 = vrot.lane.b32.xlu0 %v2203, 32
    %v2206 = vpop.permute.xlu0 %2205
    %v2208 = vadd.f32 %v2198, %v2206
    %v2209 = vtanh.pop %v2208
    %2211 = vrot.lane.b32.xlu0 %v2209, 64
    %v2212 = vpop.permute.xlu0 %2211
    %v2214 = vmul.f32 %v2196, %v2212
    %v2216 = vrot.slane %v1011, 6
    %2217 = vrot.lane.b32.xlu0 %v2216, 32
    %v2218 = vpop.permute.xlu0 %2217
    %v2219 = vsel %vm88, %v2218, 0
    %2221 = vmatprep.subr.mxu0 0.0
    %2222 = vmatpush1.msra.mxu0 %v1013
    %2223 = vmatprep.subr.mxu0 0.0
    %2224 = vmatpush1.msra.mxu0 %v1014
    %2225 = vmatprep.subr.mxu0 0.0
    %2226 = vmatpush1.msra.mxu0 %v1015
    %2227 = vmatprep.subr.mxu0 0.0
    %2228 = vmatpush1.msra.mxu0 %v1016
    %2229 = vmatprep.subr.mxu0 0.0
    %2230 = vmatpush1.msra.mxu0 0.0
    %2231 = vmatprep.subr.mxu0 0.0
    %2232 = vmatpush1.msra.mxu0 0.0
    %2233 = vmatprep.subr.mxu0 0.0
    %2234 = vmatpush1.msra.mxu0 0.0
    %2235 = vmatprep.subr.mxu0 0.0
    %2236 = vmatpush1.msra.mxu0 0.0
    %2237 = vmatprep.subr.mxu0 0.0
    %2238 = vmatpush1.msra.mxu0 0.0
    %2239 = vmatprep.subr.mxu0 0.0
    %2240 = vmatpush1.msra.mxu0 0.0
    %2241 = vmatprep.subr.mxu0 0.0
    %2242 = vmatpush1.msra.mxu0 0.0
    %2243 = vmatprep.subr.mxu0 0.0
    %2244 = vmatpush1.msra.mxu0 0.0
    %2245 = vmatprep.subr.mxu0 0.0
    %2246 = vmatpush1.msra.mxu0 0.0
    %2247 = vmatprep.subr.mxu0 0.0
    %2248 = vmatpush1.msra.mxu0 0.0
    %2249 = vmatprep.subr.mxu0 0.0
    %2250 = vmatpush1.msra.mxu0 0.0
    %2251 = vmatprep.subr.mxu0 0.0
    %2252 = vmatpush1.msra.mxu0 0.0
    %2253 = vmatprep.subr.mxu0 0.0
    %2254 = vmatpush1.msra.mxu0 0.0
    %2255 = vmatprep.subr.mxu0 0.0
    %2256 = vmatpush1.msra.mxu0 0.0
    %2257 = vmatprep.subr.mxu0 0.0
    %2258 = vmatpush1.msra.mxu0 0.0
    %2259 = vmatprep.subr.mxu0 0.0
    %2260 = vmatpush1.msra.mxu0 0.0
    %2261 = vmatprep.subr.mxu0 0.0
    %2262 = vmatpush1.msra.mxu0 0.0
    %2263 = vmatprep.subr.mxu0 0.0
    %2264 = vmatpush1.msra.mxu0 0.0
    %2265 = vmatprep.subr.mxu0 0.0
    %2266 = vmatpush1.msra.mxu0 0.0
    %2267 = vmatprep.subr.mxu0 0.0
    %2268 = vmatpush1.msra.mxu0 0.0
    %2269 = vmatprep.subr.mxu0 0.0
    %2270 = vmatpush1.msra.mxu0 0.0
    %2271 = vmatprep.subr.mxu0 0.0
    %2272 = vmatpush1.msra.mxu0 0.0
    %2273 = vmatprep.subr.mxu0 0.0
    %2274 = vmatpush1.msra.mxu0 0.0
    %2275 = vmatprep.subr.mxu0 0.0
    %2276 = vmatpush1.msra.mxu0 0.0
    %2277 = vmatprep.subr.mxu0 0.0
    %2278 = vmatpush1.msra.mxu0 0.0
    %2279 = vmatprep.subr.mxu0 0.0
    %2280 = vmatpush1.msra.mxu0 0.0
    %2281 = vmatprep.subr.mxu0 0.0
    %2282 = vmatpush1.msra.mxu0 0.0
    %2283 = vmatprep.subr.mxu0 0.0
    %2284 = vmatpush1.msra.mxu0 0.0
    %2285 = vmatprep.mubr.f32.mxu0 0.0
    %2286 = vmatmul.mubr.f32.gmra.mrb[0].mxu0 %v2219
    %v2287 = vpop.f32.mrb[0].mxu0
    %v2288 = vadd.f32 %v1028, %v2287
    %v2289 = vpop.f32.mrb[0].mxu0
    %2290 = vdwg.mxu0
    %2292 = vrot.lane.b32.xlu0 %v2214, 32
    %v2293 = vpop.permute.xlu0 %2292
    %v2294 = vsel %vm88, %v2293, 0
    %2296 = vmatprep.subr.mxu0 0.0
    %2297 = vmatpush1.msra.mxu0 %v1018
    %2298 = vmatprep.subr.mxu0 0.0
    %2299 = vmatpush1.msra.mxu0 %v1019
    %2300 = vmatprep.subr.mxu0 0.0
    %2301 = vmatpush1.msra.mxu0 %v1020
    %2302 = vmatprep.subr.mxu0 0.0
    %2303 = vmatpush1.msra.mxu0 %v1021
    %2304 = vmatprep.subr.mxu0 0.0
    %2305 = vmatpush1.msra.mxu0 0.0
    %2306 = vmatprep.subr.mxu0 0.0
    %2307 = vmatpush1.msra.mxu0 0.0
    %2308 = vmatprep.subr.mxu0 0.0
    %2309 = vmatpush1.msra.mxu0 0.0
    %2310 = vmatprep.subr.mxu0 0.0
    %2311 = vmatpush1.msra.mxu0 0.0
    %2312 = vmatprep.subr.mxu0 0.0
    %2313 = vmatpush1.msra.mxu0 0.0
    %2314 = vmatprep.subr.mxu0 0.0
    %2315 = vmatpush1.msra.mxu0 0.0
    %2316 = vmatprep.subr.mxu0 0.0
    %2317 = vmatpush1.msra.mxu0 0.0
    %2318 = vmatprep.subr.mxu0 0.0
    %2319 = vmatpush1.msra.mxu0 0.0
    %2320 = vmatprep.subr.mxu0 0.0
    %2321 = vmatpush1.msra.mxu0 0.0
    %2322 = vmatprep.subr.mxu0 0.0
    %2323 = vmatpush1.msra.mxu0 0.0
    %2324 = vmatprep.subr.mxu0 0.0
    %2325 = vmatpush1.msra.mxu0 0.0
    %2326 = vmatprep.subr.mxu0 0.0
    %2327 = vmatpush1.msra.mxu0 0.0
    %2328 = vmatprep.subr.mxu0 0.0
    %2329 = vmatpush1.msra.mxu0 0.0
    %2330 = vmatprep.subr.mxu0 0.0
    %2331 = vmatpush1.msra.mxu0 0.0
    %2332 = vmatprep.subr.mxu0 0.0
    %2333 = vmatpush1.msra.mxu0 0.0
    %2334 = vmatprep.subr.mxu0 0.0
    %2335 = vmatpush1.msra.mxu0 0.0
    %2336 = vmatprep.subr.mxu0 0.0
    %2337 = vmatpush1.msra.mxu0 0.0
    %2338 = vmatprep.subr.mxu0 0.0
    %2339 = vmatpush1.msra.mxu0 0.0
    %2340 = vmatprep.subr.mxu0 0.0
    %2341 = vmatpush1.msra.mxu0 0.0
    %2342 = vmatprep.subr.mxu0 0.0
    %2343 = vmatpush1.msra.mxu0 0.0
    %2344 = vmatprep.subr.mxu0 0.0
    %2345 = vmatpush1.msra.mxu0 0.0
    %2346 = vmatprep.subr.mxu0 0.0
    %2347 = vmatpush1.msra.mxu0 0.0
    %2348 = vmatprep.subr.mxu0 0.0
    %2349 = vmatpush1.msra.mxu0 0.0
    %2350 = vmatprep.subr.mxu0 0.0
    %2351 = vmatpush1.msra.mxu0 0.0
    %2352 = vmatprep.subr.mxu0 0.0
    %2353 = vmatpush1.msra.mxu0 0.0
    %2354 = vmatprep.subr.mxu0 0.0
    %2355 = vmatpush1.msra.mxu0 0.0
    %2356 = vmatprep.subr.mxu0 0.0
    %2357 = vmatpush1.msra.mxu0 0.0
    %2358 = vmatprep.subr.mxu0 0.0
    %2359 = vmatpush1.msra.mxu0 0.0
    %2360 = vmatprep.mubr.f32.mxu0 0.0
    %2361 = vmatmul.mubr.f32.gmra.mrb[0].mxu0 %v2294
    %v2362 = vpop.f32.mrb[0].mxu0
    %v2363 = vadd.f32 0.0, %v2362
    %v2364 = vpop.f32.mrb[0].mxu0
    %2365 = vdwg.mxu0
    %v2366 = vadd.f32 %v2288, %v2363
    %v2367 = vxor.u32 %v2366, 2147483648
    %v2368 = vmul.f32 %v2367, 1.442695
    %v2369 = vpow.pop %v2368
    %v2370 = vadd.f32 %v2369, 1.0
    %v2371 = vrcp.pop %v2370
    %v2372 = vmul.f32 1.0, %v2371
    %v2373 = vtanh.pop %v2366
    %v2374 = vmul.f32 %v2372, %v2208
    %2376 = vrot.lane.b32.xlu0 %v2373, 64
    %v2377 = vpop.permute.xlu0 %2376
    %v2379 = vmul.f32 %v2372, %v2377
    %2381 = vrot.lane.b32.xlu0 %v2379, 32
    %v2382 = vpop.permute.xlu0 %2381
    %v2384 = vadd.f32 %v2374, %v2382
    %v2385 = vtanh.pop %v2384
    %2387 = vrot.lane.b32.xlu0 %v2385, 64
    %v2388 = vpop.permute.xlu0 %2387
    %v2390 = vmul.f32 %v2372, %v2388
    %s2391 = scalar_lea.vmem [#allocation2], 64
    %v2392 = vld [vmem:[%s2391] sm:$0xff]
    %v2393 = vld [vmem:[%s2391 + $0x8] sm:$0xff]
    %v2394 = vld [vmem:[%s2391 + $0x10] sm:$0xff]
    %v2395 = vld [vmem:[%s2391 + $0x18] sm:$0xff]
    %s2396 = scalar_lea.vmem [#allocation5], 64
    %v2397 = vld [vmem:[%s2396] sm:$0xff]
    %v2398 = vld [vmem:[%s2396 + $0x8] sm:$0xff]
    %v2399 = vld [vmem:[%s2396 + $0x10] sm:$0xff]
    %v2400 = vld [vmem:[%s2396 + $0x18] sm:$0xff]
    %s2401 = scalar_lea.vmem %s3, 2
    %v2402 = vld [vmem:[%s2401] sm:$0x1]
    %v2404 = vlaneseq
    %v2405 = vshrl.u32 %v2404, 7
    %v2406 = vsub.s32 0, %v2405
    %v2407 = vrot.slane %v2402, %v2406
    %2409 = vmatprep.subr.mxu0 0.0
    %2410 = vmatpush1.msra.mxu0 %v2392
    %2411 = vmatprep.subr.mxu0 0.0
    %2412 = vmatpush1.msra.mxu0 %v2393
    %2413 = vmatprep.subr.mxu0 0.0
    %2414 = vmatpush1.msra.mxu0 %v2394
    %2415 = vmatprep.subr.mxu0 0.0
    %2416 = vmatpush1.msra.mxu0 %v2395
    %2417 = vmatprep.subr.mxu0 0.0
    %2418 = vmatpush1.msra.mxu0 0.0
    %2419 = vmatprep.subr.mxu0 0.0
    %2420 = vmatpush1.msra.mxu0 0.0
    %2421 = vmatprep.subr.mxu0 0.0
    %2422 = vmatpush1.msra.mxu0 0.0
    %2423 = vmatprep.subr.mxu0 0.0
    %2424 = vmatpush1.msra.mxu0 0.0
    %2425 = vmatprep.subr.mxu0 0.0
    %2426 = vmatpush1.msra.mxu0 0.0
    %2427 = vmatprep.subr.mxu0 0.0
    %2428 = vmatpush1.msra.mxu0 0.0
    %2429 = vmatprep.subr.mxu0 0.0
    %2430 = vmatpush1.msra.mxu0 0.0
    %2431 = vmatprep.subr.mxu0 0.0
    %2432 = vmatpush1.msra.mxu0 0.0
    %2433 = vmatprep.subr.mxu0 0.0
    %2434 = vmatpush1.msra.mxu0 0.0
    %2435 = vmatprep.subr.mxu0 0.0
    %2436 = vmatpush1.msra.mxu0 0.0
    %2437 = vmatprep.subr.mxu0 0.0
    %2438 = vmatpush1.msra.mxu0 0.0
    %2439 = vmatprep.subr.mxu0 0.0
    %2440 = vmatpush1.msra.mxu0 0.0
    %2441 = vmatprep.subr.mxu0 0.0
    %2442 = vmatpush1.msra.mxu0 0.0
    %2443 = vmatprep.subr.mxu0 0.0
    %2444 = vmatpush1.msra.mxu0 0.0
    %2445 = vmatprep.subr.mxu0 0.0
    %2446 = vmatpush1.msra.mxu0 0.0
    %2447 = vmatprep.subr.mxu0 0.0
    %2448 = vmatpush1.msra.mxu0 0.0
    %2449 = vmatprep.subr.mxu0 0.0
    %2450 = vmatpush1.msra.mxu0 0.0
    %2451 = vmatprep.subr.mxu0 0.0
    %2452 = vmatpush1.msra.mxu0 0.0
    %2453 = vmatprep.subr.mxu0 0.0
    %2454 = vmatpush1.msra.mxu0 0.0
    %2455 = vmatprep.subr.mxu0 0.0
    %2456 = vmatpush1.msra.mxu0 0.0
    %2457 = vmatprep.subr.mxu0 0.0
    %2458 = vmatpush1.msra.mxu0 0.0
    %2459 = vmatprep.subr.mxu0 0.0
    %2460 = vmatpush1.msra.mxu0 0.0
    %2461 = vmatprep.subr.mxu0 0.0
    %2462 = vmatpush1.msra.mxu0 0.0
    %2463 = vmatprep.subr.mxu0 0.0
    %2464 = vmatpush1.msra.mxu0 0.0
    %2465 = vmatprep.subr.mxu0 0.0
    %2466 = vmatpush1.msra.mxu0 0.0
    %2467 = vmatprep.subr.mxu0 0.0
    %2468 = vmatpush1.msra.mxu0 0.0
    %2469 = vmatprep.subr.mxu0 0.0
    %2470 = vmatpush1.msra.mxu0 0.0
    %2471 = vmatprep.subr.mxu0 0.0
    %2472 = vmatpush1.msra.mxu0 0.0
    %2473 = vmatprep.mubr.f32.mxu0 0.0
    %2474 = vmatmul.mubr.f32.gmra.mrb[0].mxu0 %v1268
    %v2475 = vpop.f32.mrb[0].mxu0
    %v2476 = vadd.f32 %v2407, %v2475
    %v2477 = vpop.f32.mrb[0].mxu0
    %2478 = vdwg.mxu0
    %2479 = vmatprep.subr.mxu0 0.0
    %2480 = vmatpush1.msra.mxu0 %v2397
    %2481 = vmatprep.subr.mxu0 0.0
    %2482 = vmatpush1.msra.mxu0 %v2398
    %2483 = vmatprep.subr.mxu0 0.0
    %2484 = vmatpush1.msra.mxu0 %v2399
    %2485 = vmatprep.subr.mxu0 0.0
    %2486 = vmatpush1.msra.mxu0 %v2400
    %2487 = vmatprep.subr.mxu0 0.0
    %2488 = vmatpush1.msra.mxu0 0.0
    %2489 = vmatprep.subr.mxu0 0.0
    %2490 = vmatpush1.msra.mxu0 0.0
    %2491 = vmatprep.subr.mxu0 0.0
    %2492 = vmatpush1.msra.mxu0 0.0
    %2493 = vmatprep.subr.mxu0 0.0
    %2494 = vmatpush1.msra.mxu0 0.0
    %2495 = vmatprep.subr.mxu0 0.0
    %2496 = vmatpush1.msra.mxu0 0.0
    %2497 = vmatprep.subr.mxu0 0.0
    %2498 = vmatpush1.msra.mxu0 0.0
    %2499 = vmatprep.subr.mxu0 0.0
    %2500 = vmatpush1.msra.mxu0 0.0
    %2501 = vmatprep.subr.mxu0 0.0
    %2502 = vmatpush1.msra.mxu0 0.0
    %2503 = vmatprep.subr.mxu0 0.0
    %2504 = vmatpush1.msra.mxu0 0.0
    %2505 = vmatprep.subr.mxu0 0.0
    %2506 = vmatpush1.msra.mxu0 0.0
    %2507 = vmatprep.subr.mxu0 0.0
    %2508 = vmatpush1.msra.mxu0 0.0
    %2509 = vmatprep.subr.mxu0 0.0
    %2510 = vmatpush1.msra.mxu0 0.0
    %2511 = vmatprep.subr.mxu0 0.0
    %2512 = vmatpush1.msra.mxu0 0.0
    %2513 = vmatprep.subr.mxu0 0.0
    %2514 = vmatpush1.msra.mxu0 0.0
    %2515 = vmatprep.subr.mxu0 0.0
    %2516 = vmatpush1.msra.mxu0 0.0
    %2517 = vmatprep.subr.mxu0 0.0
    %2518 = vmatpush1.msra.mxu0 0.0
    %2519 = vmatprep.subr.mxu0 0.0
    %2520 = vmatpush1.msra.mxu0 0.0
    %2521 = vmatprep.subr.mxu0 0.0
    %2522 = vmatpush1.msra.mxu0 0.0
    %2523 = vmatprep.subr.mxu0 0.0
    %2524 = vmatpush1.msra.mxu0 0.0
    %2525 = vmatprep.subr.mxu0 0.0
    %2526 = vmatpush1.msra.mxu0 0.0
    %2527 = vmatprep.subr.mxu0 0.0
    %2528 = vmatpush1.msra.mxu0 0.0
    %2529 = vmatprep.subr.mxu0 0.0
    %2530 = vmatpush1.msra.mxu0 0.0
    %2531 = vmatprep.subr.mxu0 0.0
    %2532 = vmatpush1.msra.mxu0 0.0
    %2533 = vmatprep.subr.mxu0 0.0
    %2534 = vmatpush1.msra.mxu0 0.0
    %2535 = vmatprep.subr.mxu0 0.0
    %2536 = vmatpush1.msra.mxu0 0.0
    %2537 = vmatprep.subr.mxu0 0.0
    %2538 = vmatpush1.msra.mxu0 0.0
    %2539 = vmatprep.subr.mxu0 0.0
    %2540 = vmatpush1.msra.mxu0 0.0
    %2541 = vmatprep.subr.mxu0 0.0
    %2542 = vmatpush1.msra.mxu0 0.0
    %2543 = vmatprep.mubr.f32.mxu0 0.0
    %2544 = vmatmul.mubr.f32.gmra.mrb[0].mxu0 %v171
    %v2545 = vpop.f32.mrb[0].mxu0
    %v2546 = vadd.f32 0.0, %v2545
    %v2547 = vpop.f32.mrb[0].mxu0
    %2548 = vdwg.mxu0
    %v2549 = vadd.f32 %v2476, %v2546
    %v2550 = vxor.u32 %v2549, 2147483648
    %v2551 = vmul.f32 %v2550, 1.442695
    %v2552 = vpow.pop %v2551
    %v2553 = vadd.f32 %v2552, 1.0
    %v2554 = vrcp.pop %v2553
    %v2555 = vmul.f32 1.0, %v2554
    %v2556 = vtanh.pop %v2549
    %v2557 = vmul.f32 %v2555, 0.0
    %2559 = vrot.lane.b32.xlu0 %v2556, 64
    %v2560 = vpop.permute.xlu0 %2559
    %v2562 = vmul.f32 %v2555, %v2560
    %2564 = vrot.lane.b32.xlu0 %v2562, 32
    %v2565 = vpop.permute.xlu0 %2564
    %v2567 = vadd.f32 %v2557, %v2565
    %v2568 = vtanh.pop %v2567
    %2570 = vrot.lane.b32.xlu0 %v2568, 64
    %v2571 = vpop.permute.xlu0 %2570
    %v2573 = vmul.f32 %v2555, %v2571
    %2574 = vmatprep.subr.mxu0 0.0
    %2575 = vmatpush1.msra.mxu0 %v2392
    %2576 = vmatprep.subr.mxu0 0.0
    %2577 = vmatpush1.msra.mxu0 %v2393
    %2578 = vmatprep.subr.mxu0 0.0
    %2579 = vmatpush1.msra.mxu0 %v2394
    %2580 = vmatprep.subr.mxu0 0.0
    %2581 = vmatpush1.msra.mxu0 %v2395
    %2582 = vmatprep.subr.mxu0 0.0
    %2583 = vmatpush1.msra.mxu0 0.0
    %2584 = vmatprep.subr.mxu0 0.0
    %2585 = vmatpush1.msra.mxu0 0.0
    %2586 = vmatprep.subr.mxu0 0.0
    %2587 = vmatpush1.msra.mxu0 0.0
    %2588 = vmatprep.subr.mxu0 0.0
    %2589 = vmatpush1.msra.mxu0 0.0
    %2590 = vmatprep.subr.mxu0 0.0
    %2591 = vmatpush1.msra.mxu0 0.0
    %2592 = vmatprep.subr.mxu0 0.0
    %2593 = vmatpush1.msra.mxu0 0.0
    %2594 = vmatprep.subr.mxu0 0.0
    %2595 = vmatpush1.msra.mxu0 0.0
    %2596 = vmatprep.subr.mxu0 0.0
    %2597 = vmatpush1.msra.mxu0 0.0
    %2598 = vmatprep.subr.mxu0 0.0
    %2599 = vmatpush1.msra.mxu0 0.0
    %2600 = vmatprep.subr.mxu0 0.0
    %2601 = vmatpush1.msra.mxu0 0.0
    %2602 = vmatprep.subr.mxu0 0.0
    %2603 = vmatpush1.msra.mxu0 0.0
    %2604 = vmatprep.subr.mxu0 0.0
    %2605 = vmatpush1.msra.mxu0 0.0
    %2606 = vmatprep.subr.mxu0 0.0
    %2607 = vmatpush1.msra.mxu0 0.0
    %2608 = vmatprep.subr.mxu0 0.0
    %2609 = vmatpush1.msra.mxu0 0.0
    %2610 = vmatprep.subr.mxu0 0.0
    %2611 = vmatpush1.msra.mxu0 0.0
    %2612 = vmatprep.subr.mxu0 0.0
    %2613 = vmatpush1.msra.mxu0 0.0
    %2614 = vmatprep.subr.mxu0 0.0
    %2615 = vmatpush1.msra.mxu0 0.0
    %2616 = vmatprep.subr.mxu0 0.0
    %2617 = vmatpush1.msra.mxu0 0.0
    %2618 = vmatprep.subr.mxu0 0.0
    %2619 = vmatpush1.msra.mxu0 0.0
    %2620 = vmatprep.subr.mxu0 0.0
    %2621 = vmatpush1.msra.mxu0 0.0
    %2622 = vmatprep.subr.mxu0 0.0
    %2623 = vmatpush1.msra.mxu0 0.0
    %2624 = vmatprep.subr.mxu0 0.0
    %2625 = vmatpush1.msra.mxu0 0.0
    %2626 = vmatprep.subr.mxu0 0.0
    %2627 = vmatpush1.msra.mxu0 0.0
    %2628 = vmatprep.subr.mxu0 0.0
    %2629 = vmatpush1.msra.mxu0 0.0
    %2630 = vmatprep.subr.mxu0 0.0
    %2631 = vmatpush1.msra.mxu0 0.0
    %2632 = vmatprep.subr.mxu0 0.0
    %2633 = vmatpush1.msra.mxu0 0.0
    %2634 = vmatprep.subr.mxu0 0.0
    %2635 = vmatpush1.msra.mxu0 0.0
    %2636 = vmatprep.subr.mxu0 0.0
    %2637 = vmatpush1.msra.mxu0 0.0
    %2638 = vmatprep.mubr.f32.mxu0 0.0
    %2639 = vmatmul.mubr.f32.gmra.mrb[0].mxu0 %v1438
    %v2640 = vpop.f32.mrb[0].mxu0
    %v2641 = vadd.f32 %v2407, %v2640
    %v2642 = vpop.f32.mrb[0].mxu0
    %2643 = vdwg.mxu0
    %2645 = vrot.lane.b32.xlu0 %v2573, 32
    %v2646 = vpop.permute.xlu0 %2645
    %v2647 = vsel %vm88, %v2646, 0
    %2649 = vmatprep.subr.mxu0 0.0
    %2650 = vmatpush1.msra.mxu0 %v2397
    %2651 = vmatprep.subr.mxu0 0.0
    %2652 = vmatpush1.msra.mxu0 %v2398
    %2653 = vmatprep.subr.mxu0 0.0
    %2654 = vmatpush1.msra.mxu0 %v2399
    %2655 = vmatprep.subr.mxu0 0.0
    %2656 = vmatpush1.msra.mxu0 %v2400
    %2657 = vmatprep.subr.mxu0 0.0
    %2658 = vmatpush1.msra.mxu0 0.0
    %2659 = vmatprep.subr.mxu0 0.0
    %2660 = vmatpush1.msra.mxu0 0.0
    %2661 = vmatprep.subr.mxu0 0.0
    %2662 = vmatpush1.msra.mxu0 0.0
    %2663 = vmatprep.subr.mxu0 0.0
    %2664 = vmatpush1.msra.mxu0 0.0
    %2665 = vmatprep.subr.mxu0 0.0
    %2666 = vmatpush1.msra.mxu0 0.0
    %2667 = vmatprep.subr.mxu0 0.0
    %2668 = vmatpush1.msra.mxu0 0.0
    %2669 = vmatprep.subr.mxu0 0.0
    %2670 = vmatpush1.msra.mxu0 0.0
    %2671 = vmatprep.subr.mxu0 0.0
    %2672 = vmatpush1.msra.mxu0 0.0
    %2673 = vmatprep.subr.mxu0 0.0
    %2674 = vmatpush1.msra.mxu0 0.0
    %2675 = vmatprep.subr.mxu0 0.0
    %2676 = vmatpush1.msra.mxu0 0.0
    %2677 = vmatprep.subr.mxu0 0.0
    %2678 = vmatpush1.msra.mxu0 0.0
    %2679 = vmatprep.subr.mxu0 0.0
    %2680 = vmatpush1.msra.mxu0 0.0
    %2681 = vmatprep.subr.mxu0 0.0
    %2682 = vmatpush1.msra.mxu0 0.0
    %2683 = vmatprep.subr.mxu0 0.0
    %2684 = vmatpush1.msra.mxu0 0.0
    %2685 = vmatprep.subr.mxu0 0.0
    %2686 = vmatpush1.msra.mxu0 0.0
    %2687 = vmatprep.subr.mxu0 0.0
    %2688 = vmatpush1.msra.mxu0 0.0
    %2689 = vmatprep.subr.mxu0 0.0
    %2690 = vmatpush1.msra.mxu0 0.0
    %2691 = vmatprep.subr.mxu0 0.0
    %2692 = vmatpush1.msra.mxu0 0.0
    %2693 = vmatprep.subr.mxu0 0.0
    %2694 = vmatpush1.msra.mxu0 0.0
    %2695 = vmatprep.subr.mxu0 0.0
    %2696 = vmatpush1.msra.mxu0 0.0
    %2697 = vmatprep.subr.mxu0 0.0
    %2698 = vmatpush1.msra.mxu0 0.0
    %2699 = vmatprep.subr.mxu0 0.0
    %2700 = vmatpush1.msra.mxu0 0.0
    %2701 = vmatprep.subr.mxu0 0.0
    %2702 = vmatpush1.msra.mxu0 0.0
    %2703 = vmatprep.subr.mxu0 0.0
    %2704 = vmatpush1.msra.mxu0 0.0
    %2705 = vmatprep.subr.mxu0 0.0
    %2706 = vmatpush1.msra.mxu0 0.0
    %2707 = vmatprep.subr.mxu0 0.0
    %2708 = vmatpush1.msra.mxu0 0.0
    %2709 = vmatprep.subr.mxu0 0.0
    %2710 = vmatpush1.msra.mxu0 0.0
    %2711 = vmatprep.subr.mxu0 0.0
    %2712 = vmatpush1.msra.mxu0 0.0
    %2713 = vmatprep.mubr.f32.mxu0 0.0
    %2714 = vmatmul.mubr.f32.gmra.mrb[0].mxu0 %v2647
    %v2715 = vpop.f32.mrb[0].mxu0
    %v2716 = vadd.f32 0.0, %v2715
    %v2717 = vpop.f32.mrb[0].mxu0
    %2718 = vdwg.mxu0
    %v2719 = vadd.f32 %v2641, %v2716
    %v2720 = vxor.u32 %v2719, 2147483648
    %v2721 = vmul.f32 %v2720, 1.442695
    %v2722 = vpow.pop %v2721
    %v2723 = vadd.f32 %v2722, 1.0
    %v2724 = vrcp.pop %v2723
    %v2725 = vmul.f32 1.0, %v2724
    %v2726 = vtanh.pop %v2719
    %v2727 = vmul.f32 %v2725, %v2567
    %2729 = vrot.lane.b32.xlu0 %v2726, 64
    %v2730 = vpop.permute.xlu0 %2729
    %v2732 = vmul.f32 %v2725, %v2730
    %2734 = vrot.lane.b32.xlu0 %v2732, 32
    %v2735 = vpop.permute.xlu0 %2734
    %v2737 = vadd.f32 %v2727, %v2735
    %v2738 = vtanh.pop %v2737
    %2740 = vrot.lane.b32.xlu0 %v2738, 64
    %v2741 = vpop.permute.xlu0 %2740
    %v2743 = vmul.f32 %v2725, %v2741
    %2744 = vmatprep.subr.mxu0 0.0
    %2745 = vmatpush1.msra.mxu0 %v2392
    %2746 = vmatprep.subr.mxu0 0.0
    %2747 = vmatpush1.msra.mxu0 %v2393
    %2748 = vmatprep.subr.mxu0 0.0
    %2749 = vmatpush1.msra.mxu0 %v2394
    %2750 = vmatprep.subr.mxu0 0.0
    %2751 = vmatpush1.msra.mxu0 %v2395
    %2752 = vmatprep.subr.mxu0 0.0
    %2753 = vmatpush1.msra.mxu0 0.0
    %2754 = vmatprep.subr.mxu0 0.0
    %2755 = vmatpush1.msra.mxu0 0.0
    %2756 = vmatprep.subr.mxu0 0.0
    %2757 = vmatpush1.msra.mxu0 0.0
    %2758 = vmatprep.subr.mxu0 0.0
    %2759 = vmatpush1.msra.mxu0 0.0
    %2760 = vmatprep.subr.mxu0 0.0
    %2761 = vmatpush1.msra.mxu0 0.0
    %2762 = vmatprep.subr.mxu0 0.0
    %2763 = vmatpush1.msra.mxu0 0.0
    %2764 = vmatprep.subr.mxu0 0.0
    %2765 = vmatpush1.msra.mxu0 0.0
    %2766 = vmatprep.subr.mxu0 0.0
    %2767 = vmatpush1.msra.mxu0 0.0
    %2768 = vmatprep.subr.mxu0 0.0
    %2769 = vmatpush1.msra.mxu0 0.0
    %2770 = vmatprep.subr.mxu0 0.0
    %2771 = vmatpush1.msra.mxu0 0.0
    %2772 = vmatprep.subr.mxu0 0.0
    %2773 = vmatpush1.msra.mxu0 0.0
    %2774 = vmatprep.subr.mxu0 0.0
    %2775 = vmatpush1.msra.mxu0 0.0
    %2776 = vmatprep.subr.mxu0 0.0
    %2777 = vmatpush1.msra.mxu0 0.0
    %2778 = vmatprep.subr.mxu0 0.0
    %2779 = vmatpush1.msra.mxu0 0.0
    %2780 = vmatprep.subr.mxu0 0.0
    %2781 = vmatpush1.msra.mxu0 0.0
    %2782 = vmatprep.subr.mxu0 0.0
    %2783 = vmatpush1.msra.mxu0 0.0
    %2784 = vmatprep.subr.mxu0 0.0
    %2785 = vmatpush1.msra.mxu0 0.0
    %2786 = vmatprep.subr.mxu0 0.0
    %2787 = vmatpush1.msra.mxu0 0.0
    %2788 = vmatprep.subr.mxu0 0.0
    %2789 = vmatpush1.msra.mxu0 0.0
    %2790 = vmatprep.subr.mxu0 0.0
    %2791 = vmatpush1.msra.mxu0 0.0
    %2792 = vmatprep.subr.mxu0 0.0
    %2793 = vmatpush1.msra.mxu0 0.0
    %2794 = vmatprep.subr.mxu0 0.0
    %2795 = vmatpush1.msra.mxu0 0.0
    %2796 = vmatprep.subr.mxu0 0.0
    %2797 = vmatpush1.msra.mxu0 0.0
    %2798 = vmatprep.subr.mxu0 0.0
    %2799 = vmatpush1.msra.mxu0 0.0
    %2800 = vmatprep.subr.mxu0 0.0
    %2801 = vmatpush1.msra.mxu0 0.0
    %2802 = vmatprep.subr.mxu0 0.0
    %2803 = vmatpush1.msra.mxu0 0.0
    %2804 = vmatprep.subr.mxu0 0.0
    %2805 = vmatpush1.msra.mxu0 0.0
    %2806 = vmatprep.subr.mxu0 0.0
    %2807 = vmatpush1.msra.mxu0 0.0
    %2808 = vmatprep.mubr.f32.mxu0 0.0
    %2809 = vmatmul.mubr.f32.gmra.mrb[0].mxu0 %v1608
    %v2810 = vpop.f32.mrb[0].mxu0
    %v2811 = vadd.f32 %v2407, %v2810
    %v2812 = vpop.f32.mrb[0].mxu0
    %2813 = vdwg.mxu0
    %2815 = vrot.lane.b32.xlu0 %v2743, 32
    %v2816 = vpop.permute.xlu0 %2815
    %v2817 = vsel %vm88, %v2816, 0
    %2819 = vmatprep.subr.mxu0 0.0
    %2820 = vmatpush1.msra.mxu0 %v2397
    %2821 = vmatprep.subr.mxu0 0.0
    %2822 = vmatpush1.msra.mxu0 %v2398
    %2823 = vmatprep.subr.mxu0 0.0
    %2824 = vmatpush1.msra.mxu0 %v2399
    %2825 = vmatprep.subr.mxu0 0.0
    %2826 = vmatpush1.msra.mxu0 %v2400
    %2827 = vmatprep.subr.mxu0 0.0
    %2828 = vmatpush1.msra.mxu0 0.0
    %2829 = vmatprep.subr.mxu0 0.0
    %2830 = vmatpush1.msra.mxu0 0.0
    %2831 = vmatprep.subr.mxu0 0.0
    %2832 = vmatpush1.msra.mxu0 0.0
    %2833 = vmatprep.subr.mxu0 0.0
    %2834 = vmatpush1.msra.mxu0 0.0
    %2835 = vmatprep.subr.mxu0 0.0
    %2836 = vmatpush1.msra.mxu0 0.0
    %2837 = vmatprep.subr.mxu0 0.0
    %2838 = vmatpush1.msra.mxu0 0.0
    %2839 = vmatprep.subr.mxu0 0.0
    %2840 = vmatpush1.msra.mxu0 0.0
    %2841 = vmatprep.subr.mxu0 0.0
    %2842 = vmatpush1.msra.mxu0 0.0
    %2843 = vmatprep.subr.mxu0 0.0
    %2844 = vmatpush1.msra.mxu0 0.0
    %2845 = vmatprep.subr.mxu0 0.0
    %2846 = vmatpush1.msra.mxu0 0.0
    %2847 = vmatprep.subr.mxu0 0.0
    %2848 = vmatpush1.msra.mxu0 0.0
    %2849 = vmatprep.subr.mxu0 0.0
    %2850 = vmatpush1.msra.mxu0 0.0
    %2851 = vmatprep.subr.mxu0 0.0
    %2852 = vmatpush1.msra.mxu0 0.0
    %2853 = vmatprep.subr.mxu0 0.0
    %2854 = vmatpush1.msra.mxu0 0.0
    %2855 = vmatprep.subr.mxu0 0.0
    %2856 = vmatpush1.msra.mxu0 0.0
    %2857 = vmatprep.subr.mxu0 0.0
    %2858 = vmatpush1.msra.mxu0 0.0
    %2859 = vmatprep.subr.mxu0 0.0
    %2860 = vmatpush1.msra.mxu0 0.0
    %2861 = vmatprep.subr.mxu0 0.0
    %2862 = vmatpush1.msra.mxu0 0.0
    %2863 = vmatprep.subr.mxu0 0.0
    %2864 = vmatpush1.msra.mxu0 0.0
    %2865 = vmatprep.subr.mxu0 0.0
    %2866 = vmatpush1.msra.mxu0 0.0
    %2867 = vmatprep.subr.mxu0 0.0
    %2868 = vmatpush1.msra.mxu0 0.0
    %2869 = vmatprep.subr.mxu0 0.0
    %2870 = vmatpush1.msra.mxu0 0.0
    %2871 = vmatprep.subr.mxu0 0.0
    %2872 = vmatpush1.msra.mxu0 0.0
    %2873 = vmatprep.subr.mxu0 0.0
    %2874 = vmatpush1.msra.mxu0 0.0
    %2875 = vmatprep.subr.mxu0 0.0
    %2876 = vmatpush1.msra.mxu0 0.0
    %2877 = vmatprep.subr.mxu0 0.0
    %2878 = vmatpush1.msra.mxu0 0.0
    %2879 = vmatprep.subr.mxu0 0.0
    %2880 = vmatpush1.msra.mxu0 0.0
    %2881 = vmatprep.subr.mxu0 0.0
    %2882 = vmatpush1.msra.mxu0 0.0
    %2883 = vmatprep.mubr.f32.mxu0 0.0
    %2884 = vmatmul.mubr.f32.gmra.mrb[0].mxu0 %v2817
    %v2885 = vpop.f32.mrb[0].mxu0
    %v2886 = vadd.f32 0.0, %v2885
    %v2887 = vpop.f32.mrb[0].mxu0
    %2888 = vdwg.mxu0
    %v2889 = vadd.f32 %v2811, %v2886
    %v2890 = vxor.u32 %v2889, 2147483648
    %v2891 = vmul.f32 %v2890, 1.442695
    %v2892 = vpow.pop %v2891
    %v2893 = vadd.f32 %v2892, 1.0
    %v2894 = vrcp.pop %v2893
    %v2895 = vmul.f32 1.0, %v2894
    %v2896 = vtanh.pop %v2889
    %v2897 = vmul.f32 %v2895, %v2737
    %2899 = vrot.lane.b32.xlu0 %v2896, 64
    %v2900 = vpop.permute.xlu0 %2899
    %v2902 = vmul.f32 %v2895, %v2900
    %2904 = vrot.lane.b32.xlu0 %v2902, 32
    %v2905 = vpop.permute.xlu0 %2904
    %v2907 = vadd.f32 %v2897, %v2905
    %v2908 = vtanh.pop %v2907
    %2910 = vrot.lane.b32.xlu0 %v2908, 64
    %v2911 = vpop.permute.xlu0 %2910
    %v2913 = vmul.f32 %v2895, %v2911
    %2914 = vmatprep.subr.mxu0 0.0
    %2915 = vmatpush1.msra.mxu0 %v2392
    %2916 = vmatprep.subr.mxu0 0.0
    %2917 = vmatpush1.msra.mxu0 %v2393
    %2918 = vmatprep.subr.mxu0 0.0
    %2919 = vmatpush1.msra.mxu0 %v2394
    %2920 = vmatprep.subr.mxu0 0.0
    %2921 = vmatpush1.msra.mxu0 %v2395
    %2922 = vmatprep.subr.mxu0 0.0
    %2923 = vmatpush1.msra.mxu0 0.0
    %2924 = vmatprep.subr.mxu0 0.0
    %2925 = vmatpush1.msra.mxu0 0.0
    %2926 = vmatprep.subr.mxu0 0.0
    %2927 = vmatpush1.msra.mxu0 0.0
    %2928 = vmatprep.subr.mxu0 0.0
    %2929 = vmatpush1.msra.mxu0 0.0
    %2930 = vmatprep.subr.mxu0 0.0
    %2931 = vmatpush1.msra.mxu0 0.0
    %2932 = vmatprep.subr.mxu0 0.0
    %2933 = vmatpush1.msra.mxu0 0.0
    %2934 = vmatprep.subr.mxu0 0.0
    %2935 = vmatpush1.msra.mxu0 0.0
    %2936 = vmatprep.subr.mxu0 0.0
    %2937 = vmatpush1.msra.mxu0 0.0
    %2938 = vmatprep.subr.mxu0 0.0
    %2939 = vmatpush1.msra.mxu0 0.0
    %2940 = vmatprep.subr.mxu0 0.0
    %2941 = vmatpush1.msra.mxu0 0.0
    %2942 = vmatprep.subr.mxu0 0.0
    %2943 = vmatpush1.msra.mxu0 0.0
    %2944 = vmatprep.subr.mxu0 0.0
    %2945 = vmatpush1.msra.mxu0 0.0
    %2946 = vmatprep.subr.mxu0 0.0
    %2947 = vmatpush1.msra.mxu0 0.0
    %2948 = vmatprep.subr.mxu0 0.0
    %2949 = vmatpush1.msra.mxu0 0.0
    %2950 = vmatprep.subr.mxu0 0.0
    %2951 = vmatpush1.msra.mxu0 0.0
    %2952 = vmatprep.subr.mxu0 0.0
    %2953 = vmatpush1.msra.mxu0 0.0
    %2954 = vmatprep.subr.mxu0 0.0
    %2955 = vmatpush1.msra.mxu0 0.0
    %2956 = vmatprep.subr.mxu0 0.0
    %2957 = vmatpush1.msra.mxu0 0.0
    %2958 = vmatprep.subr.mxu0 0.0
    %2959 = vmatpush1.msra.mxu0 0.0
    %2960 = vmatprep.subr.mxu0 0.0
    %2961 = vmatpush1.msra.mxu0 0.0
    %2962 = vmatprep.subr.mxu0 0.0
    %2963 = vmatpush1.msra.mxu0 0.0
    %2964 = vmatprep.subr.mxu0 0.0
    %2965 = vmatpush1.msra.mxu0 0.0
    %2966 = vmatprep.subr.mxu0 0.0
    %2967 = vmatpush1.msra.mxu0 0.0
    %2968 = vmatprep.subr.mxu0 0.0
    %2969 = vmatpush1.msra.mxu0 0.0
    %2970 = vmatprep.subr.mxu0 0.0
    %2971 = vmatpush1.msra.mxu0 0.0
    %2972 = vmatprep.subr.mxu0 0.0
    %2973 = vmatpush1.msra.mxu0 0.0
    %2974 = vmatprep.subr.mxu0 0.0
    %2975 = vmatpush1.msra.mxu0 0.0
    %2976 = vmatprep.subr.mxu0 0.0
    %2977 = vmatpush1.msra.mxu0 0.0
    %2978 = vmatprep.mubr.f32.mxu0 0.0
    %2979 = vmatmul.mubr.f32.gmra.mrb[0].mxu0 %v1778
    %v2980 = vpop.f32.mrb[0].mxu0
    %v2981 = vadd.f32 %v2407, %v2980
    %v2982 = vpop.f32.mrb[0].mxu0
    %2983 = vdwg.mxu0
    %2985 = vrot.lane.b32.xlu0 %v2913, 32
    %v2986 = vpop.permute.xlu0 %2985
    %v2987 = vsel %vm88, %v2986, 0
    %2989 = vmatprep.subr.mxu0 0.0
    %2990 = vmatpush1.msra.mxu0 %v2397
    %2991 = vmatprep.subr.mxu0 0.0
    %2992 = vmatpush1.msra.mxu0 %v2398
    %2993 = vmatprep.subr.mxu0 0.0
    %2994 = vmatpush1.msra.mxu0 %v2399
    %2995 = vmatprep.subr.mxu0 0.0
    %2996 = vmatpush1.msra.mxu0 %v2400
    %2997 = vmatprep.subr.mxu0 0.0
    %2998 = vmatpush1.msra.mxu0 0.0
    %2999 = vmatprep.subr.mxu0 0.0
    %3000 = vmatpush1.msra.mxu0 0.0
    %3001 = vmatprep.subr.mxu0 0.0
    %3002 = vmatpush1.msra.mxu0 0.0
    %3003 = vmatprep.subr.mxu0 0.0
    %3004 = vmatpush1.msra.mxu0 0.0
    %3005 = vmatprep.subr.mxu0 0.0
    %3006 = vmatpush1.msra.mxu0 0.0
    %3007 = vmatprep.subr.mxu0 0.0
    %3008 = vmatpush1.msra.mxu0 0.0
    %3009 = vmatprep.subr.mxu0 0.0
    %3010 = vmatpush1.msra.mxu0 0.0
    %3011 = vmatprep.subr.mxu0 0.0
    %3012 = vmatpush1.msra.mxu0 0.0
    %3013 = vmatprep.subr.mxu0 0.0
    %3014 = vmatpush1.msra.mxu0 0.0
    %3015 = vmatprep.subr.mxu0 0.0
    %3016 = vmatpush1.msra.mxu0 0.0
    %3017 = vmatprep.subr.mxu0 0.0
    %3018 = vmatpush1.msra.mxu0 0.0
    %3019 = vmatprep.subr.mxu0 0.0
    %3020 = vmatpush1.msra.mxu0 0.0
    %3021 = vmatprep.subr.mxu0 0.0
    %3022 = vmatpush1.msra.mxu0 0.0
    %3023 = vmatprep.subr.mxu0 0.0
    %3024 = vmatpush1.msra.mxu0 0.0
    %3025 = vmatprep.subr.mxu0 0.0
    %3026 = vmatpush1.msra.mxu0 0.0
    %3027 = vmatprep.subr.mxu0 0.0
    %3028 = vmatpush1.msra.mxu0 0.0
    %3029 = vmatprep.subr.mxu0 0.0
    %3030 = vmatpush1.msra.mxu0 0.0
    %3031 = vmatprep.subr.mxu0 0.0
    %3032 = vmatpush1.msra.mxu0 0.0
    %3033 = vmatprep.subr.mxu0 0.0
    %3034 = vmatpush1.msra.mxu0 0.0
    %3035 = vmatprep.subr.mxu0 0.0
    %3036 = vmatpush1.msra.mxu0 0.0
    %3037 = vmatprep.subr.mxu0 0.0
    %3038 = vmatpush1.msra.mxu0 0.0
    %3039 = vmatprep.subr.mxu0 0.0
    %3040 = vmatpush1.msra.mxu0 0.0
    %3041 = vmatprep.subr.mxu0 0.0
    %3042 = vmatpush1.msra.mxu0 0.0
    %3043 = vmatprep.subr.mxu0 0.0
    %3044 = vmatpush1.msra.mxu0 0.0
    %3045 = vmatprep.subr.mxu0 0.0
    %3046 = vmatpush1.msra.mxu0 0.0
    %3047 = vmatprep.subr.mxu0 0.0
    %3048 = vmatpush1.msra.mxu0 0.0
    %3049 = vmatprep.subr.mxu0 0.0
    %3050 = vmatpush1.msra.mxu0 0.0
    %3051 = vmatprep.subr.mxu0 0.0
    %3052 = vmatpush1.msra.mxu0 0.0
    %3053 = vmatprep.mubr.f32.mxu0 0.0
    %3054 = vmatmul.mubr.f32.gmra.mrb[0].mxu0 %v2987
    %v3055 = vpop.f32.mrb[0].mxu0
    %v3056 = vadd.f32 0.0, %v3055
    %v3057 = vpop.f32.mrb[0].mxu0
    %3058 = vdwg.mxu0
    %v3059 = vadd.f32 %v2981, %v3056
    %v3060 = vxor.u32 %v3059, 2147483648
    %v3061 = vmul.f32 %v3060, 1.442695
    %v3062 = vpow.pop %v3061
    %v3063 = vadd.f32 %v3062, 1.0
    %v3064 = vrcp.pop %v3063
    %v3065 = vmul.f32 1.0, %v3064
    %v3066 = vtanh.pop %v3059
    %v3067 = vmul.f32 %v3065, %v2907
    %3069 = vrot.lane.b32.xlu0 %v3066, 64
    %v3070 = vpop.permute.xlu0 %3069
    %v3072 = vmul.f32 %v3065, %v3070
    %3074 = vrot.lane.b32.xlu0 %v3072, 32
    %v3075 = vpop.permute.xlu0 %3074
    %v3077 = vadd.f32 %v3067, %v3075
    %v3078 = vtanh.pop %v3077
    %3080 = vrot.lane.b32.xlu0 %v3078, 64
    %v3081 = vpop.permute.xlu0 %3080
    %v3083 = vmul.f32 %v3065, %v3081
    %3084 = vmatprep.subr.mxu0 0.0
    %3085 = vmatpush1.msra.mxu0 %v2392
    %3086 = vmatprep.subr.mxu0 0.0
    %3087 = vmatpush1.msra.mxu0 %v2393
    %3088 = vmatprep.subr.mxu0 0.0
    %3089 = vmatpush1.msra.mxu0 %v2394
    %3090 = vmatprep.subr.mxu0 0.0
    %3091 = vmatpush1.msra.mxu0 %v2395
    %3092 = vmatprep.subr.mxu0 0.0
    %3093 = vmatpush1.msra.mxu0 0.0
    %3094 = vmatprep.subr.mxu0 0.0
    %3095 = vmatpush1.msra.mxu0 0.0
    %3096 = vmatprep.subr.mxu0 0.0
    %3097 = vmatpush1.msra.mxu0 0.0
    %3098 = vmatprep.subr.mxu0 0.0
    %3099 = vmatpush1.msra.mxu0 0.0
    %3100 = vmatprep.subr.mxu0 0.0
    %3101 = vmatpush1.msra.mxu0 0.0
    %3102 = vmatprep.subr.mxu0 0.0
    %3103 = vmatpush1.msra.mxu0 0.0
    %3104 = vmatprep.subr.mxu0 0.0
    %3105 = vmatpush1.msra.mxu0 0.0
    %3106 = vmatprep.subr.mxu0 0.0
    %3107 = vmatpush1.msra.mxu0 0.0
    %3108 = vmatprep.subr.mxu0 0.0
    %3109 = vmatpush1.msra.mxu0 0.0
    %3110 = vmatprep.subr.mxu0 0.0
    %3111 = vmatpush1.msra.mxu0 0.0
    %3112 = vmatprep.subr.mxu0 0.0
    %3113 = vmatpush1.msra.mxu0 0.0
    %3114 = vmatprep.subr.mxu0 0.0
    %3115 = vmatpush1.msra.mxu0 0.0
    %3116 = vmatprep.subr.mxu0 0.0
    %3117 = vmatpush1.msra.mxu0 0.0
    %3118 = vmatprep.subr.mxu0 0.0
    %3119 = vmatpush1.msra.mxu0 0.0
    %3120 = vmatprep.subr.mxu0 0.0
    %3121 = vmatpush1.msra.mxu0 0.0
    %3122 = vmatprep.subr.mxu0 0.0
    %3123 = vmatpush1.msra.mxu0 0.0
    %3124 = vmatprep.subr.mxu0 0.0
    %3125 = vmatpush1.msra.mxu0 0.0
    %3126 = vmatprep.subr.mxu0 0.0
    %3127 = vmatpush1.msra.mxu0 0.0
    %3128 = vmatprep.subr.mxu0 0.0
    %3129 = vmatpush1.msra.mxu0 0.0
    %3130 = vmatprep.subr.mxu0 0.0
    %3131 = vmatpush1.msra.mxu0 0.0
    %3132 = vmatprep.subr.mxu0 0.0
    %3133 = vmatpush1.msra.mxu0 0.0
    %3134 = vmatprep.subr.mxu0 0.0
    %3135 = vmatpush1.msra.mxu0 0.0
    %3136 = vmatprep.subr.mxu0 0.0
    %3137 = vmatpush1.msra.mxu0 0.0
    %3138 = vmatprep.subr.mxu0 0.0
    %3139 = vmatpush1.msra.mxu0 0.0
    %3140 = vmatprep.subr.mxu0 0.0
    %3141 = vmatpush1.msra.mxu0 0.0
    %3142 = vmatprep.subr.mxu0 0.0
    %3143 = vmatpush1.msra.mxu0 0.0
    %3144 = vmatprep.subr.mxu0 0.0
    %3145 = vmatpush1.msra.mxu0 0.0
    %3146 = vmatprep.subr.mxu0 0.0
    %3147 = vmatpush1.msra.mxu0 0.0
    %3148 = vmatprep.mubr.f32.mxu0 0.0
    %3149 = vmatmul.mubr.f32.gmra.mrb[0].mxu0 %v1948
    %v3150 = vpop.f32.mrb[0].mxu0
    %v3151 = vadd.f32 %v2407, %v3150
    %v3152 = vpop.f32.mrb[0].mxu0
    %3153 = vdwg.mxu0
    %3155 = vrot.lane.b32.xlu0 %v3083, 32
    %v3156 = vpop.permute.xlu0 %3155
    %v3157 = vsel %vm88, %v3156, 0
    %3159 = vmatprep.subr.mxu0 0.0
    %3160 = vmatpush1.msra.mxu0 %v2397
    %3161 = vmatprep.subr.mxu0 0.0
    %3162 = vmatpush1.msra.mxu0 %v2398
    %3163 = vmatprep.subr.mxu0 0.0
    %3164 = vmatpush1.msra.mxu0 %v2399
    %3165 = vmatprep.subr.mxu0 0.0
    %3166 = vmatpush1.msra.mxu0 %v2400
    %3167 = vmatprep.subr.mxu0 0.0
    %3168 = vmatpush1.msra.mxu0 0.0
    %3169 = vmatprep.subr.mxu0 0.0
    %3170 = vmatpush1.msra.mxu0 0.0
    %3171 = vmatprep.subr.mxu0 0.0
    %3172 = vmatpush1.msra.mxu0 0.0
    %3173 = vmatprep.subr.mxu0 0.0
    %3174 = vmatpush1.msra.mxu0 0.0
    %3175 = vmatprep.subr.mxu0 0.0
    %3176 = vmatpush1.msra.mxu0 0.0
    %3177 = vmatprep.subr.mxu0 0.0
    %3178 = vmatpush1.msra.mxu0 0.0
    %3179 = vmatprep.subr.mxu0 0.0
    %3180 = vmatpush1.msra.mxu0 0.0
    %3181 = vmatprep.subr.mxu0 0.0
    %3182 = vmatpush1.msra.mxu0 0.0
    %3183 = vmatprep.subr.mxu0 0.0
    %3184 = vmatpush1.msra.mxu0 0.0
    %3185 = vmatprep.subr.mxu0 0.0
    %3186 = vmatpush1.msra.mxu0 0.0
    %3187 = vmatprep.subr.mxu0 0.0
    %3188 = vmatpush1.msra.mxu0 0.0
    %3189 = vmatprep.subr.mxu0 0.0
    %3190 = vmatpush1.msra.mxu0 0.0
    %3191 = vmatprep.subr.mxu0 0.0
    %3192 = vmatpush1.msra.mxu0 0.0
    %3193 = vmatprep.subr.mxu0 0.0
    %3194 = vmatpush1.msra.mxu0 0.0
    %3195 = vmatprep.subr.mxu0 0.0
    %3196 = vmatpush1.msra.mxu0 0.0
    %3197 = vmatprep.subr.mxu0 0.0
    %3198 = vmatpush1.msra.mxu0 0.0
    %3199 = vmatprep.subr.mxu0 0.0
    %3200 = vmatpush1.msra.mxu0 0.0
    %3201 = vmatprep.subr.mxu0 0.0
    %3202 = vmatpush1.msra.mxu0 0.0
    %3203 = vmatprep.subr.mxu0 0.0
    %3204 = vmatpush1.msra.mxu0 0.0
    %3205 = vmatprep.subr.mxu0 0.0
    %3206 = vmatpush1.msra.mxu0 0.0
    %3207 = vmatprep.subr.mxu0 0.0
    %3208 = vmatpush1.msra.mxu0 0.0
    %3209 = vmatprep.subr.mxu0 0.0
    %3210 = vmatpush1.msra.mxu0 0.0
    %3211 = vmatprep.subr.mxu0 0.0
    %3212 = vmatpush1.msra.mxu0 0.0
    %3213 = vmatprep.subr.mxu0 0.0
    %3214 = vmatpush1.msra.mxu0 0.0
    %3215 = vmatprep.subr.mxu0 0.0
    %3216 = vmatpush1.msra.mxu0 0.0
    %3217 = vmatprep.subr.mxu0 0.0
    %3218 = vmatpush1.msra.mxu0 0.0
    %3219 = vmatprep.subr.mxu0 0.0
    %3220 = vmatpush1.msra.mxu0 0.0
    %3221 = vmatprep.subr.mxu0 0.0
    %3222 = vmatpush1.msra.mxu0 0.0
    %3223 = vmatprep.mubr.f32.mxu0 0.0
    %3224 = vmatmul.mubr.f32.gmra.mrb[0].mxu0 %v3157
    %v3225 = vpop.f32.mrb[0].mxu0
    %v3226 = vadd.f32 0.0, %v3225
    %v3227 = vpop.f32.mrb[0].mxu0
    %3228 = vdwg.mxu0
    %v3229 = vadd.f32 %v3151, %v3226
    %v3230 = vxor.u32 %v3229, 2147483648
    %v3231 = vmul.f32 %v3230, 1.442695
    %v3232 = vpow.pop %v3231
    %v3233 = vadd.f32 %v3232, 1.0
    %v3234 = vrcp.pop %v3233
    %v3235 = vmul.f32 1.0, %v3234
    %v3236 = vtanh.pop %v3229
    %v3237 = vmul.f32 %v3235, %v3077
    %3239 = vrot.lane.b32.xlu0 %v3236, 64
    %v3240 = vpop.permute.xlu0 %3239
    %v3242 = vmul.f32 %v3235, %v3240
    %3244 = vrot.lane.b32.xlu0 %v3242, 32
    %v3245 = vpop.permute.xlu0 %3244
    %v3247 = vadd.f32 %v3237, %v3245
    %v3248 = vtanh.pop %v3247
    %3250 = vrot.lane.b32.xlu0 %v3248, 64
    %v3251 = vpop.permute.xlu0 %3250
    %v3253 = vmul.f32 %v3235, %v3251
    %3254 = vmatprep.subr.mxu0 0.0
    %3255 = vmatpush1.msra.mxu0 %v2392
    %3256 = vmatprep.subr.mxu0 0.0
    %3257 = vmatpush1.msra.mxu0 %v2393
    %3258 = vmatprep.subr.mxu0 0.0
    %3259 = vmatpush1.msra.mxu0 %v2394
    %3260 = vmatprep.subr.mxu0 0.0
    %3261 = vmatpush1.msra.mxu0 %v2395
    %3262 = vmatprep.subr.mxu0 0.0
    %3263 = vmatpush1.msra.mxu0 0.0
    %3264 = vmatprep.subr.mxu0 0.0
    %3265 = vmatpush1.msra.mxu0 0.0
    %3266 = vmatprep.subr.mxu0 0.0
    %3267 = vmatpush1.msra.mxu0 0.0
    %3268 = vmatprep.subr.mxu0 0.0
    %3269 = vmatpush1.msra.mxu0 0.0
    %3270 = vmatprep.subr.mxu0 0.0
    %3271 = vmatpush1.msra.mxu0 0.0
    %3272 = vmatprep.subr.mxu0 0.0
    %3273 = vmatpush1.msra.mxu0 0.0
    %3274 = vmatprep.subr.mxu0 0.0
    %3275 = vmatpush1.msra.mxu0 0.0
    %3276 = vmatprep.subr.mxu0 0.0
    %3277 = vmatpush1.msra.mxu0 0.0
    %3278 = vmatprep.subr.mxu0 0.0
    %3279 = vmatpush1.msra.mxu0 0.0
    %3280 = vmatprep.subr.mxu0 0.0
    %3281 = vmatpush1.msra.mxu0 0.0
    %3282 = vmatprep.subr.mxu0 0.0
    %3283 = vmatpush1.msra.mxu0 0.0
    %3284 = vmatprep.subr.mxu0 0.0
    %3285 = vmatpush1.msra.mxu0 0.0
    %3286 = vmatprep.subr.mxu0 0.0
    %3287 = vmatpush1.msra.mxu0 0.0
    %3288 = vmatprep.subr.mxu0 0.0
    %3289 = vmatpush1.msra.mxu0 0.0
    %3290 = vmatprep.subr.mxu0 0.0
    %3291 = vmatpush1.msra.mxu0 0.0
    %3292 = vmatprep.subr.mxu0 0.0
    %3293 = vmatpush1.msra.mxu0 0.0
    %3294 = vmatprep.subr.mxu0 0.0
    %3295 = vmatpush1.msra.mxu0 0.0
    %3296 = vmatprep.subr.mxu0 0.0
    %3297 = vmatpush1.msra.mxu0 0.0
    %3298 = vmatprep.subr.mxu0 0.0
    %3299 = vmatpush1.msra.mxu0 0.0
    %3300 = vmatprep.subr.mxu0 0.0
    %3301 = vmatpush1.msra.mxu0 0.0
    %3302 = vmatprep.subr.mxu0 0.0
    %3303 = vmatpush1.msra.mxu0 0.0
    %3304 = vmatprep.subr.mxu0 0.0
    %3305 = vmatpush1.msra.mxu0 0.0
    %3306 = vmatprep.subr.mxu0 0.0
    %3307 = vmatpush1.msra.mxu0 0.0
    %3308 = vmatprep.subr.mxu0 0.0
    %3309 = vmatpush1.msra.mxu0 0.0
    %3310 = vmatprep.subr.mxu0 0.0
    %3311 = vmatpush1.msra.mxu0 0.0
    %3312 = vmatprep.subr.mxu0 0.0
    %3313 = vmatpush1.msra.mxu0 0.0
    %3314 = vmatprep.subr.mxu0 0.0
    %3315 = vmatpush1.msra.mxu0 0.0
    %3316 = vmatprep.subr.mxu0 0.0
    %3317 = vmatpush1.msra.mxu0 0.0
    %3318 = vmatprep.mubr.f32.mxu0 0.0
    %3319 = vmatmul.mubr.f32.gmra.mrb[0].mxu0 %v2118
    %v3320 = vpop.f32.mrb[0].mxu0
    %v3321 = vadd.f32 %v2407, %v3320
    %v3322 = vpop.f32.mrb[0].mxu0
    %3323 = vdwg.mxu0
    %3325 = vrot.lane.b32.xlu0 %v3253, 32
    %v3326 = vpop.permute.xlu0 %3325
    %v3327 = vsel %vm88, %v3326, 0
    %3329 = vmatprep.subr.mxu0 0.0
    %3330 = vmatpush1.msra.mxu0 %v2397
    %3331 = vmatprep.subr.mxu0 0.0
    %3332 = vmatpush1.msra.mxu0 %v2398
    %3333 = vmatprep.subr.mxu0 0.0
    %3334 = vmatpush1.msra.mxu0 %v2399
    %3335 = vmatprep.subr.mxu0 0.0
    %3336 = vmatpush1.msra.mxu0 %v2400
    %3337 = vmatprep.subr.mxu0 0.0
    %3338 = vmatpush1.msra.mxu0 0.0
    %3339 = vmatprep.subr.mxu0 0.0
    %3340 = vmatpush1.msra.mxu0 0.0
    %3341 = vmatprep.subr.mxu0 0.0
    %3342 = vmatpush1.msra.mxu0 0.0
    %3343 = vmatprep.subr.mxu0 0.0
    %3344 = vmatpush1.msra.mxu0 0.0
    %3345 = vmatprep.subr.mxu0 0.0
    %3346 = vmatpush1.msra.mxu0 0.0
    %3347 = vmatprep.subr.mxu0 0.0
    %3348 = vmatpush1.msra.mxu0 0.0
    %3349 = vmatprep.subr.mxu0 0.0
    %3350 = vmatpush1.msra.mxu0 0.0
    %3351 = vmatprep.subr.mxu0 0.0
    %3352 = vmatpush1.msra.mxu0 0.0
    %3353 = vmatprep.subr.mxu0 0.0
    %3354 = vmatpush1.msra.mxu0 0.0
    %3355 = vmatprep.subr.mxu0 0.0
    %3356 = vmatpush1.msra.mxu0 0.0
    %3357 = vmatprep.subr.mxu0 0.0
    %3358 = vmatpush1.msra.mxu0 0.0
    %3359 = vmatprep.subr.mxu0 0.0
    %3360 = vmatpush1.msra.mxu0 0.0
    %3361 = vmatprep.subr.mxu0 0.0
    %3362 = vmatpush1.msra.mxu0 0.0
    %3363 = vmatprep.subr.mxu0 0.0
    %3364 = vmatpush1.msra.mxu0 0.0
    %3365 = vmatprep.subr.mxu0 0.0
    %3366 = vmatpush1.msra.mxu0 0.0
    %3367 = vmatprep.subr.mxu0 0.0
    %3368 = vmatpush1.msra.mxu0 0.0
    %3369 = vmatprep.subr.mxu0 0.0
    %3370 = vmatpush1.msra.mxu0 0.0
    %3371 = vmatprep.subr.mxu0 0.0
    %3372 = vmatpush1.msra.mxu0 0.0
    %3373 = vmatprep.subr.mxu0 0.0
    %3374 = vmatpush1.msra.mxu0 0.0
    %3375 = vmatprep.subr.mxu0 0.0
    %3376 = vmatpush1.msra.mxu0 0.0
    %3377 = vmatprep.subr.mxu0 0.0
    %3378 = vmatpush1.msra.mxu0 0.0
    %3379 = vmatprep.subr.mxu0 0.0
    %3380 = vmatpush1.msra.mxu0 0.0
    %3381 = vmatprep.subr.mxu0 0.0
    %3382 = vmatpush1.msra.mxu0 0.0
    %3383 = vmatprep.subr.mxu0 0.0
    %3384 = vmatpush1.msra.mxu0 0.0
    %3385 = vmatprep.subr.mxu0 0.0
    %3386 = vmatpush1.msra.mxu0 0.0
    %3387 = vmatprep.subr.mxu0 0.0
    %3388 = vmatpush1.msra.mxu0 0.0
    %3389 = vmatprep.subr.mxu0 0.0
    %3390 = vmatpush1.msra.mxu0 0.0
    %3391 = vmatprep.subr.mxu0 0.0
    %3392 = vmatpush1.msra.mxu0 0.0
    %3393 = vmatprep.mubr.f32.mxu0 0.0
    %3394 = vmatmul.mubr.f32.gmra.mrb[0].mxu0 %v3327
    %v3395 = vpop.f32.mrb[0].mxu0
    %v3396 = vadd.f32 0.0, %v3395
    %v3397 = vpop.f32.mrb[0].mxu0
    %3398 = vdwg.mxu0
    %v3399 = vadd.f32 %v3321, %v3396
    %v3400 = vxor.u32 %v3399, 2147483648
    %v3401 = vmul.f32 %v3400, 1.442695
    %v3402 = vpow.pop %v3401
    %v3403 = vadd.f32 %v3402, 1.0
    %v3404 = vrcp.pop %v3403
    %v3405 = vmul.f32 1.0, %v3404
    %v3406 = vtanh.pop %v3399
    %v3407 = vmul.f32 %v3405, %v3247
    %3409 = vrot.lane.b32.xlu0 %v3406, 64
    %v3410 = vpop.permute.xlu0 %3409
    %v3412 = vmul.f32 %v3405, %v3410
    %3414 = vrot.lane.b32.xlu0 %v3412, 32
    %v3415 = vpop.permute.xlu0 %3414
    %v3417 = vadd.f32 %v3407, %v3415
    %v3418 = vtanh.pop %v3417
    %3420 = vrot.lane.b32.xlu0 %v3418, 64
    %v3421 = vpop.permute.xlu0 %3420
    %v3423 = vmul.f32 %v3405, %v3421
    %3424 = vmatprep.subr.mxu0 0.0
    %3425 = vmatpush1.msra.mxu0 %v2392
    %3426 = vmatprep.subr.mxu0 0.0
    %3427 = vmatpush1.msra.mxu0 %v2393
    %3428 = vmatprep.subr.mxu0 0.0
    %3429 = vmatpush1.msra.mxu0 %v2394
    %3430 = vmatprep.subr.mxu0 0.0
    %3431 = vmatpush1.msra.mxu0 %v2395
    %3432 = vmatprep.subr.mxu0 0.0
    %3433 = vmatpush1.msra.mxu0 0.0
    %3434 = vmatprep.subr.mxu0 0.0
    %3435 = vmatpush1.msra.mxu0 0.0
    %3436 = vmatprep.subr.mxu0 0.0
    %3437 = vmatpush1.msra.mxu0 0.0
    %3438 = vmatprep.subr.mxu0 0.0
    %3439 = vmatpush1.msra.mxu0 0.0
    %3440 = vmatprep.subr.mxu0 0.0
    %3441 = vmatpush1.msra.mxu0 0.0
    %3442 = vmatprep.subr.mxu0 0.0
    %3443 = vmatpush1.msra.mxu0 0.0
    %3444 = vmatprep.subr.mxu0 0.0
    %3445 = vmatpush1.msra.mxu0 0.0
    %3446 = vmatprep.subr.mxu0 0.0
    %3447 = vmatpush1.msra.mxu0 0.0
    %3448 = vmatprep.subr.mxu0 0.0
    %3449 = vmatpush1.msra.mxu0 0.0
    %3450 = vmatprep.subr.mxu0 0.0
    %3451 = vmatpush1.msra.mxu0 0.0
    %3452 = vmatprep.subr.mxu0 0.0
    %3453 = vmatpush1.msra.mxu0 0.0
    %3454 = vmatprep.subr.mxu0 0.0
    %3455 = vmatpush1.msra.mxu0 0.0
    %3456 = vmatprep.subr.mxu0 0.0
    %3457 = vmatpush1.msra.mxu0 0.0
    %3458 = vmatprep.subr.mxu0 0.0
    %3459 = vmatpush1.msra.mxu0 0.0
    %3460 = vmatprep.subr.mxu0 0.0
    %3461 = vmatpush1.msra.mxu0 0.0
    %3462 = vmatprep.subr.mxu0 0.0
    %3463 = vmatpush1.msra.mxu0 0.0
    %3464 = vmatprep.subr.mxu0 0.0
    %3465 = vmatpush1.msra.mxu0 0.0
    %3466 = vmatprep.subr.mxu0 0.0
    %3467 = vmatpush1.msra.mxu0 0.0
    %3468 = vmatprep.subr.mxu0 0.0
    %3469 = vmatpush1.msra.mxu0 0.0
    %3470 = vmatprep.subr.mxu0 0.0
    %3471 = vmatpush1.msra.mxu0 0.0
    %3472 = vmatprep.subr.mxu0 0.0
    %3473 = vmatpush1.msra.mxu0 0.0
    %3474 = vmatprep.subr.mxu0 0.0
    %3475 = vmatpush1.msra.mxu0 0.0
    %3476 = vmatprep.subr.mxu0 0.0
    %3477 = vmatpush1.msra.mxu0 0.0
    %3478 = vmatprep.subr.mxu0 0.0
    %3479 = vmatpush1.msra.mxu0 0.0
    %3480 = vmatprep.subr.mxu0 0.0
    %3481 = vmatpush1.msra.mxu0 0.0
    %3482 = vmatprep.subr.mxu0 0.0
    %3483 = vmatpush1.msra.mxu0 0.0
    %3484 = vmatprep.subr.mxu0 0.0
    %3485 = vmatpush1.msra.mxu0 0.0
    %3486 = vmatprep.subr.mxu0 0.0
    %3487 = vmatpush1.msra.mxu0 0.0
    %3488 = vmatprep.mubr.f32.mxu0 0.0
    %3489 = vmatmul.mubr.f32.gmra.mrb[0].mxu0 %v2294
    %v3490 = vpop.f32.mrb[0].mxu0
    %v3491 = vadd.f32 %v2407, %v3490
    %v3492 = vpop.f32.mrb[0].mxu0
    %3493 = vdwg.mxu0
    %3495 = vrot.lane.b32.xlu0 %v3423, 32
    %v3496 = vpop.permute.xlu0 %3495
    %v3497 = vsel %vm88, %v3496, 0
    %3499 = vmatprep.subr.mxu0 0.0
    %3500 = vmatpush1.msra.mxu0 %v2397
    %3501 = vmatprep.subr.mxu0 0.0
    %3502 = vmatpush1.msra.mxu0 %v2398
    %3503 = vmatprep.subr.mxu0 0.0
    %3504 = vmatpush1.msra.mxu0 %v2399
    %3505 = vmatprep.subr.mxu0 0.0
    %3506 = vmatpush1.msra.mxu0 %v2400
    %3507 = vmatprep.subr.mxu0 0.0
    %3508 = vmatpush1.msra.mxu0 0.0
    %3509 = vmatprep.subr.mxu0 0.0
    %3510 = vmatpush1.msra.mxu0 0.0
    %3511 = vmatprep.subr.mxu0 0.0
    %3512 = vmatpush1.msra.mxu0 0.0
    %3513 = vmatprep.subr.mxu0 0.0
    %3514 = vmatpush1.msra.mxu0 0.0
    %3515 = vmatprep.subr.mxu0 0.0
    %3516 = vmatpush1.msra.mxu0 0.0
    %3517 = vmatprep.subr.mxu0 0.0
    %3518 = vmatpush1.msra.mxu0 0.0
    %3519 = vmatprep.subr.mxu0 0.0
    %3520 = vmatpush1.msra.mxu0 0.0
    %3521 = vmatprep.subr.mxu0 0.0
    %3522 = vmatpush1.msra.mxu0 0.0
    %3523 = vmatprep.subr.mxu0 0.0
    %3524 = vmatpush1.msra.mxu0 0.0
    %3525 = vmatprep.subr.mxu0 0.0
    %3526 = vmatpush1.msra.mxu0 0.0
    %3527 = vmatprep.subr.mxu0 0.0
    %3528 = vmatpush1.msra.mxu0 0.0
    %3529 = vmatprep.subr.mxu0 0.0
    %3530 = vmatpush1.msra.mxu0 0.0
    %3531 = vmatprep.subr.mxu0 0.0
    %3532 = vmatpush1.msra.mxu0 0.0
    %3533 = vmatprep.subr.mxu0 0.0
    %3534 = vmatpush1.msra.mxu0 0.0
    %3535 = vmatprep.subr.mxu0 0.0
    %3536 = vmatpush1.msra.mxu0 0.0
    %3537 = vmatprep.subr.mxu0 0.0
    %3538 = vmatpush1.msra.mxu0 0.0
    %3539 = vmatprep.subr.mxu0 0.0
    %3540 = vmatpush1.msra.mxu0 0.0
    %3541 = vmatprep.subr.mxu0 0.0
    %3542 = vmatpush1.msra.mxu0 0.0
    %3543 = vmatprep.subr.mxu0 0.0
    %3544 = vmatpush1.msra.mxu0 0.0
    %3545 = vmatprep.subr.mxu0 0.0
    %3546 = vmatpush1.msra.mxu0 0.0
    %3547 = vmatprep.subr.mxu0 0.0
    %3548 = vmatpush1.msra.mxu0 0.0
    %3549 = vmatprep.subr.mxu0 0.0
    %3550 = vmatpush1.msra.mxu0 0.0
    %3551 = vmatprep.subr.mxu0 0.0
    %3552 = vmatpush1.msra.mxu0 0.0
    %3553 = vmatprep.subr.mxu0 0.0
    %3554 = vmatpush1.msra.mxu0 0.0
    %3555 = vmatprep.subr.mxu0 0.0
    %3556 = vmatpush1.msra.mxu0 0.0
    %3557 = vmatprep.subr.mxu0 0.0
    %3558 = vmatpush1.msra.mxu0 0.0
    %3559 = vmatprep.subr.mxu0 0.0
    %3560 = vmatpush1.msra.mxu0 0.0
    %3561 = vmatprep.subr.mxu0 0.0
    %3562 = vmatpush1.msra.mxu0 0.0
    %3563 = vmatprep.mubr.f32.mxu0 0.0
    %3564 = vmatmul.mubr.f32.gmra.mrb[0].mxu0 %v3497
    %v3565 = vpop.f32.mrb[0].mxu0
    %v3566 = vadd.f32 0.0, %v3565
    %v3567 = vpop.f32.mrb[0].mxu0
    %3568 = vdwg.mxu0
    %v3569 = vadd.f32 %v3491, %v3566
    %v3570 = vxor.u32 %v3569, 2147483648
    %v3571 = vmul.f32 %v3570, 1.442695
    %v3572 = vpow.pop %v3571
    %v3573 = vadd.f32 %v3572, 1.0
    %v3574 = vrcp.pop %v3573
    %v3575 = vmul.f32 1.0, %v3574
    %v3576 = vtanh.pop %v3569
    %v3577 = vmul.f32 %v3575, %v3417
    %3579 = vrot.lane.b32.xlu0 %v3576, 64
    %v3580 = vpop.permute.xlu0 %3579
    %v3582 = vmul.f32 %v3575, %v3580
    %3584 = vrot.lane.b32.xlu0 %v3582, 32
    %v3585 = vpop.permute.xlu0 %3584
    %v3587 = vadd.f32 %v3577, %v3585
    %v3588 = vtanh.pop %v3587
    %3590 = vrot.lane.b32.xlu0 %v3588, 64
    %v3591 = vpop.permute.xlu0 %3590
    %v3593 = vmul.f32 %v3575, %v3591
    %3595 = vrot.lane.b32.xlu0 %v2390, 32
    %v3596 = vpop.permute.xlu0 %3595
    %v3597 = vsel %vm88, %v3596, 0
    %3599 = vmatprep.subr.mxu0 0.0
    %3600 = vmatpush1.msra.mxu0 %v2392
    %3601 = vmatprep.subr.mxu0 0.0
    %3602 = vmatpush1.msra.mxu0 %v2393
    %3603 = vmatprep.subr.mxu0 0.0
    %3604 = vmatpush1.msra.mxu0 %v2394
    %3605 = vmatprep.subr.mxu0 0.0
    %3606 = vmatpush1.msra.mxu0 %v2395
    %3607 = vmatprep.subr.mxu0 0.0
    %3608 = vmatpush1.msra.mxu0 0.0
    %3609 = vmatprep.subr.mxu0 0.0
    %3610 = vmatpush1.msra.mxu0 0.0
    %3611 = vmatprep.subr.mxu0 0.0
    %3612 = vmatpush1.msra.mxu0 0.0
    %3613 = vmatprep.subr.mxu0 0.0
    %3614 = vmatpush1.msra.mxu0 0.0
    %3615 = vmatprep.subr.mxu0 0.0
    %3616 = vmatpush1.msra.mxu0 0.0
    %3617 = vmatprep.subr.mxu0 0.0
    %3618 = vmatpush1.msra.mxu0 0.0
    %3619 = vmatprep.subr.mxu0 0.0
    %3620 = vmatpush1.msra.mxu0 0.0
    %3621 = vmatprep.subr.mxu0 0.0
    %3622 = vmatpush1.msra.mxu0 0.0
    %3623 = vmatprep.subr.mxu0 0.0
    %3624 = vmatpush1.msra.mxu0 0.0
    %3625 = vmatprep.subr.mxu0 0.0
    %3626 = vmatpush1.msra.mxu0 0.0
    %3627 = vmatprep.subr.mxu0 0.0
    %3628 = vmatpush1.msra.mxu0 0.0
    %3629 = vmatprep.subr.mxu0 0.0
    %3630 = vmatpush1.msra.mxu0 0.0
    %3631 = vmatprep.subr.mxu0 0.0
    %3632 = vmatpush1.msra.mxu0 0.0
    %3633 = vmatprep.subr.mxu0 0.0
    %3634 = vmatpush1.msra.mxu0 0.0
    %3635 = vmatprep.subr.mxu0 0.0
    %3636 = vmatpush1.msra.mxu0 0.0
    %3637 = vmatprep.subr.mxu0 0.0
    %3638 = vmatpush1.msra.mxu0 0.0
    %3639 = vmatprep.subr.mxu0 0.0
    %3640 = vmatpush1.msra.mxu0 0.0
    %3641 = vmatprep.subr.mxu0 0.0
    %3642 = vmatpush1.msra.mxu0 0.0
    %3643 = vmatprep.subr.mxu0 0.0
    %3644 = vmatpush1.msra.mxu0 0.0
    %3645 = vmatprep.subr.mxu0 0.0
    %3646 = vmatpush1.msra.mxu0 0.0
    %3647 = vmatprep.subr.mxu0 0.0
    %3648 = vmatpush1.msra.mxu0 0.0
    %3649 = vmatprep.subr.mxu0 0.0
    %3650 = vmatpush1.msra.mxu0 0.0
    %3651 = vmatprep.subr.mxu0 0.0
    %3652 = vmatpush1.msra.mxu0 0.0
    %3653 = vmatprep.subr.mxu0 0.0
    %3654 = vmatpush1.msra.mxu0 0.0
    %3655 = vmatprep.subr.mxu0 0.0
    %3656 = vmatpush1.msra.mxu0 0.0
    %3657 = vmatprep.subr.mxu0 0.0
    %3658 = vmatpush1.msra.mxu0 0.0
    %3659 = vmatprep.subr.mxu0 0.0
    %3660 = vmatpush1.msra.mxu0 0.0
    %3661 = vmatprep.subr.mxu0 0.0
    %3662 = vmatpush1.msra.mxu0 0.0
    %3663 = vmatprep.mubr.f32.mxu0 0.0
    %3664 = vmatmul.mubr.f32.gmra.mrb[0].mxu0 %v3597
    %v3665 = vpop.f32.mrb[0].mxu0
    %v3666 = vadd.f32 %v2407, %v3665
    %v3667 = vpop.f32.mrb[0].mxu0
    %3668 = vdwg.mxu0
    %3670 = vrot.lane.b32.xlu0 %v3593, 32
    %v3671 = vpop.permute.xlu0 %3670
    %v3672 = vsel %vm88, %v3671, 0
    %3674 = vmatprep.subr.mxu0 0.0
    %3675 = vmatpush1.msra.mxu0 %v2397
    %3676 = vmatprep.subr.mxu0 0.0
    %3677 = vmatpush1.msra.mxu0 %v2398
    %3678 = vmatprep.subr.mxu0 0.0
    %3679 = vmatpush1.msra.mxu0 %v2399
    %3680 = vmatprep.subr.mxu0 0.0
    %3681 = vmatpush1.msra.mxu0 %v2400
    %3682 = vmatprep.subr.mxu0 0.0
    %3683 = vmatpush1.msra.mxu0 0.0
    %3684 = vmatprep.subr.mxu0 0.0
    %3685 = vmatpush1.msra.mxu0 0.0
    %3686 = vmatprep.subr.mxu0 0.0
    %3687 = vmatpush1.msra.mxu0 0.0
    %3688 = vmatprep.subr.mxu0 0.0
    %3689 = vmatpush1.msra.mxu0 0.0
    %3690 = vmatprep.subr.mxu0 0.0
    %3691 = vmatpush1.msra.mxu0 0.0
    %3692 = vmatprep.subr.mxu0 0.0
    %3693 = vmatpush1.msra.mxu0 0.0
    %3694 = vmatprep.subr.mxu0 0.0
    %3695 = vmatpush1.msra.mxu0 0.0
    %3696 = vmatprep.subr.mxu0 0.0
    %3697 = vmatpush1.msra.mxu0 0.0
    %3698 = vmatprep.subr.mxu0 0.0
    %3699 = vmatpush1.msra.mxu0 0.0
    %3700 = vmatprep.subr.mxu0 0.0
    %3701 = vmatpush1.msra.mxu0 0.0
    %3702 = vmatprep.subr.mxu0 0.0
    %3703 = vmatpush1.msra.mxu0 0.0
    %3704 = vmatprep.subr.mxu0 0.0
    %3705 = vmatpush1.msra.mxu0 0.0
    %3706 = vmatprep.subr.mxu0 0.0
    %3707 = vmatpush1.msra.mxu0 0.0
    %3708 = vmatprep.subr.mxu0 0.0
    %3709 = vmatpush1.msra.mxu0 0.0
    %3710 = vmatprep.subr.mxu0 0.0
    %3711 = vmatpush1.msra.mxu0 0.0
    %3712 = vmatprep.subr.mxu0 0.0
    %3713 = vmatpush1.msra.mxu0 0.0
    %3714 = vmatprep.subr.mxu0 0.0
    %3715 = vmatpush1.msra.mxu0 0.0
    %3716 = vmatprep.subr.mxu0 0.0
    %3717 = vmatpush1.msra.mxu0 0.0
    %3718 = vmatprep.subr.mxu0 0.0
    %3719 = vmatpush1.msra.mxu0 0.0
    %3720 = vmatprep.subr.mxu0 0.0
    %3721 = vmatpush1.msra.mxu0 0.0
    %3722 = vmatprep.subr.mxu0 0.0
    %3723 = vmatpush1.msra.mxu0 0.0
    %3724 = vmatprep.subr.mxu0 0.0
    %3725 = vmatpush1.msra.mxu0 0.0
    %3726 = vmatprep.subr.mxu0 0.0
    %3727 = vmatpush1.msra.mxu0 0.0
    %3728 = vmatprep.subr.mxu0 0.0
    %3729 = vmatpush1.msra.mxu0 0.0
    %3730 = vmatprep.subr.mxu0 0.0
    %3731 = vmatpush1.msra.mxu0 0.0
    %3732 = vmatprep.subr.mxu0 0.0
    %3733 = vmatpush1.msra.mxu0 0.0
    %3734 = vmatprep.subr.mxu0 0.0
    %3735 = vmatpush1.msra.mxu0 0.0
    %3736 = vmatprep.subr.mxu0 0.0
    %3737 = vmatpush1.msra.mxu0 0.0
    %3738 = vmatprep.mubr.f32.mxu0 0.0
    %3739 = vmatmul.mubr.f32.gmra.mrb[0].mxu0 %v3672
    %v3740 = vpop.f32.mrb[0].mxu0
    %v3741 = vadd.f32 0.0, %v3740
    %v3742 = vpop.f32.mrb[0].mxu0
    %3743 = vdwg.mxu0
    %v3744 = vadd.f32 %v3666, %v3741
    %v3745 = vxor.u32 %v3744, 2147483648
    %v3746 = vmul.f32 %v3745, 1.442695
    %v3747 = vpow.pop %v3746
    %v3748 = vadd.f32 %v3747, 1.0
    %v3749 = vrcp.pop %v3748
    %v3750 = vmul.f32 1.0, %v3749
    %v3751 = vtanh.pop %v3744
    %v3752 = vmul.f32 %v3750, %v3587
    %3754 = vrot.lane.b32.xlu0 %v3751, 64
    %v3755 = vpop.permute.xlu0 %3754
    %v3757 = vmul.f32 %v3750, %v3755
    %3759 = vrot.lane.b32.xlu0 %v3757, 32
    %v3760 = vpop.permute.xlu0 %3759
    %v3762 = vadd.f32 %v3752, %v3760
    %v3763 = vtanh.pop %v3762
    %3765 = vrot.lane.b32.xlu0 %v3763, 64
    %v3766 = vpop.permute.xlu0 %3765
    %v3768 = vmul.f32 %v3750, %v3766
    %s3769 = scalar_lea.vmem [#allocation2], 96
    %v3770 = vld [vmem:[%s3769] sm:$0xff]
    %v3771 = vld [vmem:[%s3769 + $0x8] sm:$0xff]
    %v3772 = vld [vmem:[%s3769 + $0x10] sm:$0xff]
    %v3773 = vld [vmem:[%s3769 + $0x18] sm:$0xff]
    %s3774 = scalar_lea.vmem [#allocation5], 96
    %v3775 = vld [vmem:[%s3774] sm:$0xff]
    %v3776 = vld [vmem:[%s3774 + $0x8] sm:$0xff]
    %v3777 = vld [vmem:[%s3774 + $0x10] sm:$0xff]
    %v3778 = vld [vmem:[%s3774 + $0x18] sm:$0xff]
    %s3779 = scalar_lea.vmem %s3, 3
    %v3780 = vld [vmem:[%s3779] sm:$0x1]
    %v3782 = vlaneseq
    %v3783 = vshrl.u32 %v3782, 7
    %v3784 = vsub.s32 0, %v3783
    %v3785 = vrot.slane %v3780, %v3784
    %3787 = vmatprep.subr.mxu0 0.0
    %3788 = vmatpush1.msra.mxu0 %v3770
    %3789 = vmatprep.subr.mxu0 0.0
    %3790 = vmatpush1.msra.mxu0 %v3771
    %3791 = vmatprep.subr.mxu0 0.0
    %3792 = vmatpush1.msra.mxu0 %v3772
    %3793 = vmatprep.subr.mxu0 0.0
    %3794 = vmatpush1.msra.mxu0 %v3773
    %3795 = vmatprep.subr.mxu0 0.0
    %3796 = vmatpush1.msra.mxu0 0.0
    %3797 = vmatprep.subr.mxu0 0.0
    %3798 = vmatpush1.msra.mxu0 0.0
    %3799 = vmatprep.subr.mxu0 0.0
    %3800 = vmatpush1.msra.mxu0 0.0
    %3801 = vmatprep.subr.mxu0 0.0
    %3802 = vmatpush1.msra.mxu0 0.0
    %3803 = vmatprep.subr.mxu0 0.0
    %3804 = vmatpush1.msra.mxu0 0.0
    %3805 = vmatprep.subr.mxu0 0.0
    %3806 = vmatpush1.msra.mxu0 0.0
    %3807 = vmatprep.subr.mxu0 0.0
    %3808 = vmatpush1.msra.mxu0 0.0
    %3809 = vmatprep.subr.mxu0 0.0
    %3810 = vmatpush1.msra.mxu0 0.0
    %3811 = vmatprep.subr.mxu0 0.0
    %3812 = vmatpush1.msra.mxu0 0.0
    %3813 = vmatprep.subr.mxu0 0.0
    %3814 = vmatpush1.msra.mxu0 0.0
    %3815 = vmatprep.subr.mxu0 0.0
    %3816 = vmatpush1.msra.mxu0 0.0
    %3817 = vmatprep.subr.mxu0 0.0
    %3818 = vmatpush1.msra.mxu0 0.0
    %3819 = vmatprep.subr.mxu0 0.0
    %3820 = vmatpush1.msra.mxu0 0.0
    %3821 = vmatprep.subr.mxu0 0.0
    %3822 = vmatpush1.msra.mxu0 0.0
    %3823 = vmatprep.subr.mxu0 0.0
    %3824 = vmatpush1.msra.mxu0 0.0
    %3825 = vmatprep.subr.mxu0 0.0
    %3826 = vmatpush1.msra.mxu0 0.0
    %3827 = vmatprep.subr.mxu0 0.0
    %3828 = vmatpush1.msra.mxu0 0.0
    %3829 = vmatprep.subr.mxu0 0.0
    %3830 = vmatpush1.msra.mxu0 0.0
    %3831 = vmatprep.subr.mxu0 0.0
    %3832 = vmatpush1.msra.mxu0 0.0
    %3833 = vmatprep.subr.mxu0 0.0
    %3834 = vmatpush1.msra.mxu0 0.0
    %3835 = vmatprep.subr.mxu0 0.0
    %3836 = vmatpush1.msra.mxu0 0.0
    %3837 = vmatprep.subr.mxu0 0.0
    %3838 = vmatpush1.msra.mxu0 0.0
    %3839 = vmatprep.subr.mxu0 0.0
    %3840 = vmatpush1.msra.mxu0 0.0
    %3841 = vmatprep.subr.mxu0 0.0
    %3842 = vmatpush1.msra.mxu0 0.0
    %3843 = vmatprep.subr.mxu0 0.0
    %3844 = vmatpush1.msra.mxu0 0.0
    %3845 = vmatprep.subr.mxu0 0.0
    %3846 = vmatpush1.msra.mxu0 0.0
    %3847 = vmatprep.subr.mxu0 0.0
    %3848 = vmatpush1.msra.mxu0 0.0
    %3849 = vmatprep.subr.mxu0 0.0
    %3850 = vmatpush1.msra.mxu0 0.0
    %3851 = vmatprep.mubr.f32.mxu0 0.0
    %3852 = vmatmul.mubr.f32.gmra.mrb[0].mxu0 %v2647
    %v3853 = vpop.f32.mrb[0].mxu0
    %v3854 = vadd.f32 %v3785, %v3853
    %v3855 = vpop.f32.mrb[0].mxu0
    %3856 = vdwg.mxu0
    %3857 = vmatprep.subr.mxu0 0.0
    %3858 = vmatpush1.msra.mxu0 %v3775
    %3859 = vmatprep.subr.mxu0 0.0
    %3860 = vmatpush1.msra.mxu0 %v3776
    %3861 = vmatprep.subr.mxu0 0.0
    %3862 = vmatpush1.msra.mxu0 %v3777
    %3863 = vmatprep.subr.mxu0 0.0
    %3864 = vmatpush1.msra.mxu0 %v3778
    %3865 = vmatprep.subr.mxu0 0.0
    %3866 = vmatpush1.msra.mxu0 0.0
    %3867 = vmatprep.subr.mxu0 0.0
    %3868 = vmatpush1.msra.mxu0 0.0
    %3869 = vmatprep.subr.mxu0 0.0
    %3870 = vmatpush1.msra.mxu0 0.0
    %3871 = vmatprep.subr.mxu0 0.0
    %3872 = vmatpush1.msra.mxu0 0.0
    %3873 = vmatprep.subr.mxu0 0.0
    %3874 = vmatpush1.msra.mxu0 0.0
    %3875 = vmatprep.subr.mxu0 0.0
    %3876 = vmatpush1.msra.mxu0 0.0
    %3877 = vmatprep.subr.mxu0 0.0
    %3878 = vmatpush1.msra.mxu0 0.0
    %3879 = vmatprep.subr.mxu0 0.0
    %3880 = vmatpush1.msra.mxu0 0.0
    %3881 = vmatprep.subr.mxu0 0.0
    %3882 = vmatpush1.msra.mxu0 0.0
    %3883 = vmatprep.subr.mxu0 0.0
    %3884 = vmatpush1.msra.mxu0 0.0
    %3885 = vmatprep.subr.mxu0 0.0
    %3886 = vmatpush1.msra.mxu0 0.0
    %3887 = vmatprep.subr.mxu0 0.0
    %3888 = vmatpush1.msra.mxu0 0.0
    %3889 = vmatprep.subr.mxu0 0.0
    %3890 = vmatpush1.msra.mxu0 0.0
    %3891 = vmatprep.subr.mxu0 0.0
    %3892 = vmatpush1.msra.mxu0 0.0
    %3893 = vmatprep.subr.mxu0 0.0
    %3894 = vmatpush1.msra.mxu0 0.0
    %3895 = vmatprep.subr.mxu0 0.0
    %3896 = vmatpush1.msra.mxu0 0.0
    %3897 = vmatprep.subr.mxu0 0.0
    %3898 = vmatpush1.msra.mxu0 0.0
    %3899 = vmatprep.subr.mxu0 0.0
    %3900 = vmatpush1.msra.mxu0 0.0
    %3901 = vmatprep.subr.mxu0 0.0
    %3902 = vmatpush1.msra.mxu0 0.0
    %3903 = vmatprep.subr.mxu0 0.0
    %3904 = vmatpush1.msra.mxu0 0.0
    %3905 = vmatprep.subr.mxu0 0.0
    %3906 = vmatpush1.msra.mxu0 0.0
    %3907 = vmatprep.subr.mxu0 0.0
    %3908 = vmatpush1.msra.mxu0 0.0
    %3909 = vmatprep.subr.mxu0 0.0
    %3910 = vmatpush1.msra.mxu0 0.0
    %3911 = vmatprep.subr.mxu0 0.0
    %3912 = vmatpush1.msra.mxu0 0.0
    %3913 = vmatprep.subr.mxu0 0.0
    %3914 = vmatpush1.msra.mxu0 0.0
    %3915 = vmatprep.subr.mxu0 0.0
    %3916 = vmatpush1.msra.mxu0 0.0
    %3917 = vmatprep.subr.mxu0 0.0
    %3918 = vmatpush1.msra.mxu0 0.0
    %3919 = vmatprep.subr.mxu0 0.0
    %3920 = vmatpush1.msra.mxu0 0.0
    %3921 = vmatprep.mubr.f32.mxu0 0.0
    %3922 = vmatmul.mubr.f32.gmra.mrb[0].mxu0 %v171
    %v3923 = vpop.f32.mrb[0].mxu0
    %v3924 = vadd.f32 0.0, %v3923
    %v3925 = vpop.f32.mrb[0].mxu0
    %3926 = vdwg.mxu0
    %v3927 = vadd.f32 %v3854, %v3924
    %v3928 = vxor.u32 %v3927, 2147483648
    %v3929 = vmul.f32 %v3928, 1.442695
    %v3930 = vpow.pop %v3929
    %v3931 = vadd.f32 %v3930, 1.0
    %v3932 = vrcp.pop %v3931
    %v3933 = vmul.f32 1.0, %v3932
    %v3934 = vtanh.pop %v3927
    %v3935 = vmul.f32 %v3933, 0.0
    %3937 = vrot.lane.b32.xlu0 %v3934, 64
    %v3938 = vpop.permute.xlu0 %3937
    %v3940 = vmul.f32 %v3933, %v3938
    %3942 = vrot.lane.b32.xlu0 %v3940, 32
    %v3943 = vpop.permute.xlu0 %3942
    %v3945 = vadd.f32 %v3935, %v3943
    %v3946 = vtanh.pop %v3945
    %3948 = vrot.lane.b32.xlu0 %v3946, 64
    %v3949 = vpop.permute.xlu0 %3948
    %v3951 = vmul.f32 %v3933, %v3949
    %3952 = vmatprep.subr.mxu0 0.0
    %3953 = vmatpush1.msra.mxu0 %v3770
    %3954 = vmatprep.subr.mxu0 0.0
    %3955 = vmatpush1.msra.mxu0 %v3771
    %3956 = vmatprep.subr.mxu0 0.0
    %3957 = vmatpush1.msra.mxu0 %v3772
    %3958 = vmatprep.subr.mxu0 0.0
    %3959 = vmatpush1.msra.mxu0 %v3773
    %3960 = vmatprep.subr.mxu0 0.0
    %3961 = vmatpush1.msra.mxu0 0.0
    %3962 = vmatprep.subr.mxu0 0.0
    %3963 = vmatpush1.msra.mxu0 0.0
    %3964 = vmatprep.subr.mxu0 0.0
    %3965 = vmatpush1.msra.mxu0 0.0
    %3966 = vmatprep.subr.mxu0 0.0
    %3967 = vmatpush1.msra.mxu0 0.0
    %3968 = vmatprep.subr.mxu0 0.0
    %3969 = vmatpush1.msra.mxu0 0.0
    %3970 = vmatprep.subr.mxu0 0.0
    %3971 = vmatpush1.msra.mxu0 0.0
    %3972 = vmatprep.subr.mxu0 0.0
    %3973 = vmatpush1.msra.mxu0 0.0
    %3974 = vmatprep.subr.mxu0 0.0
    %3975 = vmatpush1.msra.mxu0 0.0
    %3976 = vmatprep.subr.mxu0 0.0
    %3977 = vmatpush1.msra.mxu0 0.0
    %3978 = vmatprep.subr.mxu0 0.0
    %3979 = vmatpush1.msra.mxu0 0.0
    %3980 = vmatprep.subr.mxu0 0.0
    %3981 = vmatpush1.msra.mxu0 0.0
    %3982 = vmatprep.subr.mxu0 0.0
    %3983 = vmatpush1.msra.mxu0 0.0
    %3984 = vmatprep.subr.mxu0 0.0
    %3985 = vmatpush1.msra.mxu0 0.0
    %3986 = vmatprep.subr.mxu0 0.0
    %3987 = vmatpush1.msra.mxu0 0.0
    %3988 = vmatprep.subr.mxu0 0.0
    %3989 = vmatpush1.msra.mxu0 0.0
    %3990 = vmatprep.subr.mxu0 0.0
    %3991 = vmatpush1.msra.mxu0 0.0
    %3992 = vmatprep.subr.mxu0 0.0
    %3993 = vmatpush1.msra.mxu0 0.0
    %3994 = vmatprep.subr.mxu0 0.0
    %3995 = vmatpush1.msra.mxu0 0.0
    %3996 = vmatprep.subr.mxu0 0.0
    %3997 = vmatpush1.msra.mxu0 0.0
    %3998 = vmatprep.subr.mxu0 0.0
    %3999 = vmatpush1.msra.mxu0 0.0
    %4000 = vmatprep.subr.mxu0 0.0
    %4001 = vmatpush1.msra.mxu0 0.0
    %4002 = vmatprep.subr.mxu0 0.0
    %4003 = vmatpush1.msra.mxu0 0.0
    %4004 = vmatprep.subr.mxu0 0.0
    %4005 = vmatpush1.msra.mxu0 0.0
    %4006 = vmatprep.subr.mxu0 0.0
    %4007 = vmatpush1.msra.mxu0 0.0
    %4008 = vmatprep.subr.mxu0 0.0
    %4009 = vmatpush1.msra.mxu0 0.0
    %4010 = vmatprep.subr.mxu0 0.0
    %4011 = vmatpush1.msra.mxu0 0.0
    %4012 = vmatprep.subr.mxu0 0.0
    %4013 = vmatpush1.msra.mxu0 0.0
    %4014 = vmatprep.subr.mxu0 0.0
    %4015 = vmatpush1.msra.mxu0 0.0
    %4016 = vmatprep.mubr.f32.mxu0 0.0
    %4017 = vmatmul.mubr.f32.gmra.mrb[0].mxu0 %v2817
    %v4018 = vpop.f32.mrb[0].mxu0
    %v4019 = vadd.f32 %v3785, %v4018
    %v4020 = vpop.f32.mrb[0].mxu0
    %4021 = vdwg.mxu0
    %4023 = vrot.lane.b32.xlu0 %v3951, 32
    %v4024 = vpop.permute.xlu0 %4023
    %v4025 = vsel %vm88, %v4024, 0
    %4027 = vmatprep.subr.mxu0 0.0
    %4028 = vmatpush1.msra.mxu0 %v3775
    %4029 = vmatprep.subr.mxu0 0.0
    %4030 = vmatpush1.msra.mxu0 %v3776
    %4031 = vmatprep.subr.mxu0 0.0
    %4032 = vmatpush1.msra.mxu0 %v3777
    %4033 = vmatprep.subr.mxu0 0.0
    %4034 = vmatpush1.msra.mxu0 %v3778
    %4035 = vmatprep.subr.mxu0 0.0
    %4036 = vmatpush1.msra.mxu0 0.0
    %4037 = vmatprep.subr.mxu0 0.0
    %4038 = vmatpush1.msra.mxu0 0.0
    %4039 = vmatprep.subr.mxu0 0.0
    %4040 = vmatpush1.msra.mxu0 0.0
    %4041 = vmatprep.subr.mxu0 0.0
    %4042 = vmatpush1.msra.mxu0 0.0
    %4043 = vmatprep.subr.mxu0 0.0
    %4044 = vmatpush1.msra.mxu0 0.0
    %4045 = vmatprep.subr.mxu0 0.0
    %4046 = vmatpush1.msra.mxu0 0.0
    %4047 = vmatprep.subr.mxu0 0.0
    %4048 = vmatpush1.msra.mxu0 0.0
    %4049 = vmatprep.subr.mxu0 0.0
    %4050 = vmatpush1.msra.mxu0 0.0
    %4051 = vmatprep.subr.mxu0 0.0
    %4052 = vmatpush1.msra.mxu0 0.0
    %4053 = vmatprep.subr.mxu0 0.0
    %4054 = vmatpush1.msra.mxu0 0.0
    %4055 = vmatprep.subr.mxu0 0.0
    %4056 = vmatpush1.msra.mxu0 0.0
    %4057 = vmatprep.subr.mxu0 0.0
    %4058 = vmatpush1.msra.mxu0 0.0
    %4059 = vmatprep.subr.mxu0 0.0
    %4060 = vmatpush1.msra.mxu0 0.0
    %4061 = vmatprep.subr.mxu0 0.0
    %4062 = vmatpush1.msra.mxu0 0.0
    %4063 = vmatprep.subr.mxu0 0.0
    %4064 = vmatpush1.msra.mxu0 0.0
    %4065 = vmatprep.subr.mxu0 0.0
    %4066 = vmatpush1.msra.mxu0 0.0
    %4067 = vmatprep.subr.mxu0 0.0
    %4068 = vmatpush1.msra.mxu0 0.0
    %4069 = vmatprep.subr.mxu0 0.0
    %4070 = vmatpush1.msra.mxu0 0.0
    %4071 = vmatprep.subr.mxu0 0.0
    %4072 = vmatpush1.msra.mxu0 0.0
    %4073 = vmatprep.subr.mxu0 0.0
    %4074 = vmatpush1.msra.mxu0 0.0
    %4075 = vmatprep.subr.mxu0 0.0
    %4076 = vmatpush1.msra.mxu0 0.0
    %4077 = vmatprep.subr.mxu0 0.0
    %4078 = vmatpush1.msra.mxu0 0.0
    %4079 = vmatprep.subr.mxu0 0.0
    %4080 = vmatpush1.msra.mxu0 0.0
    %4081 = vmatprep.subr.mxu0 0.0
    %4082 = vmatpush1.msra.mxu0 0.0
    %4083 = vmatprep.subr.mxu0 0.0
    %4084 = vmatpush1.msra.mxu0 0.0
    %4085 = vmatprep.subr.mxu0 0.0
    %4086 = vmatpush1.msra.mxu0 0.0
    %4087 = vmatprep.subr.mxu0 0.0
    %4088 = vmatpush1.msra.mxu0 0.0
    %4089 = vmatprep.subr.mxu0 0.0
    %4090 = vmatpush1.msra.mxu0 0.0
    %4091 = vmatprep.mubr.f32.mxu0 0.0
    %4092 = vmatmul.mubr.f32.gmra.mrb[0].mxu0 %v4025
    %v4093 = vpop.f32.mrb[0].mxu0
    %v4094 = vadd.f32 0.0, %v4093
    %v4095 = vpop.f32.mrb[0].mxu0
    %4096 = vdwg.mxu0
    %v4097 = vadd.f32 %v4019, %v4094
    %v4098 = vxor.u32 %v4097, 2147483648
    %v4099 = vmul.f32 %v4098, 1.442695
    %v4100 = vpow.pop %v4099
    %v4101 = vadd.f32 %v4100, 1.0
    %v4102 = vrcp.pop %v4101
    %v4103 = vmul.f32 1.0, %v4102
    %v4104 = vtanh.pop %v4097
    %v4105 = vmul.f32 %v4103, %v3945
    %4107 = vrot.lane.b32.xlu0 %v4104, 64
    %v4108 = vpop.permute.xlu0 %4107
    %v4110 = vmul.f32 %v4103, %v4108
    %4112 = vrot.lane.b32.xlu0 %v4110, 32
    %v4113 = vpop.permute.xlu0 %4112
    %v4115 = vadd.f32 %v4105, %v4113
    %v4116 = vtanh.pop %v4115
    %4118 = vrot.lane.b32.xlu0 %v4116, 64
    %v4119 = vpop.permute.xlu0 %4118
    %v4121 = vmul.f32 %v4103, %v4119
    %4122 = vmatprep.subr.mxu0 0.0
    %4123 = vmatpush1.msra.mxu0 %v3770
    %4124 = vmatprep.subr.mxu0 0.0
    %4125 = vmatpush1.msra.mxu0 %v3771
    %4126 = vmatprep.subr.mxu0 0.0
    %4127 = vmatpush1.msra.mxu0 %v3772
    %4128 = vmatprep.subr.mxu0 0.0
    %4129 = vmatpush1.msra.mxu0 %v3773
    %4130 = vmatprep.subr.mxu0 0.0
    %4131 = vmatpush1.msra.mxu0 0.0
    %4132 = vmatprep.subr.mxu0 0.0
    %4133 = vmatpush1.msra.mxu0 0.0
    %4134 = vmatprep.subr.mxu0 0.0
    %4135 = vmatpush1.msra.mxu0 0.0
    %4136 = vmatprep.subr.mxu0 0.0
    %4137 = vmatpush1.msra.mxu0 0.0
    %4138 = vmatprep.subr.mxu0 0.0
    %4139 = vmatpush1.msra.mxu0 0.0
    %4140 = vmatprep.subr.mxu0 0.0
    %4141 = vmatpush1.msra.mxu0 0.0
    %4142 = vmatprep.subr.mxu0 0.0
    %4143 = vmatpush1.msra.mxu0 0.0
    %4144 = vmatprep.subr.mxu0 0.0
    %4145 = vmatpush1.msra.mxu0 0.0
    %4146 = vmatprep.subr.mxu0 0.0
    %4147 = vmatpush1.msra.mxu0 0.0
    %4148 = vmatprep.subr.mxu0 0.0
    %4149 = vmatpush1.msra.mxu0 0.0
    %4150 = vmatprep.subr.mxu0 0.0
    %4151 = vmatpush1.msra.mxu0 0.0
    %4152 = vmatprep.subr.mxu0 0.0
    %4153 = vmatpush1.msra.mxu0 0.0
    %4154 = vmatprep.subr.mxu0 0.0
    %4155 = vmatpush1.msra.mxu0 0.0
    %4156 = vmatprep.subr.mxu0 0.0
    %4157 = vmatpush1.msra.mxu0 0.0
    %4158 = vmatprep.subr.mxu0 0.0
    %4159 = vmatpush1.msra.mxu0 0.0
    %4160 = vmatprep.subr.mxu0 0.0
    %4161 = vmatpush1.msra.mxu0 0.0
    %4162 = vmatprep.subr.mxu0 0.0
    %4163 = vmatpush1.msra.mxu0 0.0
    %4164 = vmatprep.subr.mxu0 0.0
    %4165 = vmatpush1.msra.mxu0 0.0
    %4166 = vmatprep.subr.mxu0 0.0
    %4167 = vmatpush1.msra.mxu0 0.0
    %4168 = vmatprep.subr.mxu0 0.0
    %4169 = vmatpush1.msra.mxu0 0.0
    %4170 = vmatprep.subr.mxu0 0.0
    %4171 = vmatpush1.msra.mxu0 0.0
    %4172 = vmatprep.subr.mxu0 0.0
    %4173 = vmatpush1.msra.mxu0 0.0
    %4174 = vmatprep.subr.mxu0 0.0
    %4175 = vmatpush1.msra.mxu0 0.0
    %4176 = vmatprep.subr.mxu0 0.0
    %4177 = vmatpush1.msra.mxu0 0.0
    %4178 = vmatprep.subr.mxu0 0.0
    %4179 = vmatpush1.msra.mxu0 0.0
    %4180 = vmatprep.subr.mxu0 0.0
    %4181 = vmatpush1.msra.mxu0 0.0
    %4182 = vmatprep.subr.mxu0 0.0
    %4183 = vmatpush1.msra.mxu0 0.0
    %4184 = vmatprep.subr.mxu0 0.0
    %4185 = vmatpush1.msra.mxu0 0.0
    %4186 = vmatprep.mubr.f32.mxu0 0.0
    %4187 = vmatmul.mubr.f32.gmra.mrb[0].mxu0 %v2987
    %v4188 = vpop.f32.mrb[0].mxu0
    %v4189 = vadd.f32 %v3785, %v4188
    %v4190 = vpop.f32.mrb[0].mxu0
    %4191 = vdwg.mxu0
    %4193 = vrot.lane.b32.xlu0 %v4121, 32
    %v4194 = vpop.permute.xlu0 %4193
    %v4195 = vsel %vm88, %v4194, 0
    %4197 = vmatprep.subr.mxu0 0.0
    %4198 = vmatpush1.msra.mxu0 %v3775
    %4199 = vmatprep.subr.mxu0 0.0
    %4200 = vmatpush1.msra.mxu0 %v3776
    %4201 = vmatprep.subr.mxu0 0.0
    %4202 = vmatpush1.msra.mxu0 %v3777
    %4203 = vmatprep.subr.mxu0 0.0
    %4204 = vmatpush1.msra.mxu0 %v3778
    %4205 = vmatprep.subr.mxu0 0.0
    %4206 = vmatpush1.msra.mxu0 0.0
    %4207 = vmatprep.subr.mxu0 0.0
    %4208 = vmatpush1.msra.mxu0 0.0
    %4209 = vmatprep.subr.mxu0 0.0
    %4210 = vmatpush1.msra.mxu0 0.0
    %4211 = vmatprep.subr.mxu0 0.0
    %4212 = vmatpush1.msra.mxu0 0.0
    %4213 = vmatprep.subr.mxu0 0.0
    %4214 = vmatpush1.msra.mxu0 0.0
    %4215 = vmatprep.subr.mxu0 0.0
    %4216 = vmatpush1.msra.mxu0 0.0
    %4217 = vmatprep.subr.mxu0 0.0
    %4218 = vmatpush1.msra.mxu0 0.0
    %4219 = vmatprep.subr.mxu0 0.0
    %4220 = vmatpush1.msra.mxu0 0.0
    %4221 = vmatprep.subr.mxu0 0.0
    %4222 = vmatpush1.msra.mxu0 0.0
    %4223 = vmatprep.subr.mxu0 0.0
    %4224 = vmatpush1.msra.mxu0 0.0
    %4225 = vmatprep.subr.mxu0 0.0
    %4226 = vmatpush1.msra.mxu0 0.0
    %4227 = vmatprep.subr.mxu0 0.0
    %4228 = vmatpush1.msra.mxu0 0.0
    %4229 = vmatprep.subr.mxu0 0.0
    %4230 = vmatpush1.msra.mxu0 0.0
    %4231 = vmatprep.subr.mxu0 0.0
    %4232 = vmatpush1.msra.mxu0 0.0
    %4233 = vmatprep.subr.mxu0 0.0
    %4234 = vmatpush1.msra.mxu0 0.0
    %4235 = vmatprep.subr.mxu0 0.0
    %4236 = vmatpush1.msra.mxu0 0.0
    %4237 = vmatprep.subr.mxu0 0.0
    %4238 = vmatpush1.msra.mxu0 0.0
    %4239 = vmatprep.subr.mxu0 0.0
    %4240 = vmatpush1.msra.mxu0 0.0
    %4241 = vmatprep.subr.mxu0 0.0
    %4242 = vmatpush1.msra.mxu0 0.0
    %4243 = vmatprep.subr.mxu0 0.0
    %4244 = vmatpush1.msra.mxu0 0.0
    %4245 = vmatprep.subr.mxu0 0.0
    %4246 = vmatpush1.msra.mxu0 0.0
    %4247 = vmatprep.subr.mxu0 0.0
    %4248 = vmatpush1.msra.mxu0 0.0
    %4249 = vmatprep.subr.mxu0 0.0
    %4250 = vmatpush1.msra.mxu0 0.0
    %4251 = vmatprep.subr.mxu0 0.0
    %4252 = vmatpush1.msra.mxu0 0.0
    %4253 = vmatprep.subr.mxu0 0.0
    %4254 = vmatpush1.msra.mxu0 0.0
    %4255 = vmatprep.subr.mxu0 0.0
    %4256 = vmatpush1.msra.mxu0 0.0
    %4257 = vmatprep.subr.mxu0 0.0
    %4258 = vmatpush1.msra.mxu0 0.0
    %4259 = vmatprep.subr.mxu0 0.0
    %4260 = vmatpush1.msra.mxu0 0.0
    %4261 = vmatprep.mubr.f32.mxu0 0.0
    %4262 = vmatmul.mubr.f32.gmra.mrb[0].mxu0 %v4195
    %v4263 = vpop.f32.mrb[0].mxu0
    %v4264 = vadd.f32 0.0, %v4263
    %v4265 = vpop.f32.mrb[0].mxu0
    %4266 = vdwg.mxu0
    %v4267 = vadd.f32 %v4189, %v4264
    %v4268 = vxor.u32 %v4267, 2147483648
    %v4269 = vmul.f32 %v4268, 1.442695
    %v4270 = vpow.pop %v4269
    %v4271 = vadd.f32 %v4270, 1.0
    %v4272 = vrcp.pop %v4271
    %v4273 = vmul.f32 1.0, %v4272
    %v4274 = vtanh.pop %v4267
    %v4275 = vmul.f32 %v4273, %v4115
    %4277 = vrot.lane.b32.xlu0 %v4274, 64
    %v4278 = vpop.permute.xlu0 %4277
    %v4280 = vmul.f32 %v4273, %v4278
    %4282 = vrot.lane.b32.xlu0 %v4280, 32
    %v4283 = vpop.permute.xlu0 %4282
    %v4285 = vadd.f32 %v4275, %v4283
    %v4286 = vtanh.pop %v4285
    %4288 = vrot.lane.b32.xlu0 %v4286, 64
    %v4289 = vpop.permute.xlu0 %4288
    %v4291 = vmul.f32 %v4273, %v4289
    %4292 = vmatprep.subr.mxu0 0.0
    %4293 = vmatpush1.msra.mxu0 %v3770
    %4294 = vmatprep.subr.mxu0 0.0
    %4295 = vmatpush1.msra.mxu0 %v3771
    %4296 = vmatprep.subr.mxu0 0.0
    %4297 = vmatpush1.msra.mxu0 %v3772
    %4298 = vmatprep.subr.mxu0 0.0
    %4299 = vmatpush1.msra.mxu0 %v3773
    %4300 = vmatprep.subr.mxu0 0.0
    %4301 = vmatpush1.msra.mxu0 0.0
    %4302 = vmatprep.subr.mxu0 0.0
    %4303 = vmatpush1.msra.mxu0 0.0
    %4304 = vmatprep.subr.mxu0 0.0
    %4305 = vmatpush1.msra.mxu0 0.0
    %4306 = vmatprep.subr.mxu0 0.0
    %4307 = vmatpush1.msra.mxu0 0.0
    %4308 = vmatprep.subr.mxu0 0.0
    %4309 = vmatpush1.msra.mxu0 0.0
    %4310 = vmatprep.subr.mxu0 0.0
    %4311 = vmatpush1.msra.mxu0 0.0
    %4312 = vmatprep.subr.mxu0 0.0
    %4313 = vmatpush1.msra.mxu0 0.0
    %4314 = vmatprep.subr.mxu0 0.0
    %4315 = vmatpush1.msra.mxu0 0.0
    %4316 = vmatprep.subr.mxu0 0.0
    %4317 = vmatpush1.msra.mxu0 0.0
    %4318 = vmatprep.subr.mxu0 0.0
    %4319 = vmatpush1.msra.mxu0 0.0
    %4320 = vmatprep.subr.mxu0 0.0
    %4321 = vmatpush1.msra.mxu0 0.0
    %4322 = vmatprep.subr.mxu0 0.0
    %4323 = vmatpush1.msra.mxu0 0.0
    %4324 = vmatprep.subr.mxu0 0.0
    %4325 = vmatpush1.msra.mxu0 0.0
    %4326 = vmatprep.subr.mxu0 0.0
    %4327 = vmatpush1.msra.mxu0 0.0
    %4328 = vmatprep.subr.mxu0 0.0
    %4329 = vmatpush1.msra.mxu0 0.0
    %4330 = vmatprep.subr.mxu0 0.0
    %4331 = vmatpush1.msra.mxu0 0.0
    %4332 = vmatprep.subr.mxu0 0.0
    %4333 = vmatpush1.msra.mxu0 0.0
    %4334 = vmatprep.subr.mxu0 0.0
    %4335 = vmatpush1.msra.mxu0 0.0
    %4336 = vmatprep.subr.mxu0 0.0
    %4337 = vmatpush1.msra.mxu0 0.0
    %4338 = vmatprep.subr.mxu0 0.0
    %4339 = vmatpush1.msra.mxu0 0.0
    %4340 = vmatprep.subr.mxu0 0.0
    %4341 = vmatpush1.msra.mxu0 0.0
    %4342 = vmatprep.subr.mxu0 0.0
    %4343 = vmatpush1.msra.mxu0 0.0
    %4344 = vmatprep.subr.mxu0 0.0
    %4345 = vmatpush1.msra.mxu0 0.0
    %4346 = vmatprep.subr.mxu0 0.0
    %4347 = vmatpush1.msra.mxu0 0.0
    %4348 = vmatprep.subr.mxu0 0.0
    %4349 = vmatpush1.msra.mxu0 0.0
    %4350 = vmatprep.subr.mxu0 0.0
    %4351 = vmatpush1.msra.mxu0 0.0
    %4352 = vmatprep.subr.mxu0 0.0
    %4353 = vmatpush1.msra.mxu0 0.0
    %4354 = vmatprep.subr.mxu0 0.0
    %4355 = vmatpush1.msra.mxu0 0.0
    %4356 = vmatprep.mubr.f32.mxu0 0.0
    %4357 = vmatmul.mubr.f32.gmra.mrb[0].mxu0 %v3157
    %v4358 = vpop.f32.mrb[0].mxu0
    %v4359 = vadd.f32 %v3785, %v4358
    %v4360 = vpop.f32.mrb[0].mxu0
    %4361 = vdwg.mxu0
    %4363 = vrot.lane.b32.xlu0 %v4291, 32
    %v4364 = vpop.permute.xlu0 %4363
    %v4365 = vsel %vm88, %v4364, 0
    %4367 = vmatprep.subr.mxu0 0.0
    %4368 = vmatpush1.msra.mxu0 %v3775
    %4369 = vmatprep.subr.mxu0 0.0
    %4370 = vmatpush1.msra.mxu0 %v3776
    %4371 = vmatprep.subr.mxu0 0.0
    %4372 = vmatpush1.msra.mxu0 %v3777
    %4373 = vmatprep.subr.mxu0 0.0
    %4374 = vmatpush1.msra.mxu0 %v3778
    %4375 = vmatprep.subr.mxu0 0.0
    %4376 = vmatpush1.msra.mxu0 0.0
    %4377 = vmatprep.subr.mxu0 0.0
    %4378 = vmatpush1.msra.mxu0 0.0
    %4379 = vmatprep.subr.mxu0 0.0
    %4380 = vmatpush1.msra.mxu0 0.0
    %4381 = vmatprep.subr.mxu0 0.0
    %4382 = vmatpush1.msra.mxu0 0.0
    %4383 = vmatprep.subr.mxu0 0.0
    %4384 = vmatpush1.msra.mxu0 0.0
    %4385 = vmatprep.subr.mxu0 0.0
    %4386 = vmatpush1.msra.mxu0 0.0
    %4387 = vmatprep.subr.mxu0 0.0
    %4388 = vmatpush1.msra.mxu0 0.0
    %4389 = vmatprep.subr.mxu0 0.0
    %4390 = vmatpush1.msra.mxu0 0.0
    %4391 = vmatprep.subr.mxu0 0.0
    %4392 = vmatpush1.msra.mxu0 0.0
    %4393 = vmatprep.subr.mxu0 0.0
    %4394 = vmatpush1.msra.mxu0 0.0
    %4395 = vmatprep.subr.mxu0 0.0
    %4396 = vmatpush1.msra.mxu0 0.0
    %4397 = vmatprep.subr.mxu0 0.0
    %4398 = vmatpush1.msra.mxu0 0.0
    %4399 = vmatprep.subr.mxu0 0.0
    %4400 = vmatpush1.msra.mxu0 0.0
    %4401 = vmatprep.subr.mxu0 0.0
    %4402 = vmatpush1.msra.mxu0 0.0
    %4403 = vmatprep.subr.mxu0 0.0
    %4404 = vmatpush1.msra.mxu0 0.0
    %4405 = vmatprep.subr.mxu0 0.0
    %4406 = vmatpush1.msra.mxu0 0.0
    %4407 = vmatprep.subr.mxu0 0.0
    %4408 = vmatpush1.msra.mxu0 0.0
    %4409 = vmatprep.subr.mxu0 0.0
    %4410 = vmatpush1.msra.mxu0 0.0
    %4411 = vmatprep.subr.mxu0 0.0
    %4412 = vmatpush1.msra.mxu0 0.0
    %4413 = vmatprep.subr.mxu0 0.0
    %4414 = vmatpush1.msra.mxu0 0.0
    %4415 = vmatprep.subr.mxu0 0.0
    %4416 = vmatpush1.msra.mxu0 0.0
    %4417 = vmatprep.subr.mxu0 0.0
    %4418 = vmatpush1.msra.mxu0 0.0
    %4419 = vmatprep.subr.mxu0 0.0
    %4420 = vmatpush1.msra.mxu0 0.0
    %4421 = vmatprep.subr.mxu0 0.0
    %4422 = vmatpush1.msra.mxu0 0.0
    %4423 = vmatprep.subr.mxu0 0.0
    %4424 = vmatpush1.msra.mxu0 0.0
    %4425 = vmatprep.subr.mxu0 0.0
    %4426 = vmatpush1.msra.mxu0 0.0
    %4427 = vmatprep.subr.mxu0 0.0
    %4428 = vmatpush1.msra.mxu0 0.0
    %4429 = vmatprep.subr.mxu0 0.0
    %4430 = vmatpush1.msra.mxu0 0.0
    %4431 = vmatprep.mubr.f32.mxu0 0.0
    %4432 = vmatmul.mubr.f32.gmra.mrb[0].mxu0 %v4365
    %v4433 = vpop.f32.mrb[0].mxu0
    %v4434 = vadd.f32 0.0, %v4433
    %v4435 = vpop.f32.mrb[0].mxu0
    %4436 = vdwg.mxu0
    %v4437 = vadd.f32 %v4359, %v4434
    %v4438 = vxor.u32 %v4437, 2147483648
    %v4439 = vmul.f32 %v4438, 1.442695
    %v4440 = vpow.pop %v4439
    %v4441 = vadd.f32 %v4440, 1.0
    %v4442 = vrcp.pop %v4441
    %v4443 = vmul.f32 1.0, %v4442
    %v4444 = vtanh.pop %v4437
    %v4445 = vmul.f32 %v4443, %v4285
    %4447 = vrot.lane.b32.xlu0 %v4444, 64
    %v4448 = vpop.permute.xlu0 %4447
    %v4450 = vmul.f32 %v4443, %v4448
    %4452 = vrot.lane.b32.xlu0 %v4450, 32
    %v4453 = vpop.permute.xlu0 %4452
    %v4455 = vadd.f32 %v4445, %v4453
    %v4456 = vtanh.pop %v4455
    %4458 = vrot.lane.b32.xlu0 %v4456, 64
    %v4459 = vpop.permute.xlu0 %4458
    %v4461 = vmul.f32 %v4443, %v4459
    %4462 = vmatprep.subr.mxu0 0.0
    %4463 = vmatpush1.msra.mxu0 %v3770
    %4464 = vmatprep.subr.mxu0 0.0
    %4465 = vmatpush1.msra.mxu0 %v3771
    %4466 = vmatprep.subr.mxu0 0.0
    %4467 = vmatpush1.msra.mxu0 %v3772
    %4468 = vmatprep.subr.mxu0 0.0
    %4469 = vmatpush1.msra.mxu0 %v3773
    %4470 = vmatprep.subr.mxu0 0.0
    %4471 = vmatpush1.msra.mxu0 0.0
    %4472 = vmatprep.subr.mxu0 0.0
    %4473 = vmatpush1.msra.mxu0 0.0
    %4474 = vmatprep.subr.mxu0 0.0
    %4475 = vmatpush1.msra.mxu0 0.0
    %4476 = vmatprep.subr.mxu0 0.0
    %4477 = vmatpush1.msra.mxu0 0.0
    %4478 = vmatprep.subr.mxu0 0.0
    %4479 = vmatpush1.msra.mxu0 0.0
    %4480 = vmatprep.subr.mxu0 0.0
    %4481 = vmatpush1.msra.mxu0 0.0
    %4482 = vmatprep.subr.mxu0 0.0
    %4483 = vmatpush1.msra.mxu0 0.0
    %4484 = vmatprep.subr.mxu0 0.0
    %4485 = vmatpush1.msra.mxu0 0.0
    %4486 = vmatprep.subr.mxu0 0.0
    %4487 = vmatpush1.msra.mxu0 0.0
    %4488 = vmatprep.subr.mxu0 0.0
    %4489 = vmatpush1.msra.mxu0 0.0
    %4490 = vmatprep.subr.mxu0 0.0
    %4491 = vmatpush1.msra.mxu0 0.0
    %4492 = vmatprep.subr.mxu0 0.0
    %4493 = vmatpush1.msra.mxu0 0.0
    %4494 = vmatprep.subr.mxu0 0.0
    %4495 = vmatpush1.msra.mxu0 0.0
    %4496 = vmatprep.subr.mxu0 0.0
    %4497 = vmatpush1.msra.mxu0 0.0
    %4498 = vmatprep.subr.mxu0 0.0
    %4499 = vmatpush1.msra.mxu0 0.0
    %4500 = vmatprep.subr.mxu0 0.0
    %4501 = vmatpush1.msra.mxu0 0.0
    %4502 = vmatprep.subr.mxu0 0.0
    %4503 = vmatpush1.msra.mxu0 0.0
    %4504 = vmatprep.subr.mxu0 0.0
    %4505 = vmatpush1.msra.mxu0 0.0
    %4506 = vmatprep.subr.mxu0 0.0
    %4507 = vmatpush1.msra.mxu0 0.0
    %4508 = vmatprep.subr.mxu0 0.0
    %4509 = vmatpush1.msra.mxu0 0.0
    %4510 = vmatprep.subr.mxu0 0.0
    %4511 = vmatpush1.msra.mxu0 0.0
    %4512 = vmatprep.subr.mxu0 0.0
    %4513 = vmatpush1.msra.mxu0 0.0
    %4514 = vmatprep.subr.mxu0 0.0
    %4515 = vmatpush1.msra.mxu0 0.0
    %4516 = vmatprep.subr.mxu0 0.0
    %4517 = vmatpush1.msra.mxu0 0.0
    %4518 = vmatprep.subr.mxu0 0.0
    %4519 = vmatpush1.msra.mxu0 0.0
    %4520 = vmatprep.subr.mxu0 0.0
    %4521 = vmatpush1.msra.mxu0 0.0
    %4522 = vmatprep.subr.mxu0 0.0
    %4523 = vmatpush1.msra.mxu0 0.0
    %4524 = vmatprep.subr.mxu0 0.0
    %4525 = vmatpush1.msra.mxu0 0.0
    %4526 = vmatprep.mubr.f32.mxu0 0.0
    %4527 = vmatmul.mubr.f32.gmra.mrb[0].mxu0 %v3327
    %v4528 = vpop.f32.mrb[0].mxu0
    %v4529 = vadd.f32 %v3785, %v4528
    %v4530 = vpop.f32.mrb[0].mxu0
    %4531 = vdwg.mxu0
    %4533 = vrot.lane.b32.xlu0 %v4461, 32
    %v4534 = vpop.permute.xlu0 %4533
    %v4535 = vsel %vm88, %v4534, 0
    %4537 = vmatprep.subr.mxu0 0.0
    %4538 = vmatpush1.msra.mxu0 %v3775
    %4539 = vmatprep.subr.mxu0 0.0
    %4540 = vmatpush1.msra.mxu0 %v3776
    %4541 = vmatprep.subr.mxu0 0.0
    %4542 = vmatpush1.msra.mxu0 %v3777
    %4543 = vmatprep.subr.mxu0 0.0
    %4544 = vmatpush1.msra.mxu0 %v3778
    %4545 = vmatprep.subr.mxu0 0.0
    %4546 = vmatpush1.msra.mxu0 0.0
    %4547 = vmatprep.subr.mxu0 0.0
    %4548 = vmatpush1.msra.mxu0 0.0
    %4549 = vmatprep.subr.mxu0 0.0
    %4550 = vmatpush1.msra.mxu0 0.0
    %4551 = vmatprep.subr.mxu0 0.0
    %4552 = vmatpush1.msra.mxu0 0.0
    %4553 = vmatprep.subr.mxu0 0.0
    %4554 = vmatpush1.msra.mxu0 0.0
    %4555 = vmatprep.subr.mxu0 0.0
    %4556 = vmatpush1.msra.mxu0 0.0
    %4557 = vmatprep.subr.mxu0 0.0
    %4558 = vmatpush1.msra.mxu0 0.0
    %4559 = vmatprep.subr.mxu0 0.0
    %4560 = vmatpush1.msra.mxu0 0.0
    %4561 = vmatprep.subr.mxu0 0.0
    %4562 = vmatpush1.msra.mxu0 0.0
    %4563 = vmatprep.subr.mxu0 0.0
    %4564 = vmatpush1.msra.mxu0 0.0
    %4565 = vmatprep.subr.mxu0 0.0
    %4566 = vmatpush1.msra.mxu0 0.0
    %4567 = vmatprep.subr.mxu0 0.0
    %4568 = vmatpush1.msra.mxu0 0.0
    %4569 = vmatprep.subr.mxu0 0.0
    %4570 = vmatpush1.msra.mxu0 0.0
    %4571 = vmatprep.subr.mxu0 0.0
    %4572 = vmatpush1.msra.mxu0 0.0
    %4573 = vmatprep.subr.mxu0 0.0
    %4574 = vmatpush1.msra.mxu0 0.0
    %4575 = vmatprep.subr.mxu0 0.0
    %4576 = vmatpush1.msra.mxu0 0.0
    %4577 = vmatprep.subr.mxu0 0.0
    %4578 = vmatpush1.msra.mxu0 0.0
    %4579 = vmatprep.subr.mxu0 0.0
    %4580 = vmatpush1.msra.mxu0 0.0
    %4581 = vmatprep.subr.mxu0 0.0
    %4582 = vmatpush1.msra.mxu0 0.0
    %4583 = vmatprep.subr.mxu0 0.0
    %4584 = vmatpush1.msra.mxu0 0.0
    %4585 = vmatprep.subr.mxu0 0.0
    %4586 = vmatpush1.msra.mxu0 0.0
    %4587 = vmatprep.subr.mxu0 0.0
    %4588 = vmatpush1.msra.mxu0 0.0
    %4589 = vmatprep.subr.mxu0 0.0
    %4590 = vmatpush1.msra.mxu0 0.0
    %4591 = vmatprep.subr.mxu0 0.0
    %4592 = vmatpush1.msra.mxu0 0.0
    %4593 = vmatprep.subr.mxu0 0.0
    %4594 = vmatpush1.msra.mxu0 0.0
    %4595 = vmatprep.subr.mxu0 0.0
    %4596 = vmatpush1.msra.mxu0 0.0
    %4597 = vmatprep.subr.mxu0 0.0
    %4598 = vmatpush1.msra.mxu0 0.0
    %4599 = vmatprep.subr.mxu0 0.0
    %4600 = vmatpush1.msra.mxu0 0.0
    %4601 = vmatprep.mubr.f32.mxu0 0.0
    %4602 = vmatmul.mubr.f32.gmra.mrb[0].mxu0 %v4535
    %v4603 = vpop.f32.mrb[0].mxu0
    %v4604 = vadd.f32 0.0, %v4603
    %v4605 = vpop.f32.mrb[0].mxu0
    %4606 = vdwg.mxu0
    %v4607 = vadd.f32 %v4529, %v4604
    %v4608 = vxor.u32 %v4607, 2147483648
    %v4609 = vmul.f32 %v4608, 1.442695
    %v4610 = vpow.pop %v4609
    %v4611 = vadd.f32 %v4610, 1.0
    %v4612 = vrcp.pop %v4611
    %v4613 = vmul.f32 1.0, %v4612
    %v4614 = vtanh.pop %v4607
    %v4615 = vmul.f32 %v4613, %v4455
    %4617 = vrot.lane.b32.xlu0 %v4614, 64
    %v4618 = vpop.permute.xlu0 %4617
    %v4620 = vmul.f32 %v4613, %v4618
    %4622 = vrot.lane.b32.xlu0 %v4620, 32
    %v4623 = vpop.permute.xlu0 %4622
    %v4625 = vadd.f32 %v4615, %v4623
    %v4626 = vtanh.pop %v4625
    %4628 = vrot.lane.b32.xlu0 %v4626, 64
    %v4629 = vpop.permute.xlu0 %4628
    %v4631 = vmul.f32 %v4613, %v4629
    %4632 = vmatprep.subr.mxu0 0.0
    %4633 = vmatpush1.msra.mxu0 %v3770
    %4634 = vmatprep.subr.mxu0 0.0
    %4635 = vmatpush1.msra.mxu0 %v3771
    %4636 = vmatprep.subr.mxu0 0.0
    %4637 = vmatpush1.msra.mxu0 %v3772
    %4638 = vmatprep.subr.mxu0 0.0
    %4639 = vmatpush1.msra.mxu0 %v3773
    %4640 = vmatprep.subr.mxu0 0.0
    %4641 = vmatpush1.msra.mxu0 0.0
    %4642 = vmatprep.subr.mxu0 0.0
    %4643 = vmatpush1.msra.mxu0 0.0
    %4644 = vmatprep.subr.mxu0 0.0
    %4645 = vmatpush1.msra.mxu0 0.0
    %4646 = vmatprep.subr.mxu0 0.0
    %4647 = vmatpush1.msra.mxu0 0.0
    %4648 = vmatprep.subr.mxu0 0.0
    %4649 = vmatpush1.msra.mxu0 0.0
    %4650 = vmatprep.subr.mxu0 0.0
    %4651 = vmatpush1.msra.mxu0 0.0
    %4652 = vmatprep.subr.mxu0 0.0
    %4653 = vmatpush1.msra.mxu0 0.0
    %4654 = vmatprep.subr.mxu0 0.0
    %4655 = vmatpush1.msra.mxu0 0.0
    %4656 = vmatprep.subr.mxu0 0.0
    %4657 = vmatpush1.msra.mxu0 0.0
    %4658 = vmatprep.subr.mxu0 0.0
    %4659 = vmatpush1.msra.mxu0 0.0
    %4660 = vmatprep.subr.mxu0 0.0
    %4661 = vmatpush1.msra.mxu0 0.0
    %4662 = vmatprep.subr.mxu0 0.0
    %4663 = vmatpush1.msra.mxu0 0.0
    %4664 = vmatprep.subr.mxu0 0.0
    %4665 = vmatpush1.msra.mxu0 0.0
    %4666 = vmatprep.subr.mxu0 0.0
    %4667 = vmatpush1.msra.mxu0 0.0
    %4668 = vmatprep.subr.mxu0 0.0
    %4669 = vmatpush1.msra.mxu0 0.0
    %4670 = vmatprep.subr.mxu0 0.0
    %4671 = vmatpush1.msra.mxu0 0.0
    %4672 = vmatprep.subr.mxu0 0.0
    %4673 = vmatpush1.msra.mxu0 0.0
    %4674 = vmatprep.subr.mxu0 0.0
    %4675 = vmatpush1.msra.mxu0 0.0
    %4676 = vmatprep.subr.mxu0 0.0
    %4677 = vmatpush1.msra.mxu0 0.0
    %4678 = vmatprep.subr.mxu0 0.0
    %4679 = vmatpush1.msra.mxu0 0.0
    %4680 = vmatprep.subr.mxu0 0.0
    %4681 = vmatpush1.msra.mxu0 0.0
    %4682 = vmatprep.subr.mxu0 0.0
    %4683 = vmatpush1.msra.mxu0 0.0
    %4684 = vmatprep.subr.mxu0 0.0
    %4685 = vmatpush1.msra.mxu0 0.0
    %4686 = vmatprep.subr.mxu0 0.0
    %4687 = vmatpush1.msra.mxu0 0.0
    %4688 = vmatprep.subr.mxu0 0.0
    %4689 = vmatpush1.msra.mxu0 0.0
    %4690 = vmatprep.subr.mxu0 0.0
    %4691 = vmatpush1.msra.mxu0 0.0
    %4692 = vmatprep.subr.mxu0 0.0
    %4693 = vmatpush1.msra.mxu0 0.0
    %4694 = vmatprep.subr.mxu0 0.0
    %4695 = vmatpush1.msra.mxu0 0.0
    %4696 = vmatprep.mubr.f32.mxu0 0.0
    %4697 = vmatmul.mubr.f32.gmra.mrb[0].mxu0 %v3497
    %v4698 = vpop.f32.mrb[0].mxu0
    %v4699 = vadd.f32 %v3785, %v4698
    %v4700 = vpop.f32.mrb[0].mxu0
    %4701 = vdwg.mxu0
    %4703 = vrot.lane.b32.xlu0 %v4631, 32
    %v4704 = vpop.permute.xlu0 %4703
    %v4705 = vsel %vm88, %v4704, 0
    %4707 = vmatprep.subr.mxu0 0.0
    %4708 = vmatpush1.msra.mxu0 %v3775
    %4709 = vmatprep.subr.mxu0 0.0
    %4710 = vmatpush1.msra.mxu0 %v3776
    %4711 = vmatprep.subr.mxu0 0.0
    %4712 = vmatpush1.msra.mxu0 %v3777
    %4713 = vmatprep.subr.mxu0 0.0
    %4714 = vmatpush1.msra.mxu0 %v3778
    %4715 = vmatprep.subr.mxu0 0.0
    %4716 = vmatpush1.msra.mxu0 0.0
    %4717 = vmatprep.subr.mxu0 0.0
    %4718 = vmatpush1.msra.mxu0 0.0
    %4719 = vmatprep.subr.mxu0 0.0
    %4720 = vmatpush1.msra.mxu0 0.0
    %4721 = vmatprep.subr.mxu0 0.0
    %4722 = vmatpush1.msra.mxu0 0.0
    %4723 = vmatprep.subr.mxu0 0.0
    %4724 = vmatpush1.msra.mxu0 0.0
    %4725 = vmatprep.subr.mxu0 0.0
    %4726 = vmatpush1.msra.mxu0 0.0
    %4727 = vmatprep.subr.mxu0 0.0
    %4728 = vmatpush1.msra.mxu0 0.0
    %4729 = vmatprep.subr.mxu0 0.0
    %4730 = vmatpush1.msra.mxu0 0.0
    %4731 = vmatprep.subr.mxu0 0.0
    %4732 = vmatpush1.msra.mxu0 0.0
    %4733 = vmatprep.subr.mxu0 0.0
    %4734 = vmatpush1.msra.mxu0 0.0
    %4735 = vmatprep.subr.mxu0 0.0
    %4736 = vmatpush1.msra.mxu0 0.0
    %4737 = vmatprep.subr.mxu0 0.0
    %4738 = vmatpush1.msra.mxu0 0.0
    %4739 = vmatprep.subr.mxu0 0.0
    %4740 = vmatpush1.msra.mxu0 0.0
    %4741 = vmatprep.subr.mxu0 0.0
    %4742 = vmatpush1.msra.mxu0 0.0
    %4743 = vmatprep.subr.mxu0 0.0
    %4744 = vmatpush1.msra.mxu0 0.0
    %4745 = vmatprep.subr.mxu0 0.0
    %4746 = vmatpush1.msra.mxu0 0.0
    %4747 = vmatprep.subr.mxu0 0.0
    %4748 = vmatpush1.msra.mxu0 0.0
    %4749 = vmatprep.subr.mxu0 0.0
    %4750 = vmatpush1.msra.mxu0 0.0
    %4751 = vmatprep.subr.mxu0 0.0
    %4752 = vmatpush1.msra.mxu0 0.0
    %4753 = vmatprep.subr.mxu0 0.0
    %4754 = vmatpush1.msra.mxu0 0.0
    %4755 = vmatprep.subr.mxu0 0.0
    %4756 = vmatpush1.msra.mxu0 0.0
    %4757 = vmatprep.subr.mxu0 0.0
    %4758 = vmatpush1.msra.mxu0 0.0
    %4759 = vmatprep.subr.mxu0 0.0
    %4760 = vmatpush1.msra.mxu0 0.0
    %4761 = vmatprep.subr.mxu0 0.0
    %4762 = vmatpush1.msra.mxu0 0.0
    %4763 = vmatprep.subr.mxu0 0.0
    %4764 = vmatpush1.msra.mxu0 0.0
    %4765 = vmatprep.subr.mxu0 0.0
    %4766 = vmatpush1.msra.mxu0 0.0
    %4767 = vmatprep.subr.mxu0 0.0
    %4768 = vmatpush1.msra.mxu0 0.0
    %4769 = vmatprep.subr.mxu0 0.0
    %4770 = vmatpush1.msra.mxu0 0.0
    %4771 = vmatprep.mubr.f32.mxu0 0.0
    %4772 = vmatmul.mubr.f32.gmra.mrb[0].mxu0 %v4705
    %v4773 = vpop.f32.mrb[0].mxu0
    %v4774 = vadd.f32 0.0, %v4773
    %v4775 = vpop.f32.mrb[0].mxu0
    %4776 = vdwg.mxu0
    %v4777 = vadd.f32 %v4699, %v4774
    %v4778 = vxor.u32 %v4777, 2147483648
    %v4779 = vmul.f32 %v4778, 1.442695
    %v4780 = vpow.pop %v4779
    %v4781 = vadd.f32 %v4780, 1.0
    %v4782 = vrcp.pop %v4781
    %v4783 = vmul.f32 1.0, %v4782
    %v4784 = vtanh.pop %v4777
    %v4785 = vmul.f32 %v4783, %v4625
    %4787 = vrot.lane.b32.xlu0 %v4784, 64
    %v4788 = vpop.permute.xlu0 %4787
    %v4790 = vmul.f32 %v4783, %v4788
    %4792 = vrot.lane.b32.xlu0 %v4790, 32
    %v4793 = vpop.permute.xlu0 %4792
    %v4795 = vadd.f32 %v4785, %v4793
    %v4796 = vtanh.pop %v4795
    %4798 = vrot.lane.b32.xlu0 %v4796, 64
    %v4799 = vpop.permute.xlu0 %4798
    %v4801 = vmul.f32 %v4783, %v4799
    %4802 = vmatprep.subr.mxu0 0.0
    %4803 = vmatpush1.msra.mxu0 %v3770
    %4804 = vmatprep.subr.mxu0 0.0
    %4805 = vmatpush1.msra.mxu0 %v3771
    %4806 = vmatprep.subr.mxu0 0.0
    %4807 = vmatpush1.msra.mxu0 %v3772
    %4808 = vmatprep.subr.mxu0 0.0
    %4809 = vmatpush1.msra.mxu0 %v3773
    %4810 = vmatprep.subr.mxu0 0.0
    %4811 = vmatpush1.msra.mxu0 0.0
    %4812 = vmatprep.subr.mxu0 0.0
    %4813 = vmatpush1.msra.mxu0 0.0
    %4814 = vmatprep.subr.mxu0 0.0
    %4815 = vmatpush1.msra.mxu0 0.0
    %4816 = vmatprep.subr.mxu0 0.0
    %4817 = vmatpush1.msra.mxu0 0.0
    %4818 = vmatprep.subr.mxu0 0.0
    %4819 = vmatpush1.msra.mxu0 0.0
    %4820 = vmatprep.subr.mxu0 0.0
    %4821 = vmatpush1.msra.mxu0 0.0
    %4822 = vmatprep.subr.mxu0 0.0
    %4823 = vmatpush1.msra.mxu0 0.0
    %4824 = vmatprep.subr.mxu0 0.0
    %4825 = vmatpush1.msra.mxu0 0.0
    %4826 = vmatprep.subr.mxu0 0.0
    %4827 = vmatpush1.msra.mxu0 0.0
    %4828 = vmatprep.subr.mxu0 0.0
    %4829 = vmatpush1.msra.mxu0 0.0
    %4830 = vmatprep.subr.mxu0 0.0
    %4831 = vmatpush1.msra.mxu0 0.0
    %4832 = vmatprep.subr.mxu0 0.0
    %4833 = vmatpush1.msra.mxu0 0.0
    %4834 = vmatprep.subr.mxu0 0.0
    %4835 = vmatpush1.msra.mxu0 0.0
    %4836 = vmatprep.subr.mxu0 0.0
    %4837 = vmatpush1.msra.mxu0 0.0
    %4838 = vmatprep.subr.mxu0 0.0
    %4839 = vmatpush1.msra.mxu0 0.0
    %4840 = vmatprep.subr.mxu0 0.0
    %4841 = vmatpush1.msra.mxu0 0.0
    %4842 = vmatprep.subr.mxu0 0.0
    %4843 = vmatpush1.msra.mxu0 0.0
    %4844 = vmatprep.subr.mxu0 0.0
    %4845 = vmatpush1.msra.mxu0 0.0
    %4846 = vmatprep.subr.mxu0 0.0
    %4847 = vmatpush1.msra.mxu0 0.0
    %4848 = vmatprep.subr.mxu0 0.0
    %4849 = vmatpush1.msra.mxu0 0.0
    %4850 = vmatprep.subr.mxu0 0.0
    %4851 = vmatpush1.msra.mxu0 0.0
    %4852 = vmatprep.subr.mxu0 0.0
    %4853 = vmatpush1.msra.mxu0 0.0
    %4854 = vmatprep.subr.mxu0 0.0
    %4855 = vmatpush1.msra.mxu0 0.0
    %4856 = vmatprep.subr.mxu0 0.0
    %4857 = vmatpush1.msra.mxu0 0.0
    %4858 = vmatprep.subr.mxu0 0.0
    %4859 = vmatpush1.msra.mxu0 0.0
    %4860 = vmatprep.subr.mxu0 0.0
    %4861 = vmatpush1.msra.mxu0 0.0
    %4862 = vmatprep.subr.mxu0 0.0
    %4863 = vmatpush1.msra.mxu0 0.0
    %4864 = vmatprep.subr.mxu0 0.0
    %4865 = vmatpush1.msra.mxu0 0.0
    %4866 = vmatprep.mubr.f32.mxu0 0.0
    %4867 = vmatmul.mubr.f32.gmra.mrb[0].mxu0 %v3672
    %v4868 = vpop.f32.mrb[0].mxu0
    %v4869 = vadd.f32 %v3785, %v4868
    %v4870 = vpop.f32.mrb[0].mxu0
    %4871 = vdwg.mxu0
    %4873 = vrot.lane.b32.xlu0 %v4801, 32
    %v4874 = vpop.permute.xlu0 %4873
    %v4875 = vsel %vm88, %v4874, 0
    %4877 = vmatprep.subr.mxu0 0.0
    %4878 = vmatpush1.msra.mxu0 %v3775
    %4879 = vmatprep.subr.mxu0 0.0
    %4880 = vmatpush1.msra.mxu0 %v3776
    %4881 = vmatprep.subr.mxu0 0.0
    %4882 = vmatpush1.msra.mxu0 %v3777
    %4883 = vmatprep.subr.mxu0 0.0
    %4884 = vmatpush1.msra.mxu0 %v3778
    %4885 = vmatprep.subr.mxu0 0.0
    %4886 = vmatpush1.msra.mxu0 0.0
    %4887 = vmatprep.subr.mxu0 0.0
    %4888 = vmatpush1.msra.mxu0 0.0
    %4889 = vmatprep.subr.mxu0 0.0
    %4890 = vmatpush1.msra.mxu0 0.0
    %4891 = vmatprep.subr.mxu0 0.0
    %4892 = vmatpush1.msra.mxu0 0.0
    %4893 = vmatprep.subr.mxu0 0.0
    %4894 = vmatpush1.msra.mxu0 0.0
    %4895 = vmatprep.subr.mxu0 0.0
    %4896 = vmatpush1.msra.mxu0 0.0
    %4897 = vmatprep.subr.mxu0 0.0
    %4898 = vmatpush1.msra.mxu0 0.0
    %4899 = vmatprep.subr.mxu0 0.0
    %4900 = vmatpush1.msra.mxu0 0.0
    %4901 = vmatprep.subr.mxu0 0.0
    %4902 = vmatpush1.msra.mxu0 0.0
    %4903 = vmatprep.subr.mxu0 0.0
    %4904 = vmatpush1.msra.mxu0 0.0
    %4905 = vmatprep.subr.mxu0 0.0
    %4906 = vmatpush1.msra.mxu0 0.0
    %4907 = vmatprep.subr.mxu0 0.0
    %4908 = vmatpush1.msra.mxu0 0.0
    %4909 = vmatprep.subr.mxu0 0.0
    %4910 = vmatpush1.msra.mxu0 0.0
    %4911 = vmatprep.subr.mxu0 0.0
    %4912 = vmatpush1.msra.mxu0 0.0
    %4913 = vmatprep.subr.mxu0 0.0
    %4914 = vmatpush1.msra.mxu0 0.0
    %4915 = vmatprep.subr.mxu0 0.0
    %4916 = vmatpush1.msra.mxu0 0.0
    %4917 = vmatprep.subr.mxu0 0.0
    %4918 = vmatpush1.msra.mxu0 0.0
    %4919 = vmatprep.subr.mxu0 0.0
    %4920 = vmatpush1.msra.mxu0 0.0
    %4921 = vmatprep.subr.mxu0 0.0
    %4922 = vmatpush1.msra.mxu0 0.0
    %4923 = vmatprep.subr.mxu0 0.0
    %4924 = vmatpush1.msra.mxu0 0.0
    %4925 = vmatprep.subr.mxu0 0.0
    %4926 = vmatpush1.msra.mxu0 0.0
    %4927 = vmatprep.subr.mxu0 0.0
    %4928 = vmatpush1.msra.mxu0 0.0
    %4929 = vmatprep.subr.mxu0 0.0
    %4930 = vmatpush1.msra.mxu0 0.0
    %4931 = vmatprep.subr.mxu0 0.0
    %4932 = vmatpush1.msra.mxu0 0.0
    %4933 = vmatprep.subr.mxu0 0.0
    %4934 = vmatpush1.msra.mxu0 0.0
    %4935 = vmatprep.subr.mxu0 0.0
    %4936 = vmatpush1.msra.mxu0 0.0
    %4937 = vmatprep.subr.mxu0 0.0
    %4938 = vmatpush1.msra.mxu0 0.0
    %4939 = vmatprep.subr.mxu0 0.0
    %4940 = vmatpush1.msra.mxu0 0.0
    %4941 = vmatprep.mubr.f32.mxu0 0.0
    %4942 = vmatmul.mubr.f32.gmra.mrb[0].mxu0 %v4875
    %v4943 = vpop.f32.mrb[0].mxu0
    %v4944 = vadd.f32 0.0, %v4943
    %v4945 = vpop.f32.mrb[0].mxu0
    %4946 = vdwg.mxu0
    %v4947 = vadd.f32 %v4869, %v4944
    %v4948 = vxor.u32 %v4947, 2147483648
    %v4949 = vmul.f32 %v4948, 1.442695
    %v4950 = vpow.pop %v4949
    %v4951 = vadd.f32 %v4950, 1.0
    %v4952 = vrcp.pop %v4951
    %v4953 = vmul.f32 1.0, %v4952
    %v4954 = vtanh.pop %v4947
    %v4955 = vmul.f32 %v4953, %v4795
    %4957 = vrot.lane.b32.xlu0 %v4954, 64
    %v4958 = vpop.permute.xlu0 %4957
    %v4960 = vmul.f32 %v4953, %v4958
    %4962 = vrot.lane.b32.xlu0 %v4960, 32
    %v4963 = vpop.permute.xlu0 %4962
    %v4965 = vadd.f32 %v4955, %v4963
    %v4966 = vtanh.pop %v4965
    %4968 = vrot.lane.b32.xlu0 %v4966, 64
    %v4969 = vpop.permute.xlu0 %4968
    %v4971 = vmul.f32 %v4953, %v4969
    %4973 = vrot.lane.b32.xlu0 %v3768, 32
    %v4974 = vpop.permute.xlu0 %4973
    %v4975 = vsel %vm88, %v4974, 0
    %4977 = vmatprep.subr.mxu0 0.0
    %4978 = vmatpush1.msra.mxu0 %v3770
    %4979 = vmatprep.subr.mxu0 0.0
    %4980 = vmatpush1.msra.mxu0 %v3771
    %4981 = vmatprep.subr.mxu0 0.0
    %4982 = vmatpush1.msra.mxu0 %v3772
    %4983 = vmatprep.subr.mxu0 0.0
    %4984 = vmatpush1.msra.mxu0 %v3773
    %4985 = vmatprep.subr.mxu0 0.0
    %4986 = vmatpush1.msra.mxu0 0.0
    %4987 = vmatprep.subr.mxu0 0.0
    %4988 = vmatpush1.msra.mxu0 0.0
    %4989 = vmatprep.subr.mxu0 0.0
    %4990 = vmatpush1.msra.mxu0 0.0
    %4991 = vmatprep.subr.mxu0 0.0
    %4992 = vmatpush1.msra.mxu0 0.0
    %4993 = vmatprep.subr.mxu0 0.0
    %4994 = vmatpush1.msra.mxu0 0.0
    %4995 = vmatprep.subr.mxu0 0.0
    %4996 = vmatpush1.msra.mxu0 0.0
    %4997 = vmatprep.subr.mxu0 0.0
    %4998 = vmatpush1.msra.mxu0 0.0
    %4999 = vmatprep.subr.mxu0 0.0
    %5000 = vmatpush1.msra.mxu0 0.0
    %5001 = vmatprep.subr.mxu0 0.0
    %5002 = vmatpush1.msra.mxu0 0.0
    %5003 = vmatprep.subr.mxu0 0.0
    %5004 = vmatpush1.msra.mxu0 0.0
    %5005 = vmatprep.subr.mxu0 0.0
    %5006 = vmatpush1.msra.mxu0 0.0
    %5007 = vmatprep.subr.mxu0 0.0
    %5008 = vmatpush1.msra.mxu0 0.0
    %5009 = vmatprep.subr.mxu0 0.0
    %5010 = vmatpush1.msra.mxu0 0.0
    %5011 = vmatprep.subr.mxu0 0.0
    %5012 = vmatpush1.msra.mxu0 0.0
    %5013 = vmatprep.subr.mxu0 0.0
    %5014 = vmatpush1.msra.mxu0 0.0
    %5015 = vmatprep.subr.mxu0 0.0
    %5016 = vmatpush1.msra.mxu0 0.0
    %5017 = vmatprep.subr.mxu0 0.0
    %5018 = vmatpush1.msra.mxu0 0.0
    %5019 = vmatprep.subr.mxu0 0.0
    %5020 = vmatpush1.msra.mxu0 0.0
    %5021 = vmatprep.subr.mxu0 0.0
    %5022 = vmatpush1.msra.mxu0 0.0
    %5023 = vmatprep.subr.mxu0 0.0
    %5024 = vmatpush1.msra.mxu0 0.0
    %5025 = vmatprep.subr.mxu0 0.0
    %5026 = vmatpush1.msra.mxu0 0.0
    %5027 = vmatprep.subr.mxu0 0.0
    %5028 = vmatpush1.msra.mxu0 0.0
    %5029 = vmatprep.subr.mxu0 0.0
    %5030 = vmatpush1.msra.mxu0 0.0
    %5031 = vmatprep.subr.mxu0 0.0
    %5032 = vmatpush1.msra.mxu0 0.0
    %5033 = vmatprep.subr.mxu0 0.0
    %5034 = vmatpush1.msra.mxu0 0.0
    %5035 = vmatprep.subr.mxu0 0.0
    %5036 = vmatpush1.msra.mxu0 0.0
    %5037 = vmatprep.subr.mxu0 0.0
    %5038 = vmatpush1.msra.mxu0 0.0
    %5039 = vmatprep.subr.mxu0 0.0
    %5040 = vmatpush1.msra.mxu0 0.0
    %5041 = vmatprep.mubr.f32.mxu0 0.0
    %5042 = vmatmul.mubr.f32.gmra.mrb[0].mxu0 %v4975
    %v5043 = vpop.f32.mrb[0].mxu0
    %v5044 = vadd.f32 %v3785, %v5043
    %v5045 = vpop.f32.mrb[0].mxu0
    %5046 = vdwg.mxu0
    %5048 = vrot.lane.b32.xlu0 %v4971, 32
    %v5049 = vpop.permute.xlu0 %5048
    %v5050 = vsel %vm88, %v5049, 0
    %5052 = vmatprep.subr.mxu0 0.0
    %5053 = vmatpush1.msra.mxu0 %v3775
    %5054 = vmatprep.subr.mxu0 0.0
    %5055 = vmatpush1.msra.mxu0 %v3776
    %5056 = vmatprep.subr.mxu0 0.0
    %5057 = vmatpush1.msra.mxu0 %v3777
    %5058 = vmatprep.subr.mxu0 0.0
    %5059 = vmatpush1.msra.mxu0 %v3778
    %5060 = vmatprep.subr.mxu0 0.0
    %5061 = vmatpush1.msra.mxu0 0.0
    %5062 = vmatprep.subr.mxu0 0.0
    %5063 = vmatpush1.msra.mxu0 0.0
    %5064 = vmatprep.subr.mxu0 0.0
    %5065 = vmatpush1.msra.mxu0 0.0
    %5066 = vmatprep.subr.mxu0 0.0
    %5067 = vmatpush1.msra.mxu0 0.0
    %5068 = vmatprep.subr.mxu0 0.0
    %5069 = vmatpush1.msra.mxu0 0.0
    %5070 = vmatprep.subr.mxu0 0.0
    %5071 = vmatpush1.msra.mxu0 0.0
    %5072 = vmatprep.subr.mxu0 0.0
    %5073 = vmatpush1.msra.mxu0 0.0
    %5074 = vmatprep.subr.mxu0 0.0
    %5075 = vmatpush1.msra.mxu0 0.0
    %5076 = vmatprep.subr.mxu0 0.0
    %5077 = vmatpush1.msra.mxu0 0.0
    %5078 = vmatprep.subr.mxu0 0.0
    %5079 = vmatpush1.msra.mxu0 0.0
    %5080 = vmatprep.subr.mxu0 0.0
    %5081 = vmatpush1.msra.mxu0 0.0
    %5082 = vmatprep.subr.mxu0 0.0
    %5083 = vmatpush1.msra.mxu0 0.0
    %5084 = vmatprep.subr.mxu0 0.0
    %5085 = vmatpush1.msra.mxu0 0.0
    %5086 = vmatprep.subr.mxu0 0.0
    %5087 = vmatpush1.msra.mxu0 0.0
    %5088 = vmatprep.subr.mxu0 0.0
    %5089 = vmatpush1.msra.mxu0 0.0
    %5090 = vmatprep.subr.mxu0 0.0
    %5091 = vmatpush1.msra.mxu0 0.0
    %5092 = vmatprep.subr.mxu0 0.0
    %5093 = vmatpush1.msra.mxu0 0.0
    %5094 = vmatprep.subr.mxu0 0.0
    %5095 = vmatpush1.msra.mxu0 0.0
    %5096 = vmatprep.subr.mxu0 0.0
    %5097 = vmatpush1.msra.mxu0 0.0
    %5098 = vmatprep.subr.mxu0 0.0
    %5099 = vmatpush1.msra.mxu0 0.0
    %5100 = vmatprep.subr.mxu0 0.0
    %5101 = vmatpush1.msra.mxu0 0.0
    %5102 = vmatprep.subr.mxu0 0.0
    %5103 = vmatpush1.msra.mxu0 0.0
    %5104 = vmatprep.subr.mxu0 0.0
    %5105 = vmatpush1.msra.mxu0 0.0
    %5106 = vmatprep.subr.mxu0 0.0
    %5107 = vmatpush1.msra.mxu0 0.0
    %5108 = vmatprep.subr.mxu0 0.0
    %5109 = vmatpush1.msra.mxu0 0.0
    %5110 = vmatprep.subr.mxu0 0.0
    %5111 = vmatpush1.msra.mxu0 0.0
    %5112 = vmatprep.subr.mxu0 0.0
    %5113 = vmatpush1.msra.mxu0 0.0
    %5114 = vmatprep.subr.mxu0 0.0
    %5115 = vmatpush1.msra.mxu0 0.0
    %5116 = vmatprep.mubr.f32.mxu0 0.0
    %5117 = vmatmul.mubr.f32.gmra.mrb[0].mxu0 %v5050
    %v5118 = vpop.f32.mrb[0].mxu0
    %v5119 = vadd.f32 0.0, %v5118
    %v5120 = vpop.f32.mrb[0].mxu0
    %5121 = vdwg.mxu0
    %v5122 = vadd.f32 %v5044, %v5119
    %v5123 = vxor.u32 %v5122, 2147483648
    %v5124 = vmul.f32 %v5123, 1.442695
    %v5125 = vpow.pop %v5124
    %v5126 = vadd.f32 %v5125, 1.0
    %v5127 = vrcp.pop %v5126
    %v5128 = vmul.f32 1.0, %v5127
    %v5129 = vtanh.pop %v5122
    %v5130 = vmul.f32 %v5128, %v4965
    %5132 = vrot.lane.b32.xlu0 %v5129, 64
    %v5133 = vpop.permute.xlu0 %5132
    %v5135 = vmul.f32 %v5128, %v5133
    %5137 = vrot.lane.b32.xlu0 %v5135, 32
    %v5138 = vpop.permute.xlu0 %5137
    %v5140 = vadd.f32 %v5130, %v5138
    %v5141 = vtanh.pop %v5140
    %5143 = vrot.lane.b32.xlu0 %v5141, 64
    %v5144 = vpop.permute.xlu0 %5143
    %v5146 = vmul.f32 %v5128, %v5144
    %s5147 = scalar_lea.vmem [#allocation2], 128
    %v5148 = vld [vmem:[%s5147] sm:$0xff]
    %v5149 = vld [vmem:[%s5147 + $0x8] sm:$0xff]
    %v5150 = vld [vmem:[%s5147 + $0x10] sm:$0xff]
    %v5151 = vld [vmem:[%s5147 + $0x18] sm:$0xff]
    %s5152 = scalar_lea.vmem [#allocation5], 128
    %v5153 = vld [vmem:[%s5152] sm:$0xff]
    %v5154 = vld [vmem:[%s5152 + $0x8] sm:$0xff]
    %v5155 = vld [vmem:[%s5152 + $0x10] sm:$0xff]
    %v5156 = vld [vmem:[%s5152 + $0x18] sm:$0xff]
    %s5157 = scalar_lea.vmem %s3, 4
    %v5158 = vld [vmem:[%s5157] sm:$0x1]
    %v5160 = vlaneseq
    %v5161 = vshrl.u32 %v5160, 7
    %v5162 = vsub.s32 0, %v5161
    %v5163 = vrot.slane %v5158, %v5162
    %5165 = vmatprep.subr.mxu0 0.0
    %5166 = vmatpush1.msra.mxu0 %v5148
    %5167 = vmatprep.subr.mxu0 0.0
    %5168 = vmatpush1.msra.mxu0 %v5149
    %5169 = vmatprep.subr.mxu0 0.0
    %5170 = vmatpush1.msra.mxu0 %v5150
    %5171 = vmatprep.subr.mxu0 0.0
    %5172 = vmatpush1.msra.mxu0 %v5151
    %5173 = vmatprep.subr.mxu0 0.0
    %5174 = vmatpush1.msra.mxu0 0.0
    %5175 = vmatprep.subr.mxu0 0.0
    %5176 = vmatpush1.msra.mxu0 0.0
    %5177 = vmatprep.subr.mxu0 0.0
    %5178 = vmatpush1.msra.mxu0 0.0
    %5179 = vmatprep.subr.mxu0 0.0
    %5180 = vmatpush1.msra.mxu0 0.0
    %5181 = vmatprep.subr.mxu0 0.0
    %5182 = vmatpush1.msra.mxu0 0.0
    %5183 = vmatprep.subr.mxu0 0.0
    %5184 = vmatpush1.msra.mxu0 0.0
    %5185 = vmatprep.subr.mxu0 0.0
    %5186 = vmatpush1.msra.mxu0 0.0
    %5187 = vmatprep.subr.mxu0 0.0
    %5188 = vmatpush1.msra.mxu0 0.0
    %5189 = vmatprep.subr.mxu0 0.0
    %5190 = vmatpush1.msra.mxu0 0.0
    %5191 = vmatprep.subr.mxu0 0.0
    %5192 = vmatpush1.msra.mxu0 0.0
    %5193 = vmatprep.subr.mxu0 0.0
    %5194 = vmatpush1.msra.mxu0 0.0
    %5195 = vmatprep.subr.mxu0 0.0
    %5196 = vmatpush1.msra.mxu0 0.0
    %5197 = vmatprep.subr.mxu0 0.0
    %5198 = vmatpush1.msra.mxu0 0.0
    %5199 = vmatprep.subr.mxu0 0.0
    %5200 = vmatpush1.msra.mxu0 0.0
    %5201 = vmatprep.subr.mxu0 0.0
    %5202 = vmatpush1.msra.mxu0 0.0
    %5203 = vmatprep.subr.mxu0 0.0
    %5204 = vmatpush1.msra.mxu0 0.0
    %5205 = vmatprep.subr.mxu0 0.0
    %5206 = vmatpush1.msra.mxu0 0.0
    %5207 = vmatprep.subr.mxu0 0.0
    %5208 = vmatpush1.msra.mxu0 0.0
    %5209 = vmatprep.subr.mxu0 0.0
    %5210 = vmatpush1.msra.mxu0 0.0
    %5211 = vmatprep.subr.mxu0 0.0
    %5212 = vmatpush1.msra.mxu0 0.0
    %5213 = vmatprep.subr.mxu0 0.0
    %5214 = vmatpush1.msra.mxu0 0.0
    %5215 = vmatprep.subr.mxu0 0.0
    %5216 = vmatpush1.msra.mxu0 0.0
    %5217 = vmatprep.subr.mxu0 0.0
    %5218 = vmatpush1.msra.mxu0 0.0
    %5219 = vmatprep.subr.mxu0 0.0
    %5220 = vmatpush1.msra.mxu0 0.0
    %5221 = vmatprep.subr.mxu0 0.0
    %5222 = vmatpush1.msra.mxu0 0.0
    %5223 = vmatprep.subr.mxu0 0.0
    %5224 = vmatpush1.msra.mxu0 0.0
    %5225 = vmatprep.subr.mxu0 0.0
    %5226 = vmatpush1.msra.mxu0 0.0
    %5227 = vmatprep.subr.mxu0 0.0
    %5228 = vmatpush1.msra.mxu0 0.0
    %5229 = vmatprep.mubr.f32.mxu0 0.0
    %5230 = vmatmul.mubr.f32.gmra.mrb[0].mxu0 %v4025
    %v5231 = vpop.f32.mrb[0].mxu0
    %v5232 = vadd.f32 %v5163, %v5231
    %v5233 = vpop.f32.mrb[0].mxu0
    %5234 = vdwg.mxu0
    %5235 = vmatprep.subr.mxu0 0.0
    %5236 = vmatpush1.msra.mxu0 %v5153
    %5237 = vmatprep.subr.mxu0 0.0
    %5238 = vmatpush1.msra.mxu0 %v5154
    %5239 = vmatprep.subr.mxu0 0.0
    %5240 = vmatpush1.msra.mxu0 %v5155
    %5241 = vmatprep.subr.mxu0 0.0
    %5242 = vmatpush1.msra.mxu0 %v5156
    %5243 = vmatprep.subr.mxu0 0.0
    %5244 = vmatpush1.msra.mxu0 0.0
    %5245 = vmatprep.subr.mxu0 0.0
    %5246 = vmatpush1.msra.mxu0 0.0
    %5247 = vmatprep.subr.mxu0 0.0
    %5248 = vmatpush1.msra.mxu0 0.0
    %5249 = vmatprep.subr.mxu0 0.0
    %5250 = vmatpush1.msra.mxu0 0.0
    %5251 = vmatprep.subr.mxu0 0.0
    %5252 = vmatpush1.msra.mxu0 0.0
    %5253 = vmatprep.subr.mxu0 0.0
    %5254 = vmatpush1.msra.mxu0 0.0
    %5255 = vmatprep.subr.mxu0 0.0
    %5256 = vmatpush1.msra.mxu0 0.0
    %5257 = vmatprep.subr.mxu0 0.0
    %5258 = vmatpush1.msra.mxu0 0.0
    %5259 = vmatprep.subr.mxu0 0.0
    %5260 = vmatpush1.msra.mxu0 0.0
    %5261 = vmatprep.subr.mxu0 0.0
    %5262 = vmatpush1.msra.mxu0 0.0
    %5263 = vmatprep.subr.mxu0 0.0
    %5264 = vmatpush1.msra.mxu0 0.0
    %5265 = vmatprep.subr.mxu0 0.0
    %5266 = vmatpush1.msra.mxu0 0.0
    %5267 = vmatprep.subr.mxu0 0.0
    %5268 = vmatpush1.msra.mxu0 0.0
    %5269 = vmatprep.subr.mxu0 0.0
    %5270 = vmatpush1.msra.mxu0 0.0
    %5271 = vmatprep.subr.mxu0 0.0
    %5272 = vmatpush1.msra.mxu0 0.0
    %5273 = vmatprep.subr.mxu0 0.0
    %5274 = vmatpush1.msra.mxu0 0.0
    %5275 = vmatprep.subr.mxu0 0.0
    %5276 = vmatpush1.msra.mxu0 0.0
    %5277 = vmatprep.subr.mxu0 0.0
    %5278 = vmatpush1.msra.mxu0 0.0
    %5279 = vmatprep.subr.mxu0 0.0
    %5280 = vmatpush1.msra.mxu0 0.0
    %5281 = vmatprep.subr.mxu0 0.0
    %5282 = vmatpush1.msra.mxu0 0.0
    %5283 = vmatprep.subr.mxu0 0.0
    %5284 = vmatpush1.msra.mxu0 0.0
    %5285 = vmatprep.subr.mxu0 0.0
    %5286 = vmatpush1.msra.mxu0 0.0
    %5287 = vmatprep.subr.mxu0 0.0
    %5288 = vmatpush1.msra.mxu0 0.0
    %5289 = vmatprep.subr.mxu0 0.0
    %5290 = vmatpush1.msra.mxu0 0.0
    %5291 = vmatprep.subr.mxu0 0.0
    %5292 = vmatpush1.msra.mxu0 0.0
    %5293 = vmatprep.subr.mxu0 0.0
    %5294 = vmatpush1.msra.mxu0 0.0
    %5295 = vmatprep.subr.mxu0 0.0
    %5296 = vmatpush1.msra.mxu0 0.0
    %5297 = vmatprep.subr.mxu0 0.0
    %5298 = vmatpush1.msra.mxu0 0.0
    %5299 = vmatprep.mubr.f32.mxu0 0.0
    %5300 = vmatmul.mubr.f32.gmra.mrb[0].mxu0 %v171
    %v5301 = vpop.f32.mrb[0].mxu0
    %v5302 = vadd.f32 0.0, %v5301
    %v5303 = vpop.f32.mrb[0].mxu0
    %5304 = vdwg.mxu0
    %v5305 = vadd.f32 %v5232, %v5302
    %v5306 = vxor.u32 %v5305, 2147483648
    %v5307 = vmul.f32 %v5306, 1.442695
    %v5308 = vpow.pop %v5307
    %v5309 = vadd.f32 %v5308, 1.0
    %v5310 = vrcp.pop %v5309
    %v5311 = vmul.f32 1.0, %v5310
    %v5312 = vtanh.pop %v5305
    %v5313 = vmul.f32 %v5311, 0.0
    %5315 = vrot.lane.b32.xlu0 %v5312, 64
    %v5316 = vpop.permute.xlu0 %5315
    %v5318 = vmul.f32 %v5311, %v5316
    %5320 = vrot.lane.b32.xlu0 %v5318, 32
    %v5321 = vpop.permute.xlu0 %5320
    %v5323 = vadd.f32 %v5313, %v5321
    %v5324 = vtanh.pop %v5323
    %5326 = vrot.lane.b32.xlu0 %v5324, 64
    %v5327 = vpop.permute.xlu0 %5326
    %v5329 = vmul.f32 %v5311, %v5327
    %5330 = vmatprep.subr.mxu0 0.0
    %5331 = vmatpush1.msra.mxu0 %v5148
    %5332 = vmatprep.subr.mxu0 0.0
    %5333 = vmatpush1.msra.mxu0 %v5149
    %5334 = vmatprep.subr.mxu0 0.0
    %5335 = vmatpush1.msra.mxu0 %v5150
    %5336 = vmatprep.subr.mxu0 0.0
    %5337 = vmatpush1.msra.mxu0 %v5151
    %5338 = vmatprep.subr.mxu0 0.0
    %5339 = vmatpush1.msra.mxu0 0.0
    %5340 = vmatprep.subr.mxu0 0.0
    %5341 = vmatpush1.msra.mxu0 0.0
    %5342 = vmatprep.subr.mxu0 0.0
    %5343 = vmatpush1.msra.mxu0 0.0
    %5344 = vmatprep.subr.mxu0 0.0
    %5345 = vmatpush1.msra.mxu0 0.0
    %5346 = vmatprep.subr.mxu0 0.0
    %5347 = vmatpush1.msra.mxu0 0.0
    %5348 = vmatprep.subr.mxu0 0.0
    %5349 = vmatpush1.msra.mxu0 0.0
    %5350 = vmatprep.subr.mxu0 0.0
    %5351 = vmatpush1.msra.mxu0 0.0
    %5352 = vmatprep.subr.mxu0 0.0
    %5353 = vmatpush1.msra.mxu0 0.0
    %5354 = vmatprep.subr.mxu0 0.0
    %5355 = vmatpush1.msra.mxu0 0.0
    %5356 = vmatprep.subr.mxu0 0.0
    %5357 = vmatpush1.msra.mxu0 0.0
    %5358 = vmatprep.subr.mxu0 0.0
    %5359 = vmatpush1.msra.mxu0 0.0
    %5360 = vmatprep.subr.mxu0 0.0
    %5361 = vmatpush1.msra.mxu0 0.0
    %5362 = vmatprep.subr.mxu0 0.0
    %5363 = vmatpush1.msra.mxu0 0.0
    %5364 = vmatprep.subr.mxu0 0.0
    %5365 = vmatpush1.msra.mxu0 0.0
    %5366 = vmatprep.subr.mxu0 0.0
    %5367 = vmatpush1.msra.mxu0 0.0
    %5368 = vmatprep.subr.mxu0 0.0
    %5369 = vmatpush1.msra.mxu0 0.0
    %5370 = vmatprep.subr.mxu0 0.0
    %5371 = vmatpush1.msra.mxu0 0.0
    %5372 = vmatprep.subr.mxu0 0.0
    %5373 = vmatpush1.msra.mxu0 0.0
    %5374 = vmatprep.subr.mxu0 0.0
    %5375 = vmatpush1.msra.mxu0 0.0
    %5376 = vmatprep.subr.mxu0 0.0
    %5377 = vmatpush1.msra.mxu0 0.0
    %5378 = vmatprep.subr.mxu0 0.0
    %5379 = vmatpush1.msra.mxu0 0.0
    %5380 = vmatprep.subr.mxu0 0.0
    %5381 = vmatpush1.msra.mxu0 0.0
    %5382 = vmatprep.subr.mxu0 0.0
    %5383 = vmatpush1.msra.mxu0 0.0
    %5384 = vmatprep.subr.mxu0 0.0
    %5385 = vmatpush1.msra.mxu0 0.0
    %5386 = vmatprep.subr.mxu0 0.0
    %5387 = vmatpush1.msra.mxu0 0.0
    %5388 = vmatprep.subr.mxu0 0.0
    %5389 = vmatpush1.msra.mxu0 0.0
    %5390 = vmatprep.subr.mxu0 0.0
    %5391 = vmatpush1.msra.mxu0 0.0
    %5392 = vmatprep.subr.mxu0 0.0
    %5393 = vmatpush1.msra.mxu0 0.0
    %5394 = vmatprep.mubr.f32.mxu0 0.0
    %5395 = vmatmul.mubr.f32.gmra.mrb[0].mxu0 %v4195
    %v5396 = vpop.f32.mrb[0].mxu0
    %v5397 = vadd.f32 %v5163, %v5396
    %v5398 = vpop.f32.mrb[0].mxu0
    %5399 = vdwg.mxu0
    %5401 = vrot.lane.b32.xlu0 %v5329, 32
    %v5402 = vpop.permute.xlu0 %5401
    %v5403 = vsel %vm88, %v5402, 0
    %5405 = vmatprep.subr.mxu0 0.0
    %5406 = vmatpush1.msra.mxu0 %v5153
    %5407 = vmatprep.subr.mxu0 0.0
    %5408 = vmatpush1.msra.mxu0 %v5154
    %5409 = vmatprep.subr.mxu0 0.0
    %5410 = vmatpush1.msra.mxu0 %v5155
    %5411 = vmatprep.subr.mxu0 0.0
    %5412 = vmatpush1.msra.mxu0 %v5156
    %5413 = vmatprep.subr.mxu0 0.0
    %5414 = vmatpush1.msra.mxu0 0.0
    %5415 = vmatprep.subr.mxu0 0.0
    %5416 = vmatpush1.msra.mxu0 0.0
    %5417 = vmatprep.subr.mxu0 0.0
    %5418 = vmatpush1.msra.mxu0 0.0
    %5419 = vmatprep.subr.mxu0 0.0
    %5420 = vmatpush1.msra.mxu0 0.0
    %5421 = vmatprep.subr.mxu0 0.0
    %5422 = vmatpush1.msra.mxu0 0.0
    %5423 = vmatprep.subr.mxu0 0.0
    %5424 = vmatpush1.msra.mxu0 0.0
    %5425 = vmatprep.subr.mxu0 0.0
    %5426 = vmatpush1.msra.mxu0 0.0
    %5427 = vmatprep.subr.mxu0 0.0
    %5428 = vmatpush1.msra.mxu0 0.0
    %5429 = vmatprep.subr.mxu0 0.0
    %5430 = vmatpush1.msra.mxu0 0.0
    %5431 = vmatprep.subr.mxu0 0.0
    %5432 = vmatpush1.msra.mxu0 0.0
    %5433 = vmatprep.subr.mxu0 0.0
    %5434 = vmatpush1.msra.mxu0 0.0
    %5435 = vmatprep.subr.mxu0 0.0
    %5436 = vmatpush1.msra.mxu0 0.0
    %5437 = vmatprep.subr.mxu0 0.0
    %5438 = vmatpush1.msra.mxu0 0.0
    %5439 = vmatprep.subr.mxu0 0.0
    %5440 = vmatpush1.msra.mxu0 0.0
    %5441 = vmatprep.subr.mxu0 0.0
    %5442 = vmatpush1.msra.mxu0 0.0
    %5443 = vmatprep.subr.mxu0 0.0
    %5444 = vmatpush1.msra.mxu0 0.0
    %5445 = vmatprep.subr.mxu0 0.0
    %5446 = vmatpush1.msra.mxu0 0.0
    %5447 = vmatprep.subr.mxu0 0.0
    %5448 = vmatpush1.msra.mxu0 0.0
    %5449 = vmatprep.subr.mxu0 0.0
    %5450 = vmatpush1.msra.mxu0 0.0
    %5451 = vmatprep.subr.mxu0 0.0
    %5452 = vmatpush1.msra.mxu0 0.0
    %5453 = vmatprep.subr.mxu0 0.0
    %5454 = vmatpush1.msra.mxu0 0.0
    %5455 = vmatprep.subr.mxu0 0.0
    %5456 = vmatpush1.msra.mxu0 0.0
    %5457 = vmatprep.subr.mxu0 0.0
    %5458 = vmatpush1.msra.mxu0 0.0
    %5459 = vmatprep.subr.mxu0 0.0
    %5460 = vmatpush1.msra.mxu0 0.0
    %5461 = vmatprep.subr.mxu0 0.0
    %5462 = vmatpush1.msra.mxu0 0.0
    %5463 = vmatprep.subr.mxu0 0.0
    %5464 = vmatpush1.msra.mxu0 0.0
    %5465 = vmatprep.subr.mxu0 0.0
    %5466 = vmatpush1.msra.mxu0 0.0
    %5467 = vmatprep.subr.mxu0 0.0
    %5468 = vmatpush1.msra.mxu0 0.0
    %5469 = vmatprep.mubr.f32.mxu0 0.0
    %5470 = vmatmul.mubr.f32.gmra.mrb[0].mxu0 %v5403
    %v5471 = vpop.f32.mrb[0].mxu0
    %v5472 = vadd.f32 0.0, %v5471
    %v5473 = vpop.f32.mrb[0].mxu0
    %5474 = vdwg.mxu0
    %v5475 = vadd.f32 %v5397, %v5472
    %v5476 = vxor.u32 %v5475, 2147483648
    %v5477 = vmul.f32 %v5476, 1.442695
    %v5478 = vpow.pop %v5477
    %v5479 = vadd.f32 %v5478, 1.0
    %v5480 = vrcp.pop %v5479
    %v5481 = vmul.f32 1.0, %v5480
    %v5482 = vtanh.pop %v5475
    %v5483 = vmul.f32 %v5481, %v5323
    %5485 = vrot.lane.b32.xlu0 %v5482, 64
    %v5486 = vpop.permute.xlu0 %5485
    %v5488 = vmul.f32 %v5481, %v5486
    %5490 = vrot.lane.b32.xlu0 %v5488, 32
    %v5491 = vpop.permute.xlu0 %5490
    %v5493 = vadd.f32 %v5483, %v5491
    %v5494 = vtanh.pop %v5493
    %5496 = vrot.lane.b32.xlu0 %v5494, 64
    %v5497 = vpop.permute.xlu0 %5496
    %v5499 = vmul.f32 %v5481, %v5497
    %5500 = vmatprep.subr.mxu0 0.0
    %5501 = vmatpush1.msra.mxu0 %v5148
    %5502 = vmatprep.subr.mxu0 0.0
    %5503 = vmatpush1.msra.mxu0 %v5149
    %5504 = vmatprep.subr.mxu0 0.0
    %5505 = vmatpush1.msra.mxu0 %v5150
    %5506 = vmatprep.subr.mxu0 0.0
    %5507 = vmatpush1.msra.mxu0 %v5151
    %5508 = vmatprep.subr.mxu0 0.0
    %5509 = vmatpush1.msra.mxu0 0.0
    %5510 = vmatprep.subr.mxu0 0.0
    %5511 = vmatpush1.msra.mxu0 0.0
    %5512 = vmatprep.subr.mxu0 0.0
    %5513 = vmatpush1.msra.mxu0 0.0
    %5514 = vmatprep.subr.mxu0 0.0
    %5515 = vmatpush1.msra.mxu0 0.0
    %5516 = vmatprep.subr.mxu0 0.0
    %5517 = vmatpush1.msra.mxu0 0.0
    %5518 = vmatprep.subr.mxu0 0.0
    %5519 = vmatpush1.msra.mxu0 0.0
    %5520 = vmatprep.subr.mxu0 0.0
    %5521 = vmatpush1.msra.mxu0 0.0
    %5522 = vmatprep.subr.mxu0 0.0
    %5523 = vmatpush1.msra.mxu0 0.0
    %5524 = vmatprep.subr.mxu0 0.0
    %5525 = vmatpush1.msra.mxu0 0.0
    %5526 = vmatprep.subr.mxu0 0.0
    %5527 = vmatpush1.msra.mxu0 0.0
    %5528 = vmatprep.subr.mxu0 0.0
    %5529 = vmatpush1.msra.mxu0 0.0
    %5530 = vmatprep.subr.mxu0 0.0
    %5531 = vmatpush1.msra.mxu0 0.0
    %5532 = vmatprep.subr.mxu0 0.0
    %5533 = vmatpush1.msra.mxu0 0.0
    %5534 = vmatprep.subr.mxu0 0.0
    %5535 = vmatpush1.msra.mxu0 0.0
    %5536 = vmatprep.subr.mxu0 0.0
    %5537 = vmatpush1.msra.mxu0 0.0
    %5538 = vmatprep.subr.mxu0 0.0
    %5539 = vmatpush1.msra.mxu0 0.0
    %5540 = vmatprep.subr.mxu0 0.0
    %5541 = vmatpush1.msra.mxu0 0.0
    %5542 = vmatprep.subr.mxu0 0.0
    %5543 = vmatpush1.msra.mxu0 0.0
    %5544 = vmatprep.subr.mxu0 0.0
    %5545 = vmatpush1.msra.mxu0 0.0
    %5546 = vmatprep.subr.mxu0 0.0
    %5547 = vmatpush1.msra.mxu0 0.0
    %5548 = vmatprep.subr.mxu0 0.0
    %5549 = vmatpush1.msra.mxu0 0.0
    %5550 = vmatprep.subr.mxu0 0.0
    %5551 = vmatpush1.msra.mxu0 0.0
    %5552 = vmatprep.subr.mxu0 0.0
    %5553 = vmatpush1.msra.mxu0 0.0
    %5554 = vmatprep.subr.mxu0 0.0
    %5555 = vmatpush1.msra.mxu0 0.0
    %5556 = vmatprep.subr.mxu0 0.0
    %5557 = vmatpush1.msra.mxu0 0.0
    %5558 = vmatprep.subr.mxu0 0.0
    %5559 = vmatpush1.msra.mxu0 0.0
    %5560 = vmatprep.subr.mxu0 0.0
    %5561 = vmatpush1.msra.mxu0 0.0
    %5562 = vmatprep.subr.mxu0 0.0
    %5563 = vmatpush1.msra.mxu0 0.0
    %5564 = vmatprep.mubr.f32.mxu0 0.0
    %5565 = vmatmul.mubr.f32.gmra.mrb[0].mxu0 %v4365
    %v5566 = vpop.f32.mrb[0].mxu0
    %v5567 = vadd.f32 %v5163, %v5566
    %v5568 = vpop.f32.mrb[0].mxu0
    %5569 = vdwg.mxu0
    %5571 = vrot.lane.b32.xlu0 %v5499, 32
    %v5572 = vpop.permute.xlu0 %5571
    %v5573 = vsel %vm88, %v5572, 0
    %5575 = vmatprep.subr.mxu0 0.0
    %5576 = vmatpush1.msra.mxu0 %v5153
    %5577 = vmatprep.subr.mxu0 0.0
    %5578 = vmatpush1.msra.mxu0 %v5154
    %5579 = vmatprep.subr.mxu0 0.0
    %5580 = vmatpush1.msra.mxu0 %v5155
    %5581 = vmatprep.subr.mxu0 0.0
    %5582 = vmatpush1.msra.mxu0 %v5156
    %5583 = vmatprep.subr.mxu0 0.0
    %5584 = vmatpush1.msra.mxu0 0.0
    %5585 = vmatprep.subr.mxu0 0.0
    %5586 = vmatpush1.msra.mxu0 0.0
    %5587 = vmatprep.subr.mxu0 0.0
    %5588 = vmatpush1.msra.mxu0 0.0
    %5589 = vmatprep.subr.mxu0 0.0
    %5590 = vmatpush1.msra.mxu0 0.0
    %5591 = vmatprep.subr.mxu0 0.0
    %5592 = vmatpush1.msra.mxu0 0.0
    %5593 = vmatprep.subr.mxu0 0.0
    %5594 = vmatpush1.msra.mxu0 0.0
    %5595 = vmatprep.subr.mxu0 0.0
    %5596 = vmatpush1.msra.mxu0 0.0
    %5597 = vmatprep.subr.mxu0 0.0
    %5598 = vmatpush1.msra.mxu0 0.0
    %5599 = vmatprep.subr.mxu0 0.0
    %5600 = vmatpush1.msra.mxu0 0.0
    %5601 = vmatprep.subr.mxu0 0.0
    %5602 = vmatpush1.msra.mxu0 0.0
    %5603 = vmatprep.subr.mxu0 0.0
    %5604 = vmatpush1.msra.mxu0 0.0
    %5605 = vmatprep.subr.mxu0 0.0
    %5606 = vmatpush1.msra.mxu0 0.0
    %5607 = vmatprep.subr.mxu0 0.0
    %5608 = vmatpush1.msra.mxu0 0.0
    %5609 = vmatprep.subr.mxu0 0.0
    %5610 = vmatpush1.msra.mxu0 0.0
    %5611 = vmatprep.subr.mxu0 0.0
    %5612 = vmatpush1.msra.mxu0 0.0
    %5613 = vmatprep.subr.mxu0 0.0
    %5614 = vmatpush1.msra.mxu0 0.0
    %5615 = vmatprep.subr.mxu0 0.0
    %5616 = vmatpush1.msra.mxu0 0.0
    %5617 = vmatprep.subr.mxu0 0.0
    %5618 = vmatpush1.msra.mxu0 0.0
    %5619 = vmatprep.subr.mxu0 0.0
    %5620 = vmatpush1.msra.mxu0 0.0
    %5621 = vmatprep.subr.mxu0 0.0
    %5622 = vmatpush1.msra.mxu0 0.0
    %5623 = vmatprep.subr.mxu0 0.0
    %5624 = vmatpush1.msra.mxu0 0.0
    %5625 = vmatprep.subr.mxu0 0.0
    %5626 = vmatpush1.msra.mxu0 0.0
    %5627 = vmatprep.subr.mxu0 0.0
    %5628 = vmatpush1.msra.mxu0 0.0
    %5629 = vmatprep.subr.mxu0 0.0
    %5630 = vmatpush1.msra.mxu0 0.0
    %5631 = vmatprep.subr.mxu0 0.0
    %5632 = vmatpush1.msra.mxu0 0.0
    %5633 = vmatprep.subr.mxu0 0.0
    %5634 = vmatpush1.msra.mxu0 0.0
    %5635 = vmatprep.subr.mxu0 0.0
    %5636 = vmatpush1.msra.mxu0 0.0
    %5637 = vmatprep.subr.mxu0 0.0
    %5638 = vmatpush1.msra.mxu0 0.0
    %5639 = vmatprep.mubr.f32.mxu0 0.0
    %5640 = vmatmul.mubr.f32.gmra.mrb[0].mxu0 %v5573
    %v5641 = vpop.f32.mrb[0].mxu0
    %v5642 = vadd.f32 0.0, %v5641
    %v5643 = vpop.f32.mrb[0].mxu0
    %5644 = vdwg.mxu0
    %v5645 = vadd.f32 %v5567, %v5642
    %v5646 = vxor.u32 %v5645, 2147483648
    %v5647 = vmul.f32 %v5646, 1.442695
    %v5648 = vpow.pop %v5647
    %v5649 = vadd.f32 %v5648, 1.0
    %v5650 = vrcp.pop %v5649
    %v5651 = vmul.f32 1.0, %v5650
    %v5652 = vtanh.pop %v5645
    %v5653 = vmul.f32 %v5651, %v5493
    %5655 = vrot.lane.b32.xlu0 %v5652, 64
    %v5656 = vpop.permute.xlu0 %5655
    %v5658 = vmul.f32 %v5651, %v5656
    %5660 = vrot.lane.b32.xlu0 %v5658, 32
    %v5661 = vpop.permute.xlu0 %5660
    %v5663 = vadd.f32 %v5653, %v5661
    %v5664 = vtanh.pop %v5663
    %5666 = vrot.lane.b32.xlu0 %v5664, 64
    %v5667 = vpop.permute.xlu0 %5666
    %v5669 = vmul.f32 %v5651, %v5667
    %5670 = vmatprep.subr.mxu0 0.0
    %5671 = vmatpush1.msra.mxu0 %v5148
    %5672 = vmatprep.subr.mxu0 0.0
    %5673 = vmatpush1.msra.mxu0 %v5149
    %5674 = vmatprep.subr.mxu0 0.0
    %5675 = vmatpush1.msra.mxu0 %v5150
    %5676 = vmatprep.subr.mxu0 0.0
    %5677 = vmatpush1.msra.mxu0 %v5151
    %5678 = vmatprep.subr.mxu0 0.0
    %5679 = vmatpush1.msra.mxu0 0.0
    %5680 = vmatprep.subr.mxu0 0.0
    %5681 = vmatpush1.msra.mxu0 0.0
    %5682 = vmatprep.subr.mxu0 0.0
    %5683 = vmatpush1.msra.mxu0 0.0
    %5684 = vmatprep.subr.mxu0 0.0
    %5685 = vmatpush1.msra.mxu0 0.0
    %5686 = vmatprep.subr.mxu0 0.0
    %5687 = vmatpush1.msra.mxu0 0.0
    %5688 = vmatprep.subr.mxu0 0.0
    %5689 = vmatpush1.msra.mxu0 0.0
    %5690 = vmatprep.subr.mxu0 0.0
    %5691 = vmatpush1.msra.mxu0 0.0
    %5692 = vmatprep.subr.mxu0 0.0
    %5693 = vmatpush1.msra.mxu0 0.0
    %5694 = vmatprep.subr.mxu0 0.0
    %5695 = vmatpush1.msra.mxu0 0.0
    %5696 = vmatprep.subr.mxu0 0.0
    %5697 = vmatpush1.msra.mxu0 0.0
    %5698 = vmatprep.subr.mxu0 0.0
    %5699 = vmatpush1.msra.mxu0 0.0
    %5700 = vmatprep.subr.mxu0 0.0
    %5701 = vmatpush1.msra.mxu0 0.0
    %5702 = vmatprep.subr.mxu0 0.0
    %5703 = vmatpush1.msra.mxu0 0.0
    %5704 = vmatprep.subr.mxu0 0.0
    %5705 = vmatpush1.msra.mxu0 0.0
    %5706 = vmatprep.subr.mxu0 0.0
    %5707 = vmatpush1.msra.mxu0 0.0
    %5708 = vmatprep.subr.mxu0 0.0
    %5709 = vmatpush1.msra.mxu0 0.0
    %5710 = vmatprep.subr.mxu0 0.0
    %5711 = vmatpush1.msra.mxu0 0.0
    %5712 = vmatprep.subr.mxu0 0.0
    %5713 = vmatpush1.msra.mxu0 0.0
    %5714 = vmatprep.subr.mxu0 0.0
    %5715 = vmatpush1.msra.mxu0 0.0
    %5716 = vmatprep.subr.mxu0 0.0
    %5717 = vmatpush1.msra.mxu0 0.0
    %5718 = vmatprep.subr.mxu0 0.0
    %5719 = vmatpush1.msra.mxu0 0.0
    %5720 = vmatprep.subr.mxu0 0.0
    %5721 = vmatpush1.msra.mxu0 0.0
    %5722 = vmatprep.subr.mxu0 0.0
    %5723 = vmatpush1.msra.mxu0 0.0
    %5724 = vmatprep.subr.mxu0 0.0
    %5725 = vmatpush1.msra.mxu0 0.0
    %5726 = vmatprep.subr.mxu0 0.0
    %5727 = vmatpush1.msra.mxu0 0.0
    %5728 = vmatprep.subr.mxu0 0.0
    %5729 = vmatpush1.msra.mxu0 0.0
    %5730 = vmatprep.subr.mxu0 0.0
    %5731 = vmatpush1.msra.mxu0 0.0
    %5732 = vmatprep.subr.mxu0 0.0
    %5733 = vmatpush1.msra.mxu0 0.0
    %5734 = vmatprep.mubr.f32.mxu0 0.0
    %5735 = vmatmul.mubr.f32.gmra.mrb[0].mxu0 %v4535
    %v5736 = vpop.f32.mrb[0].mxu0
    %v5737 = vadd.f32 %v5163, %v5736
    %v5738 = vpop.f32.mrb[0].mxu0
    %5739 = vdwg.mxu0
    %5741 = vrot.lane.b32.xlu0 %v5669, 32
    %v5742 = vpop.permute.xlu0 %5741
    %v5743 = vsel %vm88, %v5742, 0
    %5745 = vmatprep.subr.mxu0 0.0
    %5746 = vmatpush1.msra.mxu0 %v5153
    %5747 = vmatprep.subr.mxu0 0.0
    %5748 = vmatpush1.msra.mxu0 %v5154
    %5749 = vmatprep.subr.mxu0 0.0
    %5750 = vmatpush1.msra.mxu0 %v5155
    %5751 = vmatprep.subr.mxu0 0.0
    %5752 = vmatpush1.msra.mxu0 %v5156
    %5753 = vmatprep.subr.mxu0 0.0
    %5754 = vmatpush1.msra.mxu0 0.0
    %5755 = vmatprep.subr.mxu0 0.0
    %5756 = vmatpush1.msra.mxu0 0.0
    %5757 = vmatprep.subr.mxu0 0.0
    %5758 = vmatpush1.msra.mxu0 0.0
    %5759 = vmatprep.subr.mxu0 0.0
    %5760 = vmatpush1.msra.mxu0 0.0
    %5761 = vmatprep.subr.mxu0 0.0
    %5762 = vmatpush1.msra.mxu0 0.0
    %5763 = vmatprep.subr.mxu0 0.0
    %5764 = vmatpush1.msra.mxu0 0.0
    %5765 = vmatprep.subr.mxu0 0.0
    %5766 = vmatpush1.msra.mxu0 0.0
    %5767 = vmatprep.subr.mxu0 0.0
    %5768 = vmatpush1.msra.mxu0 0.0
    %5769 = vmatprep.subr.mxu0 0.0
    %5770 = vmatpush1.msra.mxu0 0.0
    %5771 = vmatprep.subr.mxu0 0.0
    %5772 = vmatpush1.msra.mxu0 0.0
    %5773 = vmatprep.subr.mxu0 0.0
    %5774 = vmatpush1.msra.mxu0 0.0
    %5775 = vmatprep.subr.mxu0 0.0
    %5776 = vmatpush1.msra.mxu0 0.0
    %5777 = vmatprep.subr.mxu0 0.0
    %5778 = vmatpush1.msra.mxu0 0.0
    %5779 = vmatprep.subr.mxu0 0.0
    %5780 = vmatpush1.msra.mxu0 0.0
    %5781 = vmatprep.subr.mxu0 0.0
    %5782 = vmatpush1.msra.mxu0 0.0
    %5783 = vmatprep.subr.mxu0 0.0
    %5784 = vmatpush1.msra.mxu0 0.0
    %5785 = vmatprep.subr.mxu0 0.0
    %5786 = vmatpush1.msra.mxu0 0.0
    %5787 = vmatprep.subr.mxu0 0.0
    %5788 = vmatpush1.msra.mxu0 0.0
    %5789 = vmatprep.subr.mxu0 0.0
    %5790 = vmatpush1.msra.mxu0 0.0
    %5791 = vmatprep.subr.mxu0 0.0
    %5792 = vmatpush1.msra.mxu0 0.0
    %5793 = vmatprep.subr.mxu0 0.0
    %5794 = vmatpush1.msra.mxu0 0.0
    %5795 = vmatprep.subr.mxu0 0.0
    %5796 = vmatpush1.msra.mxu0 0.0
    %5797 = vmatprep.subr.mxu0 0.0
    %5798 = vmatpush1.msra.mxu0 0.0
    %5799 = vmatprep.subr.mxu0 0.0
    %5800 = vmatpush1.msra.mxu0 0.0
    %5801 = vmatprep.subr.mxu0 0.0
    %5802 = vmatpush1.msra.mxu0 0.0
    %5803 = vmatprep.subr.mxu0 0.0
    %5804 = vmatpush1.msra.mxu0 0.0
    %5805 = vmatprep.subr.mxu0 0.0
    %5806 = vmatpush1.msra.mxu0 0.0
    %5807 = vmatprep.subr.mxu0 0.0
    %5808 = vmatpush1.msra.mxu0 0.0
    %5809 = vmatprep.mubr.f32.mxu0 0.0
    %5810 = vmatmul.mubr.f32.gmra.mrb[0].mxu0 %v5743
    %v5811 = vpop.f32.mrb[0].mxu0
    %v5812 = vadd.f32 0.0, %v5811
    %v5813 = vpop.f32.mrb[0].mxu0
    %5814 = vdwg.mxu0
    %v5815 = vadd.f32 %v5737, %v5812
    %v5816 = vxor.u32 %v5815, 2147483648
    %v5817 = vmul.f32 %v5816, 1.442695
    %v5818 = vpow.pop %v5817
    %v5819 = vadd.f32 %v5818, 1.0
    %v5820 = vrcp.pop %v5819
    %v5821 = vmul.f32 1.0, %v5820
    %v5822 = vtanh.pop %v5815
    %v5823 = vmul.f32 %v5821, %v5663
    %5825 = vrot.lane.b32.xlu0 %v5822, 64
    %v5826 = vpop.permute.xlu0 %5825
    %v5828 = vmul.f32 %v5821, %v5826
    %5830 = vrot.lane.b32.xlu0 %v5828, 32
    %v5831 = vpop.permute.xlu0 %5830
    %v5833 = vadd.f32 %v5823, %v5831
    %v5834 = vtanh.pop %v5833
    %5836 = vrot.lane.b32.xlu0 %v5834, 64
    %v5837 = vpop.permute.xlu0 %5836
    %v5839 = vmul.f32 %v5821, %v5837
    %5840 = vmatprep.subr.mxu0 0.0
    %5841 = vmatpush1.msra.mxu0 %v5148
    %5842 = vmatprep.subr.mxu0 0.0
    %5843 = vmatpush1.msra.mxu0 %v5149
    %5844 = vmatprep.subr.mxu0 0.0
    %5845 = vmatpush1.msra.mxu0 %v5150
    %5846 = vmatprep.subr.mxu0 0.0
    %5847 = vmatpush1.msra.mxu0 %v5151
    %5848 = vmatprep.subr.mxu0 0.0
    %5849 = vmatpush1.msra.mxu0 0.0
    %5850 = vmatprep.subr.mxu0 0.0
    %5851 = vmatpush1.msra.mxu0 0.0
    %5852 = vmatprep.subr.mxu0 0.0
    %5853 = vmatpush1.msra.mxu0 0.0
    %5854 = vmatprep.subr.mxu0 0.0
    %5855 = vmatpush1.msra.mxu0 0.0
    %5856 = vmatprep.subr.mxu0 0.0
    %5857 = vmatpush1.msra.mxu0 0.0
    %5858 = vmatprep.subr.mxu0 0.0
    %5859 = vmatpush1.msra.mxu0 0.0
    %5860 = vmatprep.subr.mxu0 0.0
    %5861 = vmatpush1.msra.mxu0 0.0
    %5862 = vmatprep.subr.mxu0 0.0
    %5863 = vmatpush1.msra.mxu0 0.0
    %5864 = vmatprep.subr.mxu0 0.0
    %5865 = vmatpush1.msra.mxu0 0.0
    %5866 = vmatprep.subr.mxu0 0.0
    %5867 = vmatpush1.msra.mxu0 0.0
    %5868 = vmatprep.subr.mxu0 0.0
    %5869 = vmatpush1.msra.mxu0 0.0
    %5870 = vmatprep.subr.mxu0 0.0
    %5871 = vmatpush1.msra.mxu0 0.0
    %5872 = vmatprep.subr.mxu0 0.0
    %5873 = vmatpush1.msra.mxu0 0.0
    %5874 = vmatprep.subr.mxu0 0.0
    %5875 = vmatpush1.msra.mxu0 0.0
    %5876 = vmatprep.subr.mxu0 0.0
    %5877 = vmatpush1.msra.mxu0 0.0
    %5878 = vmatprep.subr.mxu0 0.0
    %5879 = vmatpush1.msra.mxu0 0.0
    %5880 = vmatprep.subr.mxu0 0.0
    %5881 = vmatpush1.msra.mxu0 0.0
    %5882 = vmatprep.subr.mxu0 0.0
    %5883 = vmatpush1.msra.mxu0 0.0
    %5884 = vmatprep.subr.mxu0 0.0
    %5885 = vmatpush1.msra.mxu0 0.0
    %5886 = vmatprep.subr.mxu0 0.0
    %5887 = vmatpush1.msra.mxu0 0.0
    %5888 = vmatprep.subr.mxu0 0.0
    %5889 = vmatpush1.msra.mxu0 0.0
    %5890 = vmatprep.subr.mxu0 0.0
    %5891 = vmatpush1.msra.mxu0 0.0
    %5892 = vmatprep.subr.mxu0 0.0
    %5893 = vmatpush1.msra.mxu0 0.0
    %5894 = vmatprep.subr.mxu0 0.0
    %5895 = vmatpush1.msra.mxu0 0.0
    %5896 = vmatprep.subr.mxu0 0.0
    %5897 = vmatpush1.msra.mxu0 0.0
    %5898 = vmatprep.subr.mxu0 0.0
    %5899 = vmatpush1.msra.mxu0 0.0
    %5900 = vmatprep.subr.mxu0 0.0
    %5901 = vmatpush1.msra.mxu0 0.0
    %5902 = vmatprep.subr.mxu0 0.0
    %5903 = vmatpush1.msra.mxu0 0.0
    %5904 = vmatprep.mubr.f32.mxu0 0.0
    %5905 = vmatmul.mubr.f32.gmra.mrb[0].mxu0 %v4705
    %v5906 = vpop.f32.mrb[0].mxu0
    %v5907 = vadd.f32 %v5163, %v5906
    %v5908 = vpop.f32.mrb[0].mxu0
    %5909 = vdwg.mxu0
    %5911 = vrot.lane.b32.xlu0 %v5839, 32
    %v5912 = vpop.permute.xlu0 %5911
    %v5913 = vsel %vm88, %v5912, 0
    %5915 = vmatprep.subr.mxu0 0.0
    %5916 = vmatpush1.msra.mxu0 %v5153
    %5917 = vmatprep.subr.mxu0 0.0
    %5918 = vmatpush1.msra.mxu0 %v5154
    %5919 = vmatprep.subr.mxu0 0.0
    %5920 = vmatpush1.msra.mxu0 %v5155
    %5921 = vmatprep.subr.mxu0 0.0
    %5922 = vmatpush1.msra.mxu0 %v5156
    %5923 = vmatprep.subr.mxu0 0.0
    %5924 = vmatpush1.msra.mxu0 0.0
    %5925 = vmatprep.subr.mxu0 0.0
    %5926 = vmatpush1.msra.mxu0 0.0
    %5927 = vmatprep.subr.mxu0 0.0
    %5928 = vmatpush1.msra.mxu0 0.0
    %5929 = vmatprep.subr.mxu0 0.0
    %5930 = vmatpush1.msra.mxu0 0.0
    %5931 = vmatprep.subr.mxu0 0.0
    %5932 = vmatpush1.msra.mxu0 0.0
    %5933 = vmatprep.subr.mxu0 0.0
    %5934 = vmatpush1.msra.mxu0 0.0
    %5935 = vmatprep.subr.mxu0 0.0
    %5936 = vmatpush1.msra.mxu0 0.0
    %5937 = vmatprep.subr.mxu0 0.0
    %5938 = vmatpush1.msra.mxu0 0.0
    %5939 = vmatprep.subr.mxu0 0.0
    %5940 = vmatpush1.msra.mxu0 0.0
    %5941 = vmatprep.subr.mxu0 0.0
    %5942 = vmatpush1.msra.mxu0 0.0
    %5943 = vmatprep.subr.mxu0 0.0
    %5944 = vmatpush1.msra.mxu0 0.0
    %5945 = vmatprep.subr.mxu0 0.0
    %5946 = vmatpush1.msra.mxu0 0.0
    %5947 = vmatprep.subr.mxu0 0.0
    %5948 = vmatpush1.msra.mxu0 0.0
    %5949 = vmatprep.subr.mxu0 0.0
    %5950 = vmatpush1.msra.mxu0 0.0
    %5951 = vmatprep.subr.mxu0 0.0
    %5952 = vmatpush1.msra.mxu0 0.0
    %5953 = vmatprep.subr.mxu0 0.0
    %5954 = vmatpush1.msra.mxu0 0.0
    %5955 = vmatprep.subr.mxu0 0.0
    %5956 = vmatpush1.msra.mxu0 0.0
    %5957 = vmatprep.subr.mxu0 0.0
    %5958 = vmatpush1.msra.mxu0 0.0
    %5959 = vmatprep.subr.mxu0 0.0
    %5960 = vmatpush1.msra.mxu0 0.0
    %5961 = vmatprep.subr.mxu0 0.0
    %5962 = vmatpush1.msra.mxu0 0.0
    %5963 = vmatprep.subr.mxu0 0.0
    %5964 = vmatpush1.msra.mxu0 0.0
    %5965 = vmatprep.subr.mxu0 0.0
    %5966 = vmatpush1.msra.mxu0 0.0
    %5967 = vmatprep.subr.mxu0 0.0
    %5968 = vmatpush1.msra.mxu0 0.0
    %5969 = vmatprep.subr.mxu0 0.0
    %5970 = vmatpush1.msra.mxu0 0.0
    %5971 = vmatprep.subr.mxu0 0.0
    %5972 = vmatpush1.msra.mxu0 0.0
    %5973 = vmatprep.subr.mxu0 0.0
    %5974 = vmatpush1.msra.mxu0 0.0
    %5975 = vmatprep.subr.mxu0 0.0
    %5976 = vmatpush1.msra.mxu0 0.0
    %5977 = vmatprep.subr.mxu0 0.0
    %5978 = vmatpush1.msra.mxu0 0.0
    %5979 = vmatprep.mubr.f32.mxu0 0.0
    %5980 = vmatmul.mubr.f32.gmra.mrb[0].mxu0 %v5913
    %v5981 = vpop.f32.mrb[0].mxu0
    %v5982 = vadd.f32 0.0, %v5981
    %v5983 = vpop.f32.mrb[0].mxu0
    %5984 = vdwg.mxu0
    %v5985 = vadd.f32 %v5907, %v5982
    %v5986 = vxor.u32 %v5985, 2147483648
    %v5987 = vmul.f32 %v5986, 1.442695
    %v5988 = vpow.pop %v5987
    %v5989 = vadd.f32 %v5988, 1.0
    %v5990 = vrcp.pop %v5989
    %v5991 = vmul.f32 1.0, %v5990
    %v5992 = vtanh.pop %v5985
    %v5993 = vmul.f32 %v5991, %v5833
    %5995 = vrot.lane.b32.xlu0 %v5992, 64
    %v5996 = vpop.permute.xlu0 %5995
    %v5998 = vmul.f32 %v5991, %v5996
    %6000 = vrot.lane.b32.xlu0 %v5998, 32
    %v6001 = vpop.permute.xlu0 %6000
    %v6003 = vadd.f32 %v5993, %v6001
    %v6004 = vtanh.pop %v6003
    %6006 = vrot.lane.b32.xlu0 %v6004, 64
    %v6007 = vpop.permute.xlu0 %6006
    %v6009 = vmul.f32 %v5991, %v6007
    %6010 = vmatprep.subr.mxu0 0.0
    %6011 = vmatpush1.msra.mxu0 %v5148
    %6012 = vmatprep.subr.mxu0 0.0
    %6013 = vmatpush1.msra.mxu0 %v5149
    %6014 = vmatprep.subr.mxu0 0.0
    %6015 = vmatpush1.msra.mxu0 %v5150
    %6016 = vmatprep.subr.mxu0 0.0
    %6017 = vmatpush1.msra.mxu0 %v5151
    %6018 = vmatprep.subr.mxu0 0.0
    %6019 = vmatpush1.msra.mxu0 0.0
    %6020 = vmatprep.subr.mxu0 0.0
    %6021 = vmatpush1.msra.mxu0 0.0
    %6022 = vmatprep.subr.mxu0 0.0
    %6023 = vmatpush1.msra.mxu0 0.0
    %6024 = vmatprep.subr.mxu0 0.0
    %6025 = vmatpush1.msra.mxu0 0.0
    %6026 = vmatprep.subr.mxu0 0.0
    %6027 = vmatpush1.msra.mxu0 0.0
    %6028 = vmatprep.subr.mxu0 0.0
    %6029 = vmatpush1.msra.mxu0 0.0
    %6030 = vmatprep.subr.mxu0 0.0
    %6031 = vmatpush1.msra.mxu0 0.0
    %6032 = vmatprep.subr.mxu0 0.0
    %6033 = vmatpush1.msra.mxu0 0.0
    %6034 = vmatprep.subr.mxu0 0.0
    %6035 = vmatpush1.msra.mxu0 0.0
    %6036 = vmatprep.subr.mxu0 0.0
    %6037 = vmatpush1.msra.mxu0 0.0
    %6038 = vmatprep.subr.mxu0 0.0
    %6039 = vmatpush1.msra.mxu0 0.0
    %6040 = vmatprep.subr.mxu0 0.0
    %6041 = vmatpush1.msra.mxu0 0.0
    %6042 = vmatprep.subr.mxu0 0.0
    %6043 = vmatpush1.msra.mxu0 0.0
    %6044 = vmatprep.subr.mxu0 0.0
    %6045 = vmatpush1.msra.mxu0 0.0
    %6046 = vmatprep.subr.mxu0 0.0
    %6047 = vmatpush1.msra.mxu0 0.0
    %6048 = vmatprep.subr.mxu0 0.0
    %6049 = vmatpush1.msra.mxu0 0.0
    %6050 = vmatprep.subr.mxu0 0.0
    %6051 = vmatpush1.msra.mxu0 0.0
    %6052 = vmatprep.subr.mxu0 0.0
    %6053 = vmatpush1.msra.mxu0 0.0
    %6054 = vmatprep.subr.mxu0 0.0
    %6055 = vmatpush1.msra.mxu0 0.0
    %6056 = vmatprep.subr.mxu0 0.0
    %6057 = vmatpush1.msra.mxu0 0.0
    %6058 = vmatprep.subr.mxu0 0.0
    %6059 = vmatpush1.msra.mxu0 0.0
    %6060 = vmatprep.subr.mxu0 0.0
    %6061 = vmatpush1.msra.mxu0 0.0
    %6062 = vmatprep.subr.mxu0 0.0
    %6063 = vmatpush1.msra.mxu0 0.0
    %6064 = vmatprep.subr.mxu0 0.0
    %6065 = vmatpush1.msra.mxu0 0.0
    %6066 = vmatprep.subr.mxu0 0.0
    %6067 = vmatpush1.msra.mxu0 0.0
    %6068 = vmatprep.subr.mxu0 0.0
    %6069 = vmatpush1.msra.mxu0 0.0
    %6070 = vmatprep.subr.mxu0 0.0
    %6071 = vmatpush1.msra.mxu0 0.0
    %6072 = vmatprep.subr.mxu0 0.0
    %6073 = vmatpush1.msra.mxu0 0.0
    %6074 = vmatprep.mubr.f32.mxu0 0.0
    %6075 = vmatmul.mubr.f32.gmra.mrb[0].mxu0 %v4875
    %v6076 = vpop.f32.mrb[0].mxu0
    %v6077 = vadd.f32 %v5163, %v6076
    %v6078 = vpop.f32.mrb[0].mxu0
    %6079 = vdwg.mxu0
    %6081 = vrot.lane.b32.xlu0 %v6009, 32
    %v6082 = vpop.permute.xlu0 %6081
    %v6083 = vsel %vm88, %v6082, 0
    %6085 = vmatprep.subr.mxu0 0.0
    %6086 = vmatpush1.msra.mxu0 %v5153
    %6087 = vmatprep.subr.mxu0 0.0
    %6088 = vmatpush1.msra.mxu0 %v5154
    %6089 = vmatprep.subr.mxu0 0.0
    %6090 = vmatpush1.msra.mxu0 %v5155
    %6091 = vmatprep.subr.mxu0 0.0
    %6092 = vmatpush1.msra.mxu0 %v5156
    %6093 = vmatprep.subr.mxu0 0.0
    %6094 = vmatpush1.msra.mxu0 0.0
    %6095 = vmatprep.subr.mxu0 0.0
    %6096 = vmatpush1.msra.mxu0 0.0
    %6097 = vmatprep.subr.mxu0 0.0
    %6098 = vmatpush1.msra.mxu0 0.0
    %6099 = vmatprep.subr.mxu0 0.0
    %6100 = vmatpush1.msra.mxu0 0.0
    %6101 = vmatprep.subr.mxu0 0.0
    %6102 = vmatpush1.msra.mxu0 0.0
    %6103 = vmatprep.subr.mxu0 0.0
    %6104 = vmatpush1.msra.mxu0 0.0
    %6105 = vmatprep.subr.mxu0 0.0
    %6106 = vmatpush1.msra.mxu0 0.0
    %6107 = vmatprep.subr.mxu0 0.0
    %6108 = vmatpush1.msra.mxu0 0.0
    %6109 = vmatprep.subr.mxu0 0.0
    %6110 = vmatpush1.msra.mxu0 0.0
    %6111 = vmatprep.subr.mxu0 0.0
    %6112 = vmatpush1.msra.mxu0 0.0
    %6113 = vmatprep.subr.mxu0 0.0
    %6114 = vmatpush1.msra.mxu0 0.0
    %6115 = vmatprep.subr.mxu0 0.0
    %6116 = vmatpush1.msra.mxu0 0.0
    %6117 = vmatprep.subr.mxu0 0.0
    %6118 = vmatpush1.msra.mxu0 0.0
    %6119 = vmatprep.subr.mxu0 0.0
    %6120 = vmatpush1.msra.mxu0 0.0
    %6121 = vmatprep.subr.mxu0 0.0
    %6122 = vmatpush1.msra.mxu0 0.0
    %6123 = vmatprep.subr.mxu0 0.0
    %6124 = vmatpush1.msra.mxu0 0.0
    %6125 = vmatprep.subr.mxu0 0.0
    %6126 = vmatpush1.msra.mxu0 0.0
    %6127 = vmatprep.subr.mxu0 0.0
    %6128 = vmatpush1.msra.mxu0 0.0
    %6129 = vmatprep.subr.mxu0 0.0
    %6130 = vmatpush1.msra.mxu0 0.0
    %6131 = vmatprep.subr.mxu0 0.0
    %6132 = vmatpush1.msra.mxu0 0.0
    %6133 = vmatprep.subr.mxu0 0.0
    %6134 = vmatpush1.msra.mxu0 0.0
    %6135 = vmatprep.subr.mxu0 0.0
    %6136 = vmatpush1.msra.mxu0 0.0
    %6137 = vmatprep.subr.mxu0 0.0
    %6138 = vmatpush1.msra.mxu0 0.0
    %6139 = vmatprep.subr.mxu0 0.0
    %6140 = vmatpush1.msra.mxu0 0.0
    %6141 = vmatprep.subr.mxu0 0.0
    %6142 = vmatpush1.msra.mxu0 0.0
    %6143 = vmatprep.subr.mxu0 0.0
    %6144 = vmatpush1.msra.mxu0 0.0
    %6145 = vmatprep.subr.mxu0 0.0
    %6146 = vmatpush1.msra.mxu0 0.0
    %6147 = vmatprep.subr.mxu0 0.0
    %6148 = vmatpush1.msra.mxu0 0.0
    %6149 = vmatprep.mubr.f32.mxu0 0.0
    %6150 = vmatmul.mubr.f32.gmra.mrb[0].mxu0 %v6083
    %v6151 = vpop.f32.mrb[0].mxu0
    %v6152 = vadd.f32 0.0, %v6151
    %v6153 = vpop.f32.mrb[0].mxu0
    %6154 = vdwg.mxu0
    %v6155 = vadd.f32 %v6077, %v6152
    %v6156 = vxor.u32 %v6155, 2147483648
    %v6157 = vmul.f32 %v6156, 1.442695
    %v6158 = vpow.pop %v6157
    %v6159 = vadd.f32 %v6158, 1.0
    %v6160 = vrcp.pop %v6159
    %v6161 = vmul.f32 1.0, %v6160
    %v6162 = vtanh.pop %v6155
    %v6163 = vmul.f32 %v6161, %v6003
    %6165 = vrot.lane.b32.xlu0 %v6162, 64
    %v6166 = vpop.permute.xlu0 %6165
    %v6168 = vmul.f32 %v6161, %v6166
    %6170 = vrot.lane.b32.xlu0 %v6168, 32
    %v6171 = vpop.permute.xlu0 %6170
    %v6173 = vadd.f32 %v6163, %v6171
    %v6174 = vtanh.pop %v6173
    %6176 = vrot.lane.b32.xlu0 %v6174, 64
    %v6177 = vpop.permute.xlu0 %6176
    %v6179 = vmul.f32 %v6161, %v6177
    %6180 = vmatprep.subr.mxu0 0.0
    %6181 = vmatpush1.msra.mxu0 %v5148
    %6182 = vmatprep.subr.mxu0 0.0
    %6183 = vmatpush1.msra.mxu0 %v5149
    %6184 = vmatprep.subr.mxu0 0.0
    %6185 = vmatpush1.msra.mxu0 %v5150
    %6186 = vmatprep.subr.mxu0 0.0
    %6187 = vmatpush1.msra.mxu0 %v5151
    %6188 = vmatprep.subr.mxu0 0.0
    %6189 = vmatpush1.msra.mxu0 0.0
    %6190 = vmatprep.subr.mxu0 0.0
    %6191 = vmatpush1.msra.mxu0 0.0
    %6192 = vmatprep.subr.mxu0 0.0
    %6193 = vmatpush1.msra.mxu0 0.0
    %6194 = vmatprep.subr.mxu0 0.0
    %6195 = vmatpush1.msra.mxu0 0.0
    %6196 = vmatprep.subr.mxu0 0.0
    %6197 = vmatpush1.msra.mxu0 0.0
    %6198 = vmatprep.subr.mxu0 0.0
    %6199 = vmatpush1.msra.mxu0 0.0
    %6200 = vmatprep.subr.mxu0 0.0
    %6201 = vmatpush1.msra.mxu0 0.0
    %6202 = vmatprep.subr.mxu0 0.0
    %6203 = vmatpush1.msra.mxu0 0.0
    %6204 = vmatprep.subr.mxu0 0.0
    %6205 = vmatpush1.msra.mxu0 0.0
    %6206 = vmatprep.subr.mxu0 0.0
    %6207 = vmatpush1.msra.mxu0 0.0
    %6208 = vmatprep.subr.mxu0 0.0
    %6209 = vmatpush1.msra.mxu0 0.0
    %6210 = vmatprep.subr.mxu0 0.0
    %6211 = vmatpush1.msra.mxu0 0.0
    %6212 = vmatprep.subr.mxu0 0.0
    %6213 = vmatpush1.msra.mxu0 0.0
    %6214 = vmatprep.subr.mxu0 0.0
    %6215 = vmatpush1.msra.mxu0 0.0
    %6216 = vmatprep.subr.mxu0 0.0
    %6217 = vmatpush1.msra.mxu0 0.0
    %6218 = vmatprep.subr.mxu0 0.0
    %6219 = vmatpush1.msra.mxu0 0.0
    %6220 = vmatprep.subr.mxu0 0.0
    %6221 = vmatpush1.msra.mxu0 0.0
    %6222 = vmatprep.subr.mxu0 0.0
    %6223 = vmatpush1.msra.mxu0 0.0
    %6224 = vmatprep.subr.mxu0 0.0
    %6225 = vmatpush1.msra.mxu0 0.0
    %6226 = vmatprep.subr.mxu0 0.0
    %6227 = vmatpush1.msra.mxu0 0.0
    %6228 = vmatprep.subr.mxu0 0.0
    %6229 = vmatpush1.msra.mxu0 0.0
    %6230 = vmatprep.subr.mxu0 0.0
    %6231 = vmatpush1.msra.mxu0 0.0
    %6232 = vmatprep.subr.mxu0 0.0
    %6233 = vmatpush1.msra.mxu0 0.0
    %6234 = vmatprep.subr.mxu0 0.0
    %6235 = vmatpush1.msra.mxu0 0.0
    %6236 = vmatprep.subr.mxu0 0.0
    %6237 = vmatpush1.msra.mxu0 0.0
    %6238 = vmatprep.subr.mxu0 0.0
    %6239 = vmatpush1.msra.mxu0 0.0
    %6240 = vmatprep.subr.mxu0 0.0
    %6241 = vmatpush1.msra.mxu0 0.0
    %6242 = vmatprep.subr.mxu0 0.0
    %6243 = vmatpush1.msra.mxu0 0.0
    %6244 = vmatprep.mubr.f32.mxu0 0.0
    %6245 = vmatmul.mubr.f32.gmra.mrb[0].mxu0 %v5050
    %v6246 = vpop.f32.mrb[0].mxu0
    %v6247 = vadd.f32 %v5163, %v6246
    %v6248 = vpop.f32.mrb[0].mxu0
    %6249 = vdwg.mxu0
    %6251 = vrot.lane.b32.xlu0 %v6179, 32
    %v6252 = vpop.permute.xlu0 %6251
    %v6253 = vsel %vm88, %v6252, 0
    %6255 = vmatprep.subr.mxu0 0.0
    %6256 = vmatpush1.msra.mxu0 %v5153
    %6257 = vmatprep.subr.mxu0 0.0
    %6258 = vmatpush1.msra.mxu0 %v5154
    %6259 = vmatprep.subr.mxu0 0.0
    %6260 = vmatpush1.msra.mxu0 %v5155
    %6261 = vmatprep.subr.mxu0 0.0
    %6262 = vmatpush1.msra.mxu0 %v5156
    %6263 = vmatprep.subr.mxu0 0.0
    %6264 = vmatpush1.msra.mxu0 0.0
    %6265 = vmatprep.subr.mxu0 0.0
    %6266 = vmatpush1.msra.mxu0 0.0
    %6267 = vmatprep.subr.mxu0 0.0
    %6268 = vmatpush1.msra.mxu0 0.0
    %6269 = vmatprep.subr.mxu0 0.0
    %6270 = vmatpush1.msra.mxu0 0.0
    %6271 = vmatprep.subr.mxu0 0.0
    %6272 = vmatpush1.msra.mxu0 0.0
    %6273 = vmatprep.subr.mxu0 0.0
    %6274 = vmatpush1.msra.mxu0 0.0
    %6275 = vmatprep.subr.mxu0 0.0
    %6276 = vmatpush1.msra.mxu0 0.0
    %6277 = vmatprep.subr.mxu0 0.0
    %6278 = vmatpush1.msra.mxu0 0.0
    %6279 = vmatprep.subr.mxu0 0.0
    %6280 = vmatpush1.msra.mxu0 0.0
    %6281 = vmatprep.subr.mxu0 0.0
    %6282 = vmatpush1.msra.mxu0 0.0
    %6283 = vmatprep.subr.mxu0 0.0
    %6284 = vmatpush1.msra.mxu0 0.0
    %6285 = vmatprep.subr.mxu0 0.0
    %6286 = vmatpush1.msra.mxu0 0.0
    %6287 = vmatprep.subr.mxu0 0.0
    %6288 = vmatpush1.msra.mxu0 0.0
    %6289 = vmatprep.subr.mxu0 0.0
    %6290 = vmatpush1.msra.mxu0 0.0
    %6291 = vmatprep.subr.mxu0 0.0
    %6292 = vmatpush1.msra.mxu0 0.0
    %6293 = vmatprep.subr.mxu0 0.0
    %6294 = vmatpush1.msra.mxu0 0.0
    %6295 = vmatprep.subr.mxu0 0.0
    %6296 = vmatpush1.msra.mxu0 0.0
    %6297 = vmatprep.subr.mxu0 0.0
    %6298 = vmatpush1.msra.mxu0 0.0
    %6299 = vmatprep.subr.mxu0 0.0
    %6300 = vmatpush1.msra.mxu0 0.0
    %6301 = vmatprep.subr.mxu0 0.0
    %6302 = vmatpush1.msra.mxu0 0.0
    %6303 = vmatprep.subr.mxu0 0.0
    %6304 = vmatpush1.msra.mxu0 0.0
    %6305 = vmatprep.subr.mxu0 0.0
    %6306 = vmatpush1.msra.mxu0 0.0
    %6307 = vmatprep.subr.mxu0 0.0
    %6308 = vmatpush1.msra.mxu0 0.0
    %6309 = vmatprep.subr.mxu0 0.0
    %6310 = vmatpush1.msra.mxu0 0.0
    %6311 = vmatprep.subr.mxu0 0.0
    %6312 = vmatpush1.msra.mxu0 0.0
    %6313 = vmatprep.subr.mxu0 0.0
    %6314 = vmatpush1.msra.mxu0 0.0
    %6315 = vmatprep.subr.mxu0 0.0
    %6316 = vmatpush1.msra.mxu0 0.0
    %6317 = vmatprep.subr.mxu0 0.0
    %6318 = vmatpush1.msra.mxu0 0.0
    %6319 = vmatprep.mubr.f32.mxu0 0.0
    %6320 = vmatmul.mubr.f32.gmra.mrb[0].mxu0 %v6253
    %v6321 = vpop.f32.mrb[0].mxu0
    %v6322 = vadd.f32 0.0, %v6321
    %v6323 = vpop.f32.mrb[0].mxu0
    %6324 = vdwg.mxu0
    %v6325 = vadd.f32 %v6247, %v6322
    %v6326 = vxor.u32 %v6325, 2147483648
    %v6327 = vmul.f32 %v6326, 1.442695
    %v6328 = vpow.pop %v6327
    %v6329 = vadd.f32 %v6328, 1.0
    %v6330 = vrcp.pop %v6329
    %v6331 = vmul.f32 1.0, %v6330
    %v6332 = vtanh.pop %v6325
    %v6333 = vmul.f32 %v6331, %v6173
    %6335 = vrot.lane.b32.xlu0 %v6332, 64
    %v6336 = vpop.permute.xlu0 %6335
    %v6338 = vmul.f32 %v6331, %v6336
    %6340 = vrot.lane.b32.xlu0 %v6338, 32
    %v6341 = vpop.permute.xlu0 %6340
    %v6343 = vadd.f32 %v6333, %v6341
    %v6344 = vtanh.pop %v6343
    %6346 = vrot.lane.b32.xlu0 %v6344, 64
    %v6347 = vpop.permute.xlu0 %6346
    %v6349 = vmul.f32 %v6331, %v6347
    %6351 = vrot.lane.b32.xlu0 %v5146, 32
    %v6352 = vpop.permute.xlu0 %6351
    %v6353 = vsel %vm88, %v6352, 0
    %6355 = vmatprep.subr.mxu0 0.0
    %6356 = vmatpush1.msra.mxu0 %v5148
    %6357 = vmatprep.subr.mxu0 0.0
    %6358 = vmatpush1.msra.mxu0 %v5149
    %6359 = vmatprep.subr.mxu0 0.0
    %6360 = vmatpush1.msra.mxu0 %v5150
    %6361 = vmatprep.subr.mxu0 0.0
    %6362 = vmatpush1.msra.mxu0 %v5151
    %6363 = vmatprep.subr.mxu0 0.0
    %6364 = vmatpush1.msra.mxu0 0.0
    %6365 = vmatprep.subr.mxu0 0.0
    %6366 = vmatpush1.msra.mxu0 0.0
    %6367 = vmatprep.subr.mxu0 0.0
    %6368 = vmatpush1.msra.mxu0 0.0
    %6369 = vmatprep.subr.mxu0 0.0
    %6370 = vmatpush1.msra.mxu0 0.0
    %6371 = vmatprep.subr.mxu0 0.0
    %6372 = vmatpush1.msra.mxu0 0.0
    %6373 = vmatprep.subr.mxu0 0.0
    %6374 = vmatpush1.msra.mxu0 0.0
    %6375 = vmatprep.subr.mxu0 0.0
    %6376 = vmatpush1.msra.mxu0 0.0
    %6377 = vmatprep.subr.mxu0 0.0
    %6378 = vmatpush1.msra.mxu0 0.0
    %6379 = vmatprep.subr.mxu0 0.0
    %6380 = vmatpush1.msra.mxu0 0.0
    %6381 = vmatprep.subr.mxu0 0.0
    %6382 = vmatpush1.msra.mxu0 0.0
    %6383 = vmatprep.subr.mxu0 0.0
    %6384 = vmatpush1.msra.mxu0 0.0
    %6385 = vmatprep.subr.mxu0 0.0
    %6386 = vmatpush1.msra.mxu0 0.0
    %6387 = vmatprep.subr.mxu0 0.0
    %6388 = vmatpush1.msra.mxu0 0.0
    %6389 = vmatprep.subr.mxu0 0.0
    %6390 = vmatpush1.msra.mxu0 0.0
    %6391 = vmatprep.subr.mxu0 0.0
    %6392 = vmatpush1.msra.mxu0 0.0
    %6393 = vmatprep.subr.mxu0 0.0
    %6394 = vmatpush1.msra.mxu0 0.0
    %6395 = vmatprep.subr.mxu0 0.0
    %6396 = vmatpush1.msra.mxu0 0.0
    %6397 = vmatprep.subr.mxu0 0.0
    %6398 = vmatpush1.msra.mxu0 0.0
    %6399 = vmatprep.subr.mxu0 0.0
    %6400 = vmatpush1.msra.mxu0 0.0
    %6401 = vmatprep.subr.mxu0 0.0
    %6402 = vmatpush1.msra.mxu0 0.0
    %6403 = vmatprep.subr.mxu0 0.0
    %6404 = vmatpush1.msra.mxu0 0.0
    %6405 = vmatprep.subr.mxu0 0.0
    %6406 = vmatpush1.msra.mxu0 0.0
    %6407 = vmatprep.subr.mxu0 0.0
    %6408 = vmatpush1.msra.mxu0 0.0
    %6409 = vmatprep.subr.mxu0 0.0
    %6410 = vmatpush1.msra.mxu0 0.0
    %6411 = vmatprep.subr.mxu0 0.0
    %6412 = vmatpush1.msra.mxu0 0.0
    %6413 = vmatprep.subr.mxu0 0.0
    %6414 = vmatpush1.msra.mxu0 0.0
    %6415 = vmatprep.subr.mxu0 0.0
    %6416 = vmatpush1.msra.mxu0 0.0
    %6417 = vmatprep.subr.mxu0 0.0
    %6418 = vmatpush1.msra.mxu0 0.0
    %6419 = vmatprep.mubr.f32.mxu0 0.0
    %6420 = vmatmul.mubr.f32.gmra.mrb[0].mxu0 %v6353
    %v6421 = vpop.f32.mrb[0].mxu0
    %v6422 = vadd.f32 %v5163, %v6421
    %v6423 = vpop.f32.mrb[0].mxu0
    %6424 = vdwg.mxu0
    %6426 = vrot.lane.b32.xlu0 %v6349, 32
    %v6427 = vpop.permute.xlu0 %6426
    %v6428 = vsel %vm88, %v6427, 0
    %6430 = vmatprep.subr.mxu0 0.0
    %6431 = vmatpush1.msra.mxu0 %v5153
    %6432 = vmatprep.subr.mxu0 0.0
    %6433 = vmatpush1.msra.mxu0 %v5154
    %6434 = vmatprep.subr.mxu0 0.0
    %6435 = vmatpush1.msra.mxu0 %v5155
    %6436 = vmatprep.subr.mxu0 0.0
    %6437 = vmatpush1.msra.mxu0 %v5156
    %6438 = vmatprep.subr.mxu0 0.0
    %6439 = vmatpush1.msra.mxu0 0.0
    %6440 = vmatprep.subr.mxu0 0.0
    %6441 = vmatpush1.msra.mxu0 0.0
    %6442 = vmatprep.subr.mxu0 0.0
    %6443 = vmatpush1.msra.mxu0 0.0
    %6444 = vmatprep.subr.mxu0 0.0
    %6445 = vmatpush1.msra.mxu0 0.0
    %6446 = vmatprep.subr.mxu0 0.0
    %6447 = vmatpush1.msra.mxu0 0.0
    %6448 = vmatprep.subr.mxu0 0.0
    %6449 = vmatpush1.msra.mxu0 0.0
    %6450 = vmatprep.subr.mxu0 0.0
    %6451 = vmatpush1.msra.mxu0 0.0
    %6452 = vmatprep.subr.mxu0 0.0
    %6453 = vmatpush1.msra.mxu0 0.0
    %6454 = vmatprep.subr.mxu0 0.0
    %6455 = vmatpush1.msra.mxu0 0.0
    %6456 = vmatprep.subr.mxu0 0.0
    %6457 = vmatpush1.msra.mxu0 0.0
    %6458 = vmatprep.subr.mxu0 0.0
    %6459 = vmatpush1.msra.mxu0 0.0
    %6460 = vmatprep.subr.mxu0 0.0
    %6461 = vmatpush1.msra.mxu0 0.0
    %6462 = vmatprep.subr.mxu0 0.0
    %6463 = vmatpush1.msra.mxu0 0.0
    %6464 = vmatprep.subr.mxu0 0.0
    %6465 = vmatpush1.msra.mxu0 0.0
    %6466 = vmatprep.subr.mxu0 0.0
    %6467 = vmatpush1.msra.mxu0 0.0
    %6468 = vmatprep.subr.mxu0 0.0
    %6469 = vmatpush1.msra.mxu0 0.0
    %6470 = vmatprep.subr.mxu0 0.0
    %6471 = vmatpush1.msra.mxu0 0.0
    %6472 = vmatprep.subr.mxu0 0.0
    %6473 = vmatpush1.msra.mxu0 0.0
    %6474 = vmatprep.subr.mxu0 0.0
    %6475 = vmatpush1.msra.mxu0 0.0
    %6476 = vmatprep.subr.mxu0 0.0
    %6477 = vmatpush1.msra.mxu0 0.0
    %6478 = vmatprep.subr.mxu0 0.0
    %6479 = vmatpush1.msra.mxu0 0.0
    %6480 = vmatprep.subr.mxu0 0.0
    %6481 = vmatpush1.msra.mxu0 0.0
    %6482 = vmatprep.subr.mxu0 0.0
    %6483 = vmatpush1.msra.mxu0 0.0
    %6484 = vmatprep.subr.mxu0 0.0
    %6485 = vmatpush1.msra.mxu0 0.0
    %6486 = vmatprep.subr.mxu0 0.0
    %6487 = vmatpush1.msra.mxu0 0.0
    %6488 = vmatprep.subr.mxu0 0.0
    %6489 = vmatpush1.msra.mxu0 0.0
    %6490 = vmatprep.subr.mxu0 0.0
    %6491 = vmatpush1.msra.mxu0 0.0
    %6492 = vmatprep.subr.mxu0 0.0
    %6493 = vmatpush1.msra.mxu0 0.0
    %6494 = vmatprep.mubr.f32.mxu0 0.0
    %6495 = vmatmul.mubr.f32.gmra.mrb[0].mxu0 %v6428
    %v6496 = vpop.f32.mrb[0].mxu0
    %v6497 = vadd.f32 0.0, %v6496
    %v6498 = vpop.f32.mrb[0].mxu0
    %6499 = vdwg.mxu0
    %v6500 = vadd.f32 %v6422, %v6497
    %v6501 = vxor.u32 %v6500, 2147483648
    %v6502 = vmul.f32 %v6501, 1.442695
    %v6503 = vpow.pop %v6502
    %v6504 = vadd.f32 %v6503, 1.0
    %v6505 = vrcp.pop %v6504
    %v6506 = vmul.f32 1.0, %v6505
    %v6507 = vtanh.pop %v6500
    %v6508 = vmul.f32 %v6506, %v6343
    %6510 = vrot.lane.b32.xlu0 %v6507, 64
    %v6511 = vpop.permute.xlu0 %6510
    %v6513 = vmul.f32 %v6506, %v6511
    %6515 = vrot.lane.b32.xlu0 %v6513, 32
    %v6516 = vpop.permute.xlu0 %6515
    %v6518 = vadd.f32 %v6508, %v6516
    %v6519 = vtanh.pop %v6518
    %6521 = vrot.lane.b32.xlu0 %v6519, 64
    %v6522 = vpop.permute.xlu0 %6521
    %v6524 = vmul.f32 %v6506, %v6522
    %v6526 = vrot.slane %v2390, 6
    %v6528 = vrot.slane %v3768, 4
    %v6530 = vrot.slane %v5146, 2
    %vm6532 = vcmask 1041408
    %v6533 = vsel %vm6532, %v2216, %v6526
    %vm6534 = vcmask 1043456
    %v6535 = vsel %vm6534, %v6533, %v6528
    %vm6536 = vcmask 1045504
    %v6537 = vsel %vm6536, %v6535, %v6530
    %v6538 = vmax.f32 %v6537, 0.0
    %v6539 = vmax.f32 %v6524, 0.0
    %v6540 = vld [vmem:[%s4] sm:$0xff]
    %v6541 = vld [vmem:[%s4 + $0x8] sm:$0xff]
    %v6542 = vld [vmem:[%s4 + $0x10] sm:$0xff]
    %v6543 = vld [vmem:[%s4 + $0x18] sm:$0xff]
    %v6544 = vld [vmem:[%s5] sm:$0x1]
    %v6546 = vlaneseq
    %v6547 = vshrl.u32 %v6546, 7
    %v6548 = vsub.s32 0, %v6547
    %v6549 = vrot.slane %v6544, %v6548
    %6553 = vrot.lane.b32.xlu0 %v6538, 32
    %v6554 = vpop.permute.xlu0 %6553
    %6555 = vrot.lane.b32.xlu0 %v6539, 32
    %v6556 = vpop.permute.xlu0 %6555
    %v6557 = vsel %vm88, %v6554, 0
    %v6559 = vsel %vm88, %v6556, 0
    %6561 = vmatprep.subr.mxu0 0.0
    %6562 = vmatpush1.msra.mxu0 %v6540
    %6563 = vmatprep.subr.mxu0 0.0
    %6564 = vmatpush1.msra.mxu0 %v6541
    %6565 = vmatprep.subr.mxu0 0.0
    %6566 = vmatpush1.msra.mxu0 %v6542
    %6567 = vmatprep.subr.mxu0 0.0
    %6568 = vmatpush1.msra.mxu0 %v6543
    %6569 = vmatprep.subr.mxu0 0.0
    %6570 = vmatpush1.msra.mxu0 0.0
    %6571 = vmatprep.subr.mxu0 0.0
    %6572 = vmatpush1.msra.mxu0 0.0
    %6573 = vmatprep.subr.mxu0 0.0
    %6574 = vmatpush1.msra.mxu0 0.0
    %6575 = vmatprep.subr.mxu0 0.0
    %6576 = vmatpush1.msra.mxu0 0.0
    %6577 = vmatprep.subr.mxu0 0.0
    %6578 = vmatpush1.msra.mxu0 0.0
    %6579 = vmatprep.subr.mxu0 0.0
    %6580 = vmatpush1.msra.mxu0 0.0
    %6581 = vmatprep.subr.mxu0 0.0
    %6582 = vmatpush1.msra.mxu0 0.0
    %6583 = vmatprep.subr.mxu0 0.0
    %6584 = vmatpush1.msra.mxu0 0.0
    %6585 = vmatprep.subr.mxu0 0.0
    %6586 = vmatpush1.msra.mxu0 0.0
    %6587 = vmatprep.subr.mxu0 0.0
    %6588 = vmatpush1.msra.mxu0 0.0
    %6589 = vmatprep.subr.mxu0 0.0
    %6590 = vmatpush1.msra.mxu0 0.0
    %6591 = vmatprep.subr.mxu0 0.0
    %6592 = vmatpush1.msra.mxu0 0.0
    %6593 = vmatprep.subr.mxu0 0.0
    %6594 = vmatpush1.msra.mxu0 0.0
    %6595 = vmatprep.subr.mxu0 0.0
    %6596 = vmatpush1.msra.mxu0 0.0
    %6597 = vmatprep.subr.mxu0 0.0
    %6598 = vmatpush1.msra.mxu0 0.0
    %6599 = vmatprep.subr.mxu0 0.0
    %6600 = vmatpush1.msra.mxu0 0.0
    %6601 = vmatprep.subr.mxu0 0.0
    %6602 = vmatpush1.msra.mxu0 0.0
    %6603 = vmatprep.subr.mxu0 0.0
    %6604 = vmatpush1.msra.mxu0 0.0
    %6605 = vmatprep.subr.mxu0 0.0
    %6606 = vmatpush1.msra.mxu0 0.0
    %6607 = vmatprep.subr.mxu0 0.0
    %6608 = vmatpush1.msra.mxu0 0.0
    %6609 = vmatprep.subr.mxu0 0.0
    %6610 = vmatpush1.msra.mxu0 0.0
    %6611 = vmatprep.subr.mxu0 0.0
    %6612 = vmatpush1.msra.mxu0 0.0
    %6613 = vmatprep.subr.mxu0 0.0
    %6614 = vmatpush1.msra.mxu0 0.0
    %6615 = vmatprep.subr.mxu0 0.0
    %6616 = vmatpush1.msra.mxu0 0.0
    %6617 = vmatprep.subr.mxu0 0.0
    %6618 = vmatpush1.msra.mxu0 0.0
    %6619 = vmatprep.subr.mxu0 0.0
    %6620 = vmatpush1.msra.mxu0 0.0
    %6621 = vmatprep.subr.mxu0 0.0
    %6622 = vmatpush1.msra.mxu0 0.0
    %6623 = vmatprep.subr.mxu0 0.0
    %6624 = vmatpush1.msra.mxu0 0.0
    %6625 = vmatprep.mubr.f32.mxu0 0.0
    %6626 = vmatmul.mubr.f32.gmra.mrb[0].mxu0 %v6557
    %v6627 = vpop.f32.mrb[0].mxu0
    %v6628 = vadd.f32 %v6549, %v6627
    %v6629 = vpop.f32.mrb[0].mxu0
    %6630 = vmatprep.mubr.f32.mxu0 0.0
    %6631 = vmatmul.mubr.f32.gmra.mrb[0].mxu0 %v6559
    %v6632 = vpop.f32.mrb[0].mxu0
    %v6633 = vadd.f32 %v6549, %v6632
    %v6634 = vpop.f32.mrb[0].mxu0
    %6635 = vdwg.mxu0
    %v6636 = vmax.f32 %v6628, 0.0
    %v6637 = vmax.f32 %v6633, 0.0
    %v6638 = vld [vmem:[#allocation7] sm:$0xff]
    %v6639 = vld [vmem:[#allocation7 + $0x8] sm:$0xff]
    %v6640 = vld [vmem:[#allocation7 + $0x10] sm:$0xff]
    %v6641 = vld [vmem:[#allocation7 + $0x18] sm:$0xff]
    %v6642 = vld [vmem:[#allocation7 + $0x20] sm:$0xff]
    %v6643 = vld [vmem:[#allocation7 + $0x28] sm:$0xff]
    %v6644 = vld [vmem:[#allocation7 + $0x30] sm:$0xff]
    %v6645 = vld [vmem:[#allocation7 + $0x38] sm:$0xff]
    %v6646 = vld [vmem:[#allocation7 + $0x40] sm:$0xff]
    %v6647 = vld [vmem:[#allocation7 + $0x48] sm:$0xff]
    %v6648 = vld [vmem:[#allocation7 + $0x50] sm:$0xff]
    %v6649 = vld [vmem:[#allocation7 + $0x58] sm:$0xff]
    %v6650 = vld [vmem:[#allocation7 + $0x60] sm:$0xff]
    %v6651 = vld [vmem:[#allocation7 + $0x68] sm:$0xff]
    %v6652 = vld [vmem:[#allocation7 + $0x70] sm:$0xff]
    %v6653 = vld [vmem:[#allocation7 + $0x78] sm:$0xff]
    %v6654 = vld [vmem:[%s7] sm:$0x1]
    %v6656 = vlaneseq
    %v6657 = vshrl.u32 %v6656, 7
    %v6658 = vsub.s32 0, %v6657
    %v6659 = vrot.slane %v6654, %v6658
    %6661 = vmatprep.subr.mxu0 0.0
    %6662 = vmatpush1.msra.mxu0 %v6638
    %6663 = vmatprep.subr.mxu0 0.0
    %6664 = vmatpush1.msra.mxu0 %v6639
    %6665 = vmatprep.subr.mxu0 0.0
    %6666 = vmatpush1.msra.mxu0 %v6640
    %6667 = vmatprep.subr.mxu0 0.0
    %6668 = vmatpush1.msra.mxu0 %v6641
    %6669 = vmatprep.subr.mxu0 0.0
    %6670 = vmatpush1.msra.mxu0 %v6642
    %6671 = vmatprep.subr.mxu0 0.0
    %6672 = vmatpush1.msra.mxu0 %v6643
    %6673 = vmatprep.subr.mxu0 0.0
    %6674 = vmatpush1.msra.mxu0 %v6644
    %6675 = vmatprep.subr.mxu0 0.0
    %6676 = vmatpush1.msra.mxu0 %v6645
    %6677 = vmatprep.subr.mxu0 0.0
    %6678 = vmatpush1.msra.mxu0 %v6646
    %6679 = vmatprep.subr.mxu0 0.0
    %6680 = vmatpush1.msra.mxu0 %v6647
    %6681 = vmatprep.subr.mxu0 0.0
    %6682 = vmatpush1.msra.mxu0 %v6648
    %6683 = vmatprep.subr.mxu0 0.0
    %6684 = vmatpush1.msra.mxu0 %v6649
    %6685 = vmatprep.subr.mxu0 0.0
    %6686 = vmatpush1.msra.mxu0 %v6650
    %6687 = vmatprep.subr.mxu0 0.0
    %6688 = vmatpush1.msra.mxu0 %v6651
    %6689 = vmatprep.subr.mxu0 0.0
    %6690 = vmatpush1.msra.mxu0 %v6652
    %6691 = vmatprep.subr.mxu0 0.0
    %6692 = vmatpush1.msra.mxu0 %v6653
    %6693 = vmatprep.subr.mxu0 0.0
    %6694 = vmatpush1.msra.mxu0 0.0
    %6695 = vmatprep.subr.mxu0 0.0
    %6696 = vmatpush1.msra.mxu0 0.0
    %6697 = vmatprep.subr.mxu0 0.0
    %6698 = vmatpush1.msra.mxu0 0.0
    %6699 = vmatprep.subr.mxu0 0.0
    %6700 = vmatpush1.msra.mxu0 0.0
    %6701 = vmatprep.subr.mxu0 0.0
    %6702 = vmatpush1.msra.mxu0 0.0
    %6703 = vmatprep.subr.mxu0 0.0
    %6704 = vmatpush1.msra.mxu0 0.0
    %6705 = vmatprep.subr.mxu0 0.0
    %6706 = vmatpush1.msra.mxu0 0.0
    %6707 = vmatprep.subr.mxu0 0.0
    %6708 = vmatpush1.msra.mxu0 0.0
    %6709 = vmatprep.subr.mxu0 0.0
    %6710 = vmatpush1.msra.mxu0 0.0
    %6711 = vmatprep.subr.mxu0 0.0
    %6712 = vmatpush1.msra.mxu0 0.0
    %6713 = vmatprep.subr.mxu0 0.0
    %6714 = vmatpush1.msra.mxu0 0.0
    %6715 = vmatprep.subr.mxu0 0.0
    %6716 = vmatpush1.msra.mxu0 0.0
    %6717 = vmatprep.subr.mxu0 0.0
    %6718 = vmatpush1.msra.mxu0 0.0
    %6719 = vmatprep.subr.mxu0 0.0
    %6720 = vmatpush1.msra.mxu0 0.0
    %6721 = vmatprep.subr.mxu0 0.0
    %6722 = vmatpush1.msra.mxu0 0.0
    %6723 = vmatprep.subr.mxu0 0.0
    %6724 = vmatpush1.msra.mxu0 0.0
    %6725 = vmatprep.mubr.f32.mxu0 0.0
    %6726 = vmatmul.mubr.f32.gmra.mrb[0].mxu0 %v6636
    %v6727 = vpop.f32.mrb[0].mxu0
    %v6728 = vadd.f32 %v6659, %v6727
    %v6729 = vpop.f32.mrb[0].mxu0
    %6730 = vmatprep.mubr.f32.mxu0 0.0
    %6731 = vmatmul.mubr.f32.gmra.mrb[0].mxu0 %v6637
    %v6732 = vpop.f32.mrb[0].mxu0
    %v6733 = vadd.f32 %v6659, %v6732
    %v6734 = vpop.f32.mrb[0].mxu0
    %6735 = vdwg.mxu0
    %6736 = vst [vmem:[#allocation8] sm:$0xff] %v6728
    %6737 = vst [vmem:[#allocation8 + $0x8] sm:$0x3] %v6733
    // Predicated region
    $region46: #{lstm1_forward.1} parent=1 // pred_check
      _
    $region47: #{lstm1_forward.1} parent=1 // pred_check_branch
      %6739 = sbr.rel (0) target = $region49
    $region48: #{lstm1_forward.1} parent=1 // pred_region
      %s6741 = ssub.s32 256, 256
      %6742 = vsyncadd [#allocation4], %s6741
      %s6743 = sshll.u32 [#allocation8], 4
      %s6744 = int_to_ptr.vmem [resolvable:$true] %s6743
      %6749 = dma.vmem_to_hbm [thread:$0]  %s6744, 256, %s8, [#allocation4], 128, 128, 8
    $region49: #{lstm1_forward.1} parent=1 // pred_fallthru
      _
    // Predicated region
    $region50: #{lstm1_forward.1} parent=1 // pred_check
      _
    $region51: #{lstm1_forward.1} parent=1 // pred_check_branch
      %6751 = sbr.rel (0) target = $region53
    $region52: #{lstm1_forward.1} parent=1 // pred_region
      %6752 = dma.done [#allocation4], 256
    $region53: #{lstm1_forward.1} parent=1 // pred_fallthru
      _
    %6753 = vsyncpa [#allocation3], 1
    %6754 = vsyncpa [#allocation6], 1
    %6755 = vsyncpa [#allocation4], 1

</llo_original>
